<compile_context>
chip_gen: v7x
topology: tpu7x:2x2x1
jax: 0.10.0
libtpu: 0.0.40
codegen_flags: <defaults>
</compile_context>

<pallas_src>
import jax
import jax.numpy as jnp
from jax.experimental import pallas as pl
from jax.experimental.pallas import tpu as pltpu

LANES = 128
BT = 8  # max images per grid step


# ------------------------------ fused kernel --------------------------------

def _lenet_kernel(x_ref, w1_ref, b1_ref, w2_ref, b2_ref,
                  wf1_ref, bf1_ref, wf2_ref, bf2_ref,
                  out_ref, acc1_ref, acc2_ref, p_ref):
    f32 = jnp.float32
    bf16 = jnp.bfloat16
    bt = out_ref.shape[0]

    # ---- conv1 (single K-packed matmul) + bias + ReLU -----------------------
    # x_ref rows: b*896 + oh*32 + ow (ow in [28,32) are zero-padded junk).
    a1 = jnp.dot(x_ref[...], w1_ref[...], preferred_element_type=f32)
    acc1_ref[...] = jnp.maximum(a1 + b1_ref[...], 0.0)            # (bt*896,128)

    # ---- pool1: 2x2 max ------------------------------------------------------
    h = jnp.maximum(acc1_ref[pl.ds(0, bt * 448, stride=2), :],
                    acc1_ref[pl.ds(1, bt * 448, stride=2), :])    # (bt*448,128)
    h = h.reshape(bt, 14, 32, LANES)
    p1 = jnp.maximum(h[:, :, 0:16, :], h[:, :, 16:32, :])         # (bt,14,16,128)
    p1 = p1.reshape(bt, 224, LANES)                                # row = ph*16+pw
    p1 = jnp.concatenate([p1, jnp.zeros((bt, 8, LANES), f32)], axis=1)  # (bt,232,128)

    # ---- conv2 im2col (kw packed into K): P[b, r, kw*16+c] = p1[b, r+kw, c] --
    # p1 lanes >= 6 are exactly zero, so each 16-lane block carries one kw tap.
    p_ref[:, :, 80:128] = jnp.zeros((bt, 224, 48), f32)
    for kw in range(5):
        p_ref[:, :, kw * 16:(kw + 1) * 16] = p1[:, kw:kw + 224, 0:16]
    P = p_ref[...].astype(bf16)                                    # (bt,224,128)

    # ---- conv2: 5 sublane-aligned matmuls (one per kh) + bias + ReLU --------
    def conv2_tap(kh):
        lhs = P[:, kh * 16:kh * 16 + 160, :].reshape(bt * 160, LANES)
        return jnp.dot(lhs, w2_ref[kh], preferred_element_type=f32)

    a2 = conv2_tap(0)
    for kh in range(1, 5):
        a2 = a2 + conv2_tap(kh)
    acc2_ref[...] = jnp.maximum(a2 + b2_ref[...], 0.0)            # (bt*160,128)

    # ---- pool2: 2x2 max ------------------------------------------------------
    u = jnp.maximum(acc2_ref[pl.ds(0, bt * 80, stride=2), :],
                    acc2_ref[pl.ds(1, bt * 80, stride=2), :])     # (bt*80,128)
    u = u.reshape(bt, 5, 16, LANES)
    p2 = jnp.maximum(u[:, :, 0:8, :], u[:, :, 8:16, :]).astype(bf16)  # (bt,5,8,128)

    # ---- fc1 + ReLU: 25 unrolled M=bt dots (NCHW flatten folded into wf1) ---
    f1 = jnp.dot(p2[:, 0, 0, :], wf1_ref[0], preferred_element_type=f32)
    for idx in range(1, 25):
        pp, qq = idx // 5, idx % 5
        f1 = f1 + jnp.dot(p2[:, pp, qq, :], wf1_ref[idx],
                          preferred_element_type=f32)
    f1 = jnp.maximum(f1 + bf1_ref[...], 0.0).astype(bf16)          # (bt,128)

    # ---- fc2 + ReLU (reference module applies ReLU to the logits too) -------
    y = jnp.dot(f1, wf2_ref[...], preferred_element_type=f32) + bf2_ref[...]
    out_ref[...] = jnp.maximum(y, 0.0)                             # (bt,128)


# ------------------------------ param packing -------------------------------

def _pack_conv1(w_hwio):
    # (5,5,3,6) -> (128,128); K row = (kh*5+kw)*3 + c, col = out channel.
    w = w_hwio.reshape(75, 6)
    return jnp.pad(w, ((0, LANES - 75), (0, LANES - 6))).astype(jnp.bfloat16)


def _pack_conv2(w_hwio):
    # (5,5,6,16) -> (5,128,128); block kh, K row = kw*16 + c, col = out channel.
    w = jnp.pad(w_hwio, ((0, 0), (0, 0), (0, 10), (0, LANES - 16)))  # (5,5,16,128)
    w = w.reshape(5, 80, LANES)
    return jnp.pad(w, ((0, 0), (0, LANES - 80), (0, 0))).astype(jnp.bfloat16)


def _pack_fc1(wf1):
    # wf1: (400,120) math layout (in,out); PyTorch flatten index = c*25 + p*5 + q.
    blk = (wf1.reshape(16, 5, 5, 120)     # (c, p, q, n)
              .transpose(1, 2, 0, 3)      # (p, q, c, n)
              .reshape(25, 16, 120))
    return jnp.pad(blk, ((0, 0), (0, LANES - 16),
                         (0, LANES - 120))).astype(jnp.bfloat16)


def _pack_fc2(wf2):
    return jnp.pad(wf2, ((0, LANES - 120), (0, LANES - 10))).astype(jnp.bfloat16)


def _pack_bias(b):
    return jnp.pad(b, (0, LANES - b.shape[0])).reshape(1, LANES).astype(jnp.float32)


def init_params(key):
    # Deterministic synthetic init (PyTorch-style U(-1/sqrt(fan_in), +)) in
    # "math" layout (HWIO convs, (in,out) fcs), packed once.  Real PyTorch
    # state_dict tensors ((cout,cin,kh,kw) / (out,in)) must be transposed into
    # this layout before packing.
    def uniform(k, shape, fan_in):
        bound = 1.0 / float(fan_in) ** 0.5
        return jax.random.uniform(k, shape, jnp.float32, -bound, bound)

    ks = jax.random.split(key, 8)
    w1 = uniform(ks[0], (5, 5, 3, 6), 3 * 5 * 5)
    b1 = uniform(ks[1], (6,), 3 * 5 * 5)
    w2 = uniform(ks[2], (5, 5, 6, 16), 6 * 5 * 5)
    b2 = uniform(ks[3], (16,), 6 * 5 * 5)
    wf1 = uniform(ks[4], (16 * 5 * 5, 120), 16 * 5 * 5)
    bf1 = uniform(ks[5], (120,), 16 * 5 * 5)
    wf2 = uniform(ks[6], (120, 10), 120)
    bf2 = uniform(ks[7], (10,), 120)
    return {
        "w1": _pack_conv1(w1), "b1": _pack_bias(b1),
        "w2": _pack_conv2(w2), "b2": _pack_bias(b2),
        "wf1": _pack_fc1(wf1), "bf1": _pack_bias(bf1),
        "wf2": _pack_fc2(wf2), "bf2": _pack_bias(bf2),
    }


# --------------------------------- forward ----------------------------------

@jax.jit
def net_forward(x_nchw, params):
    B = x_nchw.shape[0]
    bt = min(BT, B)
    b_pad = ((B + bt - 1) // bt) * bt
    grid = b_pad // bt

    # NCHW -> NHWC, batch padded to a multiple of bt with zero images.
    x = jnp.transpose(x_nchw, (0, 2, 3, 1)).astype(jnp.float32)     # (B,32,32,3)
    if b_pad != B:
        x = jnp.pad(x, ((0, b_pad - B), (0, 0), (0, 0), (0, 0)))
    # conv1 im2col in the wrapper: K lane = (kh*5+kw)*3 + c (75 -> 128),
    # rows = oh*32 + ow with ow in [28,32) zero padded; cast to bf16 once.
    cols = jnp.stack([x[:, kh:kh + 28, kw:kw + 28, :]
                      for kh in range(5) for kw in range(5)], axis=3)
    cols = cols.reshape(b_pad, 28, 28, 75)
    cols = jnp.pad(cols, ((0, 0), (0, 0), (0, 4), (0, LANES - 75)))  # (b,28,32,128)
    lhs1 = cols.reshape(b_pad * 896, LANES).astype(jnp.bfloat16)

    const2 = lambda b: (0, 0)
    const3 = lambda b: (0, 0, 0)

    out = pl.pallas_call(
        _lenet_kernel,
        out_shape=jax.ShapeDtypeStruct((b_pad, LANES), jnp.float32),
        grid=(grid,),
        in_specs=[
            pl.BlockSpec((bt * 896, LANES), lambda b: (b, 0)),    # im2col(x)
            pl.BlockSpec((LANES, LANES), const2),                 # w1
            pl.BlockSpec((1, LANES), const2),                     # b1
            pl.BlockSpec((5, LANES, LANES), const3),              # w2
            pl.BlockSpec((1, LANES), const2),                     # b2
            pl.BlockSpec((25, LANES, LANES), const3),             # wf1
            pl.BlockSpec((1, LANES), const2),                     # bf1
            pl.BlockSpec((LANES, LANES), const2),                 # wf2
            pl.BlockSpec((1, LANES), const2),                     # bf2
        ],
        out_specs=pl.BlockSpec((bt, LANES), lambda b: (b, 0)),
        scratch_shapes=[
            pltpu.VMEM((bt * 896, LANES), jnp.float32),   # conv1 out (28x32 rows)
            pltpu.VMEM((bt * 160, LANES), jnp.float32),   # conv2 out (10x16 rows)
            pltpu.VMEM((bt, 224, LANES), jnp.float32),    # conv2 kw-packed im2col
        ],
        compiler_params=pltpu.CompilerParams(
            dimension_semantics=("parallel",),
            vmem_limit_bytes=32 * 1024 * 1024,
        ),
    )(lhs1, params["w1"], params["b1"], params["w2"], params["b2"],
      params["wf1"], params["bf1"], params["wf2"], params["bf2"])

    return out[:B, :10]


if __name__ == "__main__":
    key = jax.random.PRNGKey(0)
    k_x, k_p = jax.random.split(key)
    # Forward math implies 32x32 RGB inputs (CIFAR-10-like): 32->28->14->10->5.
    x = jax.random.normal(k_x, (2, 3, 32, 32), dtype=jnp.float32)
    params = init_params(k_p)

    out = jax.block_until_ready(net_forward(x, params))
    assert out.shape == (2, 10), out.shape
    assert bool(jnp.all(jnp.isfinite(out)))
    print("KERNEL_OK")
</pallas_src>

<mosaic_0001>
module attributes {stable_mosaic.version = 11 : i64} {
  func.func @_lenet_kernel(%arg0: i32, %arg1: memref<1792x128xbf16, #tpu.memory_space<vmem>>, %arg2: memref<128x128xbf16, #tpu.memory_space<vmem>>, %arg3: memref<1x128xf32, #tpu.memory_space<vmem>>, %arg4: memref<5x128x128xbf16, #tpu.memory_space<vmem>>, %arg5: memref<1x128xf32, #tpu.memory_space<vmem>>, %arg6: memref<25x128x128xbf16, #tpu.memory_space<vmem>>, %arg7: memref<1x128xf32, #tpu.memory_space<vmem>>, %arg8: memref<128x128xbf16, #tpu.memory_space<vmem>>, %arg9: memref<1x128xf32, #tpu.memory_space<vmem>>, %arg10: memref<2x128xf32, #tpu.memory_space<vmem>>, %arg11: memref<1792x128xf32, #tpu.memory_space<vmem>>, %arg12: memref<320x128xf32, #tpu.memory_space<vmem>>, %arg13: memref<2x224x128xf32, #tpu.memory_space<vmem>>) attributes {dimension_semantics = [#tpu.dimension_semantics<parallel>], iteration_bounds = array<i64: 1>, scalar_prefetch = 0 : i64, scratch_operands = 3 : i64, tpu.core_type = #tpu.core_type<tc>, window_params = [{transform_indices = @transform_0, window_bounds = array<i64: 1792, 128>}, {pipeline_mode = #tpu.pipeline_mode<synchronous>, transform_indices = @transform_1, window_bounds = array<i64: 128, 128>}, {pipeline_mode = #tpu.pipeline_mode<synchronous>, transform_indices = @transform_2, window_bounds = array<i64: 1, 128>}, {pipeline_mode = #tpu.pipeline_mode<synchronous>, transform_indices = @transform_3, window_bounds = array<i64: 5, 128, 128>}, {pipeline_mode = #tpu.pipeline_mode<synchronous>, transform_indices = @transform_4, window_bounds = array<i64: 1, 128>}, {pipeline_mode = #tpu.pipeline_mode<synchronous>, transform_indices = @transform_5, window_bounds = array<i64: 25, 128, 128>}, {pipeline_mode = #tpu.pipeline_mode<synchronous>, transform_indices = @transform_6, window_bounds = array<i64: 1, 128>}, {pipeline_mode = #tpu.pipeline_mode<synchronous>, transform_indices = @transform_7, window_bounds = array<i64: 128, 128>}, {pipeline_mode = #tpu.pipeline_mode<synchronous>, transform_indices = @transform_8, window_bounds = array<i64: 1, 128>}, {transform_indices = @transform_9, window_bounds = array<i64: 2, 128>}]} {
    %c0 = arith.constant 0 : index
    %c0_0 = arith.constant 0 : index
    %0 = vector.load %arg1[%c0, %c0_0] : memref<1792x128xbf16, #tpu.memory_space<vmem>>, vector<1792x128xbf16>
    %c0_1 = arith.constant 0 : index
    %c0_2 = arith.constant 0 : index
    %1 = vector.load %arg2[%c0_1, %c0_2] : memref<128x128xbf16, #tpu.memory_space<vmem>>, vector<128x128xbf16>
    %cst = arith.constant dense<0.000000e+00> : vector<1792x128xf32>
    %2 = tpu.matmul %0, %1, %cst {dimension_numbers = #tpu.dot_dimension_numbers<[1], [0], [0], [1], [0, 0, 1, 1], [], []>} : vector<1792x128xbf16>, vector<128x128xbf16>, vector<1792x128xf32> -> vector<1792x128xf32>
    %c0_3 = arith.constant 0 : index
    %c0_4 = arith.constant 0 : index
    %3 = vector.load %arg3[%c0_3, %c0_4] : memref<1x128xf32, #tpu.memory_space<vmem>>, vector<1x128xf32>
    %4 = vector.broadcast %3 : vector<1x128xf32> to vector<1792x128xf32>
    %5 = arith.addf %2, %4 : vector<1792x128xf32>
    %cst_5 = arith.constant 0.000000e+00 : f32
    %6 = vector.broadcast %cst_5 : f32 to vector<1792x128xf32>
    %7 = arith.maximumf %5, %6 : vector<1792x128xf32>
    %c0_6 = arith.constant 0 : index
    %c0_7 = arith.constant 0 : index
    %8 = vector.load %arg11[%c0_6, %c0_7] : memref<1792x128xf32, #tpu.memory_space<vmem>>, vector<1792x128xf32>
    tpu.vector_store %arg11[%c0_6, %c0_7], %7 {strides = array<i32>} : memref<1792x128xf32, #tpu.memory_space<vmem>>, vector<1792x128xf32>,
    %c0_8 = arith.constant 0 : index
    %c0_9 = arith.constant 0 : index
    %9 = tpu.strided_load %arg11[%c0_8, %c0_9] {strides = array<i32: 2, 1>} : memref<1792x128xf32, #tpu.memory_space<vmem>>, vector<896x128xf32>
    %c1 = arith.constant 1 : index
    %c0_10 = arith.constant 0 : index
    %10 = tpu.strided_load %arg11[%c1, %c0_10] {strides = array<i32: 2, 1>} : memref<1792x128xf32, #tpu.memory_space<vmem>>, vector<896x128xf32>
    %11 = arith.maximumf %9, %10 : vector<896x128xf32>
    %12 = vector.shape_cast %11 : vector<896x128xf32> to vector<2x14x32x128xf32>
    %13 = vector.extract_strided_slice %12 {offsets = [0, 0, 0, 0], sizes = [2, 14, 16, 128], strides = [1, 1, 1, 1]} : vector<2x14x32x128xf32> to vector<2x14x16x128xf32>
    %14 = vector.extract_strided_slice %12 {offsets = [0, 0, 16, 0], sizes = [2, 14, 16, 128], strides = [1, 1, 1, 1]} : vector<2x14x32x128xf32> to vector<2x14x16x128xf32>
    %15 = arith.maximumf %13, %14 : vector<2x14x16x128xf32>
    %16 = vector.shape_cast %15 : vector<2x14x16x128xf32> to vector<2x224x128xf32>
    %cst_11 = arith.constant 0.000000e+00 : f32
    %17 = vector.broadcast %cst_11 : f32 to vector<2x8x128xf32>
    %18 = tpu.concatenate %16, %17 in 1 : vector<2x224x128xf32>, vector<2x8x128xf32> -> vector<2x232x128xf32>
    %cst_12 = arith.constant 0.000000e+00 : f32
    %19 = vector.broadcast %cst_12 : f32 to vector<2x224x48xf32>
    %c0_13 = arith.constant 0 : index
    %c0_14 = arith.constant 0 : index
    %c80 = arith.constant 80 : index
    %20 = vector.load %arg13[%c0_13, %c0_14, %c80] : memref<2x224x128xf32, #tpu.memory_space<vmem>>, vector<2x224x48xf32>
    tpu.vector_store %arg13[%c0_13, %c0_14, %c80], %19 {strides = array<i32>} : memref<2x224x128xf32, #tpu.memory_space<vmem>>, vector<2x224x48xf32>,
    %21 = vector.extract_strided_slice %18 {offsets = [0, 0, 0], sizes = [2, 224, 16], strides = [1, 1, 1]} : vector<2x232x128xf32> to vector<2x224x16xf32>
    %c0_15 = arith.constant 0 : index
    %c0_16 = arith.constant 0 : index
    %c0_17 = arith.constant 0 : index
    %22 = vector.load %arg13[%c0_15, %c0_16, %c0_17] : memref<2x224x128xf32, #tpu.memory_space<vmem>>, vector<2x224x16xf32>
    tpu.vector_store %arg13[%c0_15, %c0_16, %c0_17], %21 {strides = array<i32>} : memref<2x224x128xf32, #tpu.memory_space<vmem>>, vector<2x224x16xf32>,
    %23 = vector.extract_strided_slice %18 {offsets = [0, 1, 0], sizes = [2, 224, 16], strides = [1, 1, 1]} : vector<2x232x128xf32> to vector<2x224x16xf32>
    %c0_18 = arith.constant 0 : index
    %c0_19 = arith.constant 0 : index
    %c16 = arith.constant 16 : index
    %24 = vector.load %arg13[%c0_18, %c0_19, %c16] : memref<2x224x128xf32, #tpu.memory_space<vmem>>, vector<2x224x16xf32>
    tpu.vector_store %arg13[%c0_18, %c0_19, %c16], %23 {strides = array<i32>} : memref<2x224x128xf32, #tpu.memory_space<vmem>>, vector<2x224x16xf32>,
    %25 = vector.extract_strided_slice %18 {offsets = [0, 2, 0], sizes = [2, 224, 16], strides = [1, 1, 1]} : vector<2x232x128xf32> to vector<2x224x16xf32>
    %c0_20 = arith.constant 0 : index
    %c0_21 = arith.constant 0 : index
    %c32 = arith.constant 32 : index
    %26 = vector.load %arg13[%c0_20, %c0_21, %c32] : memref<2x224x128xf32, #tpu.memory_space<vmem>>, vector<2x224x16xf32>
    tpu.vector_store %arg13[%c0_20, %c0_21, %c32], %25 {strides = array<i32>} : memref<2x224x128xf32, #tpu.memory_space<vmem>>, vector<2x224x16xf32>,
    %27 = vector.extract_strided_slice %18 {offsets = [0, 3, 0], sizes = [2, 224, 16], strides = [1, 1, 1]} : vector<2x232x128xf32> to vector<2x224x16xf32>
    %c0_22 = arith.constant 0 : index
    %c0_23 = arith.constant 0 : index
    %c48 = arith.constant 48 : index
    %28 = vector.load %arg13[%c0_22, %c0_23, %c48] : memref<2x224x128xf32, #tpu.memory_space<vmem>>, vector<2x224x16xf32>
    tpu.vector_store %arg13[%c0_22, %c0_23, %c48], %27 {strides = array<i32>} : memref<2x224x128xf32, #tpu.memory_space<vmem>>, vector<2x224x16xf32>,
    %29 = vector.extract_strided_slice %18 {offsets = [0, 4, 0], sizes = [2, 224, 16], strides = [1, 1, 1]} : vector<2x232x128xf32> to vector<2x224x16xf32>
    %c0_24 = arith.constant 0 : index
    %c0_25 = arith.constant 0 : index
    %c64 = arith.constant 64 : index
    %30 = vector.load %arg13[%c0_24, %c0_25, %c64] : memref<2x224x128xf32, #tpu.memory_space<vmem>>, vector<2x224x16xf32>
    tpu.vector_store %arg13[%c0_24, %c0_25, %c64], %29 {strides = array<i32>} : memref<2x224x128xf32, #tpu.memory_space<vmem>>, vector<2x224x16xf32>,
    %c0_26 = arith.constant 0 : index
    %c0_27 = arith.constant 0 : index
    %c0_28 = arith.constant 0 : index
    %31 = vector.load %arg13[%c0_26, %c0_27, %c0_28] : memref<2x224x128xf32, #tpu.memory_space<vmem>>, vector<2x224x128xf32>
    %32 = arith.truncf %31 : vector<2x224x128xf32> to vector<2x224x128xbf16>
    %33 = vector.extract_strided_slice %32 {offsets = [0, 0, 0], sizes = [2, 160, 128], strides = [1, 1, 1]} : vector<2x224x128xbf16> to vector<2x160x128xbf16>
    %34 = vector.shape_cast %33 : vector<2x160x128xbf16> to vector<320x128xbf16>
    %c0_29 = arith.constant 0 : index
    %c0_30 = arith.constant 0 : index
    %c0_31 = arith.constant 0 : index
    %35 = vector.load %arg4[%c0_29, %c0_30, %c0_31] : memref<5x128x128xbf16, #tpu.memory_space<vmem>>, vector<1x128x128xbf16>
    %36 = vector.shape_cast %35 : vector<1x128x128xbf16> to vector<128x128xbf16>
    %cst_32 = arith.constant dense<0.000000e+00> : vector<320x128xf32>
    %37 = tpu.matmul %34, %36, %cst_32 {dimension_numbers = #tpu.dot_dimension_numbers<[1], [0], [0], [1], [0, 0, 1, 1], [], []>} : vector<320x128xbf16>, vector<128x128xbf16>, vector<320x128xf32> -> vector<320x128xf32>
    %38 = vector.extract_strided_slice %32 {offsets = [0, 16, 0], sizes = [2, 160, 128], strides = [1, 1, 1]} : vector<2x224x128xbf16> to vector<2x160x128xbf16>
    %39 = vector.shape_cast %38 : vector<2x160x128xbf16> to vector<320x128xbf16>
    %c1_33 = arith.constant 1 : index
    %c0_34 = arith.constant 0 : index
    %c0_35 = arith.constant 0 : index
    %40 = vector.load %arg4[%c1_33, %c0_34, %c0_35] : memref<5x128x128xbf16, #tpu.memory_space<vmem>>, vector<1x128x128xbf16>
    %41 = vector.shape_cast %40 : vector<1x128x128xbf16> to vector<128x128xbf16>
    %cst_36 = arith.constant dense<0.000000e+00> : vector<320x128xf32>
    %42 = tpu.matmul %39, %41, %cst_36 {dimension_numbers = #tpu.dot_dimension_numbers<[1], [0], [0], [1], [0, 0, 1, 1], [], []>} : vector<320x128xbf16>, vector<128x128xbf16>, vector<320x128xf32> -> vector<320x128xf32>
    %43 = arith.addf %37, %42 : vector<320x128xf32>
    %44 = vector.extract_strided_slice %32 {offsets = [0, 32, 0], sizes = [2, 160, 128], strides = [1, 1, 1]} : vector<2x224x128xbf16> to vector<2x160x128xbf16>
    %45 = vector.shape_cast %44 : vector<2x160x128xbf16> to vector<320x128xbf16>
    %c2 = arith.constant 2 : index
    %c0_37 = arith.constant 0 : index
    %c0_38 = arith.constant 0 : index
    %46 = vector.load %arg4[%c2, %c0_37, %c0_38] : memref<5x128x128xbf16, #tpu.memory_space<vmem>>, vector<1x128x128xbf16>
    %47 = vector.shape_cast %46 : vector<1x128x128xbf16> to vector<128x128xbf16>
    %cst_39 = arith.constant dense<0.000000e+00> : vector<320x128xf32>
    %48 = tpu.matmul %45, %47, %cst_39 {dimension_numbers = #tpu.dot_dimension_numbers<[1], [0], [0], [1], [0, 0, 1, 1], [], []>} : vector<320x128xbf16>, vector<128x128xbf16>, vector<320x128xf32> -> vector<320x128xf32>
    %49 = arith.addf %43, %48 : vector<320x128xf32>
    %50 = vector.extract_strided_slice %32 {offsets = [0, 48, 0], sizes = [2, 160, 128], strides = [1, 1, 1]} : vector<2x224x128xbf16> to vector<2x160x128xbf16>
    %51 = vector.shape_cast %50 : vector<2x160x128xbf16> to vector<320x128xbf16>
    %c3 = arith.constant 3 : index
    %c0_40 = arith.constant 0 : index
    %c0_41 = arith.constant 0 : index
    %52 = vector.load %arg4[%c3, %c0_40, %c0_41] : memref<5x128x128xbf16, #tpu.memory_space<vmem>>, vector<1x128x128xbf16>
    %53 = vector.shape_cast %52 : vector<1x128x128xbf16> to vector<128x128xbf16>
    %cst_42 = arith.constant dense<0.000000e+00> : vector<320x128xf32>
    %54 = tpu.matmul %51, %53, %cst_42 {dimension_numbers = #tpu.dot_dimension_numbers<[1], [0], [0], [1], [0, 0, 1, 1], [], []>} : vector<320x128xbf16>, vector<128x128xbf16>, vector<320x128xf32> -> vector<320x128xf32>
    %55 = arith.addf %49, %54 : vector<320x128xf32>
    %56 = vector.extract_strided_slice %32 {offsets = [0, 64, 0], sizes = [2, 160, 128], strides = [1, 1, 1]} : vector<2x224x128xbf16> to vector<2x160x128xbf16>
    %57 = vector.shape_cast %56 : vector<2x160x128xbf16> to vector<320x128xbf16>
    %c4 = arith.constant 4 : index
    %c0_43 = arith.constant 0 : index
    %c0_44 = arith.constant 0 : index
    %58 = vector.load %arg4[%c4, %c0_43, %c0_44] : memref<5x128x128xbf16, #tpu.memory_space<vmem>>, vector<1x128x128xbf16>
    %59 = vector.shape_cast %58 : vector<1x128x128xbf16> to vector<128x128xbf16>
    %cst_45 = arith.constant dense<0.000000e+00> : vector<320x128xf32>
    %60 = tpu.matmul %57, %59, %cst_45 {dimension_numbers = #tpu.dot_dimension_numbers<[1], [0], [0], [1], [0, 0, 1, 1], [], []>} : vector<320x128xbf16>, vector<128x128xbf16>, vector<320x128xf32> -> vector<320x128xf32>
    %61 = arith.addf %55, %60 : vector<320x128xf32>
    %c0_46 = arith.constant 0 : index
    %c0_47 = arith.constant 0 : index
    %62 = vector.load %arg5[%c0_46, %c0_47] : memref<1x128xf32, #tpu.memory_space<vmem>>, vector<1x128xf32>
    %63 = vector.broadcast %62 : vector<1x128xf32> to vector<320x128xf32>
    %64 = arith.addf %61, %63 : vector<320x128xf32>
    %cst_48 = arith.constant 0.000000e+00 : f32
    %65 = vector.broadcast %cst_48 : f32 to vector<320x128xf32>
    %66 = arith.maximumf %64, %65 : vector<320x128xf32>
    %c0_49 = arith.constant 0 : index
    %c0_50 = arith.constant 0 : index
    %67 = vector.load %arg12[%c0_49, %c0_50] : memref<320x128xf32, #tpu.memory_space<vmem>>, vector<320x128xf32>
    tpu.vector_store %arg12[%c0_49, %c0_50], %66 {strides = array<i32>} : memref<320x128xf32, #tpu.memory_space<vmem>>, vector<320x128xf32>,
    %c0_51 = arith.constant 0 : index
    %c0_52 = arith.constant 0 : index
    %68 = tpu.strided_load %arg12[%c0_51, %c0_52] {strides = array<i32: 2, 1>} : memref<320x128xf32, #tpu.memory_space<vmem>>, vector<160x128xf32>
    %c1_53 = arith.constant 1 : index
    %c0_54 = arith.constant 0 : index
    %69 = tpu.strided_load %arg12[%c1_53, %c0_54] {strides = array<i32: 2, 1>} : memref<320x128xf32, #tpu.memory_space<vmem>>, vector<160x128xf32>
    %70 = arith.maximumf %68, %69 : vector<160x128xf32>
    %71 = vector.shape_cast %70 : vector<160x128xf32> to vector<2x5x16x128xf32>
    %72 = vector.extract_strided_slice %71 {offsets = [0, 0, 0, 0], sizes = [2, 5, 8, 128], strides = [1, 1, 1, 1]} : vector<2x5x16x128xf32> to vector<2x5x8x128xf32>
    %73 = vector.extract_strided_slice %71 {offsets = [0, 0, 8, 0], sizes = [2, 5, 8, 128], strides = [1, 1, 1, 1]} : vector<2x5x16x128xf32> to vector<2x5x8x128xf32>
    %74 = arith.maximumf %72, %73 : vector<2x5x8x128xf32>
    %75 = arith.truncf %74 : vector<2x5x8x128xf32> to vector<2x5x8x128xbf16>
    %76 = vector.extract_strided_slice %75 {offsets = [0, 0, 0, 0], sizes = [2, 1, 1, 128], strides = [1, 1, 1, 1]} : vector<2x5x8x128xbf16> to vector<2x1x1x128xbf16>
    %77 = vector.shape_cast %76 : vector<2x1x1x128xbf16> to vector<2x128xbf16>
    %c0_55 = arith.constant 0 : index
    %c0_56 = arith.constant 0 : index
    %c0_57 = arith.constant 0 : index
    %78 = vector.load %arg6[%c0_55, %c0_56, %c0_57] : memref<25x128x128xbf16, #tpu.memory_space<vmem>>, vector<1x128x128xbf16>
    %79 = vector.shape_cast %78 : vector<1x128x128xbf16> to vector<128x128xbf16>
    %cst_58 = arith.constant dense<0.000000e+00> : vector<2x128xf32>
    %80 = tpu.matmul %77, %79, %cst_58 {dimension_numbers = #tpu.dot_dimension_numbers<[1], [0], [0], [1], [0, 0, 1, 1], [], []>} : vector<2x128xbf16>, vector<128x128xbf16>, vector<2x128xf32> -> vector<2x128xf32>
    %81 = vector.extract_strided_slice %75 {offsets = [0, 0, 1, 0], sizes = [2, 1, 1, 128], strides = [1, 1, 1, 1]} : vector<2x5x8x128xbf16> to vector<2x1x1x128xbf16>
    %82 = vector.shape_cast %81 : vector<2x1x1x128xbf16> to vector<2x128xbf16>
    %c1_59 = arith.constant 1 : index
    %c0_60 = arith.constant 0 : index
    %c0_61 = arith.constant 0 : index
    %83 = vector.load %arg6[%c1_59, %c0_60, %c0_61] : memref<25x128x128xbf16, #tpu.memory_space<vmem>>, vector<1x128x128xbf16>
    %84 = vector.shape_cast %83 : vector<1x128x128xbf16> to vector<128x128xbf16>
    %cst_62 = arith.constant dense<0.000000e+00> : vector<2x128xf32>
    %85 = tpu.matmul %82, %84, %cst_62 {dimension_numbers = #tpu.dot_dimension_numbers<[1], [0], [0], [1], [0, 0, 1, 1], [], []>} : vector<2x128xbf16>, vector<128x128xbf16>, vector<2x128xf32> -> vector<2x128xf32>
    %86 = arith.addf %80, %85 : vector<2x128xf32>
    %87 = vector.extract_strided_slice %75 {offsets = [0, 0, 2, 0], sizes = [2, 1, 1, 128], strides = [1, 1, 1, 1]} : vector<2x5x8x128xbf16> to vector<2x1x1x128xbf16>
    %88 = vector.shape_cast %87 : vector<2x1x1x128xbf16> to vector<2x128xbf16>
    %c2_63 = arith.constant 2 : index
    %c0_64 = arith.constant 0 : index
    %c0_65 = arith.constant 0 : index
    %89 = vector.load %arg6[%c2_63, %c0_64, %c0_65] : memref<25x128x128xbf16, #tpu.memory_space<vmem>>, vector<1x128x128xbf16>
    %90 = vector.shape_cast %89 : vector<1x128x128xbf16> to vector<128x128xbf16>
    %cst_66 = arith.constant dense<0.000000e+00> : vector<2x128xf32>
    %91 = tpu.matmul %88, %90, %cst_66 {dimension_numbers = #tpu.dot_dimension_numbers<[1], [0], [0], [1], [0, 0, 1, 1], [], []>} : vector<2x128xbf16>, vector<128x128xbf16>, vector<2x128xf32> -> vector<2x128xf32>
    %92 = arith.addf %86, %91 : vector<2x128xf32>
    %93 = vector.extract_strided_slice %75 {offsets = [0, 0, 3, 0], sizes = [2, 1, 1, 128], strides = [1, 1, 1, 1]} : vector<2x5x8x128xbf16> to vector<2x1x1x128xbf16>
    %94 = vector.shape_cast %93 : vector<2x1x1x128xbf16> to vector<2x128xbf16>
    %c3_67 = arith.constant 3 : index
    %c0_68 = arith.constant 0 : index
    %c0_69 = arith.constant 0 : index
    %95 = vector.load %arg6[%c3_67, %c0_68, %c0_69] : memref<25x128x128xbf16, #tpu.memory_space<vmem>>, vector<1x128x128xbf16>
    %96 = vector.shape_cast %95 : vector<1x128x128xbf16> to vector<128x128xbf16>
    %cst_70 = arith.constant dense<0.000000e+00> : vector<2x128xf32>
    %97 = tpu.matmul %94, %96, %cst_70 {dimension_numbers = #tpu.dot_dimension_numbers<[1], [0], [0], [1], [0, 0, 1, 1], [], []>} : vector<2x128xbf16>, vector<128x128xbf16>, vector<2x128xf32> -> vector<2x128xf32>
    %98 = arith.addf %92, %97 : vector<2x128xf32>
    %99 = vector.extract_strided_slice %75 {offsets = [0, 0, 4, 0], sizes = [2, 1, 1, 128], strides = [1, 1, 1, 1]} : vector<2x5x8x128xbf16> to vector<2x1x1x128xbf16>
    %100 = vector.shape_cast %99 : vector<2x1x1x128xbf16> to vector<2x128xbf16>
    %c4_71 = arith.constant 4 : index
    %c0_72 = arith.constant 0 : index
    %c0_73 = arith.constant 0 : index
    %101 = vector.load %arg6[%c4_71, %c0_72, %c0_73] : memref<25x128x128xbf16, #tpu.memory_space<vmem>>, vector<1x128x128xbf16>
    %102 = vector.shape_cast %101 : vector<1x128x128xbf16> to vector<128x128xbf16>
    %cst_74 = arith.constant dense<0.000000e+00> : vector<2x128xf32>
    %103 = tpu.matmul %100, %102, %cst_74 {dimension_numbers = #tpu.dot_dimension_numbers<[1], [0], [0], [1], [0, 0, 1, 1], [], []>} : vector<2x128xbf16>, vector<128x128xbf16>, vector<2x128xf32> -> vector<2x128xf32>
    %104 = arith.addf %98, %103 : vector<2x128xf32>
    %105 = vector.extract_strided_slice %75 {offsets = [0, 1, 0, 0], sizes = [2, 1, 1, 128], strides = [1, 1, 1, 1]} : vector<2x5x8x128xbf16> to vector<2x1x1x128xbf16>
    %106 = vector.shape_cast %105 : vector<2x1x1x128xbf16> to vector<2x128xbf16>
    %c5 = arith.constant 5 : index
    %c0_75 = arith.constant 0 : index
    %c0_76 = arith.constant 0 : index
    %107 = vector.load %arg6[%c5, %c0_75, %c0_76] : memref<25x128x128xbf16, #tpu.memory_space<vmem>>, vector<1x128x128xbf16>
    %108 = vector.shape_cast %107 : vector<1x128x128xbf16> to vector<128x128xbf16>
    %cst_77 = arith.constant dense<0.000000e+00> : vector<2x128xf32>
    %109 = tpu.matmul %106, %108, %cst_77 {dimension_numbers = #tpu.dot_dimension_numbers<[1], [0], [0], [1], [0, 0, 1, 1], [], []>} : vector<2x128xbf16>, vector<128x128xbf16>, vector<2x128xf32> -> vector<2x128xf32>
    %110 = arith.addf %104, %109 : vector<2x128xf32>
    %111 = vector.extract_strided_slice %75 {offsets = [0, 1, 1, 0], sizes = [2, 1, 1, 128], strides = [1, 1, 1, 1]} : vector<2x5x8x128xbf16> to vector<2x1x1x128xbf16>
    %112 = vector.shape_cast %111 : vector<2x1x1x128xbf16> to vector<2x128xbf16>
    %c6 = arith.constant 6 : index
    %c0_78 = arith.constant 0 : index
    %c0_79 = arith.constant 0 : index
    %113 = vector.load %arg6[%c6, %c0_78, %c0_79] : memref<25x128x128xbf16, #tpu.memory_space<vmem>>, vector<1x128x128xbf16>
    %114 = vector.shape_cast %113 : vector<1x128x128xbf16> to vector<128x128xbf16>
    %cst_80 = arith.constant dense<0.000000e+00> : vector<2x128xf32>
    %115 = tpu.matmul %112, %114, %cst_80 {dimension_numbers = #tpu.dot_dimension_numbers<[1], [0], [0], [1], [0, 0, 1, 1], [], []>} : vector<2x128xbf16>, vector<128x128xbf16>, vector<2x128xf32> -> vector<2x128xf32>
    %116 = arith.addf %110, %115 : vector<2x128xf32>
    %117 = vector.extract_strided_slice %75 {offsets = [0, 1, 2, 0], sizes = [2, 1, 1, 128], strides = [1, 1, 1, 1]} : vector<2x5x8x128xbf16> to vector<2x1x1x128xbf16>
    %118 = vector.shape_cast %117 : vector<2x1x1x128xbf16> to vector<2x128xbf16>
    %c7 = arith.constant 7 : index
    %c0_81 = arith.constant 0 : index
    %c0_82 = arith.constant 0 : index
    %119 = vector.load %arg6[%c7, %c0_81, %c0_82] : memref<25x128x128xbf16, #tpu.memory_space<vmem>>, vector<1x128x128xbf16>
    %120 = vector.shape_cast %119 : vector<1x128x128xbf16> to vector<128x128xbf16>
    %cst_83 = arith.constant dense<0.000000e+00> : vector<2x128xf32>
    %121 = tpu.matmul %118, %120, %cst_83 {dimension_numbers = #tpu.dot_dimension_numbers<[1], [0], [0], [1], [0, 0, 1, 1], [], []>} : vector<2x128xbf16>, vector<128x128xbf16>, vector<2x128xf32> -> vector<2x128xf32>
    %122 = arith.addf %116, %121 : vector<2x128xf32>
    %123 = vector.extract_strided_slice %75 {offsets = [0, 1, 3, 0], sizes = [2, 1, 1, 128], strides = [1, 1, 1, 1]} : vector<2x5x8x128xbf16> to vector<2x1x1x128xbf16>
    %124 = vector.shape_cast %123 : vector<2x1x1x128xbf16> to vector<2x128xbf16>
    %c8 = arith.constant 8 : index
    %c0_84 = arith.constant 0 : index
    %c0_85 = arith.constant 0 : index
    %125 = vector.load %arg6[%c8, %c0_84, %c0_85] : memref<25x128x128xbf16, #tpu.memory_space<vmem>>, vector<1x128x128xbf16>
    %126 = vector.shape_cast %125 : vector<1x128x128xbf16> to vector<128x128xbf16>
    %cst_86 = arith.constant dense<0.000000e+00> : vector<2x128xf32>
    %127 = tpu.matmul %124, %126, %cst_86 {dimension_numbers = #tpu.dot_dimension_numbers<[1], [0], [0], [1], [0, 0, 1, 1], [], []>} : vector<2x128xbf16>, vector<128x128xbf16>, vector<2x128xf32> -> vector<2x128xf32>
    %128 = arith.addf %122, %127 : vector<2x128xf32>
    %129 = vector.extract_strided_slice %75 {offsets = [0, 1, 4, 0], sizes = [2, 1, 1, 128], strides = [1, 1, 1, 1]} : vector<2x5x8x128xbf16> to vector<2x1x1x128xbf16>
    %130 = vector.shape_cast %129 : vector<2x1x1x128xbf16> to vector<2x128xbf16>
    %c9 = arith.constant 9 : index
    %c0_87 = arith.constant 0 : index
    %c0_88 = arith.constant 0 : index
    %131 = vector.load %arg6[%c9, %c0_87, %c0_88] : memref<25x128x128xbf16, #tpu.memory_space<vmem>>, vector<1x128x128xbf16>
    %132 = vector.shape_cast %131 : vector<1x128x128xbf16> to vector<128x128xbf16>
    %cst_89 = arith.constant dense<0.000000e+00> : vector<2x128xf32>
    %133 = tpu.matmul %130, %132, %cst_89 {dimension_numbers = #tpu.dot_dimension_numbers<[1], [0], [0], [1], [0, 0, 1, 1], [], []>} : vector<2x128xbf16>, vector<128x128xbf16>, vector<2x128xf32> -> vector<2x128xf32>
    %134 = arith.addf %128, %133 : vector<2x128xf32>
    %135 = vector.extract_strided_slice %75 {offsets = [0, 2, 0, 0], sizes = [2, 1, 1, 128], strides = [1, 1, 1, 1]} : vector<2x5x8x128xbf16> to vector<2x1x1x128xbf16>
    %136 = vector.shape_cast %135 : vector<2x1x1x128xbf16> to vector<2x128xbf16>
    %c10 = arith.constant 10 : index
    %c0_90 = arith.constant 0 : index
    %c0_91 = arith.constant 0 : index
    %137 = vector.load %arg6[%c10, %c0_90, %c0_91] : memref<25x128x128xbf16, #tpu.memory_space<vmem>>, vector<1x128x128xbf16>
    %138 = vector.shape_cast %137 : vector<1x128x128xbf16> to vector<128x128xbf16>
    %cst_92 = arith.constant dense<0.000000e+00> : vector<2x128xf32>
    %139 = tpu.matmul %136, %138, %cst_92 {dimension_numbers = #tpu.dot_dimension_numbers<[1], [0], [0], [1], [0, 0, 1, 1], [], []>} : vector<2x128xbf16>, vector<128x128xbf16>, vector<2x128xf32> -> vector<2x128xf32>
    %140 = arith.addf %134, %139 : vector<2x128xf32>
    %141 = vector.extract_strided_slice %75 {offsets = [0, 2, 1, 0], sizes = [2, 1, 1, 128], strides = [1, 1, 1, 1]} : vector<2x5x8x128xbf16> to vector<2x1x1x128xbf16>
    %142 = vector.shape_cast %141 : vector<2x1x1x128xbf16> to vector<2x128xbf16>
    %c11 = arith.constant 11 : index
    %c0_93 = arith.constant 0 : index
    %c0_94 = arith.constant 0 : index
    %143 = vector.load %arg6[%c11, %c0_93, %c0_94] : memref<25x128x128xbf16, #tpu.memory_space<vmem>>, vector<1x128x128xbf16>
    %144 = vector.shape_cast %143 : vector<1x128x128xbf16> to vector<128x128xbf16>
    %cst_95 = arith.constant dense<0.000000e+00> : vector<2x128xf32>
    %145 = tpu.matmul %142, %144, %cst_95 {dimension_numbers = #tpu.dot_dimension_numbers<[1], [0], [0], [1], [0, 0, 1, 1], [], []>} : vector<2x128xbf16>, vector<128x128xbf16>, vector<2x128xf32> -> vector<2x128xf32>
    %146 = arith.addf %140, %145 : vector<2x128xf32>
    %147 = vector.extract_strided_slice %75 {offsets = [0, 2, 2, 0], sizes = [2, 1, 1, 128], strides = [1, 1, 1, 1]} : vector<2x5x8x128xbf16> to vector<2x1x1x128xbf16>
    %148 = vector.shape_cast %147 : vector<2x1x1x128xbf16> to vector<2x128xbf16>
    %c12 = arith.constant 12 : index
    %c0_96 = arith.constant 0 : index
    %c0_97 = arith.constant 0 : index
    %149 = vector.load %arg6[%c12, %c0_96, %c0_97] : memref<25x128x128xbf16, #tpu.memory_space<vmem>>, vector<1x128x128xbf16>
    %150 = vector.shape_cast %149 : vector<1x128x128xbf16> to vector<128x128xbf16>
    %cst_98 = arith.constant dense<0.000000e+00> : vector<2x128xf32>
    %151 = tpu.matmul %148, %150, %cst_98 {dimension_numbers = #tpu.dot_dimension_numbers<[1], [0], [0], [1], [0, 0, 1, 1], [], []>} : vector<2x128xbf16>, vector<128x128xbf16>, vector<2x128xf32> -> vector<2x128xf32>
    %152 = arith.addf %146, %151 : vector<2x128xf32>
    %153 = vector.extract_strided_slice %75 {offsets = [0, 2, 3, 0], sizes = [2, 1, 1, 128], strides = [1, 1, 1, 1]} : vector<2x5x8x128xbf16> to vector<2x1x1x128xbf16>
    %154 = vector.shape_cast %153 : vector<2x1x1x128xbf16> to vector<2x128xbf16>
    %c13 = arith.constant 13 : index
    %c0_99 = arith.constant 0 : index
    %c0_100 = arith.constant 0 : index
    %155 = vector.load %arg6[%c13, %c0_99, %c0_100] : memref<25x128x128xbf16, #tpu.memory_space<vmem>>, vector<1x128x128xbf16>
    %156 = vector.shape_cast %155 : vector<1x128x128xbf16> to vector<128x128xbf16>
    %cst_101 = arith.constant dense<0.000000e+00> : vector<2x128xf32>
    %157 = tpu.matmul %154, %156, %cst_101 {dimension_numbers = #tpu.dot_dimension_numbers<[1], [0], [0], [1], [0, 0, 1, 1], [], []>} : vector<2x128xbf16>, vector<128x128xbf16>, vector<2x128xf32> -> vector<2x128xf32>
    %158 = arith.addf %152, %157 : vector<2x128xf32>
    %159 = vector.extract_strided_slice %75 {offsets = [0, 2, 4, 0], sizes = [2, 1, 1, 128], strides = [1, 1, 1, 1]} : vector<2x5x8x128xbf16> to vector<2x1x1x128xbf16>
    %160 = vector.shape_cast %159 : vector<2x1x1x128xbf16> to vector<2x128xbf16>
    %c14 = arith.constant 14 : index
    %c0_102 = arith.constant 0 : index
    %c0_103 = arith.constant 0 : index
    %161 = vector.load %arg6[%c14, %c0_102, %c0_103] : memref<25x128x128xbf16, #tpu.memory_space<vmem>>, vector<1x128x128xbf16>
    %162 = vector.shape_cast %161 : vector<1x128x128xbf16> to vector<128x128xbf16>
    %cst_104 = arith.constant dense<0.000000e+00> : vector<2x128xf32>
    %163 = tpu.matmul %160, %162, %cst_104 {dimension_numbers = #tpu.dot_dimension_numbers<[1], [0], [0], [1], [0, 0, 1, 1], [], []>} : vector<2x128xbf16>, vector<128x128xbf16>, vector<2x128xf32> -> vector<2x128xf32>
    %164 = arith.addf %158, %163 : vector<2x128xf32>
    %165 = vector.extract_strided_slice %75 {offsets = [0, 3, 0, 0], sizes = [2, 1, 1, 128], strides = [1, 1, 1, 1]} : vector<2x5x8x128xbf16> to vector<2x1x1x128xbf16>
    %166 = vector.shape_cast %165 : vector<2x1x1x128xbf16> to vector<2x128xbf16>
    %c15 = arith.constant 15 : index
    %c0_105 = arith.constant 0 : index
    %c0_106 = arith.constant 0 : index
    %167 = vector.load %arg6[%c15, %c0_105, %c0_106] : memref<25x128x128xbf16, #tpu.memory_space<vmem>>, vector<1x128x128xbf16>
    %168 = vector.shape_cast %167 : vector<1x128x128xbf16> to vector<128x128xbf16>
    %cst_107 = arith.constant dense<0.000000e+00> : vector<2x128xf32>
    %169 = tpu.matmul %166, %168, %cst_107 {dimension_numbers = #tpu.dot_dimension_numbers<[1], [0], [0], [1], [0, 0, 1, 1], [], []>} : vector<2x128xbf16>, vector<128x128xbf16>, vector<2x128xf32> -> vector<2x128xf32>
    %170 = arith.addf %164, %169 : vector<2x128xf32>
    %171 = vector.extract_strided_slice %75 {offsets = [0, 3, 1, 0], sizes = [2, 1, 1, 128], strides = [1, 1, 1, 1]} : vector<2x5x8x128xbf16> to vector<2x1x1x128xbf16>
    %172 = vector.shape_cast %171 : vector<2x1x1x128xbf16> to vector<2x128xbf16>
    %c16_108 = arith.constant 16 : index
    %c0_109 = arith.constant 0 : index
    %c0_110 = arith.constant 0 : index
    %173 = vector.load %arg6[%c16_108, %c0_109, %c0_110] : memref<25x128x128xbf16, #tpu.memory_space<vmem>>, vector<1x128x128xbf16>
    %174 = vector.shape_cast %173 : vector<1x128x128xbf16> to vector<128x128xbf16>
    %cst_111 = arith.constant dense<0.000000e+00> : vector<2x128xf32>
    %175 = tpu.matmul %172, %174, %cst_111 {dimension_numbers = #tpu.dot_dimension_numbers<[1], [0], [0], [1], [0, 0, 1, 1], [], []>} : vector<2x128xbf16>, vector<128x128xbf16>, vector<2x128xf32> -> vector<2x128xf32>
    %176 = arith.addf %170, %175 : vector<2x128xf32>
    %177 = vector.extract_strided_slice %75 {offsets = [0, 3, 2, 0], sizes = [2, 1, 1, 128], strides = [1, 1, 1, 1]} : vector<2x5x8x128xbf16> to vector<2x1x1x128xbf16>
    %178 = vector.shape_cast %177 : vector<2x1x1x128xbf16> to vector<2x128xbf16>
    %c17 = arith.constant 17 : index
    %c0_112 = arith.constant 0 : index
    %c0_113 = arith.constant 0 : index
    %179 = vector.load %arg6[%c17, %c0_112, %c0_113] : memref<25x128x128xbf16, #tpu.memory_space<vmem>>, vector<1x128x128xbf16>
    %180 = vector.shape_cast %179 : vector<1x128x128xbf16> to vector<128x128xbf16>
    %cst_114 = arith.constant dense<0.000000e+00> : vector<2x128xf32>
    %181 = tpu.matmul %178, %180, %cst_114 {dimension_numbers = #tpu.dot_dimension_numbers<[1], [0], [0], [1], [0, 0, 1, 1], [], []>} : vector<2x128xbf16>, vector<128x128xbf16>, vector<2x128xf32> -> vector<2x128xf32>
    %182 = arith.addf %176, %181 : vector<2x128xf32>
    %183 = vector.extract_strided_slice %75 {offsets = [0, 3, 3, 0], sizes = [2, 1, 1, 128], strides = [1, 1, 1, 1]} : vector<2x5x8x128xbf16> to vector<2x1x1x128xbf16>
    %184 = vector.shape_cast %183 : vector<2x1x1x128xbf16> to vector<2x128xbf16>
    %c18 = arith.constant 18 : index
    %c0_115 = arith.constant 0 : index
    %c0_116 = arith.constant 0 : index
    %185 = vector.load %arg6[%c18, %c0_115, %c0_116] : memref<25x128x128xbf16, #tpu.memory_space<vmem>>, vector<1x128x128xbf16>
    %186 = vector.shape_cast %185 : vector<1x128x128xbf16> to vector<128x128xbf16>
    %cst_117 = arith.constant dense<0.000000e+00> : vector<2x128xf32>
    %187 = tpu.matmul %184, %186, %cst_117 {dimension_numbers = #tpu.dot_dimension_numbers<[1], [0], [0], [1], [0, 0, 1, 1], [], []>} : vector<2x128xbf16>, vector<128x128xbf16>, vector<2x128xf32> -> vector<2x128xf32>
    %188 = arith.addf %182, %187 : vector<2x128xf32>
    %189 = vector.extract_strided_slice %75 {offsets = [0, 3, 4, 0], sizes = [2, 1, 1, 128], strides = [1, 1, 1, 1]} : vector<2x5x8x128xbf16> to vector<2x1x1x128xbf16>
    %190 = vector.shape_cast %189 : vector<2x1x1x128xbf16> to vector<2x128xbf16>
    %c19 = arith.constant 19 : index
    %c0_118 = arith.constant 0 : index
    %c0_119 = arith.constant 0 : index
    %191 = vector.load %arg6[%c19, %c0_118, %c0_119] : memref<25x128x128xbf16, #tpu.memory_space<vmem>>, vector<1x128x128xbf16>
    %192 = vector.shape_cast %191 : vector<1x128x128xbf16> to vector<128x128xbf16>
    %cst_120 = arith.constant dense<0.000000e+00> : vector<2x128xf32>
    %193 = tpu.matmul %190, %192, %cst_120 {dimension_numbers = #tpu.dot_dimension_numbers<[1], [0], [0], [1], [0, 0, 1, 1], [], []>} : vector<2x128xbf16>, vector<128x128xbf16>, vector<2x128xf32> -> vector<2x128xf32>
    %194 = arith.addf %188, %193 : vector<2x128xf32>
    %195 = vector.extract_strided_slice %75 {offsets = [0, 4, 0, 0], sizes = [2, 1, 1, 128], strides = [1, 1, 1, 1]} : vector<2x5x8x128xbf16> to vector<2x1x1x128xbf16>
    %196 = vector.shape_cast %195 : vector<2x1x1x128xbf16> to vector<2x128xbf16>
    %c20 = arith.constant 20 : index
    %c0_121 = arith.constant 0 : index
    %c0_122 = arith.constant 0 : index
    %197 = vector.load %arg6[%c20, %c0_121, %c0_122] : memref<25x128x128xbf16, #tpu.memory_space<vmem>>, vector<1x128x128xbf16>
    %198 = vector.shape_cast %197 : vector<1x128x128xbf16> to vector<128x128xbf16>
    %cst_123 = arith.constant dense<0.000000e+00> : vector<2x128xf32>
    %199 = tpu.matmul %196, %198, %cst_123 {dimension_numbers = #tpu.dot_dimension_numbers<[1], [0], [0], [1], [0, 0, 1, 1], [], []>} : vector<2x128xbf16>, vector<128x128xbf16>, vector<2x128xf32> -> vector<2x128xf32>
    %200 = arith.addf %194, %199 : vector<2x128xf32>
    %201 = vector.extract_strided_slice %75 {offsets = [0, 4, 1, 0], sizes = [2, 1, 1, 128], strides = [1, 1, 1, 1]} : vector<2x5x8x128xbf16> to vector<2x1x1x128xbf16>
    %202 = vector.shape_cast %201 : vector<2x1x1x128xbf16> to vector<2x128xbf16>
    %c21 = arith.constant 21 : index
    %c0_124 = arith.constant 0 : index
    %c0_125 = arith.constant 0 : index
    %203 = vector.load %arg6[%c21, %c0_124, %c0_125] : memref<25x128x128xbf16, #tpu.memory_space<vmem>>, vector<1x128x128xbf16>
    %204 = vector.shape_cast %203 : vector<1x128x128xbf16> to vector<128x128xbf16>
    %cst_126 = arith.constant dense<0.000000e+00> : vector<2x128xf32>
    %205 = tpu.matmul %202, %204, %cst_126 {dimension_numbers = #tpu.dot_dimension_numbers<[1], [0], [0], [1], [0, 0, 1, 1], [], []>} : vector<2x128xbf16>, vector<128x128xbf16>, vector<2x128xf32> -> vector<2x128xf32>
    %206 = arith.addf %200, %205 : vector<2x128xf32>
    %207 = vector.extract_strided_slice %75 {offsets = [0, 4, 2, 0], sizes = [2, 1, 1, 128], strides = [1, 1, 1, 1]} : vector<2x5x8x128xbf16> to vector<2x1x1x128xbf16>
    %208 = vector.shape_cast %207 : vector<2x1x1x128xbf16> to vector<2x128xbf16>
    %c22 = arith.constant 22 : index
    %c0_127 = arith.constant 0 : index
    %c0_128 = arith.constant 0 : index
    %209 = vector.load %arg6[%c22, %c0_127, %c0_128] : memref<25x128x128xbf16, #tpu.memory_space<vmem>>, vector<1x128x128xbf16>
    %210 = vector.shape_cast %209 : vector<1x128x128xbf16> to vector<128x128xbf16>
    %cst_129 = arith.constant dense<0.000000e+00> : vector<2x128xf32>
    %211 = tpu.matmul %208, %210, %cst_129 {dimension_numbers = #tpu.dot_dimension_numbers<[1], [0], [0], [1], [0, 0, 1, 1], [], []>} : vector<2x128xbf16>, vector<128x128xbf16>, vector<2x128xf32> -> vector<2x128xf32>
    %212 = arith.addf %206, %211 : vector<2x128xf32>
    %213 = vector.extract_strided_slice %75 {offsets = [0, 4, 3, 0], sizes = [2, 1, 1, 128], strides = [1, 1, 1, 1]} : vector<2x5x8x128xbf16> to vector<2x1x1x128xbf16>
    %214 = vector.shape_cast %213 : vector<2x1x1x128xbf16> to vector<2x128xbf16>
    %c23 = arith.constant 23 : index
    %c0_130 = arith.constant 0 : index
    %c0_131 = arith.constant 0 : index
    %215 = vector.load %arg6[%c23, %c0_130, %c0_131] : memref<25x128x128xbf16, #tpu.memory_space<vmem>>, vector<1x128x128xbf16>
    %216 = vector.shape_cast %215 : vector<1x128x128xbf16> to vector<128x128xbf16>
    %cst_132 = arith.constant dense<0.000000e+00> : vector<2x128xf32>
    %217 = tpu.matmul %214, %216, %cst_132 {dimension_numbers = #tpu.dot_dimension_numbers<[1], [0], [0], [1], [0, 0, 1, 1], [], []>} : vector<2x128xbf16>, vector<128x128xbf16>, vector<2x128xf32> -> vector<2x128xf32>
    %218 = arith.addf %212, %217 : vector<2x128xf32>
    %219 = vector.extract_strided_slice %75 {offsets = [0, 4, 4, 0], sizes = [2, 1, 1, 128], strides = [1, 1, 1, 1]} : vector<2x5x8x128xbf16> to vector<2x1x1x128xbf16>
    %220 = vector.shape_cast %219 : vector<2x1x1x128xbf16> to vector<2x128xbf16>
    %c24 = arith.constant 24 : index
    %c0_133 = arith.constant 0 : index
    %c0_134 = arith.constant 0 : index
    %221 = vector.load %arg6[%c24, %c0_133, %c0_134] : memref<25x128x128xbf16, #tpu.memory_space<vmem>>, vector<1x128x128xbf16>
    %222 = vector.shape_cast %221 : vector<1x128x128xbf16> to vector<128x128xbf16>
    %cst_135 = arith.constant dense<0.000000e+00> : vector<2x128xf32>
    %223 = tpu.matmul %220, %222, %cst_135 {dimension_numbers = #tpu.dot_dimension_numbers<[1], [0], [0], [1], [0, 0, 1, 1], [], []>} : vector<2x128xbf16>, vector<128x128xbf16>, vector<2x128xf32> -> vector<2x128xf32>
    %224 = arith.addf %218, %223 : vector<2x128xf32>
    %c0_136 = arith.constant 0 : index
    %c0_137 = arith.constant 0 : index
    %225 = vector.load %arg7[%c0_136, %c0_137] : memref<1x128xf32, #tpu.memory_space<vmem>>, vector<1x128xf32>
    %226 = vector.broadcast %225 : vector<1x128xf32> to vector<2x128xf32>
    %227 = arith.addf %224, %226 : vector<2x128xf32>
    %cst_138 = arith.constant 0.000000e+00 : f32
    %228 = vector.broadcast %cst_138 : f32 to vector<2x128xf32>
    %229 = arith.maximumf %227, %228 : vector<2x128xf32>
    %230 = arith.truncf %229 : vector<2x128xf32> to vector<2x128xbf16>
    %c0_139 = arith.constant 0 : index
    %c0_140 = arith.constant 0 : index
    %231 = vector.load %arg8[%c0_139, %c0_140] : memref<128x128xbf16, #tpu.memory_space<vmem>>, vector<128x128xbf16>
    %cst_141 = arith.constant dense<0.000000e+00> : vector<2x128xf32>
    %232 = tpu.matmul %230, %231, %cst_141 {dimension_numbers = #tpu.dot_dimension_numbers<[1], [0], [0], [1], [0, 0, 1, 1], [], []>} : vector<2x128xbf16>, vector<128x128xbf16>, vector<2x128xf32> -> vector<2x128xf32>
    %c0_142 = arith.constant 0 : index
    %c0_143 = arith.constant 0 : index
    %233 = vector.load %arg9[%c0_142, %c0_143] : memref<1x128xf32, #tpu.memory_space<vmem>>, vector<1x128xf32>
    %234 = vector.broadcast %233 : vector<1x128xf32> to vector<2x128xf32>
    %235 = arith.addf %232, %234 : vector<2x128xf32>
    %cst_144 = arith.constant 0.000000e+00 : f32
    %236 = vector.broadcast %cst_144 : f32 to vector<2x128xf32>
    %237 = arith.maximumf %235, %236 : vector<2x128xf32>
    %c0_145 = arith.constant 0 : index
    %c0_146 = arith.constant 0 : index
    %238 = vector.load %arg10[%c0_145, %c0_146] : memref<2x128xf32, #tpu.memory_space<vmem>>, vector<2x128xf32>
    tpu.vector_store %arg10[%c0_145, %c0_146], %237 {strides = array<i32>} : memref<2x128xf32, #tpu.memory_space<vmem>>, vector<2x128xf32>,
    return
  }
  func.func @transform_0(%arg0: i32) -> (i32, i32) {
    %c0_i32 = arith.constant 0 : i32
    %c0_i32_0 = arith.constant 0 : i32
    return %arg0, %c0_i32 : i32, i32
  }
  func.func @transform_1(%arg0: i32) -> (i32, i32) {
    %c0_i32 = arith.constant 0 : i32
    %c0_i32_0 = arith.constant 0 : i32
    %c0_i32_1 = arith.constant 0 : i32
    return %c0_i32, %c0_i32_0 : i32, i32
  }
  func.func @transform_2(%arg0: i32) -> (i32, i32) {
    %c0_i32 = arith.constant 0 : i32
    %c0_i32_0 = arith.constant 0 : i32
    %c0_i32_1 = arith.constant 0 : i32
    return %c0_i32, %c0_i32_0 : i32, i32
  }
  func.func @transform_3(%arg0: i32) -> (i32, i32, i32) {
    %c0_i32 = arith.constant 0 : i32
    %c0_i32_0 = arith.constant 0 : i32
    %c0_i32_1 = arith.constant 0 : i32
    %c0_i32_2 = arith.constant 0 : i32
    return %c0_i32, %c0_i32_0, %c0_i32_1 : i32, i32, i32
  }
  func.func @transform_4(%arg0: i32) -> (i32, i32) {
    %c0_i32 = arith.constant 0 : i32
    %c0_i32_0 = arith.constant 0 : i32
    %c0_i32_1 = arith.constant 0 : i32
    return %c0_i32, %c0_i32_0 : i32, i32
  }
  func.func @transform_5(%arg0: i32) -> (i32, i32, i32) {
    %c0_i32 = arith.constant 0 : i32
    %c0_i32_0 = arith.constant 0 : i32
    %c0_i32_1 = arith.constant 0 : i32
    %c0_i32_2 = arith.constant 0 : i32
    return %c0_i32, %c0_i32_0, %c0_i32_1 : i32, i32, i32
  }
  func.func @transform_6(%arg0: i32) -> (i32, i32) {
    %c0_i32 = arith.constant 0 : i32
    %c0_i32_0 = arith.constant 0 : i32
    %c0_i32_1 = arith.constant 0 : i32
    return %c0_i32, %c0_i32_0 : i32, i32
  }
  func.func @transform_7(%arg0: i32) -> (i32, i32) {
    %c0_i32 = arith.constant 0 : i32
    %c0_i32_0 = arith.constant 0 : i32
    %c0_i32_1 = arith.constant 0 : i32
    return %c0_i32, %c0_i32_0 : i32, i32
  }
  func.func @transform_8(%arg0: i32) -> (i32, i32) {
    %c0_i32 = arith.constant 0 : i32
    %c0_i32_0 = arith.constant 0 : i32
    %c0_i32_1 = arith.constant 0 : i32
    return %c0_i32, %c0_i32_0 : i32, i32
  }
  func.func @transform_9(%arg0: i32) -> (i32, i32) {
    %c0_i32 = arith.constant 0 : i32
    %c0_i32_0 = arith.constant 0 : i32
    return %arg0, %c0_i32 : i32, i32
  }
}

</mosaic_0001>

<llo_original>
// kernel: net_forward.1
$region0: #{net_forward.1}
  #allocation0 [shape = 'u32[]', space=smem, size = 0x4, offset = 0x4, fixed_abs, tag = 'smem constant byte address 0x4 - core index']
  #allocation1 [shape = 'u32[144,128]{1,0:T(1,128)}', space=vmem, size = 0x12000, scoped, tag = 'internal scratch']
  #allocation2 [shape = 'f32[1792,128]{1,0:T(8,128)}', space=vmem, size = 0xe0000, scoped, tag = 'scratch operand']
  #allocation3 [shape = 'f32[320,128]{1,0:T(8,128)}', space=vmem, size = 0x28000, scoped, tag = 'scratch operand']
  #allocation4 [shape = 'f32[2,224,128]{2,1,0:T(8,128)}', space=vmem, size = 0x38000, scoped, tag = 'scratch operand']
  %s0 = inlined_call_operand.vmem [shape: bf16[1792,128], index: 0, kind: input, shape index: {}]
  %s1 = inlined_call_operand.vmem [shape: bf16[128,128], index: 1, kind: input, shape index: {}]
  %s2 = inlined_call_operand.vmem [shape: f32[1,128], index: 2, kind: input, shape index: {}]
  %s3 = inlined_call_operand.vmem [shape: bf16[5,128,128], index: 3, kind: input, shape index: {}]
  %s4 = inlined_call_operand.vmem [shape: f32[1,128], index: 4, kind: input, shape index: {}]
  %s5 = inlined_call_operand.vmem [shape: bf16[25,128,128], index: 5, kind: input, shape index: {}]
  %s6 = inlined_call_operand.vmem [shape: f32[1,128], index: 6, kind: input, shape index: {}]
  %s7 = inlined_call_operand.vmem [shape: bf16[128,128], index: 7, kind: input, shape index: {}]
  %s8 = inlined_call_operand.vmem [shape: f32[1,128], index: 8, kind: input, shape index: {}]
  %s9 = inlined_call_operand.hbm [shape: f32[2,128], index: 9, kind: output, shape index: {}]
  %s10 = sld [smem:[#allocation0]]
  $region46: #{net_forward.1} parent=0
    _
  %s12 = ssub.s32 1, %s10
  %s13 = scalar_select 0, %s12, %s10
  $region1: #{net_forward.1} parent=0
    #allocation5 [shape = 'u8[1024]{0}', space=vmem, size = 0x400, scoped, tag = 'output window, operand 0, single buffered']
    #allocation6 [shape = 's32[1]{0}', space=sflag, size = 0x4, scoped, tag = 'scoped memory for net_forward.1']
    %14 = vsyncpa [#allocation6], 0
    // Predicated region
    $region2: #{net_forward.1} parent=1 // pred_check
      _
    $region3: #{net_forward.1} parent=1 // pred_check_branch
      %16 = sbr.rel (0) target = $region5
    $region4: #{net_forward.1} parent=1 // pred_region
      _
    $region5: #{net_forward.1} parent=1 // pred_fallthru
      _
    // Predicated region
    $region6: #{net_forward.1} parent=1 // pred_check
      _
    $region7: #{net_forward.1} parent=1 // pred_check_branch
      %18 = sbr.rel (0) target = $region9
    $region8: #{net_forward.1} parent=1 // pred_region
      _
    $region9: #{net_forward.1} parent=1 // pred_fallthru
      _
    // Predicated region
    $region10: #{net_forward.1} parent=1 // pred_check
      _
    $region11: #{net_forward.1} parent=1 // pred_check_branch
      %20 = sbr.rel (0) target = $region13
    $region12: #{net_forward.1} parent=1 // pred_region
      _
    $region13: #{net_forward.1} parent=1 // pred_fallthru
      _
    // Predicated region
    $region14: #{net_forward.1} parent=1 // pred_check
      _
    $region15: #{net_forward.1} parent=1 // pred_check_branch
      %22 = sbr.rel (0) target = $region17
    $region16: #{net_forward.1} parent=1 // pred_region
      _
    $region17: #{net_forward.1} parent=1 // pred_fallthru
      _
    // Predicated region
    $region18: #{net_forward.1} parent=1 // pred_check
      _
    $region19: #{net_forward.1} parent=1 // pred_check_branch
      %24 = sbr.rel (0) target = $region21
    $region20: #{net_forward.1} parent=1 // pred_region
      _
    $region21: #{net_forward.1} parent=1 // pred_fallthru
      _
    // Predicated region
    $region22: #{net_forward.1} parent=1 // pred_check
      _
    $region23: #{net_forward.1} parent=1 // pred_check_branch
      %26 = sbr.rel (0) target = $region25
    $region24: #{net_forward.1} parent=1 // pred_region
      _
    $region25: #{net_forward.1} parent=1 // pred_fallthru
      _
    // Predicated region
    $region26: #{net_forward.1} parent=1 // pred_check
      _
    $region27: #{net_forward.1} parent=1 // pred_check_branch
      %28 = sbr.rel (0) target = $region29
    $region28: #{net_forward.1} parent=1 // pred_region
      _
    $region29: #{net_forward.1} parent=1 // pred_fallthru
      _
    // Predicated region
    $region30: #{net_forward.1} parent=1 // pred_check
      _
    $region31: #{net_forward.1} parent=1 // pred_check_branch
      %30 = sbr.rel (0) target = $region33
    $region32: #{net_forward.1} parent=1 // pred_region
      _
    $region33: #{net_forward.1} parent=1 // pred_fallthru
      _
    // Predicated region
    $region34: #{net_forward.1} parent=1 // pred_check
      _
    $region35: #{net_forward.1} parent=1 // pred_check_branch
      %32 = sbr.rel (0) target = $region37
    $region36: #{net_forward.1} parent=1 // pred_region
      _
    $region37: #{net_forward.1} parent=1 // pred_fallthru
      _
    %v34 = vld [vmem:[%s0] sm:$0xf]
    %v35 = vld [vmem:[%s0 + $0x4] sm:$0xf]
    %v36 = vld [vmem:[%s0 + $0x8] sm:$0xf]
    %v37 = vld [vmem:[%s0 + $0xc] sm:$0xf]
    %v38 = vld [vmem:[%s0 + $0x10] sm:$0xf]
    %v39 = vld [vmem:[%s0 + $0x14] sm:$0xf]
    %v40 = vld [vmem:[%s0 + $0x18] sm:$0xf]
    %v41 = vld [vmem:[%s0 + $0x1c] sm:$0xf]
    %v42 = vld [vmem:[%s0 + $0x20] sm:$0xf]
    %v43 = vld [vmem:[%s0 + $0x24] sm:$0xf]
    %v44 = vld [vmem:[%s0 + $0x28] sm:$0xf]
    %v45 = vld [vmem:[%s0 + $0x2c] sm:$0xf]
    %v46 = vld [vmem:[%s0 + $0x30] sm:$0xf]
    %v47 = vld [vmem:[%s0 + $0x34] sm:$0xf]
    %v48 = vld [vmem:[%s0 + $0x38] sm:$0xf]
    %v49 = vld [vmem:[%s0 + $0x3c] sm:$0xf]
    %v50 = vld [vmem:[%s0 + $0x40] sm:$0xf]
    %v51 = vld [vmem:[%s0 + $0x44] sm:$0xf]
    %v52 = vld [vmem:[%s0 + $0x48] sm:$0xf]
    %v53 = vld [vmem:[%s0 + $0x4c] sm:$0xf]
    %v54 = vld [vmem:[%s0 + $0x50] sm:$0xf]
    %v55 = vld [vmem:[%s0 + $0x54] sm:$0xf]
    %v56 = vld [vmem:[%s0 + $0x58] sm:$0xf]
    %v57 = vld [vmem:[%s0 + $0x5c] sm:$0xf]
    %v58 = vld [vmem:[%s0 + $0x60] sm:$0xf]
    %v59 = vld [vmem:[%s0 + $0x64] sm:$0xf]
    %v60 = vld [vmem:[%s0 + $0x68] sm:$0xf]
    %v61 = vld [vmem:[%s0 + $0x6c] sm:$0xf]
    %v62 = vld [vmem:[%s0 + $0x70] sm:$0xf]
    %v63 = vld [vmem:[%s0 + $0x74] sm:$0xf]
    %v64 = vld [vmem:[%s0 + $0x78] sm:$0xf]
    %v65 = vld [vmem:[%s0 + $0x7c] sm:$0xf]
    %v66 = vld [vmem:[%s0 + $0x80] sm:$0xf]
    %v67 = vld [vmem:[%s0 + $0x84] sm:$0xf]
    %v68 = vld [vmem:[%s0 + $0x88] sm:$0xf]
    %v69 = vld [vmem:[%s0 + $0x8c] sm:$0xf]
    %v70 = vld [vmem:[%s0 + $0x90] sm:$0xf]
    %v71 = vld [vmem:[%s0 + $0x94] sm:$0xf]
    %v72 = vld [vmem:[%s0 + $0x98] sm:$0xf]
    %v73 = vld [vmem:[%s0 + $0x9c] sm:$0xf]
    %v74 = vld [vmem:[%s0 + $0xa0] sm:$0xf]
    %v75 = vld [vmem:[%s0 + $0xa4] sm:$0xf]
    %v76 = vld [vmem:[%s0 + $0xa8] sm:$0xf]
    %v77 = vld [vmem:[%s0 + $0xac] sm:$0xf]
    %v78 = vld [vmem:[%s0 + $0xb0] sm:$0xf]
    %v79 = vld [vmem:[%s0 + $0xb4] sm:$0xf]
    %v80 = vld [vmem:[%s0 + $0xb8] sm:$0xf]
    %v81 = vld [vmem:[%s0 + $0xbc] sm:$0xf]
    %v82 = vld [vmem:[%s0 + $0xc0] sm:$0xf]
    %v83 = vld [vmem:[%s0 + $0xc4] sm:$0xf]
    %v84 = vld [vmem:[%s0 + $0xc8] sm:$0xf]
    %v85 = vld [vmem:[%s0 + $0xcc] sm:$0xf]
    %v86 = vld [vmem:[%s0 + $0xd0] sm:$0xf]
    %v87 = vld [vmem:[%s0 + $0xd4] sm:$0xf]
    %v88 = vld [vmem:[%s0 + $0xd8] sm:$0xf]
    %v89 = vld [vmem:[%s0 + $0xdc] sm:$0xf]
    %v90 = vld [vmem:[%s0 + $0xe0] sm:$0xf]
    %v91 = vld [vmem:[%s0 + $0xe4] sm:$0xf]
    %v92 = vld [vmem:[%s0 + $0xe8] sm:$0xf]
    %v93 = vld [vmem:[%s0 + $0xec] sm:$0xf]
    %v94 = vld [vmem:[%s0 + $0xf0] sm:$0xf]
    %v95 = vld [vmem:[%s0 + $0xf4] sm:$0xf]
    %v96 = vld [vmem:[%s0 + $0xf8] sm:$0xf]
    %v97 = vld [vmem:[%s0 + $0xfc] sm:$0xf]
    %v98 = vld [vmem:[%s0 + $0x100] sm:$0xf]
    %v99 = vld [vmem:[%s0 + $0x104] sm:$0xf]
    %v100 = vld [vmem:[%s0 + $0x108] sm:$0xf]
    %v101 = vld [vmem:[%s0 + $0x10c] sm:$0xf]
    %v102 = vld [vmem:[%s0 + $0x110] sm:$0xf]
    %v103 = vld [vmem:[%s0 + $0x114] sm:$0xf]
    %v104 = vld [vmem:[%s0 + $0x118] sm:$0xf]
    %v105 = vld [vmem:[%s0 + $0x11c] sm:$0xf]
    %v106 = vld [vmem:[%s0 + $0x120] sm:$0xf]
    %v107 = vld [vmem:[%s0 + $0x124] sm:$0xf]
    %v108 = vld [vmem:[%s0 + $0x128] sm:$0xf]
    %v109 = vld [vmem:[%s0 + $0x12c] sm:$0xf]
    %v110 = vld [vmem:[%s0 + $0x130] sm:$0xf]
    %v111 = vld [vmem:[%s0 + $0x134] sm:$0xf]
    %v112 = vld [vmem:[%s0 + $0x138] sm:$0xf]
    %v113 = vld [vmem:[%s0 + $0x13c] sm:$0xf]
    %v114 = vld [vmem:[%s0 + $0x140] sm:$0xf]
    %v115 = vld [vmem:[%s0 + $0x144] sm:$0xf]
    %v116 = vld [vmem:[%s0 + $0x148] sm:$0xf]
    %v117 = vld [vmem:[%s0 + $0x14c] sm:$0xf]
    %v118 = vld [vmem:[%s0 + $0x150] sm:$0xf]
    %v119 = vld [vmem:[%s0 + $0x154] sm:$0xf]
    %v120 = vld [vmem:[%s0 + $0x158] sm:$0xf]
    %v121 = vld [vmem:[%s0 + $0x15c] sm:$0xf]
    %v122 = vld [vmem:[%s0 + $0x160] sm:$0xf]
    %v123 = vld [vmem:[%s0 + $0x164] sm:$0xf]
    %v124 = vld [vmem:[%s0 + $0x168] sm:$0xf]
    %v125 = vld [vmem:[%s0 + $0x16c] sm:$0xf]
    %v126 = vld [vmem:[%s0 + $0x170] sm:$0xf]
    %v127 = vld [vmem:[%s0 + $0x174] sm:$0xf]
    %v128 = vld [vmem:[%s0 + $0x178] sm:$0xf]
    %v129 = vld [vmem:[%s0 + $0x17c] sm:$0xf]
    %v130 = vld [vmem:[%s0 + $0x180] sm:$0xf]
    %v131 = vld [vmem:[%s0 + $0x184] sm:$0xf]
    %v132 = vld [vmem:[%s0 + $0x188] sm:$0xf]
    %v133 = vld [vmem:[%s0 + $0x18c] sm:$0xf]
    %v134 = vld [vmem:[%s0 + $0x190] sm:$0xf]
    %v135 = vld [vmem:[%s0 + $0x194] sm:$0xf]
    %v136 = vld [vmem:[%s0 + $0x198] sm:$0xf]
    %v137 = vld [vmem:[%s0 + $0x19c] sm:$0xf]
    %v138 = vld [vmem:[%s0 + $0x1a0] sm:$0xf]
    %v139 = vld [vmem:[%s0 + $0x1a4] sm:$0xf]
    %v140 = vld [vmem:[%s0 + $0x1a8] sm:$0xf]
    %v141 = vld [vmem:[%s0 + $0x1ac] sm:$0xf]
    %v142 = vld [vmem:[%s0 + $0x1b0] sm:$0xf]
    %v143 = vld [vmem:[%s0 + $0x1b4] sm:$0xf]
    %v144 = vld [vmem:[%s0 + $0x1b8] sm:$0xf]
    %v145 = vld [vmem:[%s0 + $0x1bc] sm:$0xf]
    %v146 = vld [vmem:[%s0 + $0x1c0] sm:$0xf]
    %v147 = vld [vmem:[%s0 + $0x1c4] sm:$0xf]
    %v148 = vld [vmem:[%s0 + $0x1c8] sm:$0xf]
    %v149 = vld [vmem:[%s0 + $0x1cc] sm:$0xf]
    %v150 = vld [vmem:[%s0 + $0x1d0] sm:$0xf]
    %v151 = vld [vmem:[%s0 + $0x1d4] sm:$0xf]
    %v152 = vld [vmem:[%s0 + $0x1d8] sm:$0xf]
    %v153 = vld [vmem:[%s0 + $0x1dc] sm:$0xf]
    %v154 = vld [vmem:[%s0 + $0x1e0] sm:$0xf]
    %v155 = vld [vmem:[%s0 + $0x1e4] sm:$0xf]
    %v156 = vld [vmem:[%s0 + $0x1e8] sm:$0xf]
    %v157 = vld [vmem:[%s0 + $0x1ec] sm:$0xf]
    %v158 = vld [vmem:[%s0 + $0x1f0] sm:$0xf]
    %v159 = vld [vmem:[%s0 + $0x1f4] sm:$0xf]
    %v160 = vld [vmem:[%s0 + $0x1f8] sm:$0xf]
    %v161 = vld [vmem:[%s0 + $0x1fc] sm:$0xf]
    %v162 = vld [vmem:[%s0 + $0x200] sm:$0xf]
    %v163 = vld [vmem:[%s0 + $0x204] sm:$0xf]
    %v164 = vld [vmem:[%s0 + $0x208] sm:$0xf]
    %v165 = vld [vmem:[%s0 + $0x20c] sm:$0xf]
    %v166 = vld [vmem:[%s0 + $0x210] sm:$0xf]
    %v167 = vld [vmem:[%s0 + $0x214] sm:$0xf]
    %v168 = vld [vmem:[%s0 + $0x218] sm:$0xf]
    %v169 = vld [vmem:[%s0 + $0x21c] sm:$0xf]
    %v170 = vld [vmem:[%s0 + $0x220] sm:$0xf]
    %v171 = vld [vmem:[%s0 + $0x224] sm:$0xf]
    %v172 = vld [vmem:[%s0 + $0x228] sm:$0xf]
    %v173 = vld [vmem:[%s0 + $0x22c] sm:$0xf]
    %v174 = vld [vmem:[%s0 + $0x230] sm:$0xf]
    %v175 = vld [vmem:[%s0 + $0x234] sm:$0xf]
    %v176 = vld [vmem:[%s0 + $0x238] sm:$0xf]
    %v177 = vld [vmem:[%s0 + $0x23c] sm:$0xf]
    %v178 = vld [vmem:[%s0 + $0x240] sm:$0xf]
    %v179 = vld [vmem:[%s0 + $0x244] sm:$0xf]
    %v180 = vld [vmem:[%s0 + $0x248] sm:$0xf]
    %v181 = vld [vmem:[%s0 + $0x24c] sm:$0xf]
    %v182 = vld [vmem:[%s0 + $0x250] sm:$0xf]
    %v183 = vld [vmem:[%s0 + $0x254] sm:$0xf]
    %v184 = vld [vmem:[%s0 + $0x258] sm:$0xf]
    %v185 = vld [vmem:[%s0 + $0x25c] sm:$0xf]
    %v186 = vld [vmem:[%s0 + $0x260] sm:$0xf]
    %v187 = vld [vmem:[%s0 + $0x264] sm:$0xf]
    %v188 = vld [vmem:[%s0 + $0x268] sm:$0xf]
    %v189 = vld [vmem:[%s0 + $0x26c] sm:$0xf]
    %v190 = vld [vmem:[%s0 + $0x270] sm:$0xf]
    %v191 = vld [vmem:[%s0 + $0x274] sm:$0xf]
    %v192 = vld [vmem:[%s0 + $0x278] sm:$0xf]
    %v193 = vld [vmem:[%s0 + $0x27c] sm:$0xf]
    %v194 = vld [vmem:[%s0 + $0x280] sm:$0xf]
    %v195 = vld [vmem:[%s0 + $0x284] sm:$0xf]
    %v196 = vld [vmem:[%s0 + $0x288] sm:$0xf]
    %v197 = vld [vmem:[%s0 + $0x28c] sm:$0xf]
    %v198 = vld [vmem:[%s0 + $0x290] sm:$0xf]
    %v199 = vld [vmem:[%s0 + $0x294] sm:$0xf]
    %v200 = vld [vmem:[%s0 + $0x298] sm:$0xf]
    %v201 = vld [vmem:[%s0 + $0x29c] sm:$0xf]
    %v202 = vld [vmem:[%s0 + $0x2a0] sm:$0xf]
    %v203 = vld [vmem:[%s0 + $0x2a4] sm:$0xf]
    %v204 = vld [vmem:[%s0 + $0x2a8] sm:$0xf]
    %v205 = vld [vmem:[%s0 + $0x2ac] sm:$0xf]
    %v206 = vld [vmem:[%s0 + $0x2b0] sm:$0xf]
    %v207 = vld [vmem:[%s0 + $0x2b4] sm:$0xf]
    %v208 = vld [vmem:[%s0 + $0x2b8] sm:$0xf]
    %v209 = vld [vmem:[%s0 + $0x2bc] sm:$0xf]
    %v210 = vld [vmem:[%s0 + $0x2c0] sm:$0xf]
    %v211 = vld [vmem:[%s0 + $0x2c4] sm:$0xf]
    %v212 = vld [vmem:[%s0 + $0x2c8] sm:$0xf]
    %v213 = vld [vmem:[%s0 + $0x2cc] sm:$0xf]
    %v214 = vld [vmem:[%s0 + $0x2d0] sm:$0xf]
    %v215 = vld [vmem:[%s0 + $0x2d4] sm:$0xf]
    %v216 = vld [vmem:[%s0 + $0x2d8] sm:$0xf]
    %v217 = vld [vmem:[%s0 + $0x2dc] sm:$0xf]
    %v218 = vld [vmem:[%s0 + $0x2e0] sm:$0xf]
    %v219 = vld [vmem:[%s0 + $0x2e4] sm:$0xf]
    %v220 = vld [vmem:[%s0 + $0x2e8] sm:$0xf]
    %v221 = vld [vmem:[%s0 + $0x2ec] sm:$0xf]
    %v222 = vld [vmem:[%s0 + $0x2f0] sm:$0xf]
    %v223 = vld [vmem:[%s0 + $0x2f4] sm:$0xf]
    %v224 = vld [vmem:[%s0 + $0x2f8] sm:$0xf]
    %v225 = vld [vmem:[%s0 + $0x2fc] sm:$0xf]
    %v226 = vld [vmem:[%s0 + $0x300] sm:$0xf]
    %v227 = vld [vmem:[%s0 + $0x304] sm:$0xf]
    %v228 = vld [vmem:[%s0 + $0x308] sm:$0xf]
    %v229 = vld [vmem:[%s0 + $0x30c] sm:$0xf]
    %v230 = vld [vmem:[%s0 + $0x310] sm:$0xf]
    %v231 = vld [vmem:[%s0 + $0x314] sm:$0xf]
    %v232 = vld [vmem:[%s0 + $0x318] sm:$0xf]
    %v233 = vld [vmem:[%s0 + $0x31c] sm:$0xf]
    %v234 = vld [vmem:[%s0 + $0x320] sm:$0xf]
    %v235 = vld [vmem:[%s0 + $0x324] sm:$0xf]
    %v236 = vld [vmem:[%s0 + $0x328] sm:$0xf]
    %v237 = vld [vmem:[%s0 + $0x32c] sm:$0xf]
    %v238 = vld [vmem:[%s0 + $0x330] sm:$0xf]
    %v239 = vld [vmem:[%s0 + $0x334] sm:$0xf]
    %v240 = vld [vmem:[%s0 + $0x338] sm:$0xf]
    %v241 = vld [vmem:[%s0 + $0x33c] sm:$0xf]
    %v242 = vld [vmem:[%s0 + $0x340] sm:$0xf]
    %v243 = vld [vmem:[%s0 + $0x344] sm:$0xf]
    %v244 = vld [vmem:[%s0 + $0x348] sm:$0xf]
    %v245 = vld [vmem:[%s0 + $0x34c] sm:$0xf]
    %v246 = vld [vmem:[%s0 + $0x350] sm:$0xf]
    %v247 = vld [vmem:[%s0 + $0x354] sm:$0xf]
    %v248 = vld [vmem:[%s0 + $0x358] sm:$0xf]
    %v249 = vld [vmem:[%s0 + $0x35c] sm:$0xf]
    %v250 = vld [vmem:[%s0 + $0x360] sm:$0xf]
    %v251 = vld [vmem:[%s0 + $0x364] sm:$0xf]
    %v252 = vld [vmem:[%s0 + $0x368] sm:$0xf]
    %v253 = vld [vmem:[%s0 + $0x36c] sm:$0xf]
    %v254 = vld [vmem:[%s0 + $0x370] sm:$0xf]
    %v255 = vld [vmem:[%s0 + $0x374] sm:$0xf]
    %v256 = vld [vmem:[%s0 + $0x378] sm:$0xf]
    %v257 = vld [vmem:[%s0 + $0x37c] sm:$0xf]
    %v258 = vld [vmem:[%s1] sm:$0xf]
    %v259 = vld [vmem:[%s1 + $0x4] sm:$0xf]
    %v260 = vld [vmem:[%s1 + $0x8] sm:$0xf]
    %v261 = vld [vmem:[%s1 + $0xc] sm:$0xf]
    %v262 = vld [vmem:[%s1 + $0x10] sm:$0xf]
    %v263 = vld [vmem:[%s1 + $0x14] sm:$0xf]
    %v264 = vld [vmem:[%s1 + $0x18] sm:$0xf]
    %v265 = vld [vmem:[%s1 + $0x1c] sm:$0xf]
    %v266 = vld [vmem:[%s1 + $0x20] sm:$0xf]
    %v267 = vld [vmem:[%s1 + $0x24] sm:$0xf]
    %v268 = vld [vmem:[%s1 + $0x28] sm:$0xf]
    %v269 = vld [vmem:[%s1 + $0x2c] sm:$0xf]
    %v270 = vld [vmem:[%s1 + $0x30] sm:$0xf]
    %v271 = vld [vmem:[%s1 + $0x34] sm:$0xf]
    %v272 = vld [vmem:[%s1 + $0x38] sm:$0xf]
    %v273 = vld [vmem:[%s1 + $0x3c] sm:$0xf]
    %v274 = vld [vmem:[%s2] sm:$0x1]
    %v276 = vlaneseq
    %v277 = vshrl.u32 %v276, 7
    %v278 = vsub.s32 0, %v277
    %v279 = vrot.slane %v274, %v278
    %v505 = vunpack.c.l.b16 %v34
    %v506 = vunpack.c.l.b16 %v35
    %v507 = vunpack.c.l.b16 %v36
    %v508 = vunpack.c.l.b16 %v37
    %v509 = vunpack.c.l.b16 %v38
    %v510 = vunpack.c.l.b16 %v39
    %v511 = vunpack.c.l.b16 %v40
    %v512 = vunpack.c.l.b16 %v41
    %v513 = vunpack.c.l.b16 %v42
    %v514 = vunpack.c.l.b16 %v43
    %v515 = vunpack.c.l.b16 %v44
    %v516 = vunpack.c.l.b16 %v45
    %v517 = vunpack.c.l.b16 %v46
    %v518 = vunpack.c.l.b16 %v47
    %v519 = vunpack.c.l.b16 %v48
    %v520 = vunpack.c.l.b16 %v49
    %v521 = vunpack.c.l.b16 %v50
    %v522 = vunpack.c.l.b16 %v51
    %v523 = vunpack.c.l.b16 %v52
    %v524 = vunpack.c.l.b16 %v53
    %v525 = vunpack.c.l.b16 %v54
    %v526 = vunpack.c.l.b16 %v55
    %v527 = vunpack.c.l.b16 %v56
    %v528 = vunpack.c.l.b16 %v57
    %v529 = vunpack.c.l.b16 %v58
    %v530 = vunpack.c.l.b16 %v59
    %v531 = vunpack.c.l.b16 %v60
    %v532 = vunpack.c.l.b16 %v61
    %v533 = vunpack.c.l.b16 %v62
    %v534 = vunpack.c.l.b16 %v63
    %v535 = vunpack.c.l.b16 %v64
    %v536 = vunpack.c.l.b16 %v65
    %v537 = vunpack.c.l.b16 %v66
    %v538 = vunpack.c.l.b16 %v67
    %v539 = vunpack.c.l.b16 %v68
    %v540 = vunpack.c.l.b16 %v69
    %v541 = vunpack.c.l.b16 %v70
    %v542 = vunpack.c.l.b16 %v71
    %v543 = vunpack.c.l.b16 %v72
    %v544 = vunpack.c.l.b16 %v73
    %v545 = vunpack.c.l.b16 %v74
    %v546 = vunpack.c.l.b16 %v75
    %v547 = vunpack.c.l.b16 %v76
    %v548 = vunpack.c.l.b16 %v77
    %v549 = vunpack.c.l.b16 %v78
    %v550 = vunpack.c.l.b16 %v79
    %v551 = vunpack.c.l.b16 %v80
    %v552 = vunpack.c.l.b16 %v81
    %v553 = vunpack.c.l.b16 %v82
    %v554 = vunpack.c.l.b16 %v83
    %v555 = vunpack.c.l.b16 %v84
    %v556 = vunpack.c.l.b16 %v85
    %v557 = vunpack.c.l.b16 %v86
    %v558 = vunpack.c.l.b16 %v87
    %v559 = vunpack.c.l.b16 %v88
    %v560 = vunpack.c.l.b16 %v89
    %v561 = vunpack.c.l.b16 %v90
    %v562 = vunpack.c.l.b16 %v91
    %v563 = vunpack.c.l.b16 %v92
    %v564 = vunpack.c.l.b16 %v93
    %v565 = vunpack.c.l.b16 %v94
    %v566 = vunpack.c.l.b16 %v95
    %v567 = vunpack.c.l.b16 %v96
    %v568 = vunpack.c.l.b16 %v97
    %v569 = vunpack.c.l.b16 %v98
    %v570 = vunpack.c.l.b16 %v99
    %v571 = vunpack.c.l.b16 %v100
    %v572 = vunpack.c.l.b16 %v101
    %v573 = vunpack.c.l.b16 %v102
    %v574 = vunpack.c.l.b16 %v103
    %v575 = vunpack.c.l.b16 %v104
    %v576 = vunpack.c.l.b16 %v105
    %v577 = vunpack.c.l.b16 %v106
    %v578 = vunpack.c.l.b16 %v107
    %v579 = vunpack.c.l.b16 %v108
    %v580 = vunpack.c.l.b16 %v109
    %v581 = vunpack.c.l.b16 %v110
    %v582 = vunpack.c.l.b16 %v111
    %v583 = vunpack.c.l.b16 %v112
    %v584 = vunpack.c.l.b16 %v113
    %v585 = vunpack.c.l.b16 %v114
    %v586 = vunpack.c.l.b16 %v115
    %v587 = vunpack.c.l.b16 %v116
    %v588 = vunpack.c.l.b16 %v117
    %v589 = vunpack.c.l.b16 %v118
    %v590 = vunpack.c.l.b16 %v119
    %v591 = vunpack.c.l.b16 %v120
    %v592 = vunpack.c.l.b16 %v121
    %v593 = vunpack.c.l.b16 %v122
    %v594 = vunpack.c.l.b16 %v123
    %v595 = vunpack.c.l.b16 %v124
    %v596 = vunpack.c.l.b16 %v125
    %v597 = vunpack.c.l.b16 %v126
    %v598 = vunpack.c.l.b16 %v127
    %v599 = vunpack.c.l.b16 %v128
    %v600 = vunpack.c.l.b16 %v129
    %v601 = vunpack.c.l.b16 %v130
    %v602 = vunpack.c.l.b16 %v131
    %v603 = vunpack.c.l.b16 %v132
    %v604 = vunpack.c.l.b16 %v133
    %v605 = vunpack.c.l.b16 %v134
    %v606 = vunpack.c.l.b16 %v135
    %v607 = vunpack.c.l.b16 %v136
    %v608 = vunpack.c.l.b16 %v137
    %v609 = vunpack.c.l.b16 %v138
    %v610 = vunpack.c.l.b16 %v139
    %v611 = vunpack.c.l.b16 %v140
    %v612 = vunpack.c.l.b16 %v141
    %v613 = vunpack.c.l.b16 %v142
    %v614 = vunpack.c.l.b16 %v143
    %v615 = vunpack.c.l.b16 %v144
    %v616 = vunpack.c.l.b16 %v145
    %v617 = vunpack.c.l.b16 %v146
    %v618 = vunpack.c.l.b16 %v147
    %v619 = vunpack.c.l.b16 %v148
    %v620 = vunpack.c.l.b16 %v149
    %v621 = vunpack.c.l.b16 %v150
    %v622 = vunpack.c.l.b16 %v151
    %v623 = vunpack.c.l.b16 %v152
    %v624 = vunpack.c.l.b16 %v153
    %v625 = vunpack.c.l.b16 %v154
    %v626 = vunpack.c.l.b16 %v155
    %v627 = vunpack.c.l.b16 %v156
    %v628 = vunpack.c.l.b16 %v157
    %v629 = vunpack.c.l.b16 %v158
    %v630 = vunpack.c.l.b16 %v159
    %v631 = vunpack.c.l.b16 %v160
    %v632 = vunpack.c.l.b16 %v161
    %v633 = vunpack.c.l.b16 %v162
    %v634 = vunpack.c.l.b16 %v163
    %v635 = vunpack.c.l.b16 %v164
    %v636 = vunpack.c.l.b16 %v165
    %v637 = vunpack.c.l.b16 %v166
    %v638 = vunpack.c.l.b16 %v167
    %v639 = vunpack.c.l.b16 %v168
    %v640 = vunpack.c.l.b16 %v169
    %v641 = vunpack.c.l.b16 %v170
    %v642 = vunpack.c.l.b16 %v171
    %v643 = vunpack.c.l.b16 %v172
    %v644 = vunpack.c.l.b16 %v173
    %v645 = vunpack.c.l.b16 %v174
    %v646 = vunpack.c.l.b16 %v175
    %v647 = vunpack.c.l.b16 %v176
    %v648 = vunpack.c.l.b16 %v177
    %v649 = vunpack.c.l.b16 %v178
    %v650 = vunpack.c.l.b16 %v179
    %v651 = vunpack.c.l.b16 %v180
    %v652 = vunpack.c.l.b16 %v181
    %v653 = vunpack.c.l.b16 %v182
    %v654 = vunpack.c.l.b16 %v183
    %v655 = vunpack.c.l.b16 %v184
    %v656 = vunpack.c.l.b16 %v185
    %v657 = vunpack.c.l.b16 %v186
    %v658 = vunpack.c.l.b16 %v187
    %v659 = vunpack.c.l.b16 %v188
    %v660 = vunpack.c.l.b16 %v189
    %v661 = vunpack.c.l.b16 %v190
    %v662 = vunpack.c.l.b16 %v191
    %v663 = vunpack.c.l.b16 %v192
    %v664 = vunpack.c.l.b16 %v193
    %v665 = vunpack.c.l.b16 %v194
    %v666 = vunpack.c.l.b16 %v195
    %v667 = vunpack.c.l.b16 %v196
    %v668 = vunpack.c.l.b16 %v197
    %v669 = vunpack.c.l.b16 %v198
    %v670 = vunpack.c.l.b16 %v199
    %v671 = vunpack.c.l.b16 %v200
    %v672 = vunpack.c.l.b16 %v201
    %v673 = vunpack.c.l.b16 %v202
    %v674 = vunpack.c.l.b16 %v203
    %v675 = vunpack.c.l.b16 %v204
    %v676 = vunpack.c.l.b16 %v205
    %v677 = vunpack.c.l.b16 %v206
    %v678 = vunpack.c.l.b16 %v207
    %v679 = vunpack.c.l.b16 %v208
    %v680 = vunpack.c.l.b16 %v209
    %v681 = vunpack.c.l.b16 %v210
    %v682 = vunpack.c.l.b16 %v211
    %v683 = vunpack.c.l.b16 %v212
    %v684 = vunpack.c.l.b16 %v213
    %v685 = vunpack.c.l.b16 %v214
    %v686 = vunpack.c.l.b16 %v215
    %v687 = vunpack.c.l.b16 %v216
    %v688 = vunpack.c.l.b16 %v217
    %v689 = vunpack.c.l.b16 %v218
    %v690 = vunpack.c.l.b16 %v219
    %v691 = vunpack.c.l.b16 %v220
    %v692 = vunpack.c.l.b16 %v221
    %v693 = vunpack.c.l.b16 %v222
    %v694 = vunpack.c.l.b16 %v223
    %v695 = vunpack.c.l.b16 %v224
    %v696 = vunpack.c.l.b16 %v225
    %v697 = vunpack.c.l.b16 %v226
    %v698 = vunpack.c.l.b16 %v227
    %v699 = vunpack.c.l.b16 %v228
    %v700 = vunpack.c.l.b16 %v229
    %v701 = vunpack.c.l.b16 %v230
    %v702 = vunpack.c.l.b16 %v231
    %v703 = vunpack.c.l.b16 %v232
    %v704 = vunpack.c.l.b16 %v233
    %v705 = vunpack.c.l.b16 %v234
    %v706 = vunpack.c.l.b16 %v235
    %v707 = vunpack.c.l.b16 %v236
    %v708 = vunpack.c.l.b16 %v237
    %v709 = vunpack.c.l.b16 %v238
    %v710 = vunpack.c.l.b16 %v239
    %v711 = vunpack.c.l.b16 %v240
    %v712 = vunpack.c.l.b16 %v241
    %v713 = vunpack.c.l.b16 %v242
    %v714 = vunpack.c.l.b16 %v243
    %v715 = vunpack.c.l.b16 %v244
    %v716 = vunpack.c.l.b16 %v245
    %v717 = vunpack.c.l.b16 %v246
    %v718 = vunpack.c.l.b16 %v247
    %v719 = vunpack.c.l.b16 %v248
    %v720 = vunpack.c.l.b16 %v249
    %v721 = vunpack.c.l.b16 %v250
    %v722 = vunpack.c.l.b16 %v251
    %v723 = vunpack.c.l.b16 %v252
    %v724 = vunpack.c.l.b16 %v253
    %v725 = vunpack.c.l.b16 %v254
    %v726 = vunpack.c.l.b16 %v255
    %v727 = vunpack.c.l.b16 %v256
    %v728 = vunpack.c.l.b16 %v257
    %v729 = vpack.c.b16 %v506, %v505
    %v730 = vpack.c.b16 %v508, %v507
    %v731 = vpack.c.b16 %v510, %v509
    %v732 = vpack.c.b16 %v512, %v511
    %v733 = vpack.c.b16 %v514, %v513
    %v734 = vpack.c.b16 %v516, %v515
    %v735 = vpack.c.b16 %v518, %v517
    %v736 = vpack.c.b16 %v520, %v519
    %v737 = vpack.c.b16 %v522, %v521
    %v738 = vpack.c.b16 %v524, %v523
    %v739 = vpack.c.b16 %v526, %v525
    %v740 = vpack.c.b16 %v528, %v527
    %v741 = vpack.c.b16 %v530, %v529
    %v742 = vpack.c.b16 %v532, %v531
    %v743 = vpack.c.b16 %v534, %v533
    %v744 = vpack.c.b16 %v536, %v535
    %v745 = vpack.c.b16 %v538, %v537
    %v746 = vpack.c.b16 %v540, %v539
    %v747 = vpack.c.b16 %v542, %v541
    %v748 = vpack.c.b16 %v544, %v543
    %v749 = vpack.c.b16 %v546, %v545
    %v750 = vpack.c.b16 %v548, %v547
    %v751 = vpack.c.b16 %v550, %v549
    %v752 = vpack.c.b16 %v552, %v551
    %v753 = vpack.c.b16 %v554, %v553
    %v754 = vpack.c.b16 %v556, %v555
    %v755 = vpack.c.b16 %v558, %v557
    %v756 = vpack.c.b16 %v560, %v559
    %v757 = vpack.c.b16 %v562, %v561
    %v758 = vpack.c.b16 %v564, %v563
    %v759 = vpack.c.b16 %v566, %v565
    %v760 = vpack.c.b16 %v568, %v567
    %v761 = vpack.c.b16 %v570, %v569
    %v762 = vpack.c.b16 %v572, %v571
    %v763 = vpack.c.b16 %v574, %v573
    %v764 = vpack.c.b16 %v576, %v575
    %v765 = vpack.c.b16 %v578, %v577
    %v766 = vpack.c.b16 %v580, %v579
    %v767 = vpack.c.b16 %v582, %v581
    %v768 = vpack.c.b16 %v584, %v583
    %v769 = vpack.c.b16 %v586, %v585
    %v770 = vpack.c.b16 %v588, %v587
    %v771 = vpack.c.b16 %v590, %v589
    %v772 = vpack.c.b16 %v592, %v591
    %v773 = vpack.c.b16 %v594, %v593
    %v774 = vpack.c.b16 %v596, %v595
    %v775 = vpack.c.b16 %v598, %v597
    %v776 = vpack.c.b16 %v600, %v599
    %v777 = vpack.c.b16 %v602, %v601
    %v778 = vpack.c.b16 %v604, %v603
    %v779 = vpack.c.b16 %v606, %v605
    %v780 = vpack.c.b16 %v608, %v607
    %v781 = vpack.c.b16 %v610, %v609
    %v782 = vpack.c.b16 %v612, %v611
    %v783 = vpack.c.b16 %v614, %v613
    %v784 = vpack.c.b16 %v616, %v615
    %v785 = vpack.c.b16 %v618, %v617
    %v786 = vpack.c.b16 %v620, %v619
    %v787 = vpack.c.b16 %v622, %v621
    %v788 = vpack.c.b16 %v624, %v623
    %v789 = vpack.c.b16 %v626, %v625
    %v790 = vpack.c.b16 %v628, %v627
    %v791 = vpack.c.b16 %v630, %v629
    %v792 = vpack.c.b16 %v632, %v631
    %v793 = vpack.c.b16 %v634, %v633
    %v794 = vpack.c.b16 %v636, %v635
    %v795 = vpack.c.b16 %v638, %v637
    %v796 = vpack.c.b16 %v640, %v639
    %v797 = vpack.c.b16 %v642, %v641
    %v798 = vpack.c.b16 %v644, %v643
    %v799 = vpack.c.b16 %v646, %v645
    %v800 = vpack.c.b16 %v648, %v647
    %v801 = vpack.c.b16 %v650, %v649
    %v802 = vpack.c.b16 %v652, %v651
    %v803 = vpack.c.b16 %v654, %v653
    %v804 = vpack.c.b16 %v656, %v655
    %v805 = vpack.c.b16 %v658, %v657
    %v806 = vpack.c.b16 %v660, %v659
    %v807 = vpack.c.b16 %v662, %v661
    %v808 = vpack.c.b16 %v664, %v663
    %v809 = vpack.c.b16 %v666, %v665
    %v810 = vpack.c.b16 %v668, %v667
    %v811 = vpack.c.b16 %v670, %v669
    %v812 = vpack.c.b16 %v672, %v671
    %v813 = vpack.c.b16 %v674, %v673
    %v814 = vpack.c.b16 %v676, %v675
    %v815 = vpack.c.b16 %v678, %v677
    %v816 = vpack.c.b16 %v680, %v679
    %v817 = vpack.c.b16 %v682, %v681
    %v818 = vpack.c.b16 %v684, %v683
    %v819 = vpack.c.b16 %v686, %v685
    %v820 = vpack.c.b16 %v688, %v687
    %v821 = vpack.c.b16 %v690, %v689
    %v822 = vpack.c.b16 %v692, %v691
    %v823 = vpack.c.b16 %v694, %v693
    %v824 = vpack.c.b16 %v696, %v695
    %v825 = vpack.c.b16 %v698, %v697
    %v826 = vpack.c.b16 %v700, %v699
    %v827 = vpack.c.b16 %v702, %v701
    %v828 = vpack.c.b16 %v704, %v703
    %v829 = vpack.c.b16 %v706, %v705
    %v830 = vpack.c.b16 %v708, %v707
    %v831 = vpack.c.b16 %v710, %v709
    %v832 = vpack.c.b16 %v712, %v711
    %v833 = vpack.c.b16 %v714, %v713
    %v834 = vpack.c.b16 %v716, %v715
    %v835 = vpack.c.b16 %v718, %v717
    %v836 = vpack.c.b16 %v720, %v719
    %v837 = vpack.c.b16 %v722, %v721
    %v838 = vpack.c.b16 %v724, %v723
    %v839 = vpack.c.b16 %v726, %v725
    %v840 = vpack.c.b16 %v728, %v727
    %v969 = vunpack.c.l.b16 %v258
    %v970 = vunpack.c.l.b16 %v259
    %v971 = vunpack.c.l.b16 %v260
    %v972 = vunpack.c.l.b16 %v261
    %v973 = vunpack.c.l.b16 %v262
    %v974 = vunpack.c.l.b16 %v263
    %v975 = vunpack.c.l.b16 %v264
    %v976 = vunpack.c.l.b16 %v265
    %v977 = vunpack.c.l.b16 %v266
    %v978 = vunpack.c.l.b16 %v267
    %v979 = vunpack.c.l.b16 %v268
    %v980 = vunpack.c.l.b16 %v269
    %v981 = vunpack.c.l.b16 %v270
    %v982 = vunpack.c.l.b16 %v271
    %v983 = vunpack.c.l.b16 %v272
    %v984 = vunpack.c.l.b16 %v273
    %v985 = vpack.c.b16 %v970, %v969
    %v986 = vpack.c.b16 %v972, %v971
    %v987 = vpack.c.b16 %v974, %v973
    %v988 = vpack.c.b16 %v976, %v975
    %v989 = vpack.c.b16 %v978, %v977
    %v990 = vpack.c.b16 %v980, %v979
    %v991 = vpack.c.b16 %v982, %v981
    %v992 = vpack.c.b16 %v984, %v983
    %1001 = vmatprep.subr.bf16.mxu0 0
    %1002 = vmatpush1.bf16.msra.mxu0 %v985
    %1003 = vmatprep.subr.bf16.mxu0 0
    %1004 = vmatpush1.bf16.msra.mxu0 %v986
    %1005 = vmatprep.subr.bf16.mxu0 0
    %1006 = vmatpush1.bf16.msra.mxu0 %v987
    %1007 = vmatprep.subr.bf16.mxu0 0
    %1008 = vmatpush1.bf16.msra.mxu0 %v988
    %1009 = vmatprep.subr.bf16.mxu0 0
    %1010 = vmatpush1.bf16.msra.mxu0 %v989
    %1011 = vmatprep.subr.bf16.mxu0 0
    %1012 = vmatpush1.bf16.msra.mxu0 %v990
    %1013 = vmatprep.subr.bf16.mxu0 0
    %1014 = vmatpush1.bf16.msra.mxu0 %v991
    %1015 = vmatprep.subr.bf16.mxu0 0
    %1016 = vmatpush1.bf16.msra.mxu0 %v992
    %1017 = vmatprep.subr.bf16.mxu0 0
    %1018 = vmatpush1.bf16.msra.mxu0 0
    %1019 = vmatprep.subr.bf16.mxu0 0
    %1020 = vmatpush1.bf16.msra.mxu0 0
    %1021 = vmatprep.subr.bf16.mxu0 0
    %1022 = vmatpush1.bf16.msra.mxu0 0
    %1023 = vmatprep.subr.bf16.mxu0 0
    %1024 = vmatpush1.bf16.msra.mxu0 0
    %1025 = vmatprep.subr.bf16.mxu0 0
    %1026 = vmatpush1.bf16.msra.mxu0 0
    %1027 = vmatprep.subr.bf16.mxu0 0
    %1028 = vmatpush1.bf16.msra.mxu0 0
    %1029 = vmatprep.subr.bf16.mxu0 0
    %1030 = vmatpush1.bf16.msra.mxu0 0
    %1031 = vmatprep.subr.bf16.mxu0 0
    %1032 = vmatpush1.bf16.msra.mxu0 0
    %1033 = vmatprep.mubr.bf16.mxu0 0
    %1034 = vmatmul.mubr.bf16.gmra.mrb[0].mxu0 %v729
    %v1035 = vpop.f32.mrb[0].mxu0
    %v1036 = vadd.f32 %v279, %v1035
    %v1037 = vpop.f32.mrb[0].mxu0
    %v1038 = vpop.f32.mrb[0].mxu0
    %v1039 = vadd.f32 %v279, %v1038
    %v1040 = vpop.f32.mrb[0].mxu0
    %1041 = vmatprep.mubr.bf16.mxu0 0
    %1042 = vmatmul.mubr.bf16.gmra.mrb[0].mxu0 %v730
    %v1043 = vpop.f32.mrb[0].mxu0
    %v1044 = vadd.f32 %v279, %v1043
    %v1045 = vpop.f32.mrb[0].mxu0
    %v1046 = vpop.f32.mrb[0].mxu0
    %v1047 = vadd.f32 %v279, %v1046
    %v1048 = vpop.f32.mrb[0].mxu0
    %1049 = vmatprep.mubr.bf16.mxu0 0
    %1050 = vmatmul.mubr.bf16.gmra.mrb[0].mxu0 %v731
    %v1051 = vpop.f32.mrb[0].mxu0
    %v1052 = vadd.f32 %v279, %v1051
    %v1053 = vpop.f32.mrb[0].mxu0
    %v1054 = vpop.f32.mrb[0].mxu0
    %v1055 = vadd.f32 %v279, %v1054
    %v1056 = vpop.f32.mrb[0].mxu0
    %1057 = vmatprep.mubr.bf16.mxu0 0
    %1058 = vmatmul.mubr.bf16.gmra.mrb[0].mxu0 %v732
    %v1059 = vpop.f32.mrb[0].mxu0
    %v1060 = vadd.f32 %v279, %v1059
    %v1061 = vpop.f32.mrb[0].mxu0
    %v1062 = vpop.f32.mrb[0].mxu0
    %v1063 = vadd.f32 %v279, %v1062
    %v1064 = vpop.f32.mrb[0].mxu0
    %1065 = vmatprep.mubr.bf16.mxu0 0
    %1066 = vmatmul.mubr.bf16.gmra.mrb[0].mxu0 %v733
    %v1067 = vpop.f32.mrb[0].mxu0
    %v1068 = vadd.f32 %v279, %v1067
    %v1069 = vpop.f32.mrb[0].mxu0
    %v1070 = vpop.f32.mrb[0].mxu0
    %v1071 = vadd.f32 %v279, %v1070
    %v1072 = vpop.f32.mrb[0].mxu0
    %1073 = vmatprep.mubr.bf16.mxu0 0
    %1074 = vmatmul.mubr.bf16.gmra.mrb[0].mxu0 %v734
    %v1075 = vpop.f32.mrb[0].mxu0
    %v1076 = vadd.f32 %v279, %v1075
    %v1077 = vpop.f32.mrb[0].mxu0
    %v1078 = vpop.f32.mrb[0].mxu0
    %v1079 = vadd.f32 %v279, %v1078
    %v1080 = vpop.f32.mrb[0].mxu0
    %1081 = vmatprep.mubr.bf16.mxu0 0
    %1082 = vmatmul.mubr.bf16.gmra.mrb[0].mxu0 %v735
    %v1083 = vpop.f32.mrb[0].mxu0
    %v1084 = vadd.f32 %v279, %v1083
    %v1085 = vpop.f32.mrb[0].mxu0
    %v1086 = vpop.f32.mrb[0].mxu0
    %v1087 = vadd.f32 %v279, %v1086
    %v1088 = vpop.f32.mrb[0].mxu0
    %1089 = vmatprep.mubr.bf16.mxu0 0
    %1090 = vmatmul.mubr.bf16.gmra.mrb[0].mxu0 %v736
    %v1091 = vpop.f32.mrb[0].mxu0
    %v1092 = vadd.f32 %v279, %v1091
    %v1093 = vpop.f32.mrb[0].mxu0
    %v1094 = vpop.f32.mrb[0].mxu0
    %v1095 = vadd.f32 %v279, %v1094
    %v1096 = vpop.f32.mrb[0].mxu0
    %1097 = vmatprep.mubr.bf16.mxu0 0
    %1098 = vmatmul.mubr.bf16.gmra.mrb[0].mxu0 %v737
    %v1099 = vpop.f32.mrb[0].mxu0
    %v1100 = vadd.f32 %v279, %v1099
    %v1101 = vpop.f32.mrb[0].mxu0
    %v1102 = vpop.f32.mrb[0].mxu0
    %v1103 = vadd.f32 %v279, %v1102
    %v1104 = vpop.f32.mrb[0].mxu0
    %1105 = vmatprep.mubr.bf16.mxu0 0
    %1106 = vmatmul.mubr.bf16.gmra.mrb[0].mxu0 %v738
    %v1107 = vpop.f32.mrb[0].mxu0
    %v1108 = vadd.f32 %v279, %v1107
    %v1109 = vpop.f32.mrb[0].mxu0
    %v1110 = vpop.f32.mrb[0].mxu0
    %v1111 = vadd.f32 %v279, %v1110
    %v1112 = vpop.f32.mrb[0].mxu0
    %1113 = vmatprep.mubr.bf16.mxu0 0
    %1114 = vmatmul.mubr.bf16.gmra.mrb[0].mxu0 %v739
    %v1115 = vpop.f32.mrb[0].mxu0
    %v1116 = vadd.f32 %v279, %v1115
    %v1117 = vpop.f32.mrb[0].mxu0
    %v1118 = vpop.f32.mrb[0].mxu0
    %v1119 = vadd.f32 %v279, %v1118
    %v1120 = vpop.f32.mrb[0].mxu0
    %1121 = vmatprep.mubr.bf16.mxu0 0
    %1122 = vmatmul.mubr.bf16.gmra.mrb[0].mxu0 %v740
    %v1123 = vpop.f32.mrb[0].mxu0
    %v1124 = vadd.f32 %v279, %v1123
    %v1125 = vpop.f32.mrb[0].mxu0
    %v1126 = vpop.f32.mrb[0].mxu0
    %v1127 = vadd.f32 %v279, %v1126
    %v1128 = vpop.f32.mrb[0].mxu0
    %1129 = vmatprep.mubr.bf16.mxu0 0
    %1130 = vmatmul.mubr.bf16.gmra.mrb[0].mxu0 %v741
    %v1131 = vpop.f32.mrb[0].mxu0
    %v1132 = vadd.f32 %v279, %v1131
    %v1133 = vpop.f32.mrb[0].mxu0
    %v1134 = vpop.f32.mrb[0].mxu0
    %v1135 = vadd.f32 %v279, %v1134
    %v1136 = vpop.f32.mrb[0].mxu0
    %1137 = vmatprep.mubr.bf16.mxu0 0
    %1138 = vmatmul.mubr.bf16.gmra.mrb[0].mxu0 %v742
    %v1139 = vpop.f32.mrb[0].mxu0
    %v1140 = vadd.f32 %v279, %v1139
    %v1141 = vpop.f32.mrb[0].mxu0
    %v1142 = vpop.f32.mrb[0].mxu0
    %v1143 = vadd.f32 %v279, %v1142
    %v1144 = vpop.f32.mrb[0].mxu0
    %1145 = vmatprep.mubr.bf16.mxu0 0
    %1146 = vmatmul.mubr.bf16.gmra.mrb[0].mxu0 %v743
    %v1147 = vpop.f32.mrb[0].mxu0
    %v1148 = vadd.f32 %v279, %v1147
    %v1149 = vpop.f32.mrb[0].mxu0
    %v1150 = vpop.f32.mrb[0].mxu0
    %v1151 = vadd.f32 %v279, %v1150
    %v1152 = vpop.f32.mrb[0].mxu0
    %1153 = vmatprep.mubr.bf16.mxu0 0
    %1154 = vmatmul.mubr.bf16.gmra.mrb[0].mxu0 %v744
    %v1155 = vpop.f32.mrb[0].mxu0
    %v1156 = vadd.f32 %v279, %v1155
    %v1157 = vpop.f32.mrb[0].mxu0
    %v1158 = vpop.f32.mrb[0].mxu0
    %v1159 = vadd.f32 %v279, %v1158
    %v1160 = vpop.f32.mrb[0].mxu0
    %1161 = vmatprep.mubr.bf16.mxu0 0
    %1162 = vmatmul.mubr.bf16.gmra.mrb[0].mxu0 %v745
    %v1163 = vpop.f32.mrb[0].mxu0
    %v1164 = vadd.f32 %v279, %v1163
    %v1165 = vpop.f32.mrb[0].mxu0
    %v1166 = vpop.f32.mrb[0].mxu0
    %v1167 = vadd.f32 %v279, %v1166
    %v1168 = vpop.f32.mrb[0].mxu0
    %1169 = vmatprep.mubr.bf16.mxu0 0
    %1170 = vmatmul.mubr.bf16.gmra.mrb[0].mxu0 %v746
    %v1171 = vpop.f32.mrb[0].mxu0
    %v1172 = vadd.f32 %v279, %v1171
    %v1173 = vpop.f32.mrb[0].mxu0
    %v1174 = vpop.f32.mrb[0].mxu0
    %v1175 = vadd.f32 %v279, %v1174
    %v1176 = vpop.f32.mrb[0].mxu0
    %1177 = vmatprep.mubr.bf16.mxu0 0
    %1178 = vmatmul.mubr.bf16.gmra.mrb[0].mxu0 %v747
    %v1179 = vpop.f32.mrb[0].mxu0
    %v1180 = vadd.f32 %v279, %v1179
    %v1181 = vpop.f32.mrb[0].mxu0
    %v1182 = vpop.f32.mrb[0].mxu0
    %v1183 = vadd.f32 %v279, %v1182
    %v1184 = vpop.f32.mrb[0].mxu0
    %1185 = vmatprep.mubr.bf16.mxu0 0
    %1186 = vmatmul.mubr.bf16.gmra.mrb[0].mxu0 %v748
    %v1187 = vpop.f32.mrb[0].mxu0
    %v1188 = vadd.f32 %v279, %v1187
    %v1189 = vpop.f32.mrb[0].mxu0
    %v1190 = vpop.f32.mrb[0].mxu0
    %v1191 = vadd.f32 %v279, %v1190
    %v1192 = vpop.f32.mrb[0].mxu0
    %1193 = vmatprep.mubr.bf16.mxu0 0
    %1194 = vmatmul.mubr.bf16.gmra.mrb[0].mxu0 %v749
    %v1195 = vpop.f32.mrb[0].mxu0
    %v1196 = vadd.f32 %v279, %v1195
    %v1197 = vpop.f32.mrb[0].mxu0
    %v1198 = vpop.f32.mrb[0].mxu0
    %v1199 = vadd.f32 %v279, %v1198
    %v1200 = vpop.f32.mrb[0].mxu0
    %1201 = vmatprep.mubr.bf16.mxu0 0
    %1202 = vmatmul.mubr.bf16.gmra.mrb[0].mxu0 %v750
    %v1203 = vpop.f32.mrb[0].mxu0
    %v1204 = vadd.f32 %v279, %v1203
    %v1205 = vpop.f32.mrb[0].mxu0
    %v1206 = vpop.f32.mrb[0].mxu0
    %v1207 = vadd.f32 %v279, %v1206
    %v1208 = vpop.f32.mrb[0].mxu0
    %1209 = vmatprep.mubr.bf16.mxu0 0
    %1210 = vmatmul.mubr.bf16.gmra.mrb[0].mxu0 %v751
    %v1211 = vpop.f32.mrb[0].mxu0
    %v1212 = vadd.f32 %v279, %v1211
    %v1213 = vpop.f32.mrb[0].mxu0
    %v1214 = vpop.f32.mrb[0].mxu0
    %v1215 = vadd.f32 %v279, %v1214
    %v1216 = vpop.f32.mrb[0].mxu0
    %1217 = vmatprep.mubr.bf16.mxu0 0
    %1218 = vmatmul.mubr.bf16.gmra.mrb[0].mxu0 %v752
    %v1219 = vpop.f32.mrb[0].mxu0
    %v1220 = vadd.f32 %v279, %v1219
    %v1221 = vpop.f32.mrb[0].mxu0
    %v1222 = vpop.f32.mrb[0].mxu0
    %v1223 = vadd.f32 %v279, %v1222
    %v1224 = vpop.f32.mrb[0].mxu0
    %1225 = vmatprep.mubr.bf16.mxu0 0
    %1226 = vmatmul.mubr.bf16.gmra.mrb[0].mxu0 %v753
    %v1227 = vpop.f32.mrb[0].mxu0
    %v1228 = vadd.f32 %v279, %v1227
    %v1229 = vpop.f32.mrb[0].mxu0
    %v1230 = vpop.f32.mrb[0].mxu0
    %v1231 = vadd.f32 %v279, %v1230
    %v1232 = vpop.f32.mrb[0].mxu0
    %1233 = vmatprep.mubr.bf16.mxu0 0
    %1234 = vmatmul.mubr.bf16.gmra.mrb[0].mxu0 %v754
    %v1235 = vpop.f32.mrb[0].mxu0
    %v1236 = vadd.f32 %v279, %v1235
    %v1237 = vpop.f32.mrb[0].mxu0
    %v1238 = vpop.f32.mrb[0].mxu0
    %v1239 = vadd.f32 %v279, %v1238
    %v1240 = vpop.f32.mrb[0].mxu0
    %1241 = vmatprep.mubr.bf16.mxu0 0
    %1242 = vmatmul.mubr.bf16.gmra.mrb[0].mxu0 %v755
    %v1243 = vpop.f32.mrb[0].mxu0
    %v1244 = vadd.f32 %v279, %v1243
    %v1245 = vpop.f32.mrb[0].mxu0
    %v1246 = vpop.f32.mrb[0].mxu0
    %v1247 = vadd.f32 %v279, %v1246
    %v1248 = vpop.f32.mrb[0].mxu0
    %1249 = vmatprep.mubr.bf16.mxu0 0
    %1250 = vmatmul.mubr.bf16.gmra.mrb[0].mxu0 %v756
    %v1251 = vpop.f32.mrb[0].mxu0
    %v1252 = vadd.f32 %v279, %v1251
    %v1253 = vpop.f32.mrb[0].mxu0
    %v1254 = vpop.f32.mrb[0].mxu0
    %v1255 = vadd.f32 %v279, %v1254
    %v1256 = vpop.f32.mrb[0].mxu0
    %1257 = vmatprep.mubr.bf16.mxu0 0
    %1258 = vmatmul.mubr.bf16.gmra.mrb[0].mxu0 %v757
    %v1259 = vpop.f32.mrb[0].mxu0
    %v1260 = vadd.f32 %v279, %v1259
    %v1261 = vpop.f32.mrb[0].mxu0
    %v1262 = vpop.f32.mrb[0].mxu0
    %v1263 = vadd.f32 %v279, %v1262
    %v1264 = vpop.f32.mrb[0].mxu0
    %1265 = vmatprep.mubr.bf16.mxu0 0
    %1266 = vmatmul.mubr.bf16.gmra.mrb[0].mxu0 %v758
    %v1267 = vpop.f32.mrb[0].mxu0
    %v1268 = vadd.f32 %v279, %v1267
    %v1269 = vpop.f32.mrb[0].mxu0
    %v1270 = vpop.f32.mrb[0].mxu0
    %v1271 = vadd.f32 %v279, %v1270
    %v1272 = vpop.f32.mrb[0].mxu0
    %1273 = vmatprep.mubr.bf16.mxu0 0
    %1274 = vmatmul.mubr.bf16.gmra.mrb[0].mxu0 %v759
    %v1275 = vpop.f32.mrb[0].mxu0
    %v1276 = vadd.f32 %v279, %v1275
    %v1277 = vpop.f32.mrb[0].mxu0
    %v1278 = vpop.f32.mrb[0].mxu0
    %v1279 = vadd.f32 %v279, %v1278
    %v1280 = vpop.f32.mrb[0].mxu0
    %1281 = vmatprep.mubr.bf16.mxu0 0
    %1282 = vmatmul.mubr.bf16.gmra.mrb[0].mxu0 %v760
    %v1283 = vpop.f32.mrb[0].mxu0
    %v1284 = vadd.f32 %v279, %v1283
    %v1285 = vpop.f32.mrb[0].mxu0
    %v1286 = vpop.f32.mrb[0].mxu0
    %v1287 = vadd.f32 %v279, %v1286
    %v1288 = vpop.f32.mrb[0].mxu0
    %1289 = vmatprep.mubr.bf16.mxu0 0
    %1290 = vmatmul.mubr.bf16.gmra.mrb[0].mxu0 %v761
    %v1291 = vpop.f32.mrb[0].mxu0
    %v1292 = vadd.f32 %v279, %v1291
    %v1293 = vpop.f32.mrb[0].mxu0
    %v1294 = vpop.f32.mrb[0].mxu0
    %v1295 = vadd.f32 %v279, %v1294
    %v1296 = vpop.f32.mrb[0].mxu0
    %1297 = vmatprep.mubr.bf16.mxu0 0
    %1298 = vmatmul.mubr.bf16.gmra.mrb[0].mxu0 %v762
    %v1299 = vpop.f32.mrb[0].mxu0
    %v1300 = vadd.f32 %v279, %v1299
    %v1301 = vpop.f32.mrb[0].mxu0
    %v1302 = vpop.f32.mrb[0].mxu0
    %v1303 = vadd.f32 %v279, %v1302
    %v1304 = vpop.f32.mrb[0].mxu0
    %1305 = vmatprep.mubr.bf16.mxu0 0
    %1306 = vmatmul.mubr.bf16.gmra.mrb[0].mxu0 %v763
    %v1307 = vpop.f32.mrb[0].mxu0
    %v1308 = vadd.f32 %v279, %v1307
    %v1309 = vpop.f32.mrb[0].mxu0
    %v1310 = vpop.f32.mrb[0].mxu0
    %v1311 = vadd.f32 %v279, %v1310
    %v1312 = vpop.f32.mrb[0].mxu0
    %1313 = vmatprep.mubr.bf16.mxu0 0
    %1314 = vmatmul.mubr.bf16.gmra.mrb[0].mxu0 %v764
    %v1315 = vpop.f32.mrb[0].mxu0
    %v1316 = vadd.f32 %v279, %v1315
    %v1317 = vpop.f32.mrb[0].mxu0
    %v1318 = vpop.f32.mrb[0].mxu0
    %v1319 = vadd.f32 %v279, %v1318
    %v1320 = vpop.f32.mrb[0].mxu0
    %1321 = vmatprep.mubr.bf16.mxu0 0
    %1322 = vmatmul.mubr.bf16.gmra.mrb[0].mxu0 %v765
    %v1323 = vpop.f32.mrb[0].mxu0
    %v1324 = vadd.f32 %v279, %v1323
    %v1325 = vpop.f32.mrb[0].mxu0
    %v1326 = vpop.f32.mrb[0].mxu0
    %v1327 = vadd.f32 %v279, %v1326
    %v1328 = vpop.f32.mrb[0].mxu0
    %1329 = vmatprep.mubr.bf16.mxu0 0
    %1330 = vmatmul.mubr.bf16.gmra.mrb[0].mxu0 %v766
    %v1331 = vpop.f32.mrb[0].mxu0
    %v1332 = vadd.f32 %v279, %v1331
    %v1333 = vpop.f32.mrb[0].mxu0
    %v1334 = vpop.f32.mrb[0].mxu0
    %v1335 = vadd.f32 %v279, %v1334
    %v1336 = vpop.f32.mrb[0].mxu0
    %1337 = vmatprep.mubr.bf16.mxu0 0
    %1338 = vmatmul.mubr.bf16.gmra.mrb[0].mxu0 %v767
    %v1339 = vpop.f32.mrb[0].mxu0
    %v1340 = vadd.f32 %v279, %v1339
    %v1341 = vpop.f32.mrb[0].mxu0
    %v1342 = vpop.f32.mrb[0].mxu0
    %v1343 = vadd.f32 %v279, %v1342
    %v1344 = vpop.f32.mrb[0].mxu0
    %1345 = vmatprep.mubr.bf16.mxu0 0
    %1346 = vmatmul.mubr.bf16.gmra.mrb[0].mxu0 %v768
    %v1347 = vpop.f32.mrb[0].mxu0
    %v1348 = vadd.f32 %v279, %v1347
    %v1349 = vpop.f32.mrb[0].mxu0
    %v1350 = vpop.f32.mrb[0].mxu0
    %v1351 = vadd.f32 %v279, %v1350
    %v1352 = vpop.f32.mrb[0].mxu0
    %1353 = vmatprep.mubr.bf16.mxu0 0
    %1354 = vmatmul.mubr.bf16.gmra.mrb[0].mxu0 %v769
    %v1355 = vpop.f32.mrb[0].mxu0
    %v1356 = vadd.f32 %v279, %v1355
    %v1357 = vpop.f32.mrb[0].mxu0
    %v1358 = vpop.f32.mrb[0].mxu0
    %v1359 = vadd.f32 %v279, %v1358
    %v1360 = vpop.f32.mrb[0].mxu0
    %1361 = vmatprep.mubr.bf16.mxu0 0
    %1362 = vmatmul.mubr.bf16.gmra.mrb[0].mxu0 %v770
    %v1363 = vpop.f32.mrb[0].mxu0
    %v1364 = vadd.f32 %v279, %v1363
    %v1365 = vpop.f32.mrb[0].mxu0
    %v1366 = vpop.f32.mrb[0].mxu0
    %v1367 = vadd.f32 %v279, %v1366
    %v1368 = vpop.f32.mrb[0].mxu0
    %1369 = vmatprep.mubr.bf16.mxu0 0
    %1370 = vmatmul.mubr.bf16.gmra.mrb[0].mxu0 %v771
    %v1371 = vpop.f32.mrb[0].mxu0
    %v1372 = vadd.f32 %v279, %v1371
    %v1373 = vpop.f32.mrb[0].mxu0
    %v1374 = vpop.f32.mrb[0].mxu0
    %v1375 = vadd.f32 %v279, %v1374
    %v1376 = vpop.f32.mrb[0].mxu0
    %1377 = vmatprep.mubr.bf16.mxu0 0
    %1378 = vmatmul.mubr.bf16.gmra.mrb[0].mxu0 %v772
    %v1379 = vpop.f32.mrb[0].mxu0
    %v1380 = vadd.f32 %v279, %v1379
    %v1381 = vpop.f32.mrb[0].mxu0
    %v1382 = vpop.f32.mrb[0].mxu0
    %v1383 = vadd.f32 %v279, %v1382
    %v1384 = vpop.f32.mrb[0].mxu0
    %1385 = vmatprep.mubr.bf16.mxu0 0
    %1386 = vmatmul.mubr.bf16.gmra.mrb[0].mxu0 %v773
    %v1387 = vpop.f32.mrb[0].mxu0
    %v1388 = vadd.f32 %v279, %v1387
    %v1389 = vpop.f32.mrb[0].mxu0
    %v1390 = vpop.f32.mrb[0].mxu0
    %v1391 = vadd.f32 %v279, %v1390
    %v1392 = vpop.f32.mrb[0].mxu0
    %1393 = vmatprep.mubr.bf16.mxu0 0
    %1394 = vmatmul.mubr.bf16.gmra.mrb[0].mxu0 %v774
    %v1395 = vpop.f32.mrb[0].mxu0
    %v1396 = vadd.f32 %v279, %v1395
    %v1397 = vpop.f32.mrb[0].mxu0
    %v1398 = vpop.f32.mrb[0].mxu0
    %v1399 = vadd.f32 %v279, %v1398
    %v1400 = vpop.f32.mrb[0].mxu0
    %1401 = vmatprep.mubr.bf16.mxu0 0
    %1402 = vmatmul.mubr.bf16.gmra.mrb[0].mxu0 %v775
    %v1403 = vpop.f32.mrb[0].mxu0
    %v1404 = vadd.f32 %v279, %v1403
    %v1405 = vpop.f32.mrb[0].mxu0
    %v1406 = vpop.f32.mrb[0].mxu0
    %v1407 = vadd.f32 %v279, %v1406
    %v1408 = vpop.f32.mrb[0].mxu0
    %1409 = vmatprep.mubr.bf16.mxu0 0
    %1410 = vmatmul.mubr.bf16.gmra.mrb[0].mxu0 %v776
    %v1411 = vpop.f32.mrb[0].mxu0
    %v1412 = vadd.f32 %v279, %v1411
    %v1413 = vpop.f32.mrb[0].mxu0
    %v1414 = vpop.f32.mrb[0].mxu0
    %v1415 = vadd.f32 %v279, %v1414
    %v1416 = vpop.f32.mrb[0].mxu0
    %1417 = vmatprep.mubr.bf16.mxu0 0
    %1418 = vmatmul.mubr.bf16.gmra.mrb[0].mxu0 %v777
    %v1419 = vpop.f32.mrb[0].mxu0
    %v1420 = vadd.f32 %v279, %v1419
    %v1421 = vpop.f32.mrb[0].mxu0
    %v1422 = vpop.f32.mrb[0].mxu0
    %v1423 = vadd.f32 %v279, %v1422
    %v1424 = vpop.f32.mrb[0].mxu0
    %1425 = vmatprep.mubr.bf16.mxu0 0
    %1426 = vmatmul.mubr.bf16.gmra.mrb[0].mxu0 %v778
    %v1427 = vpop.f32.mrb[0].mxu0
    %v1428 = vadd.f32 %v279, %v1427
    %v1429 = vpop.f32.mrb[0].mxu0
    %v1430 = vpop.f32.mrb[0].mxu0
    %v1431 = vadd.f32 %v279, %v1430
    %v1432 = vpop.f32.mrb[0].mxu0
    %1433 = vmatprep.mubr.bf16.mxu0 0
    %1434 = vmatmul.mubr.bf16.gmra.mrb[0].mxu0 %v779
    %v1435 = vpop.f32.mrb[0].mxu0
    %v1436 = vadd.f32 %v279, %v1435
    %v1437 = vpop.f32.mrb[0].mxu0
    %v1438 = vpop.f32.mrb[0].mxu0
    %v1439 = vadd.f32 %v279, %v1438
    %v1440 = vpop.f32.mrb[0].mxu0
    %1441 = vmatprep.mubr.bf16.mxu0 0
    %1442 = vmatmul.mubr.bf16.gmra.mrb[0].mxu0 %v780
    %v1443 = vpop.f32.mrb[0].mxu0
    %v1444 = vadd.f32 %v279, %v1443
    %v1445 = vpop.f32.mrb[0].mxu0
    %v1446 = vpop.f32.mrb[0].mxu0
    %v1447 = vadd.f32 %v279, %v1446
    %v1448 = vpop.f32.mrb[0].mxu0
    %1449 = vmatprep.mubr.bf16.mxu0 0
    %1450 = vmatmul.mubr.bf16.gmra.mrb[0].mxu0 %v781
    %v1451 = vpop.f32.mrb[0].mxu0
    %v1452 = vadd.f32 %v279, %v1451
    %v1453 = vpop.f32.mrb[0].mxu0
    %v1454 = vpop.f32.mrb[0].mxu0
    %v1455 = vadd.f32 %v279, %v1454
    %v1456 = vpop.f32.mrb[0].mxu0
    %1457 = vmatprep.mubr.bf16.mxu0 0
    %1458 = vmatmul.mubr.bf16.gmra.mrb[0].mxu0 %v782
    %v1459 = vpop.f32.mrb[0].mxu0
    %v1460 = vadd.f32 %v279, %v1459
    %v1461 = vpop.f32.mrb[0].mxu0
    %v1462 = vpop.f32.mrb[0].mxu0
    %v1463 = vadd.f32 %v279, %v1462
    %v1464 = vpop.f32.mrb[0].mxu0
    %1465 = vmatprep.mubr.bf16.mxu0 0
    %1466 = vmatmul.mubr.bf16.gmra.mrb[0].mxu0 %v783
    %v1467 = vpop.f32.mrb[0].mxu0
    %v1468 = vadd.f32 %v279, %v1467
    %v1469 = vpop.f32.mrb[0].mxu0
    %v1470 = vpop.f32.mrb[0].mxu0
    %v1471 = vadd.f32 %v279, %v1470
    %v1472 = vpop.f32.mrb[0].mxu0
    %1473 = vmatprep.mubr.bf16.mxu0 0
    %1474 = vmatmul.mubr.bf16.gmra.mrb[0].mxu0 %v784
    %v1475 = vpop.f32.mrb[0].mxu0
    %v1476 = vadd.f32 %v279, %v1475
    %v1477 = vpop.f32.mrb[0].mxu0
    %v1478 = vpop.f32.mrb[0].mxu0
    %v1479 = vadd.f32 %v279, %v1478
    %v1480 = vpop.f32.mrb[0].mxu0
    %1481 = vmatprep.mubr.bf16.mxu0 0
    %1482 = vmatmul.mubr.bf16.gmra.mrb[0].mxu0 %v785
    %v1483 = vpop.f32.mrb[0].mxu0
    %v1484 = vadd.f32 %v279, %v1483
    %v1485 = vpop.f32.mrb[0].mxu0
    %v1486 = vpop.f32.mrb[0].mxu0
    %v1487 = vadd.f32 %v279, %v1486
    %v1488 = vpop.f32.mrb[0].mxu0
    %1489 = vmatprep.mubr.bf16.mxu0 0
    %1490 = vmatmul.mubr.bf16.gmra.mrb[0].mxu0 %v786
    %v1491 = vpop.f32.mrb[0].mxu0
    %v1492 = vadd.f32 %v279, %v1491
    %v1493 = vpop.f32.mrb[0].mxu0
    %v1494 = vpop.f32.mrb[0].mxu0
    %v1495 = vadd.f32 %v279, %v1494
    %v1496 = vpop.f32.mrb[0].mxu0
    %1497 = vmatprep.mubr.bf16.mxu0 0
    %1498 = vmatmul.mubr.bf16.gmra.mrb[0].mxu0 %v787
    %v1499 = vpop.f32.mrb[0].mxu0
    %v1500 = vadd.f32 %v279, %v1499
    %v1501 = vpop.f32.mrb[0].mxu0
    %v1502 = vpop.f32.mrb[0].mxu0
    %v1503 = vadd.f32 %v279, %v1502
    %v1504 = vpop.f32.mrb[0].mxu0
    %1505 = vmatprep.mubr.bf16.mxu0 0
    %1506 = vmatmul.mubr.bf16.gmra.mrb[0].mxu0 %v788
    %v1507 = vpop.f32.mrb[0].mxu0
    %v1508 = vadd.f32 %v279, %v1507
    %v1509 = vpop.f32.mrb[0].mxu0
    %v1510 = vpop.f32.mrb[0].mxu0
    %v1511 = vadd.f32 %v279, %v1510
    %v1512 = vpop.f32.mrb[0].mxu0
    %1513 = vmatprep.mubr.bf16.mxu0 0
    %1514 = vmatmul.mubr.bf16.gmra.mrb[0].mxu0 %v789
    %v1515 = vpop.f32.mrb[0].mxu0
    %v1516 = vadd.f32 %v279, %v1515
    %v1517 = vpop.f32.mrb[0].mxu0
    %v1518 = vpop.f32.mrb[0].mxu0
    %v1519 = vadd.f32 %v279, %v1518
    %v1520 = vpop.f32.mrb[0].mxu0
    %1521 = vmatprep.mubr.bf16.mxu0 0
    %1522 = vmatmul.mubr.bf16.gmra.mrb[0].mxu0 %v790
    %v1523 = vpop.f32.mrb[0].mxu0
    %v1524 = vadd.f32 %v279, %v1523
    %v1525 = vpop.f32.mrb[0].mxu0
    %v1526 = vpop.f32.mrb[0].mxu0
    %v1527 = vadd.f32 %v279, %v1526
    %v1528 = vpop.f32.mrb[0].mxu0
    %1529 = vmatprep.mubr.bf16.mxu0 0
    %1530 = vmatmul.mubr.bf16.gmra.mrb[0].mxu0 %v791
    %v1531 = vpop.f32.mrb[0].mxu0
    %v1532 = vadd.f32 %v279, %v1531
    %v1533 = vpop.f32.mrb[0].mxu0
    %v1534 = vpop.f32.mrb[0].mxu0
    %v1535 = vadd.f32 %v279, %v1534
    %v1536 = vpop.f32.mrb[0].mxu0
    %1537 = vmatprep.mubr.bf16.mxu0 0
    %1538 = vmatmul.mubr.bf16.gmra.mrb[0].mxu0 %v792
    %v1539 = vpop.f32.mrb[0].mxu0
    %v1540 = vadd.f32 %v279, %v1539
    %v1541 = vpop.f32.mrb[0].mxu0
    %v1542 = vpop.f32.mrb[0].mxu0
    %v1543 = vadd.f32 %v279, %v1542
    %v1544 = vpop.f32.mrb[0].mxu0
    %1545 = vmatprep.mubr.bf16.mxu0 0
    %1546 = vmatmul.mubr.bf16.gmra.mrb[0].mxu0 %v793
    %v1547 = vpop.f32.mrb[0].mxu0
    %v1548 = vadd.f32 %v279, %v1547
    %v1549 = vpop.f32.mrb[0].mxu0
    %v1550 = vpop.f32.mrb[0].mxu0
    %v1551 = vadd.f32 %v279, %v1550
    %v1552 = vpop.f32.mrb[0].mxu0
    %1553 = vmatprep.mubr.bf16.mxu0 0
    %1554 = vmatmul.mubr.bf16.gmra.mrb[0].mxu0 %v794
    %v1555 = vpop.f32.mrb[0].mxu0
    %v1556 = vadd.f32 %v279, %v1555
    %v1557 = vpop.f32.mrb[0].mxu0
    %v1558 = vpop.f32.mrb[0].mxu0
    %v1559 = vadd.f32 %v279, %v1558
    %v1560 = vpop.f32.mrb[0].mxu0
    %1561 = vmatprep.mubr.bf16.mxu0 0
    %1562 = vmatmul.mubr.bf16.gmra.mrb[0].mxu0 %v795
    %v1563 = vpop.f32.mrb[0].mxu0
    %v1564 = vadd.f32 %v279, %v1563
    %v1565 = vpop.f32.mrb[0].mxu0
    %v1566 = vpop.f32.mrb[0].mxu0
    %v1567 = vadd.f32 %v279, %v1566
    %v1568 = vpop.f32.mrb[0].mxu0
    %1569 = vmatprep.mubr.bf16.mxu0 0
    %1570 = vmatmul.mubr.bf16.gmra.mrb[0].mxu0 %v796
    %v1571 = vpop.f32.mrb[0].mxu0
    %v1572 = vadd.f32 %v279, %v1571
    %v1573 = vpop.f32.mrb[0].mxu0
    %v1574 = vpop.f32.mrb[0].mxu0
    %v1575 = vadd.f32 %v279, %v1574
    %v1576 = vpop.f32.mrb[0].mxu0
    %1577 = vmatprep.mubr.bf16.mxu0 0
    %1578 = vmatmul.mubr.bf16.gmra.mrb[0].mxu0 %v797
    %v1579 = vpop.f32.mrb[0].mxu0
    %v1580 = vadd.f32 %v279, %v1579
    %v1581 = vpop.f32.mrb[0].mxu0
    %v1582 = vpop.f32.mrb[0].mxu0
    %v1583 = vadd.f32 %v279, %v1582
    %v1584 = vpop.f32.mrb[0].mxu0
    %1585 = vmatprep.mubr.bf16.mxu0 0
    %1586 = vmatmul.mubr.bf16.gmra.mrb[0].mxu0 %v798
    %v1587 = vpop.f32.mrb[0].mxu0
    %v1588 = vadd.f32 %v279, %v1587
    %v1589 = vpop.f32.mrb[0].mxu0
    %v1590 = vpop.f32.mrb[0].mxu0
    %v1591 = vadd.f32 %v279, %v1590
    %v1592 = vpop.f32.mrb[0].mxu0
    %1593 = vmatprep.mubr.bf16.mxu0 0
    %1594 = vmatmul.mubr.bf16.gmra.mrb[0].mxu0 %v799
    %v1595 = vpop.f32.mrb[0].mxu0
    %v1596 = vadd.f32 %v279, %v1595
    %v1597 = vpop.f32.mrb[0].mxu0
    %v1598 = vpop.f32.mrb[0].mxu0
    %v1599 = vadd.f32 %v279, %v1598
    %v1600 = vpop.f32.mrb[0].mxu0
    %1601 = vmatprep.mubr.bf16.mxu0 0
    %1602 = vmatmul.mubr.bf16.gmra.mrb[0].mxu0 %v800
    %v1603 = vpop.f32.mrb[0].mxu0
    %v1604 = vadd.f32 %v279, %v1603
    %v1605 = vpop.f32.mrb[0].mxu0
    %v1606 = vpop.f32.mrb[0].mxu0
    %v1607 = vadd.f32 %v279, %v1606
    %v1608 = vpop.f32.mrb[0].mxu0
    %1609 = vmatprep.mubr.bf16.mxu0 0
    %1610 = vmatmul.mubr.bf16.gmra.mrb[0].mxu0 %v801
    %v1611 = vpop.f32.mrb[0].mxu0
    %v1612 = vadd.f32 %v279, %v1611
    %v1613 = vpop.f32.mrb[0].mxu0
    %v1614 = vpop.f32.mrb[0].mxu0
    %v1615 = vadd.f32 %v279, %v1614
    %v1616 = vpop.f32.mrb[0].mxu0
    %1617 = vmatprep.mubr.bf16.mxu0 0
    %1618 = vmatmul.mubr.bf16.gmra.mrb[0].mxu0 %v802
    %v1619 = vpop.f32.mrb[0].mxu0
    %v1620 = vadd.f32 %v279, %v1619
    %v1621 = vpop.f32.mrb[0].mxu0
    %v1622 = vpop.f32.mrb[0].mxu0
    %v1623 = vadd.f32 %v279, %v1622
    %v1624 = vpop.f32.mrb[0].mxu0
    %1625 = vmatprep.mubr.bf16.mxu0 0
    %1626 = vmatmul.mubr.bf16.gmra.mrb[0].mxu0 %v803
    %v1627 = vpop.f32.mrb[0].mxu0
    %v1628 = vadd.f32 %v279, %v1627
    %v1629 = vpop.f32.mrb[0].mxu0
    %v1630 = vpop.f32.mrb[0].mxu0
    %v1631 = vadd.f32 %v279, %v1630
    %v1632 = vpop.f32.mrb[0].mxu0
    %1633 = vmatprep.mubr.bf16.mxu0 0
    %1634 = vmatmul.mubr.bf16.gmra.mrb[0].mxu0 %v804
    %v1635 = vpop.f32.mrb[0].mxu0
    %v1636 = vadd.f32 %v279, %v1635
    %v1637 = vpop.f32.mrb[0].mxu0
    %v1638 = vpop.f32.mrb[0].mxu0
    %v1639 = vadd.f32 %v279, %v1638
    %v1640 = vpop.f32.mrb[0].mxu0
    %1641 = vmatprep.mubr.bf16.mxu0 0
    %1642 = vmatmul.mubr.bf16.gmra.mrb[0].mxu0 %v805
    %v1643 = vpop.f32.mrb[0].mxu0
    %v1644 = vadd.f32 %v279, %v1643
    %v1645 = vpop.f32.mrb[0].mxu0
    %v1646 = vpop.f32.mrb[0].mxu0
    %v1647 = vadd.f32 %v279, %v1646
    %v1648 = vpop.f32.mrb[0].mxu0
    %1649 = vmatprep.mubr.bf16.mxu0 0
    %1650 = vmatmul.mubr.bf16.gmra.mrb[0].mxu0 %v806
    %v1651 = vpop.f32.mrb[0].mxu0
    %v1652 = vadd.f32 %v279, %v1651
    %v1653 = vpop.f32.mrb[0].mxu0
    %v1654 = vpop.f32.mrb[0].mxu0
    %v1655 = vadd.f32 %v279, %v1654
    %v1656 = vpop.f32.mrb[0].mxu0
    %1657 = vmatprep.mubr.bf16.mxu0 0
    %1658 = vmatmul.mubr.bf16.gmra.mrb[0].mxu0 %v807
    %v1659 = vpop.f32.mrb[0].mxu0
    %v1660 = vadd.f32 %v279, %v1659
    %v1661 = vpop.f32.mrb[0].mxu0
    %v1662 = vpop.f32.mrb[0].mxu0
    %v1663 = vadd.f32 %v279, %v1662
    %v1664 = vpop.f32.mrb[0].mxu0
    %1665 = vmatprep.mubr.bf16.mxu0 0
    %1666 = vmatmul.mubr.bf16.gmra.mrb[0].mxu0 %v808
    %v1667 = vpop.f32.mrb[0].mxu0
    %v1668 = vadd.f32 %v279, %v1667
    %v1669 = vpop.f32.mrb[0].mxu0
    %v1670 = vpop.f32.mrb[0].mxu0
    %v1671 = vadd.f32 %v279, %v1670
    %v1672 = vpop.f32.mrb[0].mxu0
    %1673 = vmatprep.mubr.bf16.mxu0 0
    %1674 = vmatmul.mubr.bf16.gmra.mrb[0].mxu0 %v809
    %v1675 = vpop.f32.mrb[0].mxu0
    %v1676 = vadd.f32 %v279, %v1675
    %v1677 = vpop.f32.mrb[0].mxu0
    %v1678 = vpop.f32.mrb[0].mxu0
    %v1679 = vadd.f32 %v279, %v1678
    %v1680 = vpop.f32.mrb[0].mxu0
    %1681 = vmatprep.mubr.bf16.mxu0 0
    %1682 = vmatmul.mubr.bf16.gmra.mrb[0].mxu0 %v810
    %v1683 = vpop.f32.mrb[0].mxu0
    %v1684 = vadd.f32 %v279, %v1683
    %v1685 = vpop.f32.mrb[0].mxu0
    %v1686 = vpop.f32.mrb[0].mxu0
    %v1687 = vadd.f32 %v279, %v1686
    %v1688 = vpop.f32.mrb[0].mxu0
    %1689 = vmatprep.mubr.bf16.mxu0 0
    %1690 = vmatmul.mubr.bf16.gmra.mrb[0].mxu0 %v811
    %v1691 = vpop.f32.mrb[0].mxu0
    %v1692 = vadd.f32 %v279, %v1691
    %v1693 = vpop.f32.mrb[0].mxu0
    %v1694 = vpop.f32.mrb[0].mxu0
    %v1695 = vadd.f32 %v279, %v1694
    %v1696 = vpop.f32.mrb[0].mxu0
    %1697 = vmatprep.mubr.bf16.mxu0 0
    %1698 = vmatmul.mubr.bf16.gmra.mrb[0].mxu0 %v812
    %v1699 = vpop.f32.mrb[0].mxu0
    %v1700 = vadd.f32 %v279, %v1699
    %v1701 = vpop.f32.mrb[0].mxu0
    %v1702 = vpop.f32.mrb[0].mxu0
    %v1703 = vadd.f32 %v279, %v1702
    %v1704 = vpop.f32.mrb[0].mxu0
    %1705 = vmatprep.mubr.bf16.mxu0 0
    %1706 = vmatmul.mubr.bf16.gmra.mrb[0].mxu0 %v813
    %v1707 = vpop.f32.mrb[0].mxu0
    %v1708 = vadd.f32 %v279, %v1707
    %v1709 = vpop.f32.mrb[0].mxu0
    %v1710 = vpop.f32.mrb[0].mxu0
    %v1711 = vadd.f32 %v279, %v1710
    %v1712 = vpop.f32.mrb[0].mxu0
    %1713 = vmatprep.mubr.bf16.mxu0 0
    %1714 = vmatmul.mubr.bf16.gmra.mrb[0].mxu0 %v814
    %v1715 = vpop.f32.mrb[0].mxu0
    %v1716 = vadd.f32 %v279, %v1715
    %v1717 = vpop.f32.mrb[0].mxu0
    %v1718 = vpop.f32.mrb[0].mxu0
    %v1719 = vadd.f32 %v279, %v1718
    %v1720 = vpop.f32.mrb[0].mxu0
    %1721 = vmatprep.mubr.bf16.mxu0 0
    %1722 = vmatmul.mubr.bf16.gmra.mrb[0].mxu0 %v815
    %v1723 = vpop.f32.mrb[0].mxu0
    %v1724 = vadd.f32 %v279, %v1723
    %v1725 = vpop.f32.mrb[0].mxu0
    %v1726 = vpop.f32.mrb[0].mxu0
    %v1727 = vadd.f32 %v279, %v1726
    %v1728 = vpop.f32.mrb[0].mxu0
    %1729 = vmatprep.mubr.bf16.mxu0 0
    %1730 = vmatmul.mubr.bf16.gmra.mrb[0].mxu0 %v816
    %v1731 = vpop.f32.mrb[0].mxu0
    %v1732 = vadd.f32 %v279, %v1731
    %v1733 = vpop.f32.mrb[0].mxu0
    %v1734 = vpop.f32.mrb[0].mxu0
    %v1735 = vadd.f32 %v279, %v1734
    %v1736 = vpop.f32.mrb[0].mxu0
    %1737 = vmatprep.mubr.bf16.mxu0 0
    %1738 = vmatmul.mubr.bf16.gmra.mrb[0].mxu0 %v817
    %v1739 = vpop.f32.mrb[0].mxu0
    %v1740 = vadd.f32 %v279, %v1739
    %v1741 = vpop.f32.mrb[0].mxu0
    %v1742 = vpop.f32.mrb[0].mxu0
    %v1743 = vadd.f32 %v279, %v1742
    %v1744 = vpop.f32.mrb[0].mxu0
    %1745 = vmatprep.mubr.bf16.mxu0 0
    %1746 = vmatmul.mubr.bf16.gmra.mrb[0].mxu0 %v818
    %v1747 = vpop.f32.mrb[0].mxu0
    %v1748 = vadd.f32 %v279, %v1747
    %v1749 = vpop.f32.mrb[0].mxu0
    %v1750 = vpop.f32.mrb[0].mxu0
    %v1751 = vadd.f32 %v279, %v1750
    %v1752 = vpop.f32.mrb[0].mxu0
    %1753 = vmatprep.mubr.bf16.mxu0 0
    %1754 = vmatmul.mubr.bf16.gmra.mrb[0].mxu0 %v819
    %v1755 = vpop.f32.mrb[0].mxu0
    %v1756 = vadd.f32 %v279, %v1755
    %v1757 = vpop.f32.mrb[0].mxu0
    %v1758 = vpop.f32.mrb[0].mxu0
    %v1759 = vadd.f32 %v279, %v1758
    %v1760 = vpop.f32.mrb[0].mxu0
    %1761 = vmatprep.mubr.bf16.mxu0 0
    %1762 = vmatmul.mubr.bf16.gmra.mrb[0].mxu0 %v820
    %v1763 = vpop.f32.mrb[0].mxu0
    %v1764 = vadd.f32 %v279, %v1763
    %v1765 = vpop.f32.mrb[0].mxu0
    %v1766 = vpop.f32.mrb[0].mxu0
    %v1767 = vadd.f32 %v279, %v1766
    %v1768 = vpop.f32.mrb[0].mxu0
    %1769 = vmatprep.mubr.bf16.mxu0 0
    %1770 = vmatmul.mubr.bf16.gmra.mrb[0].mxu0 %v821
    %v1771 = vpop.f32.mrb[0].mxu0
    %v1772 = vadd.f32 %v279, %v1771
    %v1773 = vpop.f32.mrb[0].mxu0
    %v1774 = vpop.f32.mrb[0].mxu0
    %v1775 = vadd.f32 %v279, %v1774
    %v1776 = vpop.f32.mrb[0].mxu0
    %1777 = vmatprep.mubr.bf16.mxu0 0
    %1778 = vmatmul.mubr.bf16.gmra.mrb[0].mxu0 %v822
    %v1779 = vpop.f32.mrb[0].mxu0
    %v1780 = vadd.f32 %v279, %v1779
    %v1781 = vpop.f32.mrb[0].mxu0
    %v1782 = vpop.f32.mrb[0].mxu0
    %v1783 = vadd.f32 %v279, %v1782
    %v1784 = vpop.f32.mrb[0].mxu0
    %1785 = vmatprep.mubr.bf16.mxu0 0
    %1786 = vmatmul.mubr.bf16.gmra.mrb[0].mxu0 %v823
    %v1787 = vpop.f32.mrb[0].mxu0
    %v1788 = vadd.f32 %v279, %v1787
    %v1789 = vpop.f32.mrb[0].mxu0
    %v1790 = vpop.f32.mrb[0].mxu0
    %v1791 = vadd.f32 %v279, %v1790
    %v1792 = vpop.f32.mrb[0].mxu0
    %1793 = vmatprep.mubr.bf16.mxu0 0
    %1794 = vmatmul.mubr.bf16.gmra.mrb[0].mxu0 %v824
    %v1795 = vpop.f32.mrb[0].mxu0
    %v1796 = vadd.f32 %v279, %v1795
    %v1797 = vpop.f32.mrb[0].mxu0
    %v1798 = vpop.f32.mrb[0].mxu0
    %v1799 = vadd.f32 %v279, %v1798
    %v1800 = vpop.f32.mrb[0].mxu0
    %1801 = vmatprep.mubr.bf16.mxu0 0
    %1802 = vmatmul.mubr.bf16.gmra.mrb[0].mxu0 %v825
    %v1803 = vpop.f32.mrb[0].mxu0
    %v1804 = vadd.f32 %v279, %v1803
    %v1805 = vpop.f32.mrb[0].mxu0
    %v1806 = vpop.f32.mrb[0].mxu0
    %v1807 = vadd.f32 %v279, %v1806
    %v1808 = vpop.f32.mrb[0].mxu0
    %1809 = vmatprep.mubr.bf16.mxu0 0
    %1810 = vmatmul.mubr.bf16.gmra.mrb[0].mxu0 %v826
    %v1811 = vpop.f32.mrb[0].mxu0
    %v1812 = vadd.f32 %v279, %v1811
    %v1813 = vpop.f32.mrb[0].mxu0
    %v1814 = vpop.f32.mrb[0].mxu0
    %v1815 = vadd.f32 %v279, %v1814
    %v1816 = vpop.f32.mrb[0].mxu0
    %1817 = vmatprep.mubr.bf16.mxu0 0
    %1818 = vmatmul.mubr.bf16.gmra.mrb[0].mxu0 %v827
    %v1819 = vpop.f32.mrb[0].mxu0
    %v1820 = vadd.f32 %v279, %v1819
    %v1821 = vpop.f32.mrb[0].mxu0
    %v1822 = vpop.f32.mrb[0].mxu0
    %v1823 = vadd.f32 %v279, %v1822
    %v1824 = vpop.f32.mrb[0].mxu0
    %1825 = vmatprep.mubr.bf16.mxu0 0
    %1826 = vmatmul.mubr.bf16.gmra.mrb[0].mxu0 %v828
    %v1827 = vpop.f32.mrb[0].mxu0
    %v1828 = vadd.f32 %v279, %v1827
    %v1829 = vpop.f32.mrb[0].mxu0
    %v1830 = vpop.f32.mrb[0].mxu0
    %v1831 = vadd.f32 %v279, %v1830
    %v1832 = vpop.f32.mrb[0].mxu0
    %1833 = vmatprep.mubr.bf16.mxu0 0
    %1834 = vmatmul.mubr.bf16.gmra.mrb[0].mxu0 %v829
    %v1835 = vpop.f32.mrb[0].mxu0
    %v1836 = vadd.f32 %v279, %v1835
    %v1837 = vpop.f32.mrb[0].mxu0
    %v1838 = vpop.f32.mrb[0].mxu0
    %v1839 = vadd.f32 %v279, %v1838
    %v1840 = vpop.f32.mrb[0].mxu0
    %1841 = vmatprep.mubr.bf16.mxu0 0
    %1842 = vmatmul.mubr.bf16.gmra.mrb[0].mxu0 %v830
    %v1843 = vpop.f32.mrb[0].mxu0
    %v1844 = vadd.f32 %v279, %v1843
    %v1845 = vpop.f32.mrb[0].mxu0
    %v1846 = vpop.f32.mrb[0].mxu0
    %v1847 = vadd.f32 %v279, %v1846
    %v1848 = vpop.f32.mrb[0].mxu0
    %1849 = vmatprep.mubr.bf16.mxu0 0
    %1850 = vmatmul.mubr.bf16.gmra.mrb[0].mxu0 %v831
    %v1851 = vpop.f32.mrb[0].mxu0
    %v1852 = vadd.f32 %v279, %v1851
    %v1853 = vpop.f32.mrb[0].mxu0
    %v1854 = vpop.f32.mrb[0].mxu0
    %v1855 = vadd.f32 %v279, %v1854
    %v1856 = vpop.f32.mrb[0].mxu0
    %1857 = vmatprep.mubr.bf16.mxu0 0
    %1858 = vmatmul.mubr.bf16.gmra.mrb[0].mxu0 %v832
    %v1859 = vpop.f32.mrb[0].mxu0
    %v1860 = vadd.f32 %v279, %v1859
    %v1861 = vpop.f32.mrb[0].mxu0
    %v1862 = vpop.f32.mrb[0].mxu0
    %v1863 = vadd.f32 %v279, %v1862
    %v1864 = vpop.f32.mrb[0].mxu0
    %1865 = vmatprep.mubr.bf16.mxu0 0
    %1866 = vmatmul.mubr.bf16.gmra.mrb[0].mxu0 %v833
    %v1867 = vpop.f32.mrb[0].mxu0
    %v1868 = vadd.f32 %v279, %v1867
    %v1869 = vpop.f32.mrb[0].mxu0
    %v1870 = vpop.f32.mrb[0].mxu0
    %v1871 = vadd.f32 %v279, %v1870
    %v1872 = vpop.f32.mrb[0].mxu0
    %1873 = vmatprep.mubr.bf16.mxu0 0
    %1874 = vmatmul.mubr.bf16.gmra.mrb[0].mxu0 %v834
    %v1875 = vpop.f32.mrb[0].mxu0
    %v1876 = vadd.f32 %v279, %v1875
    %v1877 = vpop.f32.mrb[0].mxu0
    %v1878 = vpop.f32.mrb[0].mxu0
    %v1879 = vadd.f32 %v279, %v1878
    %v1880 = vpop.f32.mrb[0].mxu0
    %1881 = vmatprep.mubr.bf16.mxu0 0
    %1882 = vmatmul.mubr.bf16.gmra.mrb[0].mxu0 %v835
    %v1883 = vpop.f32.mrb[0].mxu0
    %v1884 = vadd.f32 %v279, %v1883
    %v1885 = vpop.f32.mrb[0].mxu0
    %v1886 = vpop.f32.mrb[0].mxu0
    %v1887 = vadd.f32 %v279, %v1886
    %v1888 = vpop.f32.mrb[0].mxu0
    %1889 = vmatprep.mubr.bf16.mxu0 0
    %1890 = vmatmul.mubr.bf16.gmra.mrb[0].mxu0 %v836
    %v1891 = vpop.f32.mrb[0].mxu0
    %v1892 = vadd.f32 %v279, %v1891
    %v1893 = vpop.f32.mrb[0].mxu0
    %v1894 = vpop.f32.mrb[0].mxu0
    %v1895 = vadd.f32 %v279, %v1894
    %v1896 = vpop.f32.mrb[0].mxu0
    %1897 = vmatprep.mubr.bf16.mxu0 0
    %1898 = vmatmul.mubr.bf16.gmra.mrb[0].mxu0 %v837
    %v1899 = vpop.f32.mrb[0].mxu0
    %v1900 = vadd.f32 %v279, %v1899
    %v1901 = vpop.f32.mrb[0].mxu0
    %v1902 = vpop.f32.mrb[0].mxu0
    %v1903 = vadd.f32 %v279, %v1902
    %v1904 = vpop.f32.mrb[0].mxu0
    %1905 = vmatprep.mubr.bf16.mxu0 0
    %1906 = vmatmul.mubr.bf16.gmra.mrb[0].mxu0 %v838
    %v1907 = vpop.f32.mrb[0].mxu0
    %v1908 = vadd.f32 %v279, %v1907
    %v1909 = vpop.f32.mrb[0].mxu0
    %v1910 = vpop.f32.mrb[0].mxu0
    %v1911 = vadd.f32 %v279, %v1910
    %v1912 = vpop.f32.mrb[0].mxu0
    %1913 = vmatprep.mubr.bf16.mxu0 0
    %1914 = vmatmul.mubr.bf16.gmra.mrb[0].mxu0 %v839
    %v1915 = vpop.f32.mrb[0].mxu0
    %v1916 = vadd.f32 %v279, %v1915
    %v1917 = vpop.f32.mrb[0].mxu0
    %v1918 = vpop.f32.mrb[0].mxu0
    %v1919 = vadd.f32 %v279, %v1918
    %v1920 = vpop.f32.mrb[0].mxu0
    %1921 = vmatprep.mubr.bf16.mxu0 0
    %1922 = vmatmul.mubr.bf16.gmra.mrb[0].mxu0 %v840
    %v1923 = vpop.f32.mrb[0].mxu0
    %v1924 = vadd.f32 %v279, %v1923
    %v1925 = vpop.f32.mrb[0].mxu0
    %v1926 = vpop.f32.mrb[0].mxu0
    %v1927 = vadd.f32 %v279, %v1926
    %v1928 = vpop.f32.mrb[0].mxu0
    %1929 = vdwg.mxu0
    %v1930 = vmax.f32 %v1036, 0.0
    %v1931 = vmax.f32 %v1039, 0.0
    %v1932 = vmax.f32 %v1044, 0.0
    %v1933 = vmax.f32 %v1047, 0.0
    %v1934 = vmax.f32 %v1052, 0.0
    %v1935 = vmax.f32 %v1055, 0.0
    %v1936 = vmax.f32 %v1060, 0.0
    %v1937 = vmax.f32 %v1063, 0.0
    %v1938 = vmax.f32 %v1068, 0.0
    %v1939 = vmax.f32 %v1071, 0.0
    %v1940 = vmax.f32 %v1076, 0.0
    %v1941 = vmax.f32 %v1079, 0.0
    %v1942 = vmax.f32 %v1084, 0.0
    %v1943 = vmax.f32 %v1087, 0.0
    %v1944 = vmax.f32 %v1092, 0.0
    %v1945 = vmax.f32 %v1095, 0.0
    %v1946 = vmax.f32 %v1100, 0.0
    %v1947 = vmax.f32 %v1103, 0.0
    %v1948 = vmax.f32 %v1108, 0.0
    %v1949 = vmax.f32 %v1111, 0.0
    %v1950 = vmax.f32 %v1116, 0.0
    %v1951 = vmax.f32 %v1119, 0.0
    %v1952 = vmax.f32 %v1124, 0.0
    %v1953 = vmax.f32 %v1127, 0.0
    %v1954 = vmax.f32 %v1132, 0.0
    %v1955 = vmax.f32 %v1135, 0.0
    %v1956 = vmax.f32 %v1140, 0.0
    %v1957 = vmax.f32 %v1143, 0.0
    %v1958 = vmax.f32 %v1148, 0.0
    %v1959 = vmax.f32 %v1151, 0.0
    %v1960 = vmax.f32 %v1156, 0.0
    %v1961 = vmax.f32 %v1159, 0.0
    %v1962 = vmax.f32 %v1164, 0.0
    %v1963 = vmax.f32 %v1167, 0.0
    %v1964 = vmax.f32 %v1172, 0.0
    %v1965 = vmax.f32 %v1175, 0.0
    %v1966 = vmax.f32 %v1180, 0.0
    %v1967 = vmax.f32 %v1183, 0.0
    %v1968 = vmax.f32 %v1188, 0.0
    %v1969 = vmax.f32 %v1191, 0.0
    %v1970 = vmax.f32 %v1196, 0.0
    %v1971 = vmax.f32 %v1199, 0.0
    %v1972 = vmax.f32 %v1204, 0.0
    %v1973 = vmax.f32 %v1207, 0.0
    %v1974 = vmax.f32 %v1212, 0.0
    %v1975 = vmax.f32 %v1215, 0.0
    %v1976 = vmax.f32 %v1220, 0.0
    %v1977 = vmax.f32 %v1223, 0.0
    %v1978 = vmax.f32 %v1228, 0.0
    %v1979 = vmax.f32 %v1231, 0.0
    %v1980 = vmax.f32 %v1236, 0.0
    %v1981 = vmax.f32 %v1239, 0.0
    %v1982 = vmax.f32 %v1244, 0.0
    %v1983 = vmax.f32 %v1247, 0.0
    %v1984 = vmax.f32 %v1252, 0.0
    %v1985 = vmax.f32 %v1255, 0.0
    %v1986 = vmax.f32 %v1260, 0.0
    %v1987 = vmax.f32 %v1263, 0.0
    %v1988 = vmax.f32 %v1268, 0.0
    %v1989 = vmax.f32 %v1271, 0.0
    %v1990 = vmax.f32 %v1276, 0.0
    %v1991 = vmax.f32 %v1279, 0.0
    %v1992 = vmax.f32 %v1284, 0.0
    %v1993 = vmax.f32 %v1287, 0.0
    %v1994 = vmax.f32 %v1292, 0.0
    %v1995 = vmax.f32 %v1295, 0.0
    %v1996 = vmax.f32 %v1300, 0.0
    %v1997 = vmax.f32 %v1303, 0.0
    %v1998 = vmax.f32 %v1308, 0.0
    %v1999 = vmax.f32 %v1311, 0.0
    %v2000 = vmax.f32 %v1316, 0.0
    %v2001 = vmax.f32 %v1319, 0.0
    %v2002 = vmax.f32 %v1324, 0.0
    %v2003 = vmax.f32 %v1327, 0.0
    %v2004 = vmax.f32 %v1332, 0.0
    %v2005 = vmax.f32 %v1335, 0.0
    %v2006 = vmax.f32 %v1340, 0.0
    %v2007 = vmax.f32 %v1343, 0.0
    %v2008 = vmax.f32 %v1348, 0.0
    %v2009 = vmax.f32 %v1351, 0.0
    %v2010 = vmax.f32 %v1356, 0.0
    %v2011 = vmax.f32 %v1359, 0.0
    %v2012 = vmax.f32 %v1364, 0.0
    %v2013 = vmax.f32 %v1367, 0.0
    %v2014 = vmax.f32 %v1372, 0.0
    %v2015 = vmax.f32 %v1375, 0.0
    %v2016 = vmax.f32 %v1380, 0.0
    %v2017 = vmax.f32 %v1383, 0.0
    %v2018 = vmax.f32 %v1388, 0.0
    %v2019 = vmax.f32 %v1391, 0.0
    %v2020 = vmax.f32 %v1396, 0.0
    %v2021 = vmax.f32 %v1399, 0.0
    %v2022 = vmax.f32 %v1404, 0.0
    %v2023 = vmax.f32 %v1407, 0.0
    %v2024 = vmax.f32 %v1412, 0.0
    %v2025 = vmax.f32 %v1415, 0.0
    %v2026 = vmax.f32 %v1420, 0.0
    %v2027 = vmax.f32 %v1423, 0.0
    %v2028 = vmax.f32 %v1428, 0.0
    %v2029 = vmax.f32 %v1431, 0.0
    %v2030 = vmax.f32 %v1436, 0.0
    %v2031 = vmax.f32 %v1439, 0.0
    %v2032 = vmax.f32 %v1444, 0.0
    %v2033 = vmax.f32 %v1447, 0.0
    %v2034 = vmax.f32 %v1452, 0.0
    %v2035 = vmax.f32 %v1455, 0.0
    %v2036 = vmax.f32 %v1460, 0.0
    %v2037 = vmax.f32 %v1463, 0.0
    %v2038 = vmax.f32 %v1468, 0.0
    %v2039 = vmax.f32 %v1471, 0.0
    %v2040 = vmax.f32 %v1476, 0.0
    %v2041 = vmax.f32 %v1479, 0.0
    %v2042 = vmax.f32 %v1484, 0.0
    %v2043 = vmax.f32 %v1487, 0.0
    %v2044 = vmax.f32 %v1492, 0.0
    %v2045 = vmax.f32 %v1495, 0.0
    %v2046 = vmax.f32 %v1500, 0.0
    %v2047 = vmax.f32 %v1503, 0.0
    %v2048 = vmax.f32 %v1508, 0.0
    %v2049 = vmax.f32 %v1511, 0.0
    %v2050 = vmax.f32 %v1516, 0.0
    %v2051 = vmax.f32 %v1519, 0.0
    %v2052 = vmax.f32 %v1524, 0.0
    %v2053 = vmax.f32 %v1527, 0.0
    %v2054 = vmax.f32 %v1532, 0.0
    %v2055 = vmax.f32 %v1535, 0.0
    %v2056 = vmax.f32 %v1540, 0.0
    %v2057 = vmax.f32 %v1543, 0.0
    %v2058 = vmax.f32 %v1548, 0.0
    %v2059 = vmax.f32 %v1551, 0.0
    %v2060 = vmax.f32 %v1556, 0.0
    %v2061 = vmax.f32 %v1559, 0.0
    %v2062 = vmax.f32 %v1564, 0.0
    %v2063 = vmax.f32 %v1567, 0.0
    %v2064 = vmax.f32 %v1572, 0.0
    %v2065 = vmax.f32 %v1575, 0.0
    %v2066 = vmax.f32 %v1580, 0.0
    %v2067 = vmax.f32 %v1583, 0.0
    %v2068 = vmax.f32 %v1588, 0.0
    %v2069 = vmax.f32 %v1591, 0.0
    %v2070 = vmax.f32 %v1596, 0.0
    %v2071 = vmax.f32 %v1599, 0.0
    %v2072 = vmax.f32 %v1604, 0.0
    %v2073 = vmax.f32 %v1607, 0.0
    %v2074 = vmax.f32 %v1612, 0.0
    %v2075 = vmax.f32 %v1615, 0.0
    %v2076 = vmax.f32 %v1620, 0.0
    %v2077 = vmax.f32 %v1623, 0.0
    %v2078 = vmax.f32 %v1628, 0.0
    %v2079 = vmax.f32 %v1631, 0.0
    %v2080 = vmax.f32 %v1636, 0.0
    %v2081 = vmax.f32 %v1639, 0.0
    %v2082 = vmax.f32 %v1644, 0.0
    %v2083 = vmax.f32 %v1647, 0.0
    %v2084 = vmax.f32 %v1652, 0.0
    %v2085 = vmax.f32 %v1655, 0.0
    %v2086 = vmax.f32 %v1660, 0.0
    %v2087 = vmax.f32 %v1663, 0.0
    %v2088 = vmax.f32 %v1668, 0.0
    %v2089 = vmax.f32 %v1671, 0.0
    %v2090 = vmax.f32 %v1676, 0.0
    %v2091 = vmax.f32 %v1679, 0.0
    %v2092 = vmax.f32 %v1684, 0.0
    %v2093 = vmax.f32 %v1687, 0.0
    %v2094 = vmax.f32 %v1692, 0.0
    %v2095 = vmax.f32 %v1695, 0.0
    %v2096 = vmax.f32 %v1700, 0.0
    %v2097 = vmax.f32 %v1703, 0.0
    %v2098 = vmax.f32 %v1708, 0.0
    %v2099 = vmax.f32 %v1711, 0.0
    %v2100 = vmax.f32 %v1716, 0.0
    %v2101 = vmax.f32 %v1719, 0.0
    %v2102 = vmax.f32 %v1724, 0.0
    %v2103 = vmax.f32 %v1727, 0.0
    %v2104 = vmax.f32 %v1732, 0.0
    %v2105 = vmax.f32 %v1735, 0.0
    %v2106 = vmax.f32 %v1740, 0.0
    %v2107 = vmax.f32 %v1743, 0.0
    %v2108 = vmax.f32 %v1748, 0.0
    %v2109 = vmax.f32 %v1751, 0.0
    %v2110 = vmax.f32 %v1756, 0.0
    %v2111 = vmax.f32 %v1759, 0.0
    %v2112 = vmax.f32 %v1764, 0.0
    %v2113 = vmax.f32 %v1767, 0.0
    %v2114 = vmax.f32 %v1772, 0.0
    %v2115 = vmax.f32 %v1775, 0.0
    %v2116 = vmax.f32 %v1780, 0.0
    %v2117 = vmax.f32 %v1783, 0.0
    %v2118 = vmax.f32 %v1788, 0.0
    %v2119 = vmax.f32 %v1791, 0.0
    %v2120 = vmax.f32 %v1796, 0.0
    %v2121 = vmax.f32 %v1799, 0.0
    %v2122 = vmax.f32 %v1804, 0.0
    %v2123 = vmax.f32 %v1807, 0.0
    %v2124 = vmax.f32 %v1812, 0.0
    %v2125 = vmax.f32 %v1815, 0.0
    %v2126 = vmax.f32 %v1820, 0.0
    %v2127 = vmax.f32 %v1823, 0.0
    %v2128 = vmax.f32 %v1828, 0.0
    %v2129 = vmax.f32 %v1831, 0.0
    %v2130 = vmax.f32 %v1836, 0.0
    %v2131 = vmax.f32 %v1839, 0.0
    %v2132 = vmax.f32 %v1844, 0.0
    %v2133 = vmax.f32 %v1847, 0.0
    %v2134 = vmax.f32 %v1852, 0.0
    %v2135 = vmax.f32 %v1855, 0.0
    %v2136 = vmax.f32 %v1860, 0.0
    %v2137 = vmax.f32 %v1863, 0.0
    %v2138 = vmax.f32 %v1868, 0.0
    %v2139 = vmax.f32 %v1871, 0.0
    %v2140 = vmax.f32 %v1876, 0.0
    %v2141 = vmax.f32 %v1879, 0.0
    %v2142 = vmax.f32 %v1884, 0.0
    %v2143 = vmax.f32 %v1887, 0.0
    %v2144 = vmax.f32 %v1892, 0.0
    %v2145 = vmax.f32 %v1895, 0.0
    %v2146 = vmax.f32 %v1900, 0.0
    %v2147 = vmax.f32 %v1903, 0.0
    %v2148 = vmax.f32 %v1908, 0.0
    %v2149 = vmax.f32 %v1911, 0.0
    %v2150 = vmax.f32 %v1916, 0.0
    %v2151 = vmax.f32 %v1919, 0.0
    %v2152 = vmax.f32 %v1924, 0.0
    %v2153 = vmax.f32 %v1927, 0.0
    %2154 = vst [vmem:[#allocation2] sm:$0xff] %v1930
    %2155 = vst [vmem:[#allocation2 + $0x8] sm:$0xff] %v1931
    %2156 = vst [vmem:[#allocation2 + $0x10] sm:$0xff] %v1932
    %2157 = vst [vmem:[#allocation2 + $0x18] sm:$0xff] %v1933
    %2158 = vst [vmem:[#allocation2 + $0x20] sm:$0xff] %v1934
    %2159 = vst [vmem:[#allocation2 + $0x28] sm:$0xff] %v1935
    %2160 = vst [vmem:[#allocation2 + $0x30] sm:$0xff] %v1936
    %2161 = vst [vmem:[#allocation2 + $0x38] sm:$0xff] %v1937
    %2162 = vst [vmem:[#allocation2 + $0x40] sm:$0xff] %v1938
    %2163 = vst [vmem:[#allocation2 + $0x48] sm:$0xff] %v1939
    %2164 = vst [vmem:[#allocation2 + $0x50] sm:$0xff] %v1940
    %2165 = vst [vmem:[#allocation2 + $0x58] sm:$0xff] %v1941
    %2166 = vst [vmem:[#allocation2 + $0x60] sm:$0xff] %v1942
    %2167 = vst [vmem:[#allocation2 + $0x68] sm:$0xff] %v1943
    %2168 = vst [vmem:[#allocation2 + $0x70] sm:$0xff] %v1944
    %2169 = vst [vmem:[#allocation2 + $0x78] sm:$0xff] %v1945
    %2170 = vst [vmem:[#allocation2 + $0x80] sm:$0xff] %v1946
    %2171 = vst [vmem:[#allocation2 + $0x88] sm:$0xff] %v1947
    %2172 = vst [vmem:[#allocation2 + $0x90] sm:$0xff] %v1948
    %2173 = vst [vmem:[#allocation2 + $0x98] sm:$0xff] %v1949
    %2174 = vst [vmem:[#allocation2 + $0xa0] sm:$0xff] %v1950
    %2175 = vst [vmem:[#allocation2 + $0xa8] sm:$0xff] %v1951
    %2176 = vst [vmem:[#allocation2 + $0xb0] sm:$0xff] %v1952
    %2177 = vst [vmem:[#allocation2 + $0xb8] sm:$0xff] %v1953
    %2178 = vst [vmem:[#allocation2 + $0xc0] sm:$0xff] %v1954
    %2179 = vst [vmem:[#allocation2 + $0xc8] sm:$0xff] %v1955
    %2180 = vst [vmem:[#allocation2 + $0xd0] sm:$0xff] %v1956
    %2181 = vst [vmem:[#allocation2 + $0xd8] sm:$0xff] %v1957
    %2182 = vst [vmem:[#allocation2 + $0xe0] sm:$0xff] %v1958
    %2183 = vst [vmem:[#allocation2 + $0xe8] sm:$0xff] %v1959
    %2184 = vst [vmem:[#allocation2 + $0xf0] sm:$0xff] %v1960
    %2185 = vst [vmem:[#allocation2 + $0xf8] sm:$0xff] %v1961
    %2186 = vst [vmem:[#allocation2 + $0x100] sm:$0xff] %v1962
    %2187 = vst [vmem:[#allocation2 + $0x108] sm:$0xff] %v1963
    %2188 = vst [vmem:[#allocation2 + $0x110] sm:$0xff] %v1964
    %2189 = vst [vmem:[#allocation2 + $0x118] sm:$0xff] %v1965
    %2190 = vst [vmem:[#allocation2 + $0x120] sm:$0xff] %v1966
    %2191 = vst [vmem:[#allocation2 + $0x128] sm:$0xff] %v1967
    %2192 = vst [vmem:[#allocation2 + $0x130] sm:$0xff] %v1968
    %2193 = vst [vmem:[#allocation2 + $0x138] sm:$0xff] %v1969
    %2194 = vst [vmem:[#allocation2 + $0x140] sm:$0xff] %v1970
    %2195 = vst [vmem:[#allocation2 + $0x148] sm:$0xff] %v1971
    %2196 = vst [vmem:[#allocation2 + $0x150] sm:$0xff] %v1972
    %2197 = vst [vmem:[#allocation2 + $0x158] sm:$0xff] %v1973
    %2198 = vst [vmem:[#allocation2 + $0x160] sm:$0xff] %v1974
    %2199 = vst [vmem:[#allocation2 + $0x168] sm:$0xff] %v1975
    %2200 = vst [vmem:[#allocation2 + $0x170] sm:$0xff] %v1976
    %2201 = vst [vmem:[#allocation2 + $0x178] sm:$0xff] %v1977
    %2202 = vst [vmem:[#allocation2 + $0x180] sm:$0xff] %v1978
    %2203 = vst [vmem:[#allocation2 + $0x188] sm:$0xff] %v1979
    %2204 = vst [vmem:[#allocation2 + $0x190] sm:$0xff] %v1980
    %2205 = vst [vmem:[#allocation2 + $0x198] sm:$0xff] %v1981
    %2206 = vst [vmem:[#allocation2 + $0x1a0] sm:$0xff] %v1982
    %2207 = vst [vmem:[#allocation2 + $0x1a8] sm:$0xff] %v1983
    %2208 = vst [vmem:[#allocation2 + $0x1b0] sm:$0xff] %v1984
    %2209 = vst [vmem:[#allocation2 + $0x1b8] sm:$0xff] %v1985
    %2210 = vst [vmem:[#allocation2 + $0x1c0] sm:$0xff] %v1986
    %2211 = vst [vmem:[#allocation2 + $0x1c8] sm:$0xff] %v1987
    %2212 = vst [vmem:[#allocation2 + $0x1d0] sm:$0xff] %v1988
    %2213 = vst [vmem:[#allocation2 + $0x1d8] sm:$0xff] %v1989
    %2214 = vst [vmem:[#allocation2 + $0x1e0] sm:$0xff] %v1990
    %2215 = vst [vmem:[#allocation2 + $0x1e8] sm:$0xff] %v1991
    %2216 = vst [vmem:[#allocation2 + $0x1f0] sm:$0xff] %v1992
    %2217 = vst [vmem:[#allocation2 + $0x1f8] sm:$0xff] %v1993
    %2218 = vst [vmem:[#allocation2 + $0x200] sm:$0xff] %v1994
    %2219 = vst [vmem:[#allocation2 + $0x208] sm:$0xff] %v1995
    %2220 = vst [vmem:[#allocation2 + $0x210] sm:$0xff] %v1996
    %2221 = vst [vmem:[#allocation2 + $0x218] sm:$0xff] %v1997
    %2222 = vst [vmem:[#allocation2 + $0x220] sm:$0xff] %v1998
    %2223 = vst [vmem:[#allocation2 + $0x228] sm:$0xff] %v1999
    %2224 = vst [vmem:[#allocation2 + $0x230] sm:$0xff] %v2000
    %2225 = vst [vmem:[#allocation2 + $0x238] sm:$0xff] %v2001
    %2226 = vst [vmem:[#allocation2 + $0x240] sm:$0xff] %v2002
    %2227 = vst [vmem:[#allocation2 + $0x248] sm:$0xff] %v2003
    %2228 = vst [vmem:[#allocation2 + $0x250] sm:$0xff] %v2004
    %2229 = vst [vmem:[#allocation2 + $0x258] sm:$0xff] %v2005
    %2230 = vst [vmem:[#allocation2 + $0x260] sm:$0xff] %v2006
    %2231 = vst [vmem:[#allocation2 + $0x268] sm:$0xff] %v2007
    %2232 = vst [vmem:[#allocation2 + $0x270] sm:$0xff] %v2008
    %2233 = vst [vmem:[#allocation2 + $0x278] sm:$0xff] %v2009
    %2234 = vst [vmem:[#allocation2 + $0x280] sm:$0xff] %v2010
    %2235 = vst [vmem:[#allocation2 + $0x288] sm:$0xff] %v2011
    %2236 = vst [vmem:[#allocation2 + $0x290] sm:$0xff] %v2012
    %2237 = vst [vmem:[#allocation2 + $0x298] sm:$0xff] %v2013
    %2238 = vst [vmem:[#allocation2 + $0x2a0] sm:$0xff] %v2014
    %2239 = vst [vmem:[#allocation2 + $0x2a8] sm:$0xff] %v2015
    %2240 = vst [vmem:[#allocation2 + $0x2b0] sm:$0xff] %v2016
    %2241 = vst [vmem:[#allocation2 + $0x2b8] sm:$0xff] %v2017
    %2242 = vst [vmem:[#allocation2 + $0x2c0] sm:$0xff] %v2018
    %2243 = vst [vmem:[#allocation2 + $0x2c8] sm:$0xff] %v2019
    %2244 = vst [vmem:[#allocation2 + $0x2d0] sm:$0xff] %v2020
    %2245 = vst [vmem:[#allocation2 + $0x2d8] sm:$0xff] %v2021
    %2246 = vst [vmem:[#allocation2 + $0x2e0] sm:$0xff] %v2022
    %2247 = vst [vmem:[#allocation2 + $0x2e8] sm:$0xff] %v2023
    %2248 = vst [vmem:[#allocation2 + $0x2f0] sm:$0xff] %v2024
    %2249 = vst [vmem:[#allocation2 + $0x2f8] sm:$0xff] %v2025
    %2250 = vst [vmem:[#allocation2 + $0x300] sm:$0xff] %v2026
    %2251 = vst [vmem:[#allocation2 + $0x308] sm:$0xff] %v2027
    %2252 = vst [vmem:[#allocation2 + $0x310] sm:$0xff] %v2028
    %2253 = vst [vmem:[#allocation2 + $0x318] sm:$0xff] %v2029
    %2254 = vst [vmem:[#allocation2 + $0x320] sm:$0xff] %v2030
    %2255 = vst [vmem:[#allocation2 + $0x328] sm:$0xff] %v2031
    %2256 = vst [vmem:[#allocation2 + $0x330] sm:$0xff] %v2032
    %2257 = vst [vmem:[#allocation2 + $0x338] sm:$0xff] %v2033
    %2258 = vst [vmem:[#allocation2 + $0x340] sm:$0xff] %v2034
    %2259 = vst [vmem:[#allocation2 + $0x348] sm:$0xff] %v2035
    %2260 = vst [vmem:[#allocation2 + $0x350] sm:$0xff] %v2036
    %2261 = vst [vmem:[#allocation2 + $0x358] sm:$0xff] %v2037
    %2262 = vst [vmem:[#allocation2 + $0x360] sm:$0xff] %v2038
    %2263 = vst [vmem:[#allocation2 + $0x368] sm:$0xff] %v2039
    %2264 = vst [vmem:[#allocation2 + $0x370] sm:$0xff] %v2040
    %2265 = vst [vmem:[#allocation2 + $0x378] sm:$0xff] %v2041
    %2266 = vst [vmem:[#allocation2 + $0x380] sm:$0xff] %v2042
    %2267 = vst [vmem:[#allocation2 + $0x388] sm:$0xff] %v2043
    %2268 = vst [vmem:[#allocation2 + $0x390] sm:$0xff] %v2044
    %2269 = vst [vmem:[#allocation2 + $0x398] sm:$0xff] %v2045
    %2270 = vst [vmem:[#allocation2 + $0x3a0] sm:$0xff] %v2046
    %2271 = vst [vmem:[#allocation2 + $0x3a8] sm:$0xff] %v2047
    %2272 = vst [vmem:[#allocation2 + $0x3b0] sm:$0xff] %v2048
    %2273 = vst [vmem:[#allocation2 + $0x3b8] sm:$0xff] %v2049
    %2274 = vst [vmem:[#allocation2 + $0x3c0] sm:$0xff] %v2050
    %2275 = vst [vmem:[#allocation2 + $0x3c8] sm:$0xff] %v2051
    %2276 = vst [vmem:[#allocation2 + $0x3d0] sm:$0xff] %v2052
    %2277 = vst [vmem:[#allocation2 + $0x3d8] sm:$0xff] %v2053
    %2278 = vst [vmem:[#allocation2 + $0x3e0] sm:$0xff] %v2054
    %2279 = vst [vmem:[#allocation2 + $0x3e8] sm:$0xff] %v2055
    %2280 = vst [vmem:[#allocation2 + $0x3f0] sm:$0xff] %v2056
    %2281 = vst [vmem:[#allocation2 + $0x3f8] sm:$0xff] %v2057
    %2282 = vst [vmem:[#allocation2 + $0x400] sm:$0xff] %v2058
    %2283 = vst [vmem:[#allocation2 + $0x408] sm:$0xff] %v2059
    %2284 = vst [vmem:[#allocation2 + $0x410] sm:$0xff] %v2060
    %2285 = vst [vmem:[#allocation2 + $0x418] sm:$0xff] %v2061
    %2286 = vst [vmem:[#allocation2 + $0x420] sm:$0xff] %v2062
    %2287 = vst [vmem:[#allocation2 + $0x428] sm:$0xff] %v2063
    %2288 = vst [vmem:[#allocation2 + $0x430] sm:$0xff] %v2064
    %2289 = vst [vmem:[#allocation2 + $0x438] sm:$0xff] %v2065
    %2290 = vst [vmem:[#allocation2 + $0x440] sm:$0xff] %v2066
    %2291 = vst [vmem:[#allocation2 + $0x448] sm:$0xff] %v2067
    %2292 = vst [vmem:[#allocation2 + $0x450] sm:$0xff] %v2068
    %2293 = vst [vmem:[#allocation2 + $0x458] sm:$0xff] %v2069
    %2294 = vst [vmem:[#allocation2 + $0x460] sm:$0xff] %v2070
    %2295 = vst [vmem:[#allocation2 + $0x468] sm:$0xff] %v2071
    %2296 = vst [vmem:[#allocation2 + $0x470] sm:$0xff] %v2072
    %2297 = vst [vmem:[#allocation2 + $0x478] sm:$0xff] %v2073
    %2298 = vst [vmem:[#allocation2 + $0x480] sm:$0xff] %v2074
    %2299 = vst [vmem:[#allocation2 + $0x488] sm:$0xff] %v2075
    %2300 = vst [vmem:[#allocation2 + $0x490] sm:$0xff] %v2076
    %2301 = vst [vmem:[#allocation2 + $0x498] sm:$0xff] %v2077
    %2302 = vst [vmem:[#allocation2 + $0x4a0] sm:$0xff] %v2078
    %2303 = vst [vmem:[#allocation2 + $0x4a8] sm:$0xff] %v2079
    %2304 = vst [vmem:[#allocation2 + $0x4b0] sm:$0xff] %v2080
    %2305 = vst [vmem:[#allocation2 + $0x4b8] sm:$0xff] %v2081
    %2306 = vst [vmem:[#allocation2 + $0x4c0] sm:$0xff] %v2082
    %2307 = vst [vmem:[#allocation2 + $0x4c8] sm:$0xff] %v2083
    %2308 = vst [vmem:[#allocation2 + $0x4d0] sm:$0xff] %v2084
    %2309 = vst [vmem:[#allocation2 + $0x4d8] sm:$0xff] %v2085
    %2310 = vst [vmem:[#allocation2 + $0x4e0] sm:$0xff] %v2086
    %2311 = vst [vmem:[#allocation2 + $0x4e8] sm:$0xff] %v2087
    %2312 = vst [vmem:[#allocation2 + $0x4f0] sm:$0xff] %v2088
    %2313 = vst [vmem:[#allocation2 + $0x4f8] sm:$0xff] %v2089
    %2314 = vst [vmem:[#allocation2 + $0x500] sm:$0xff] %v2090
    %2315 = vst [vmem:[#allocation2 + $0x508] sm:$0xff] %v2091
    %2316 = vst [vmem:[#allocation2 + $0x510] sm:$0xff] %v2092
    %2317 = vst [vmem:[#allocation2 + $0x518] sm:$0xff] %v2093
    %2318 = vst [vmem:[#allocation2 + $0x520] sm:$0xff] %v2094
    %2319 = vst [vmem:[#allocation2 + $0x528] sm:$0xff] %v2095
    %2320 = vst [vmem:[#allocation2 + $0x530] sm:$0xff] %v2096
    %2321 = vst [vmem:[#allocation2 + $0x538] sm:$0xff] %v2097
    %2322 = vst [vmem:[#allocation2 + $0x540] sm:$0xff] %v2098
    %2323 = vst [vmem:[#allocation2 + $0x548] sm:$0xff] %v2099
    %2324 = vst [vmem:[#allocation2 + $0x550] sm:$0xff] %v2100
    %2325 = vst [vmem:[#allocation2 + $0x558] sm:$0xff] %v2101
    %2326 = vst [vmem:[#allocation2 + $0x560] sm:$0xff] %v2102
    %2327 = vst [vmem:[#allocation2 + $0x568] sm:$0xff] %v2103
    %2328 = vst [vmem:[#allocation2 + $0x570] sm:$0xff] %v2104
    %2329 = vst [vmem:[#allocation2 + $0x578] sm:$0xff] %v2105
    %2330 = vst [vmem:[#allocation2 + $0x580] sm:$0xff] %v2106
    %2331 = vst [vmem:[#allocation2 + $0x588] sm:$0xff] %v2107
    %2332 = vst [vmem:[#allocation2 + $0x590] sm:$0xff] %v2108
    %2333 = vst [vmem:[#allocation2 + $0x598] sm:$0xff] %v2109
    %2334 = vst [vmem:[#allocation2 + $0x5a0] sm:$0xff] %v2110
    %2335 = vst [vmem:[#allocation2 + $0x5a8] sm:$0xff] %v2111
    %2336 = vst [vmem:[#allocation2 + $0x5b0] sm:$0xff] %v2112
    %2337 = vst [vmem:[#allocation2 + $0x5b8] sm:$0xff] %v2113
    %2338 = vst [vmem:[#allocation2 + $0x5c0] sm:$0xff] %v2114
    %2339 = vst [vmem:[#allocation2 + $0x5c8] sm:$0xff] %v2115
    %2340 = vst [vmem:[#allocation2 + $0x5d0] sm:$0xff] %v2116
    %2341 = vst [vmem:[#allocation2 + $0x5d8] sm:$0xff] %v2117
    %2342 = vst [vmem:[#allocation2 + $0x5e0] sm:$0xff] %v2118
    %2343 = vst [vmem:[#allocation2 + $0x5e8] sm:$0xff] %v2119
    %2344 = vst [vmem:[#allocation2 + $0x5f0] sm:$0xff] %v2120
    %2345 = vst [vmem:[#allocation2 + $0x5f8] sm:$0xff] %v2121
    %2346 = vst [vmem:[#allocation2 + $0x600] sm:$0xff] %v2122
    %2347 = vst [vmem:[#allocation2 + $0x608] sm:$0xff] %v2123
    %2348 = vst [vmem:[#allocation2 + $0x610] sm:$0xff] %v2124
    %2349 = vst [vmem:[#allocation2 + $0x618] sm:$0xff] %v2125
    %2350 = vst [vmem:[#allocation2 + $0x620] sm:$0xff] %v2126
    %2351 = vst [vmem:[#allocation2 + $0x628] sm:$0xff] %v2127
    %2352 = vst [vmem:[#allocation2 + $0x630] sm:$0xff] %v2128
    %2353 = vst [vmem:[#allocation2 + $0x638] sm:$0xff] %v2129
    %2354 = vst [vmem:[#allocation2 + $0x640] sm:$0xff] %v2130
    %2355 = vst [vmem:[#allocation2 + $0x648] sm:$0xff] %v2131
    %2356 = vst [vmem:[#allocation2 + $0x650] sm:$0xff] %v2132
    %2357 = vst [vmem:[#allocation2 + $0x658] sm:$0xff] %v2133
    %2358 = vst [vmem:[#allocation2 + $0x660] sm:$0xff] %v2134
    %2359 = vst [vmem:[#allocation2 + $0x668] sm:$0xff] %v2135
    %2360 = vst [vmem:[#allocation2 + $0x670] sm:$0xff] %v2136
    %2361 = vst [vmem:[#allocation2 + $0x678] sm:$0xff] %v2137
    %2362 = vst [vmem:[#allocation2 + $0x680] sm:$0xff] %v2138
    %2363 = vst [vmem:[#allocation2 + $0x688] sm:$0xff] %v2139
    %2364 = vst [vmem:[#allocation2 + $0x690] sm:$0xff] %v2140
    %2365 = vst [vmem:[#allocation2 + $0x698] sm:$0xff] %v2141
    %2366 = vst [vmem:[#allocation2 + $0x6a0] sm:$0xff] %v2142
    %2367 = vst [vmem:[#allocation2 + $0x6a8] sm:$0xff] %v2143
    %2368 = vst [vmem:[#allocation2 + $0x6b0] sm:$0xff] %v2144
    %2369 = vst [vmem:[#allocation2 + $0x6b8] sm:$0xff] %v2145
    %2370 = vst [vmem:[#allocation2 + $0x6c0] sm:$0xff] %v2146
    %2371 = vst [vmem:[#allocation2 + $0x6c8] sm:$0xff] %v2147
    %2372 = vst [vmem:[#allocation2 + $0x6d0] sm:$0xff] %v2148
    %2373 = vst [vmem:[#allocation2 + $0x6d8] sm:$0xff] %v2149
    %2374 = vst [vmem:[#allocation2 + $0x6e0] sm:$0xff] %v2150
    %2375 = vst [vmem:[#allocation2 + $0x6e8] sm:$0xff] %v2151
    %2376 = vst [vmem:[#allocation2 + $0x6f0] sm:$0xff] %v2152
    %2377 = vst [vmem:[#allocation2 + $0x6f8] sm:$0xff] %v2153
    %v2378 = vld [vmem:[#allocation2] ss:$2 sm:$0xff]
    %s2379 = scalar_lea.vmem [#allocation2], 16
    %v2380 = vld [vmem:[%s2379] ss:$2 sm:$0xff]
    %s2381 = scalar_lea.vmem [#allocation2], 32
    %v2382 = vld [vmem:[%s2381] ss:$2 sm:$0xff]
    %s2383 = scalar_lea.vmem [#allocation2], 48
    %v2384 = vld [vmem:[%s2383] ss:$2 sm:$0xff]
    %s2385 = scalar_lea.vmem [#allocation2], 64
    %v2386 = vld [vmem:[%s2385] ss:$2 sm:$0xff]
    %s2387 = scalar_lea.vmem [#allocation2], 80
    %v2388 = vld [vmem:[%s2387] ss:$2 sm:$0xff]
    %s2389 = scalar_lea.vmem [#allocation2], 96
    %v2390 = vld [vmem:[%s2389] ss:$2 sm:$0xff]
    %s2391 = scalar_lea.vmem [#allocation2], 112
    %v2392 = vld [vmem:[%s2391] ss:$2 sm:$0xff]
    %s2393 = scalar_lea.vmem [#allocation2], 128
    %v2394 = vld [vmem:[%s2393] ss:$2 sm:$0xff]
    %s2395 = scalar_lea.vmem [#allocation2], 144
    %v2396 = vld [vmem:[%s2395] ss:$2 sm:$0xff]
    %s2397 = scalar_lea.vmem [#allocation2], 160
    %v2398 = vld [vmem:[%s2397] ss:$2 sm:$0xff]
    %s2399 = scalar_lea.vmem [#allocation2], 176
    %v2400 = vld [vmem:[%s2399] ss:$2 sm:$0xff]
    %s2401 = scalar_lea.vmem [#allocation2], 192
    %v2402 = vld [vmem:[%s2401] ss:$2 sm:$0xff]
    %s2403 = scalar_lea.vmem [#allocation2], 208
    %v2404 = vld [vmem:[%s2403] ss:$2 sm:$0xff]
    %s2405 = scalar_lea.vmem [#allocation2], 224
    %v2406 = vld [vmem:[%s2405] ss:$2 sm:$0xff]
    %s2407 = scalar_lea.vmem [#allocation2], 240
    %v2408 = vld [vmem:[%s2407] ss:$2 sm:$0xff]
    %s2409 = scalar_lea.vmem [#allocation2], 256
    %v2410 = vld [vmem:[%s2409] ss:$2 sm:$0xff]
    %s2411 = scalar_lea.vmem [#allocation2], 272
    %v2412 = vld [vmem:[%s2411] ss:$2 sm:$0xff]
    %s2413 = scalar_lea.vmem [#allocation2], 288
    %v2414 = vld [vmem:[%s2413] ss:$2 sm:$0xff]
    %s2415 = scalar_lea.vmem [#allocation2], 304
    %v2416 = vld [vmem:[%s2415] ss:$2 sm:$0xff]
    %s2417 = scalar_lea.vmem [#allocation2], 320
    %v2418 = vld [vmem:[%s2417] ss:$2 sm:$0xff]
    %s2419 = scalar_lea.vmem [#allocation2], 336
    %v2420 = vld [vmem:[%s2419] ss:$2 sm:$0xff]
    %s2421 = scalar_lea.vmem [#allocation2], 352
    %v2422 = vld [vmem:[%s2421] ss:$2 sm:$0xff]
    %s2423 = scalar_lea.vmem [#allocation2], 368
    %v2424 = vld [vmem:[%s2423] ss:$2 sm:$0xff]
    %s2425 = scalar_lea.vmem [#allocation2], 384
    %v2426 = vld [vmem:[%s2425] ss:$2 sm:$0xff]
    %s2427 = scalar_lea.vmem [#allocation2], 400
    %v2428 = vld [vmem:[%s2427] ss:$2 sm:$0xff]
    %s2429 = scalar_lea.vmem [#allocation2], 416
    %v2430 = vld [vmem:[%s2429] ss:$2 sm:$0xff]
    %s2431 = scalar_lea.vmem [#allocation2], 432
    %v2432 = vld [vmem:[%s2431] ss:$2 sm:$0xff]
    %s2433 = scalar_lea.vmem [#allocation2], 448
    %v2434 = vld [vmem:[%s2433] ss:$2 sm:$0xff]
    %s2435 = scalar_lea.vmem [#allocation2], 464
    %v2436 = vld [vmem:[%s2435] ss:$2 sm:$0xff]
    %s2437 = scalar_lea.vmem [#allocation2], 480
    %v2438 = vld [vmem:[%s2437] ss:$2 sm:$0xff]
    %s2439 = scalar_lea.vmem [#allocation2], 496
    %v2440 = vld [vmem:[%s2439] ss:$2 sm:$0xff]
    %s2441 = scalar_lea.vmem [#allocation2], 512
    %v2442 = vld [vmem:[%s2441] ss:$2 sm:$0xff]
    %s2443 = scalar_lea.vmem [#allocation2], 528
    %v2444 = vld [vmem:[%s2443] ss:$2 sm:$0xff]
    %s2445 = scalar_lea.vmem [#allocation2], 544
    %v2446 = vld [vmem:[%s2445] ss:$2 sm:$0xff]
    %s2447 = scalar_lea.vmem [#allocation2], 560
    %v2448 = vld [vmem:[%s2447] ss:$2 sm:$0xff]
    %s2449 = scalar_lea.vmem [#allocation2], 576
    %v2450 = vld [vmem:[%s2449] ss:$2 sm:$0xff]
    %s2451 = scalar_lea.vmem [#allocation2], 592
    %v2452 = vld [vmem:[%s2451] ss:$2 sm:$0xff]
    %s2453 = scalar_lea.vmem [#allocation2], 608
    %v2454 = vld [vmem:[%s2453] ss:$2 sm:$0xff]
    %s2455 = scalar_lea.vmem [#allocation2], 624
    %v2456 = vld [vmem:[%s2455] ss:$2 sm:$0xff]
    %s2457 = scalar_lea.vmem [#allocation2], 640
    %v2458 = vld [vmem:[%s2457] ss:$2 sm:$0xff]
    %s2459 = scalar_lea.vmem [#allocation2], 656
    %v2460 = vld [vmem:[%s2459] ss:$2 sm:$0xff]
    %s2461 = scalar_lea.vmem [#allocation2], 672
    %v2462 = vld [vmem:[%s2461] ss:$2 sm:$0xff]
    %s2463 = scalar_lea.vmem [#allocation2], 688
    %v2464 = vld [vmem:[%s2463] ss:$2 sm:$0xff]
    %s2465 = scalar_lea.vmem [#allocation2], 704
    %v2466 = vld [vmem:[%s2465] ss:$2 sm:$0xff]
    %s2467 = scalar_lea.vmem [#allocation2], 720
    %v2468 = vld [vmem:[%s2467] ss:$2 sm:$0xff]
    %s2469 = scalar_lea.vmem [#allocation2], 736
    %v2470 = vld [vmem:[%s2469] ss:$2 sm:$0xff]
    %s2471 = scalar_lea.vmem [#allocation2], 752
    %v2472 = vld [vmem:[%s2471] ss:$2 sm:$0xff]
    %s2473 = scalar_lea.vmem [#allocation2], 768
    %v2474 = vld [vmem:[%s2473] ss:$2 sm:$0xff]
    %s2475 = scalar_lea.vmem [#allocation2], 784
    %v2476 = vld [vmem:[%s2475] ss:$2 sm:$0xff]
    %s2477 = scalar_lea.vmem [#allocation2], 800
    %v2478 = vld [vmem:[%s2477] ss:$2 sm:$0xff]
    %s2479 = scalar_lea.vmem [#allocation2], 816
    %v2480 = vld [vmem:[%s2479] ss:$2 sm:$0xff]
    %s2481 = scalar_lea.vmem [#allocation2], 832
    %v2482 = vld [vmem:[%s2481] ss:$2 sm:$0xff]
    %s2483 = scalar_lea.vmem [#allocation2], 848
    %v2484 = vld [vmem:[%s2483] ss:$2 sm:$0xff]
    %s2485 = scalar_lea.vmem [#allocation2], 864
    %v2486 = vld [vmem:[%s2485] ss:$2 sm:$0xff]
    %s2487 = scalar_lea.vmem [#allocation2], 880
    %v2488 = vld [vmem:[%s2487] ss:$2 sm:$0xff]
    %s2489 = scalar_lea.vmem [#allocation2], 896
    %v2490 = vld [vmem:[%s2489] ss:$2 sm:$0xff]
    %s2491 = scalar_lea.vmem [#allocation2], 912
    %v2492 = vld [vmem:[%s2491] ss:$2 sm:$0xff]
    %s2493 = scalar_lea.vmem [#allocation2], 928
    %v2494 = vld [vmem:[%s2493] ss:$2 sm:$0xff]
    %s2495 = scalar_lea.vmem [#allocation2], 944
    %v2496 = vld [vmem:[%s2495] ss:$2 sm:$0xff]
    %s2497 = scalar_lea.vmem [#allocation2], 960
    %v2498 = vld [vmem:[%s2497] ss:$2 sm:$0xff]
    %s2499 = scalar_lea.vmem [#allocation2], 976
    %v2500 = vld [vmem:[%s2499] ss:$2 sm:$0xff]
    %s2501 = scalar_lea.vmem [#allocation2], 992
    %v2502 = vld [vmem:[%s2501] ss:$2 sm:$0xff]
    %s2503 = scalar_lea.vmem [#allocation2], 1008
    %v2504 = vld [vmem:[%s2503] ss:$2 sm:$0xff]
    %s2505 = scalar_lea.vmem [#allocation2], 1024
    %v2506 = vld [vmem:[%s2505] ss:$2 sm:$0xff]
    %s2507 = scalar_lea.vmem [#allocation2], 1040
    %v2508 = vld [vmem:[%s2507] ss:$2 sm:$0xff]
    %s2509 = scalar_lea.vmem [#allocation2], 1056
    %v2510 = vld [vmem:[%s2509] ss:$2 sm:$0xff]
    %s2511 = scalar_lea.vmem [#allocation2], 1072
    %v2512 = vld [vmem:[%s2511] ss:$2 sm:$0xff]
    %s2513 = scalar_lea.vmem [#allocation2], 1088
    %v2514 = vld [vmem:[%s2513] ss:$2 sm:$0xff]
    %s2515 = scalar_lea.vmem [#allocation2], 1104
    %v2516 = vld [vmem:[%s2515] ss:$2 sm:$0xff]
    %s2517 = scalar_lea.vmem [#allocation2], 1120
    %v2518 = vld [vmem:[%s2517] ss:$2 sm:$0xff]
    %s2519 = scalar_lea.vmem [#allocation2], 1136
    %v2520 = vld [vmem:[%s2519] ss:$2 sm:$0xff]
    %s2521 = scalar_lea.vmem [#allocation2], 1152
    %v2522 = vld [vmem:[%s2521] ss:$2 sm:$0xff]
    %s2523 = scalar_lea.vmem [#allocation2], 1168
    %v2524 = vld [vmem:[%s2523] ss:$2 sm:$0xff]
    %s2525 = scalar_lea.vmem [#allocation2], 1184
    %v2526 = vld [vmem:[%s2525] ss:$2 sm:$0xff]
    %s2527 = scalar_lea.vmem [#allocation2], 1200
    %v2528 = vld [vmem:[%s2527] ss:$2 sm:$0xff]
    %s2529 = scalar_lea.vmem [#allocation2], 1216
    %v2530 = vld [vmem:[%s2529] ss:$2 sm:$0xff]
    %s2531 = scalar_lea.vmem [#allocation2], 1232
    %v2532 = vld [vmem:[%s2531] ss:$2 sm:$0xff]
    %s2533 = scalar_lea.vmem [#allocation2], 1248
    %v2534 = vld [vmem:[%s2533] ss:$2 sm:$0xff]
    %s2535 = scalar_lea.vmem [#allocation2], 1264
    %v2536 = vld [vmem:[%s2535] ss:$2 sm:$0xff]
    %s2537 = scalar_lea.vmem [#allocation2], 1280
    %v2538 = vld [vmem:[%s2537] ss:$2 sm:$0xff]
    %s2539 = scalar_lea.vmem [#allocation2], 1296
    %v2540 = vld [vmem:[%s2539] ss:$2 sm:$0xff]
    %s2541 = scalar_lea.vmem [#allocation2], 1312
    %v2542 = vld [vmem:[%s2541] ss:$2 sm:$0xff]
    %s2543 = scalar_lea.vmem [#allocation2], 1328
    %v2544 = vld [vmem:[%s2543] ss:$2 sm:$0xff]
    %s2545 = scalar_lea.vmem [#allocation2], 1344
    %v2546 = vld [vmem:[%s2545] ss:$2 sm:$0xff]
    %s2547 = scalar_lea.vmem [#allocation2], 1360
    %v2548 = vld [vmem:[%s2547] ss:$2 sm:$0xff]
    %s2549 = scalar_lea.vmem [#allocation2], 1376
    %v2550 = vld [vmem:[%s2549] ss:$2 sm:$0xff]
    %s2551 = scalar_lea.vmem [#allocation2], 1392
    %v2552 = vld [vmem:[%s2551] ss:$2 sm:$0xff]
    %s2553 = scalar_lea.vmem [#allocation2], 1408
    %v2554 = vld [vmem:[%s2553] ss:$2 sm:$0xff]
    %s2555 = scalar_lea.vmem [#allocation2], 1424
    %v2556 = vld [vmem:[%s2555] ss:$2 sm:$0xff]
    %s2557 = scalar_lea.vmem [#allocation2], 1440
    %v2558 = vld [vmem:[%s2557] ss:$2 sm:$0xff]
    %s2559 = scalar_lea.vmem [#allocation2], 1456
    %v2560 = vld [vmem:[%s2559] ss:$2 sm:$0xff]
    %s2561 = scalar_lea.vmem [#allocation2], 1472
    %v2562 = vld [vmem:[%s2561] ss:$2 sm:$0xff]
    %s2563 = scalar_lea.vmem [#allocation2], 1488
    %v2564 = vld [vmem:[%s2563] ss:$2 sm:$0xff]
    %s2565 = scalar_lea.vmem [#allocation2], 1504
    %v2566 = vld [vmem:[%s2565] ss:$2 sm:$0xff]
    %s2567 = scalar_lea.vmem [#allocation2], 1520
    %v2568 = vld [vmem:[%s2567] ss:$2 sm:$0xff]
    %s2569 = scalar_lea.vmem [#allocation2], 1536
    %v2570 = vld [vmem:[%s2569] ss:$2 sm:$0xff]
    %s2571 = scalar_lea.vmem [#allocation2], 1552
    %v2572 = vld [vmem:[%s2571] ss:$2 sm:$0xff]
    %s2573 = scalar_lea.vmem [#allocation2], 1568
    %v2574 = vld [vmem:[%s2573] ss:$2 sm:$0xff]
    %s2575 = scalar_lea.vmem [#allocation2], 1584
    %v2576 = vld [vmem:[%s2575] ss:$2 sm:$0xff]
    %s2577 = scalar_lea.vmem [#allocation2], 1600
    %v2578 = vld [vmem:[%s2577] ss:$2 sm:$0xff]
    %s2579 = scalar_lea.vmem [#allocation2], 1616
    %v2580 = vld [vmem:[%s2579] ss:$2 sm:$0xff]
    %s2581 = scalar_lea.vmem [#allocation2], 1632
    %v2582 = vld [vmem:[%s2581] ss:$2 sm:$0xff]
    %s2583 = scalar_lea.vmem [#allocation2], 1648
    %v2584 = vld [vmem:[%s2583] ss:$2 sm:$0xff]
    %s2585 = scalar_lea.vmem [#allocation2], 1664
    %v2586 = vld [vmem:[%s2585] ss:$2 sm:$0xff]
    %s2587 = scalar_lea.vmem [#allocation2], 1680
    %v2588 = vld [vmem:[%s2587] ss:$2 sm:$0xff]
    %s2589 = scalar_lea.vmem [#allocation2], 1696
    %v2590 = vld [vmem:[%s2589] ss:$2 sm:$0xff]
    %s2591 = scalar_lea.vmem [#allocation2], 1712
    %v2592 = vld [vmem:[%s2591] ss:$2 sm:$0xff]
    %s2593 = scalar_lea.vmem [#allocation2], 1728
    %v2594 = vld [vmem:[%s2593] ss:$2 sm:$0xff]
    %s2595 = scalar_lea.vmem [#allocation2], 1744
    %v2596 = vld [vmem:[%s2595] ss:$2 sm:$0xff]
    %s2597 = scalar_lea.vmem [#allocation2], 1760
    %v2598 = vld [vmem:[%s2597] ss:$2 sm:$0xff]
    %s2599 = scalar_lea.vmem [#allocation2], 1776
    %v2600 = vld [vmem:[%s2599] ss:$2 sm:$0xff]
    %s2601 = scalar_lea.vmem [#allocation2], 1
    %v2602 = vld [vmem:[%s2601] ss:$2 sm:$0xff]
    %s2603 = scalar_lea.vmem [#allocation2], 17
    %v2604 = vld [vmem:[%s2603] ss:$2 sm:$0xff]
    %s2605 = scalar_lea.vmem [#allocation2], 33
    %v2606 = vld [vmem:[%s2605] ss:$2 sm:$0xff]
    %s2607 = scalar_lea.vmem [#allocation2], 49
    %v2608 = vld [vmem:[%s2607] ss:$2 sm:$0xff]
    %s2609 = scalar_lea.vmem [#allocation2], 65
    %v2610 = vld [vmem:[%s2609] ss:$2 sm:$0xff]
    %s2611 = scalar_lea.vmem [#allocation2], 81
    %v2612 = vld [vmem:[%s2611] ss:$2 sm:$0xff]
    %s2613 = scalar_lea.vmem [#allocation2], 97
    %v2614 = vld [vmem:[%s2613] ss:$2 sm:$0xff]
    %s2615 = scalar_lea.vmem [#allocation2], 113
    %v2616 = vld [vmem:[%s2615] ss:$2 sm:$0xff]
    %s2617 = scalar_lea.vmem [#allocation2], 129
    %v2618 = vld [vmem:[%s2617] ss:$2 sm:$0xff]
    %s2619 = scalar_lea.vmem [#allocation2], 145
    %v2620 = vld [vmem:[%s2619] ss:$2 sm:$0xff]
    %s2621 = scalar_lea.vmem [#allocation2], 161
    %v2622 = vld [vmem:[%s2621] ss:$2 sm:$0xff]
    %s2623 = scalar_lea.vmem [#allocation2], 177
    %v2624 = vld [vmem:[%s2623] ss:$2 sm:$0xff]
    %s2625 = scalar_lea.vmem [#allocation2], 193
    %v2626 = vld [vmem:[%s2625] ss:$2 sm:$0xff]
    %s2627 = scalar_lea.vmem [#allocation2], 209
    %v2628 = vld [vmem:[%s2627] ss:$2 sm:$0xff]
    %s2629 = scalar_lea.vmem [#allocation2], 225
    %v2630 = vld [vmem:[%s2629] ss:$2 sm:$0xff]
    %s2631 = scalar_lea.vmem [#allocation2], 241
    %v2632 = vld [vmem:[%s2631] ss:$2 sm:$0xff]
    %s2633 = scalar_lea.vmem [#allocation2], 257
    %v2634 = vld [vmem:[%s2633] ss:$2 sm:$0xff]
    %s2635 = scalar_lea.vmem [#allocation2], 273
    %v2636 = vld [vmem:[%s2635] ss:$2 sm:$0xff]
    %s2637 = scalar_lea.vmem [#allocation2], 289
    %v2638 = vld [vmem:[%s2637] ss:$2 sm:$0xff]
    %s2639 = scalar_lea.vmem [#allocation2], 305
    %v2640 = vld [vmem:[%s2639] ss:$2 sm:$0xff]
    %s2641 = scalar_lea.vmem [#allocation2], 321
    %v2642 = vld [vmem:[%s2641] ss:$2 sm:$0xff]
    %s2643 = scalar_lea.vmem [#allocation2], 337
    %v2644 = vld [vmem:[%s2643] ss:$2 sm:$0xff]
    %s2645 = scalar_lea.vmem [#allocation2], 353
    %v2646 = vld [vmem:[%s2645] ss:$2 sm:$0xff]
    %s2647 = scalar_lea.vmem [#allocation2], 369
    %v2648 = vld [vmem:[%s2647] ss:$2 sm:$0xff]
    %s2649 = scalar_lea.vmem [#allocation2], 385
    %v2650 = vld [vmem:[%s2649] ss:$2 sm:$0xff]
    %s2651 = scalar_lea.vmem [#allocation2], 401
    %v2652 = vld [vmem:[%s2651] ss:$2 sm:$0xff]
    %s2653 = scalar_lea.vmem [#allocation2], 417
    %v2654 = vld [vmem:[%s2653] ss:$2 sm:$0xff]
    %s2655 = scalar_lea.vmem [#allocation2], 433
    %v2656 = vld [vmem:[%s2655] ss:$2 sm:$0xff]
    %s2657 = scalar_lea.vmem [#allocation2], 449
    %v2658 = vld [vmem:[%s2657] ss:$2 sm:$0xff]
    %s2659 = scalar_lea.vmem [#allocation2], 465
    %v2660 = vld [vmem:[%s2659] ss:$2 sm:$0xff]
    %s2661 = scalar_lea.vmem [#allocation2], 481
    %v2662 = vld [vmem:[%s2661] ss:$2 sm:$0xff]
    %s2663 = scalar_lea.vmem [#allocation2], 497
    %v2664 = vld [vmem:[%s2663] ss:$2 sm:$0xff]
    %s2665 = scalar_lea.vmem [#allocation2], 513
    %v2666 = vld [vmem:[%s2665] ss:$2 sm:$0xff]
    %s2667 = scalar_lea.vmem [#allocation2], 529
    %v2668 = vld [vmem:[%s2667] ss:$2 sm:$0xff]
    %s2669 = scalar_lea.vmem [#allocation2], 545
    %v2670 = vld [vmem:[%s2669] ss:$2 sm:$0xff]
    %s2671 = scalar_lea.vmem [#allocation2], 561
    %v2672 = vld [vmem:[%s2671] ss:$2 sm:$0xff]
    %s2673 = scalar_lea.vmem [#allocation2], 577
    %v2674 = vld [vmem:[%s2673] ss:$2 sm:$0xff]
    %s2675 = scalar_lea.vmem [#allocation2], 593
    %v2676 = vld [vmem:[%s2675] ss:$2 sm:$0xff]
    %s2677 = scalar_lea.vmem [#allocation2], 609
    %v2678 = vld [vmem:[%s2677] ss:$2 sm:$0xff]
    %s2679 = scalar_lea.vmem [#allocation2], 625
    %v2680 = vld [vmem:[%s2679] ss:$2 sm:$0xff]
    %s2681 = scalar_lea.vmem [#allocation2], 641
    %v2682 = vld [vmem:[%s2681] ss:$2 sm:$0xff]
    %s2683 = scalar_lea.vmem [#allocation2], 657
    %v2684 = vld [vmem:[%s2683] ss:$2 sm:$0xff]
    %s2685 = scalar_lea.vmem [#allocation2], 673
    %v2686 = vld [vmem:[%s2685] ss:$2 sm:$0xff]
    %s2687 = scalar_lea.vmem [#allocation2], 689
    %v2688 = vld [vmem:[%s2687] ss:$2 sm:$0xff]
    %s2689 = scalar_lea.vmem [#allocation2], 705
    %v2690 = vld [vmem:[%s2689] ss:$2 sm:$0xff]
    %s2691 = scalar_lea.vmem [#allocation2], 721
    %v2692 = vld [vmem:[%s2691] ss:$2 sm:$0xff]
    %s2693 = scalar_lea.vmem [#allocation2], 737
    %v2694 = vld [vmem:[%s2693] ss:$2 sm:$0xff]
    %s2695 = scalar_lea.vmem [#allocation2], 753
    %v2696 = vld [vmem:[%s2695] ss:$2 sm:$0xff]
    %s2697 = scalar_lea.vmem [#allocation2], 769
    %v2698 = vld [vmem:[%s2697] ss:$2 sm:$0xff]
    %s2699 = scalar_lea.vmem [#allocation2], 785
    %v2700 = vld [vmem:[%s2699] ss:$2 sm:$0xff]
    %s2701 = scalar_lea.vmem [#allocation2], 801
    %v2702 = vld [vmem:[%s2701] ss:$2 sm:$0xff]
    %s2703 = scalar_lea.vmem [#allocation2], 817
    %v2704 = vld [vmem:[%s2703] ss:$2 sm:$0xff]
    %s2705 = scalar_lea.vmem [#allocation2], 833
    %v2706 = vld [vmem:[%s2705] ss:$2 sm:$0xff]
    %s2707 = scalar_lea.vmem [#allocation2], 849
    %v2708 = vld [vmem:[%s2707] ss:$2 sm:$0xff]
    %s2709 = scalar_lea.vmem [#allocation2], 865
    %v2710 = vld [vmem:[%s2709] ss:$2 sm:$0xff]
    %s2711 = scalar_lea.vmem [#allocation2], 881
    %v2712 = vld [vmem:[%s2711] ss:$2 sm:$0xff]
    %s2713 = scalar_lea.vmem [#allocation2], 897
    %v2714 = vld [vmem:[%s2713] ss:$2 sm:$0xff]
    %s2715 = scalar_lea.vmem [#allocation2], 913
    %v2716 = vld [vmem:[%s2715] ss:$2 sm:$0xff]
    %s2717 = scalar_lea.vmem [#allocation2], 929
    %v2718 = vld [vmem:[%s2717] ss:$2 sm:$0xff]
    %s2719 = scalar_lea.vmem [#allocation2], 945
    %v2720 = vld [vmem:[%s2719] ss:$2 sm:$0xff]
    %s2721 = scalar_lea.vmem [#allocation2], 961
    %v2722 = vld [vmem:[%s2721] ss:$2 sm:$0xff]
    %s2723 = scalar_lea.vmem [#allocation2], 977
    %v2724 = vld [vmem:[%s2723] ss:$2 sm:$0xff]
    %s2725 = scalar_lea.vmem [#allocation2], 993
    %v2726 = vld [vmem:[%s2725] ss:$2 sm:$0xff]
    %s2727 = scalar_lea.vmem [#allocation2], 1009
    %v2728 = vld [vmem:[%s2727] ss:$2 sm:$0xff]
    %s2729 = scalar_lea.vmem [#allocation2], 1025
    %v2730 = vld [vmem:[%s2729] ss:$2 sm:$0xff]
    %s2731 = scalar_lea.vmem [#allocation2], 1041
    %v2732 = vld [vmem:[%s2731] ss:$2 sm:$0xff]
    %s2733 = scalar_lea.vmem [#allocation2], 1057
    %v2734 = vld [vmem:[%s2733] ss:$2 sm:$0xff]
    %s2735 = scalar_lea.vmem [#allocation2], 1073
    %v2736 = vld [vmem:[%s2735] ss:$2 sm:$0xff]
    %s2737 = scalar_lea.vmem [#allocation2], 1089
    %v2738 = vld [vmem:[%s2737] ss:$2 sm:$0xff]
    %s2739 = scalar_lea.vmem [#allocation2], 1105
    %v2740 = vld [vmem:[%s2739] ss:$2 sm:$0xff]
    %s2741 = scalar_lea.vmem [#allocation2], 1121
    %v2742 = vld [vmem:[%s2741] ss:$2 sm:$0xff]
    %s2743 = scalar_lea.vmem [#allocation2], 1137
    %v2744 = vld [vmem:[%s2743] ss:$2 sm:$0xff]
    %s2745 = scalar_lea.vmem [#allocation2], 1153
    %v2746 = vld [vmem:[%s2745] ss:$2 sm:$0xff]
    %s2747 = scalar_lea.vmem [#allocation2], 1169
    %v2748 = vld [vmem:[%s2747] ss:$2 sm:$0xff]
    %s2749 = scalar_lea.vmem [#allocation2], 1185
    %v2750 = vld [vmem:[%s2749] ss:$2 sm:$0xff]
    %s2751 = scalar_lea.vmem [#allocation2], 1201
    %v2752 = vld [vmem:[%s2751] ss:$2 sm:$0xff]
    %s2753 = scalar_lea.vmem [#allocation2], 1217
    %v2754 = vld [vmem:[%s2753] ss:$2 sm:$0xff]
    %s2755 = scalar_lea.vmem [#allocation2], 1233
    %v2756 = vld [vmem:[%s2755] ss:$2 sm:$0xff]
    %s2757 = scalar_lea.vmem [#allocation2], 1249
    %v2758 = vld [vmem:[%s2757] ss:$2 sm:$0xff]
    %s2759 = scalar_lea.vmem [#allocation2], 1265
    %v2760 = vld [vmem:[%s2759] ss:$2 sm:$0xff]
    %s2761 = scalar_lea.vmem [#allocation2], 1281
    %v2762 = vld [vmem:[%s2761] ss:$2 sm:$0xff]
    %s2763 = scalar_lea.vmem [#allocation2], 1297
    %v2764 = vld [vmem:[%s2763] ss:$2 sm:$0xff]
    %s2765 = scalar_lea.vmem [#allocation2], 1313
    %v2766 = vld [vmem:[%s2765] ss:$2 sm:$0xff]
    %s2767 = scalar_lea.vmem [#allocation2], 1329
    %v2768 = vld [vmem:[%s2767] ss:$2 sm:$0xff]
    %s2769 = scalar_lea.vmem [#allocation2], 1345
    %v2770 = vld [vmem:[%s2769] ss:$2 sm:$0xff]
    %s2771 = scalar_lea.vmem [#allocation2], 1361
    %v2772 = vld [vmem:[%s2771] ss:$2 sm:$0xff]
    %s2773 = scalar_lea.vmem [#allocation2], 1377
    %v2774 = vld [vmem:[%s2773] ss:$2 sm:$0xff]
    %s2775 = scalar_lea.vmem [#allocation2], 1393
    %v2776 = vld [vmem:[%s2775] ss:$2 sm:$0xff]
    %s2777 = scalar_lea.vmem [#allocation2], 1409
    %v2778 = vld [vmem:[%s2777] ss:$2 sm:$0xff]
    %s2779 = scalar_lea.vmem [#allocation2], 1425
    %v2780 = vld [vmem:[%s2779] ss:$2 sm:$0xff]
    %s2781 = scalar_lea.vmem [#allocation2], 1441
    %v2782 = vld [vmem:[%s2781] ss:$2 sm:$0xff]
    %s2783 = scalar_lea.vmem [#allocation2], 1457
    %v2784 = vld [vmem:[%s2783] ss:$2 sm:$0xff]
    %s2785 = scalar_lea.vmem [#allocation2], 1473
    %v2786 = vld [vmem:[%s2785] ss:$2 sm:$0xff]
    %s2787 = scalar_lea.vmem [#allocation2], 1489
    %v2788 = vld [vmem:[%s2787] ss:$2 sm:$0xff]
    %s2789 = scalar_lea.vmem [#allocation2], 1505
    %v2790 = vld [vmem:[%s2789] ss:$2 sm:$0xff]
    %s2791 = scalar_lea.vmem [#allocation2], 1521
    %v2792 = vld [vmem:[%s2791] ss:$2 sm:$0xff]
    %s2793 = scalar_lea.vmem [#allocation2], 1537
    %v2794 = vld [vmem:[%s2793] ss:$2 sm:$0xff]
    %s2795 = scalar_lea.vmem [#allocation2], 1553
    %v2796 = vld [vmem:[%s2795] ss:$2 sm:$0xff]
    %s2797 = scalar_lea.vmem [#allocation2], 1569
    %v2798 = vld [vmem:[%s2797] ss:$2 sm:$0xff]
    %s2799 = scalar_lea.vmem [#allocation2], 1585
    %v2800 = vld [vmem:[%s2799] ss:$2 sm:$0xff]
    %s2801 = scalar_lea.vmem [#allocation2], 1601
    %v2802 = vld [vmem:[%s2801] ss:$2 sm:$0xff]
    %s2803 = scalar_lea.vmem [#allocation2], 1617
    %v2804 = vld [vmem:[%s2803] ss:$2 sm:$0xff]
    %s2805 = scalar_lea.vmem [#allocation2], 1633
    %v2806 = vld [vmem:[%s2805] ss:$2 sm:$0xff]
    %s2807 = scalar_lea.vmem [#allocation2], 1649
    %v2808 = vld [vmem:[%s2807] ss:$2 sm:$0xff]
    %s2809 = scalar_lea.vmem [#allocation2], 1665
    %v2810 = vld [vmem:[%s2809] ss:$2 sm:$0xff]
    %s2811 = scalar_lea.vmem [#allocation2], 1681
    %v2812 = vld [vmem:[%s2811] ss:$2 sm:$0xff]
    %s2813 = scalar_lea.vmem [#allocation2], 1697
    %v2814 = vld [vmem:[%s2813] ss:$2 sm:$0xff]
    %s2815 = scalar_lea.vmem [#allocation2], 1713
    %v2816 = vld [vmem:[%s2815] ss:$2 sm:$0xff]
    %s2817 = scalar_lea.vmem [#allocation2], 1729
    %v2818 = vld [vmem:[%s2817] ss:$2 sm:$0xff]
    %s2819 = scalar_lea.vmem [#allocation2], 1745
    %v2820 = vld [vmem:[%s2819] ss:$2 sm:$0xff]
    %s2821 = scalar_lea.vmem [#allocation2], 1761
    %v2822 = vld [vmem:[%s2821] ss:$2 sm:$0xff]
    %s2823 = scalar_lea.vmem [#allocation2], 1777
    %v2824 = vld [vmem:[%s2823] ss:$2 sm:$0xff]
    %v2825 = vmax.f32 %v2378, %v2602
    %v2826 = vmax.f32 %v2380, %v2604
    %v2827 = vmax.f32 %v2382, %v2606
    %v2828 = vmax.f32 %v2384, %v2608
    %v2829 = vmax.f32 %v2386, %v2610
    %v2830 = vmax.f32 %v2388, %v2612
    %v2831 = vmax.f32 %v2390, %v2614
    %v2832 = vmax.f32 %v2392, %v2616
    %v2833 = vmax.f32 %v2394, %v2618
    %v2834 = vmax.f32 %v2396, %v2620
    %v2835 = vmax.f32 %v2398, %v2622
    %v2836 = vmax.f32 %v2400, %v2624
    %v2837 = vmax.f32 %v2402, %v2626
    %v2838 = vmax.f32 %v2404, %v2628
    %v2839 = vmax.f32 %v2406, %v2630
    %v2840 = vmax.f32 %v2408, %v2632
    %v2841 = vmax.f32 %v2410, %v2634
    %v2842 = vmax.f32 %v2412, %v2636
    %v2843 = vmax.f32 %v2414, %v2638
    %v2844 = vmax.f32 %v2416, %v2640
    %v2845 = vmax.f32 %v2418, %v2642
    %v2846 = vmax.f32 %v2420, %v2644
    %v2847 = vmax.f32 %v2422, %v2646
    %v2848 = vmax.f32 %v2424, %v2648
    %v2849 = vmax.f32 %v2426, %v2650
    %v2850 = vmax.f32 %v2428, %v2652
    %v2851 = vmax.f32 %v2430, %v2654
    %v2852 = vmax.f32 %v2432, %v2656
    %v2853 = vmax.f32 %v2434, %v2658
    %v2854 = vmax.f32 %v2436, %v2660
    %v2855 = vmax.f32 %v2438, %v2662
    %v2856 = vmax.f32 %v2440, %v2664
    %v2857 = vmax.f32 %v2442, %v2666
    %v2858 = vmax.f32 %v2444, %v2668
    %v2859 = vmax.f32 %v2446, %v2670
    %v2860 = vmax.f32 %v2448, %v2672
    %v2861 = vmax.f32 %v2450, %v2674
    %v2862 = vmax.f32 %v2452, %v2676
    %v2863 = vmax.f32 %v2454, %v2678
    %v2864 = vmax.f32 %v2456, %v2680
    %v2865 = vmax.f32 %v2458, %v2682
    %v2866 = vmax.f32 %v2460, %v2684
    %v2867 = vmax.f32 %v2462, %v2686
    %v2868 = vmax.f32 %v2464, %v2688
    %v2869 = vmax.f32 %v2466, %v2690
    %v2870 = vmax.f32 %v2468, %v2692
    %v2871 = vmax.f32 %v2470, %v2694
    %v2872 = vmax.f32 %v2472, %v2696
    %v2873 = vmax.f32 %v2474, %v2698
    %v2874 = vmax.f32 %v2476, %v2700
    %v2875 = vmax.f32 %v2478, %v2702
    %v2876 = vmax.f32 %v2480, %v2704
    %v2877 = vmax.f32 %v2482, %v2706
    %v2878 = vmax.f32 %v2484, %v2708
    %v2879 = vmax.f32 %v2486, %v2710
    %v2880 = vmax.f32 %v2488, %v2712
    %v2881 = vmax.f32 %v2490, %v2714
    %v2882 = vmax.f32 %v2492, %v2716
    %v2883 = vmax.f32 %v2494, %v2718
    %v2884 = vmax.f32 %v2496, %v2720
    %v2885 = vmax.f32 %v2498, %v2722
    %v2886 = vmax.f32 %v2500, %v2724
    %v2887 = vmax.f32 %v2502, %v2726
    %v2888 = vmax.f32 %v2504, %v2728
    %v2889 = vmax.f32 %v2506, %v2730
    %v2890 = vmax.f32 %v2508, %v2732
    %v2891 = vmax.f32 %v2510, %v2734
    %v2892 = vmax.f32 %v2512, %v2736
    %v2893 = vmax.f32 %v2514, %v2738
    %v2894 = vmax.f32 %v2516, %v2740
    %v2895 = vmax.f32 %v2518, %v2742
    %v2896 = vmax.f32 %v2520, %v2744
    %v2897 = vmax.f32 %v2522, %v2746
    %v2898 = vmax.f32 %v2524, %v2748
    %v2899 = vmax.f32 %v2526, %v2750
    %v2900 = vmax.f32 %v2528, %v2752
    %v2901 = vmax.f32 %v2530, %v2754
    %v2902 = vmax.f32 %v2532, %v2756
    %v2903 = vmax.f32 %v2534, %v2758
    %v2904 = vmax.f32 %v2536, %v2760
    %v2905 = vmax.f32 %v2538, %v2762
    %v2906 = vmax.f32 %v2540, %v2764
    %v2907 = vmax.f32 %v2542, %v2766
    %v2908 = vmax.f32 %v2544, %v2768
    %v2909 = vmax.f32 %v2546, %v2770
    %v2910 = vmax.f32 %v2548, %v2772
    %v2911 = vmax.f32 %v2550, %v2774
    %v2912 = vmax.f32 %v2552, %v2776
    %v2913 = vmax.f32 %v2554, %v2778
    %v2914 = vmax.f32 %v2556, %v2780
    %v2915 = vmax.f32 %v2558, %v2782
    %v2916 = vmax.f32 %v2560, %v2784
    %v2917 = vmax.f32 %v2562, %v2786
    %v2918 = vmax.f32 %v2564, %v2788
    %v2919 = vmax.f32 %v2566, %v2790
    %v2920 = vmax.f32 %v2568, %v2792
    %v2921 = vmax.f32 %v2570, %v2794
    %v2922 = vmax.f32 %v2572, %v2796
    %v2923 = vmax.f32 %v2574, %v2798
    %v2924 = vmax.f32 %v2576, %v2800
    %v2925 = vmax.f32 %v2578, %v2802
    %v2926 = vmax.f32 %v2580, %v2804
    %v2927 = vmax.f32 %v2582, %v2806
    %v2928 = vmax.f32 %v2584, %v2808
    %v2929 = vmax.f32 %v2586, %v2810
    %v2930 = vmax.f32 %v2588, %v2812
    %v2931 = vmax.f32 %v2590, %v2814
    %v2932 = vmax.f32 %v2592, %v2816
    %v2933 = vmax.f32 %v2594, %v2818
    %v2934 = vmax.f32 %v2596, %v2820
    %v2935 = vmax.f32 %v2598, %v2822
    %v2936 = vmax.f32 %v2600, %v2824
    %v2937 = vmax.f32 %v2825, %v2827
    %v2938 = vmax.f32 %v2826, %v2828
    %v2939 = vmax.f32 %v2829, %v2831
    %v2940 = vmax.f32 %v2830, %v2832
    %v2941 = vmax.f32 %v2833, %v2835
    %v2942 = vmax.f32 %v2834, %v2836
    %v2943 = vmax.f32 %v2837, %v2839
    %v2944 = vmax.f32 %v2838, %v2840
    %v2945 = vmax.f32 %v2841, %v2843
    %v2946 = vmax.f32 %v2842, %v2844
    %v2947 = vmax.f32 %v2845, %v2847
    %v2948 = vmax.f32 %v2846, %v2848
    %v2949 = vmax.f32 %v2849, %v2851
    %v2950 = vmax.f32 %v2850, %v2852
    %v2951 = vmax.f32 %v2853, %v2855
    %v2952 = vmax.f32 %v2854, %v2856
    %v2953 = vmax.f32 %v2857, %v2859
    %v2954 = vmax.f32 %v2858, %v2860
    %v2955 = vmax.f32 %v2861, %v2863
    %v2956 = vmax.f32 %v2862, %v2864
    %v2957 = vmax.f32 %v2865, %v2867
    %v2958 = vmax.f32 %v2866, %v2868
    %v2959 = vmax.f32 %v2869, %v2871
    %v2960 = vmax.f32 %v2870, %v2872
    %v2961 = vmax.f32 %v2873, %v2875
    %v2962 = vmax.f32 %v2874, %v2876
    %v2963 = vmax.f32 %v2877, %v2879
    %v2964 = vmax.f32 %v2878, %v2880
    %v2965 = vmax.f32 %v2881, %v2883
    %v2966 = vmax.f32 %v2882, %v2884
    %v2967 = vmax.f32 %v2885, %v2887
    %v2968 = vmax.f32 %v2886, %v2888
    %v2969 = vmax.f32 %v2889, %v2891
    %v2970 = vmax.f32 %v2890, %v2892
    %v2971 = vmax.f32 %v2893, %v2895
    %v2972 = vmax.f32 %v2894, %v2896
    %v2973 = vmax.f32 %v2897, %v2899
    %v2974 = vmax.f32 %v2898, %v2900
    %v2975 = vmax.f32 %v2901, %v2903
    %v2976 = vmax.f32 %v2902, %v2904
    %v2977 = vmax.f32 %v2905, %v2907
    %v2978 = vmax.f32 %v2906, %v2908
    %v2979 = vmax.f32 %v2909, %v2911
    %v2980 = vmax.f32 %v2910, %v2912
    %v2981 = vmax.f32 %v2913, %v2915
    %v2982 = vmax.f32 %v2914, %v2916
    %v2983 = vmax.f32 %v2917, %v2919
    %v2984 = vmax.f32 %v2918, %v2920
    %v2985 = vmax.f32 %v2921, %v2923
    %v2986 = vmax.f32 %v2922, %v2924
    %v2987 = vmax.f32 %v2925, %v2927
    %v2988 = vmax.f32 %v2926, %v2928
    %v2989 = vmax.f32 %v2929, %v2931
    %v2990 = vmax.f32 %v2930, %v2932
    %v2991 = vmax.f32 %v2933, %v2935
    %v2992 = vmax.f32 %v2934, %v2936
    %vm2993 = vcmask 1048192
    %2994 = vst.msk [vmem:[#allocation4] sm:$0xff] %vm2993, 0.0
    %2995 = vst.msk [vmem:[#allocation4 + $0x8] sm:$0xff] %vm2993, 0.0
    %2996 = vst.msk [vmem:[#allocation4 + $0x10] sm:$0xff] %vm2993, 0.0
    %2997 = vst.msk [vmem:[#allocation4 + $0x18] sm:$0xff] %vm2993, 0.0
    %2998 = vst.msk [vmem:[#allocation4 + $0x20] sm:$0xff] %vm2993, 0.0
    %2999 = vst.msk [vmem:[#allocation4 + $0x28] sm:$0xff] %vm2993, 0.0
    %3000 = vst.msk [vmem:[#allocation4 + $0x30] sm:$0xff] %vm2993, 0.0
    %3001 = vst.msk [vmem:[#allocation4 + $0x38] sm:$0xff] %vm2993, 0.0
    %3002 = vst.msk [vmem:[#allocation4 + $0x40] sm:$0xff] %vm2993, 0.0
    %3003 = vst.msk [vmem:[#allocation4 + $0x48] sm:$0xff] %vm2993, 0.0
    %3004 = vst.msk [vmem:[#allocation4 + $0x50] sm:$0xff] %vm2993, 0.0
    %3005 = vst.msk [vmem:[#allocation4 + $0x58] sm:$0xff] %vm2993, 0.0
    %3006 = vst.msk [vmem:[#allocation4 + $0x60] sm:$0xff] %vm2993, 0.0
    %3007 = vst.msk [vmem:[#allocation4 + $0x68] sm:$0xff] %vm2993, 0.0
    %3008 = vst.msk [vmem:[#allocation4 + $0x70] sm:$0xff] %vm2993, 0.0
    %3009 = vst.msk [vmem:[#allocation4 + $0x78] sm:$0xff] %vm2993, 0.0
    %3010 = vst.msk [vmem:[#allocation4 + $0x80] sm:$0xff] %vm2993, 0.0
    %3011 = vst.msk [vmem:[#allocation4 + $0x88] sm:$0xff] %vm2993, 0.0
    %3012 = vst.msk [vmem:[#allocation4 + $0x90] sm:$0xff] %vm2993, 0.0
    %3013 = vst.msk [vmem:[#allocation4 + $0x98] sm:$0xff] %vm2993, 0.0
    %3014 = vst.msk [vmem:[#allocation4 + $0xa0] sm:$0xff] %vm2993, 0.0
    %3015 = vst.msk [vmem:[#allocation4 + $0xa8] sm:$0xff] %vm2993, 0.0
    %3016 = vst.msk [vmem:[#allocation4 + $0xb0] sm:$0xff] %vm2993, 0.0
    %3017 = vst.msk [vmem:[#allocation4 + $0xb8] sm:$0xff] %vm2993, 0.0
    %3018 = vst.msk [vmem:[#allocation4 + $0xc0] sm:$0xff] %vm2993, 0.0
    %3019 = vst.msk [vmem:[#allocation4 + $0xc8] sm:$0xff] %vm2993, 0.0
    %3020 = vst.msk [vmem:[#allocation4 + $0xd0] sm:$0xff] %vm2993, 0.0
    %3021 = vst.msk [vmem:[#allocation4 + $0xd8] sm:$0xff] %vm2993, 0.0
    %3022 = vst.msk [vmem:[#allocation4 + $0xe0] sm:$0xff] %vm2993, 0.0
    %3023 = vst.msk [vmem:[#allocation4 + $0xe8] sm:$0xff] %vm2993, 0.0
    %3024 = vst.msk [vmem:[#allocation4 + $0xf0] sm:$0xff] %vm2993, 0.0
    %3025 = vst.msk [vmem:[#allocation4 + $0xf8] sm:$0xff] %vm2993, 0.0
    %3026 = vst.msk [vmem:[#allocation4 + $0x100] sm:$0xff] %vm2993, 0.0
    %3027 = vst.msk [vmem:[#allocation4 + $0x108] sm:$0xff] %vm2993, 0.0
    %3028 = vst.msk [vmem:[#allocation4 + $0x110] sm:$0xff] %vm2993, 0.0
    %3029 = vst.msk [vmem:[#allocation4 + $0x118] sm:$0xff] %vm2993, 0.0
    %3030 = vst.msk [vmem:[#allocation4 + $0x120] sm:$0xff] %vm2993, 0.0
    %3031 = vst.msk [vmem:[#allocation4 + $0x128] sm:$0xff] %vm2993, 0.0
    %3032 = vst.msk [vmem:[#allocation4 + $0x130] sm:$0xff] %vm2993, 0.0
    %3033 = vst.msk [vmem:[#allocation4 + $0x138] sm:$0xff] %vm2993, 0.0
    %3034 = vst.msk [vmem:[#allocation4 + $0x140] sm:$0xff] %vm2993, 0.0
    %3035 = vst.msk [vmem:[#allocation4 + $0x148] sm:$0xff] %vm2993, 0.0
    %3036 = vst.msk [vmem:[#allocation4 + $0x150] sm:$0xff] %vm2993, 0.0
    %3037 = vst.msk [vmem:[#allocation4 + $0x158] sm:$0xff] %vm2993, 0.0
    %3038 = vst.msk [vmem:[#allocation4 + $0x160] sm:$0xff] %vm2993, 0.0
    %3039 = vst.msk [vmem:[#allocation4 + $0x168] sm:$0xff] %vm2993, 0.0
    %3040 = vst.msk [vmem:[#allocation4 + $0x170] sm:$0xff] %vm2993, 0.0
    %3041 = vst.msk [vmem:[#allocation4 + $0x178] sm:$0xff] %vm2993, 0.0
    %3042 = vst.msk [vmem:[#allocation4 + $0x180] sm:$0xff] %vm2993, 0.0
    %3043 = vst.msk [vmem:[#allocation4 + $0x188] sm:$0xff] %vm2993, 0.0
    %3044 = vst.msk [vmem:[#allocation4 + $0x190] sm:$0xff] %vm2993, 0.0
    %3045 = vst.msk [vmem:[#allocation4 + $0x198] sm:$0xff] %vm2993, 0.0
    %3046 = vst.msk [vmem:[#allocation4 + $0x1a0] sm:$0xff] %vm2993, 0.0
    %3047 = vst.msk [vmem:[#allocation4 + $0x1a8] sm:$0xff] %vm2993, 0.0
    %3048 = vst.msk [vmem:[#allocation4 + $0x1b0] sm:$0xff] %vm2993, 0.0
    %3049 = vst.msk [vmem:[#allocation4 + $0x1b8] sm:$0xff] %vm2993, 0.0
    %vm3050 = vcmask 130048
    %3051 = vst.msk [vmem:[#allocation4] sm:$0xff] %vm3050, %v2937
    %3052 = vst.msk [vmem:[#allocation4 + $0x8] sm:$0xff] %vm3050, %v2938
    %3053 = vst.msk [vmem:[#allocation4 + $0x10] sm:$0xff] %vm3050, %v2939
    %3054 = vst.msk [vmem:[#allocation4 + $0x18] sm:$0xff] %vm3050, %v2940
    %3055 = vst.msk [vmem:[#allocation4 + $0x20] sm:$0xff] %vm3050, %v2941
    %3056 = vst.msk [vmem:[#allocation4 + $0x28] sm:$0xff] %vm3050, %v2942
    %3057 = vst.msk [vmem:[#allocation4 + $0x30] sm:$0xff] %vm3050, %v2943
    %3058 = vst.msk [vmem:[#allocation4 + $0x38] sm:$0xff] %vm3050, %v2944
    %3059 = vst.msk [vmem:[#allocation4 + $0x40] sm:$0xff] %vm3050, %v2945
    %3060 = vst.msk [vmem:[#allocation4 + $0x48] sm:$0xff] %vm3050, %v2946
    %3061 = vst.msk [vmem:[#allocation4 + $0x50] sm:$0xff] %vm3050, %v2947
    %3062 = vst.msk [vmem:[#allocation4 + $0x58] sm:$0xff] %vm3050, %v2948
    %3063 = vst.msk [vmem:[#allocation4 + $0x60] sm:$0xff] %vm3050, %v2949
    %3064 = vst.msk [vmem:[#allocation4 + $0x68] sm:$0xff] %vm3050, %v2950
    %3065 = vst.msk [vmem:[#allocation4 + $0x70] sm:$0xff] %vm3050, %v2951
    %3066 = vst.msk [vmem:[#allocation4 + $0x78] sm:$0xff] %vm3050, %v2952
    %3067 = vst.msk [vmem:[#allocation4 + $0x80] sm:$0xff] %vm3050, %v2953
    %3068 = vst.msk [vmem:[#allocation4 + $0x88] sm:$0xff] %vm3050, %v2954
    %3069 = vst.msk [vmem:[#allocation4 + $0x90] sm:$0xff] %vm3050, %v2955
    %3070 = vst.msk [vmem:[#allocation4 + $0x98] sm:$0xff] %vm3050, %v2956
    %3071 = vst.msk [vmem:[#allocation4 + $0xa0] sm:$0xff] %vm3050, %v2957
    %3072 = vst.msk [vmem:[#allocation4 + $0xa8] sm:$0xff] %vm3050, %v2958
    %3073 = vst.msk [vmem:[#allocation4 + $0xb0] sm:$0xff] %vm3050, %v2959
    %3074 = vst.msk [vmem:[#allocation4 + $0xb8] sm:$0xff] %vm3050, %v2960
    %3075 = vst.msk [vmem:[#allocation4 + $0xc0] sm:$0xff] %vm3050, %v2961
    %3076 = vst.msk [vmem:[#allocation4 + $0xc8] sm:$0xff] %vm3050, %v2962
    %3077 = vst.msk [vmem:[#allocation4 + $0xd0] sm:$0xff] %vm3050, %v2963
    %3078 = vst.msk [vmem:[#allocation4 + $0xd8] sm:$0xff] %vm3050, %v2964
    %3079 = vst.msk [vmem:[#allocation4 + $0xe0] sm:$0xff] %vm3050, %v2965
    %3080 = vst.msk [vmem:[#allocation4 + $0xe8] sm:$0xff] %vm3050, %v2966
    %3081 = vst.msk [vmem:[#allocation4 + $0xf0] sm:$0xff] %vm3050, %v2967
    %3082 = vst.msk [vmem:[#allocation4 + $0xf8] sm:$0xff] %vm3050, %v2968
    %3083 = vst.msk [vmem:[#allocation4 + $0x100] sm:$0xff] %vm3050, %v2969
    %3084 = vst.msk [vmem:[#allocation4 + $0x108] sm:$0xff] %vm3050, %v2970
    %3085 = vst.msk [vmem:[#allocation4 + $0x110] sm:$0xff] %vm3050, %v2971
    %3086 = vst.msk [vmem:[#allocation4 + $0x118] sm:$0xff] %vm3050, %v2972
    %3087 = vst.msk [vmem:[#allocation4 + $0x120] sm:$0xff] %vm3050, %v2973
    %3088 = vst.msk [vmem:[#allocation4 + $0x128] sm:$0xff] %vm3050, %v2974
    %3089 = vst.msk [vmem:[#allocation4 + $0x130] sm:$0xff] %vm3050, %v2975
    %3090 = vst.msk [vmem:[#allocation4 + $0x138] sm:$0xff] %vm3050, %v2976
    %3091 = vst.msk [vmem:[#allocation4 + $0x140] sm:$0xff] %vm3050, %v2977
    %3092 = vst.msk [vmem:[#allocation4 + $0x148] sm:$0xff] %vm3050, %v2978
    %3093 = vst.msk [vmem:[#allocation4 + $0x150] sm:$0xff] %vm3050, %v2979
    %3094 = vst.msk [vmem:[#allocation4 + $0x158] sm:$0xff] %vm3050, %v2980
    %3095 = vst.msk [vmem:[#allocation4 + $0x160] sm:$0xff] %vm3050, %v2981
    %3096 = vst.msk [vmem:[#allocation4 + $0x168] sm:$0xff] %vm3050, %v2982
    %3097 = vst.msk [vmem:[#allocation4 + $0x170] sm:$0xff] %vm3050, %v2983
    %3098 = vst.msk [vmem:[#allocation4 + $0x178] sm:$0xff] %vm3050, %v2984
    %3099 = vst.msk [vmem:[#allocation4 + $0x180] sm:$0xff] %vm3050, %v2985
    %3100 = vst.msk [vmem:[#allocation4 + $0x188] sm:$0xff] %vm3050, %v2986
    %3101 = vst.msk [vmem:[#allocation4 + $0x190] sm:$0xff] %vm3050, %v2987
    %3102 = vst.msk [vmem:[#allocation4 + $0x198] sm:$0xff] %vm3050, %v2988
    %3103 = vst.msk [vmem:[#allocation4 + $0x1a0] sm:$0xff] %vm3050, %v2989
    %3104 = vst.msk [vmem:[#allocation4 + $0x1a8] sm:$0xff] %vm3050, %v2990
    %3105 = vst.msk [vmem:[#allocation4 + $0x1b0] sm:$0xff] %vm3050, %v2991
    %3106 = vst.msk [vmem:[#allocation4 + $0x1b8] sm:$0xff] %vm3050, %v2992
    %3164 = vrot.lane.b32.xlu0 %v2937, 16
    %v3165 = vpop.permute.xlu0 %3164
    %3166 = vrot.lane.b32.xlu0 %v2938, 16
    %v3167 = vpop.permute.xlu0 %3166
    %3168 = vrot.lane.b32.xlu0 %v2939, 16
    %v3169 = vpop.permute.xlu0 %3168
    %3170 = vrot.lane.b32.xlu0 %v2940, 16
    %v3171 = vpop.permute.xlu0 %3170
    %3172 = vrot.lane.b32.xlu0 %v2941, 16
    %v3173 = vpop.permute.xlu0 %3172
    %3174 = vrot.lane.b32.xlu0 %v2942, 16
    %v3175 = vpop.permute.xlu0 %3174
    %3176 = vrot.lane.b32.xlu0 %v2943, 16
    %v3177 = vpop.permute.xlu0 %3176
    %3178 = vrot.lane.b32.xlu0 %v2944, 16
    %v3179 = vpop.permute.xlu0 %3178
    %3180 = vrot.lane.b32.xlu0 %v2945, 16
    %v3181 = vpop.permute.xlu0 %3180
    %3182 = vrot.lane.b32.xlu0 %v2946, 16
    %v3183 = vpop.permute.xlu0 %3182
    %3184 = vrot.lane.b32.xlu0 %v2947, 16
    %v3185 = vpop.permute.xlu0 %3184
    %3186 = vrot.lane.b32.xlu0 %v2948, 16
    %v3187 = vpop.permute.xlu0 %3186
    %3188 = vrot.lane.b32.xlu0 %v2949, 16
    %v3189 = vpop.permute.xlu0 %3188
    %3190 = vrot.lane.b32.xlu0 %v2950, 16
    %v3191 = vpop.permute.xlu0 %3190
    %3192 = vrot.lane.b32.xlu0 %v2951, 16
    %v3193 = vpop.permute.xlu0 %3192
    %3194 = vrot.lane.b32.xlu0 %v2952, 16
    %v3195 = vpop.permute.xlu0 %3194
    %3196 = vrot.lane.b32.xlu0 %v2953, 16
    %v3197 = vpop.permute.xlu0 %3196
    %3198 = vrot.lane.b32.xlu0 %v2954, 16
    %v3199 = vpop.permute.xlu0 %3198
    %3200 = vrot.lane.b32.xlu0 %v2955, 16
    %v3201 = vpop.permute.xlu0 %3200
    %3202 = vrot.lane.b32.xlu0 %v2956, 16
    %v3203 = vpop.permute.xlu0 %3202
    %3204 = vrot.lane.b32.xlu0 %v2957, 16
    %v3205 = vpop.permute.xlu0 %3204
    %3206 = vrot.lane.b32.xlu0 %v2958, 16
    %v3207 = vpop.permute.xlu0 %3206
    %3208 = vrot.lane.b32.xlu0 %v2959, 16
    %v3209 = vpop.permute.xlu0 %3208
    %3210 = vrot.lane.b32.xlu0 %v2960, 16
    %v3211 = vpop.permute.xlu0 %3210
    %3212 = vrot.lane.b32.xlu0 %v2961, 16
    %v3213 = vpop.permute.xlu0 %3212
    %3214 = vrot.lane.b32.xlu0 %v2962, 16
    %v3215 = vpop.permute.xlu0 %3214
    %3216 = vrot.lane.b32.xlu0 %v2963, 16
    %v3217 = vpop.permute.xlu0 %3216
    %3218 = vrot.lane.b32.xlu0 %v2964, 16
    %v3219 = vpop.permute.xlu0 %3218
    %3220 = vrot.lane.b32.xlu0 0.0, 16
    %v3221 = vpop.permute.xlu0 %3220
    %3222 = vrot.lane.b32.xlu0 %v2965, 16
    %v3223 = vpop.permute.xlu0 %3222
    %3224 = vrot.lane.b32.xlu0 %v2966, 16
    %v3225 = vpop.permute.xlu0 %3224
    %3226 = vrot.lane.b32.xlu0 %v2967, 16
    %v3227 = vpop.permute.xlu0 %3226
    %3228 = vrot.lane.b32.xlu0 %v2968, 16
    %v3229 = vpop.permute.xlu0 %3228
    %3230 = vrot.lane.b32.xlu0 %v2969, 16
    %v3231 = vpop.permute.xlu0 %3230
    %3232 = vrot.lane.b32.xlu0 %v2970, 16
    %v3233 = vpop.permute.xlu0 %3232
    %3234 = vrot.lane.b32.xlu0 %v2971, 16
    %v3235 = vpop.permute.xlu0 %3234
    %3236 = vrot.lane.b32.xlu0 %v2972, 16
    %v3237 = vpop.permute.xlu0 %3236
    %3238 = vrot.lane.b32.xlu0 %v2973, 16
    %v3239 = vpop.permute.xlu0 %3238
    %3240 = vrot.lane.b32.xlu0 %v2974, 16
    %v3241 = vpop.permute.xlu0 %3240
    %3242 = vrot.lane.b32.xlu0 %v2975, 16
    %v3243 = vpop.permute.xlu0 %3242
    %3244 = vrot.lane.b32.xlu0 %v2976, 16
    %v3245 = vpop.permute.xlu0 %3244
    %3246 = vrot.lane.b32.xlu0 %v2977, 16
    %v3247 = vpop.permute.xlu0 %3246
    %3248 = vrot.lane.b32.xlu0 %v2978, 16
    %v3249 = vpop.permute.xlu0 %3248
    %3250 = vrot.lane.b32.xlu0 %v2979, 16
    %v3251 = vpop.permute.xlu0 %3250
    %3252 = vrot.lane.b32.xlu0 %v2980, 16
    %v3253 = vpop.permute.xlu0 %3252
    %3254 = vrot.lane.b32.xlu0 %v2981, 16
    %v3255 = vpop.permute.xlu0 %3254
    %3256 = vrot.lane.b32.xlu0 %v2982, 16
    %v3257 = vpop.permute.xlu0 %3256
    %3258 = vrot.lane.b32.xlu0 %v2983, 16
    %v3259 = vpop.permute.xlu0 %3258
    %3260 = vrot.lane.b32.xlu0 %v2984, 16
    %v3261 = vpop.permute.xlu0 %3260
    %3262 = vrot.lane.b32.xlu0 %v2985, 16
    %v3263 = vpop.permute.xlu0 %3262
    %3264 = vrot.lane.b32.xlu0 %v2986, 16
    %v3265 = vpop.permute.xlu0 %3264
    %3266 = vrot.lane.b32.xlu0 %v2987, 16
    %v3267 = vpop.permute.xlu0 %3266
    %3268 = vrot.lane.b32.xlu0 %v2988, 16
    %v3269 = vpop.permute.xlu0 %3268
    %3270 = vrot.lane.b32.xlu0 %v2989, 16
    %v3271 = vpop.permute.xlu0 %3270
    %3272 = vrot.lane.b32.xlu0 %v2990, 16
    %v3273 = vpop.permute.xlu0 %3272
    %3274 = vrot.lane.b32.xlu0 %v2991, 16
    %v3275 = vpop.permute.xlu0 %3274
    %3276 = vrot.lane.b32.xlu0 %v2992, 16
    %v3277 = vpop.permute.xlu0 %3276
    %vm3335 = vcmask 261249
    %3336 = vst.msk [vmem:[#allocation4 - $0x1] sm:$0xfe] %vm3335, %v3165
    %vm3337 = vcmask 261248
    %3338 = vst.msk [vmem:[#allocation4 + $0x7] sm:$0xff] %vm3337, %v3167
    %3339 = vst.msk [vmem:[#allocation4 + $0xf] sm:$0xff] %vm3337, %v3169
    %3340 = vst.msk [vmem:[#allocation4 + $0x17] sm:$0xff] %vm3337, %v3171
    %3341 = vst.msk [vmem:[#allocation4 + $0x1f] sm:$0xff] %vm3337, %v3173
    %3342 = vst.msk [vmem:[#allocation4 + $0x27] sm:$0xff] %vm3337, %v3175
    %3343 = vst.msk [vmem:[#allocation4 + $0x2f] sm:$0xff] %vm3337, %v3177
    %3344 = vst.msk [vmem:[#allocation4 + $0x37] sm:$0xff] %vm3337, %v3179
    %3345 = vst.msk [vmem:[#allocation4 + $0x3f] sm:$0xff] %vm3337, %v3181
    %3346 = vst.msk [vmem:[#allocation4 + $0x47] sm:$0xff] %vm3337, %v3183
    %3347 = vst.msk [vmem:[#allocation4 + $0x4f] sm:$0xff] %vm3337, %v3185
    %3348 = vst.msk [vmem:[#allocation4 + $0x57] sm:$0xff] %vm3337, %v3187
    %3349 = vst.msk [vmem:[#allocation4 + $0x5f] sm:$0xff] %vm3337, %v3189
    %3350 = vst.msk [vmem:[#allocation4 + $0x67] sm:$0xff] %vm3337, %v3191
    %3351 = vst.msk [vmem:[#allocation4 + $0x6f] sm:$0xff] %vm3337, %v3193
    %3352 = vst.msk [vmem:[#allocation4 + $0x77] sm:$0xff] %vm3337, %v3195
    %3353 = vst.msk [vmem:[#allocation4 + $0x7f] sm:$0xff] %vm3337, %v3197
    %3354 = vst.msk [vmem:[#allocation4 + $0x87] sm:$0xff] %vm3337, %v3199
    %3355 = vst.msk [vmem:[#allocation4 + $0x8f] sm:$0xff] %vm3337, %v3201
    %3356 = vst.msk [vmem:[#allocation4 + $0x97] sm:$0xff] %vm3337, %v3203
    %3357 = vst.msk [vmem:[#allocation4 + $0x9f] sm:$0xff] %vm3337, %v3205
    %3358 = vst.msk [vmem:[#allocation4 + $0xa7] sm:$0xff] %vm3337, %v3207
    %3359 = vst.msk [vmem:[#allocation4 + $0xaf] sm:$0xff] %vm3337, %v3209
    %3360 = vst.msk [vmem:[#allocation4 + $0xb7] sm:$0xff] %vm3337, %v3211
    %3361 = vst.msk [vmem:[#allocation4 + $0xbf] sm:$0xff] %vm3337, %v3213
    %3362 = vst.msk [vmem:[#allocation4 + $0xc7] sm:$0xff] %vm3337, %v3215
    %3363 = vst.msk [vmem:[#allocation4 + $0xcf] sm:$0xff] %vm3337, %v3217
    %3364 = vst.msk [vmem:[#allocation4 + $0xd7] sm:$0xff] %vm3337, %v3219
    %vm3365 = vcmask 254080
    %3366 = vst.msk [vmem:[#allocation4 + $0xdf] sm:$0x1] %vm3365, %v3221
    %3367 = vst.msk [vmem:[#allocation4 + $0xdf] sm:$0xfe] %vm3335, %v3223
    %3368 = vst.msk [vmem:[#allocation4 + $0xe7] sm:$0xff] %vm3337, %v3225
    %3369 = vst.msk [vmem:[#allocation4 + $0xef] sm:$0xff] %vm3337, %v3227
    %3370 = vst.msk [vmem:[#allocation4 + $0xf7] sm:$0xff] %vm3337, %v3229
    %3371 = vst.msk [vmem:[#allocation4 + $0xff] sm:$0xff] %vm3337, %v3231
    %3372 = vst.msk [vmem:[#allocation4 + $0x107] sm:$0xff] %vm3337, %v3233
    %3373 = vst.msk [vmem:[#allocation4 + $0x10f] sm:$0xff] %vm3337, %v3235
    %3374 = vst.msk [vmem:[#allocation4 + $0x117] sm:$0xff] %vm3337, %v3237
    %3375 = vst.msk [vmem:[#allocation4 + $0x11f] sm:$0xff] %vm3337, %v3239
    %3376 = vst.msk [vmem:[#allocation4 + $0x127] sm:$0xff] %vm3337, %v3241
    %3377 = vst.msk [vmem:[#allocation4 + $0x12f] sm:$0xff] %vm3337, %v3243
    %3378 = vst.msk [vmem:[#allocation4 + $0x137] sm:$0xff] %vm3337, %v3245
    %3379 = vst.msk [vmem:[#allocation4 + $0x13f] sm:$0xff] %vm3337, %v3247
    %3380 = vst.msk [vmem:[#allocation4 + $0x147] sm:$0xff] %vm3337, %v3249
    %3381 = vst.msk [vmem:[#allocation4 + $0x14f] sm:$0xff] %vm3337, %v3251
    %3382 = vst.msk [vmem:[#allocation4 + $0x157] sm:$0xff] %vm3337, %v3253
    %3383 = vst.msk [vmem:[#allocation4 + $0x15f] sm:$0xff] %vm3337, %v3255
    %3384 = vst.msk [vmem:[#allocation4 + $0x167] sm:$0xff] %vm3337, %v3257
    %3385 = vst.msk [vmem:[#allocation4 + $0x16f] sm:$0xff] %vm3337, %v3259
    %3386 = vst.msk [vmem:[#allocation4 + $0x177] sm:$0xff] %vm3337, %v3261
    %3387 = vst.msk [vmem:[#allocation4 + $0x17f] sm:$0xff] %vm3337, %v3263
    %3388 = vst.msk [vmem:[#allocation4 + $0x187] sm:$0xff] %vm3337, %v3265
    %3389 = vst.msk [vmem:[#allocation4 + $0x18f] sm:$0xff] %vm3337, %v3267
    %3390 = vst.msk [vmem:[#allocation4 + $0x197] sm:$0xff] %vm3337, %v3269
    %3391 = vst.msk [vmem:[#allocation4 + $0x19f] sm:$0xff] %vm3337, %v3271
    %3392 = vst.msk [vmem:[#allocation4 + $0x1a7] sm:$0xff] %vm3337, %v3273
    %3393 = vst.msk [vmem:[#allocation4 + $0x1af] sm:$0xff] %vm3337, %v3275
    %3394 = vst.msk [vmem:[#allocation4 + $0x1b7] sm:$0xff] %vm3337, %v3277
    %3395 = vst.msk [vmem:[#allocation4 + $0x1bf] sm:$0x1] %vm3365, %v3221
    %3396 = vrot.lane.b32.xlu0 %v2937, 32
    %v3397 = vpop.permute.xlu0 %3396
    %3398 = vrot.lane.b32.xlu0 %v2938, 32
    %v3399 = vpop.permute.xlu0 %3398
    %3400 = vrot.lane.b32.xlu0 %v2939, 32
    %v3401 = vpop.permute.xlu0 %3400
    %3402 = vrot.lane.b32.xlu0 %v2940, 32
    %v3403 = vpop.permute.xlu0 %3402
    %3404 = vrot.lane.b32.xlu0 %v2941, 32
    %v3405 = vpop.permute.xlu0 %3404
    %3406 = vrot.lane.b32.xlu0 %v2942, 32
    %v3407 = vpop.permute.xlu0 %3406
    %3408 = vrot.lane.b32.xlu0 %v2943, 32
    %v3409 = vpop.permute.xlu0 %3408
    %3410 = vrot.lane.b32.xlu0 %v2944, 32
    %v3411 = vpop.permute.xlu0 %3410
    %3412 = vrot.lane.b32.xlu0 %v2945, 32
    %v3413 = vpop.permute.xlu0 %3412
    %3414 = vrot.lane.b32.xlu0 %v2946, 32
    %v3415 = vpop.permute.xlu0 %3414
    %3416 = vrot.lane.b32.xlu0 %v2947, 32
    %v3417 = vpop.permute.xlu0 %3416
    %3418 = vrot.lane.b32.xlu0 %v2948, 32
    %v3419 = vpop.permute.xlu0 %3418
    %3420 = vrot.lane.b32.xlu0 %v2949, 32
    %v3421 = vpop.permute.xlu0 %3420
    %3422 = vrot.lane.b32.xlu0 %v2950, 32
    %v3423 = vpop.permute.xlu0 %3422
    %3424 = vrot.lane.b32.xlu0 %v2951, 32
    %v3425 = vpop.permute.xlu0 %3424
    %3426 = vrot.lane.b32.xlu0 %v2952, 32
    %v3427 = vpop.permute.xlu0 %3426
    %3428 = vrot.lane.b32.xlu0 %v2953, 32
    %v3429 = vpop.permute.xlu0 %3428
    %3430 = vrot.lane.b32.xlu0 %v2954, 32
    %v3431 = vpop.permute.xlu0 %3430
    %3432 = vrot.lane.b32.xlu0 %v2955, 32
    %v3433 = vpop.permute.xlu0 %3432
    %3434 = vrot.lane.b32.xlu0 %v2956, 32
    %v3435 = vpop.permute.xlu0 %3434
    %3436 = vrot.lane.b32.xlu0 %v2957, 32
    %v3437 = vpop.permute.xlu0 %3436
    %3438 = vrot.lane.b32.xlu0 %v2958, 32
    %v3439 = vpop.permute.xlu0 %3438
    %3440 = vrot.lane.b32.xlu0 %v2959, 32
    %v3441 = vpop.permute.xlu0 %3440
    %3442 = vrot.lane.b32.xlu0 %v2960, 32
    %v3443 = vpop.permute.xlu0 %3442
    %3444 = vrot.lane.b32.xlu0 %v2961, 32
    %v3445 = vpop.permute.xlu0 %3444
    %3446 = vrot.lane.b32.xlu0 %v2962, 32
    %v3447 = vpop.permute.xlu0 %3446
    %3448 = vrot.lane.b32.xlu0 %v2963, 32
    %v3449 = vpop.permute.xlu0 %3448
    %3450 = vrot.lane.b32.xlu0 %v2964, 32
    %v3451 = vpop.permute.xlu0 %3450
    %3452 = vrot.lane.b32.xlu0 0.0, 32
    %v3453 = vpop.permute.xlu0 %3452
    %3454 = vrot.lane.b32.xlu0 %v2965, 32
    %v3455 = vpop.permute.xlu0 %3454
    %3456 = vrot.lane.b32.xlu0 %v2966, 32
    %v3457 = vpop.permute.xlu0 %3456
    %3458 = vrot.lane.b32.xlu0 %v2967, 32
    %v3459 = vpop.permute.xlu0 %3458
    %3460 = vrot.lane.b32.xlu0 %v2968, 32
    %v3461 = vpop.permute.xlu0 %3460
    %3462 = vrot.lane.b32.xlu0 %v2969, 32
    %v3463 = vpop.permute.xlu0 %3462
    %3464 = vrot.lane.b32.xlu0 %v2970, 32
    %v3465 = vpop.permute.xlu0 %3464
    %3466 = vrot.lane.b32.xlu0 %v2971, 32
    %v3467 = vpop.permute.xlu0 %3466
    %3468 = vrot.lane.b32.xlu0 %v2972, 32
    %v3469 = vpop.permute.xlu0 %3468
    %3470 = vrot.lane.b32.xlu0 %v2973, 32
    %v3471 = vpop.permute.xlu0 %3470
    %3472 = vrot.lane.b32.xlu0 %v2974, 32
    %v3473 = vpop.permute.xlu0 %3472
    %3474 = vrot.lane.b32.xlu0 %v2975, 32
    %v3475 = vpop.permute.xlu0 %3474
    %3476 = vrot.lane.b32.xlu0 %v2976, 32
    %v3477 = vpop.permute.xlu0 %3476
    %3478 = vrot.lane.b32.xlu0 %v2977, 32
    %v3479 = vpop.permute.xlu0 %3478
    %3480 = vrot.lane.b32.xlu0 %v2978, 32
    %v3481 = vpop.permute.xlu0 %3480
    %3482 = vrot.lane.b32.xlu0 %v2979, 32
    %v3483 = vpop.permute.xlu0 %3482
    %3484 = vrot.lane.b32.xlu0 %v2980, 32
    %v3485 = vpop.permute.xlu0 %3484
    %3486 = vrot.lane.b32.xlu0 %v2981, 32
    %v3487 = vpop.permute.xlu0 %3486
    %3488 = vrot.lane.b32.xlu0 %v2982, 32
    %v3489 = vpop.permute.xlu0 %3488
    %3490 = vrot.lane.b32.xlu0 %v2983, 32
    %v3491 = vpop.permute.xlu0 %3490
    %3492 = vrot.lane.b32.xlu0 %v2984, 32
    %v3493 = vpop.permute.xlu0 %3492
    %3494 = vrot.lane.b32.xlu0 %v2985, 32
    %v3495 = vpop.permute.xlu0 %3494
    %3496 = vrot.lane.b32.xlu0 %v2986, 32
    %v3497 = vpop.permute.xlu0 %3496
    %3498 = vrot.lane.b32.xlu0 %v2987, 32
    %v3499 = vpop.permute.xlu0 %3498
    %3500 = vrot.lane.b32.xlu0 %v2988, 32
    %v3501 = vpop.permute.xlu0 %3500
    %3502 = vrot.lane.b32.xlu0 %v2989, 32
    %v3503 = vpop.permute.xlu0 %3502
    %3504 = vrot.lane.b32.xlu0 %v2990, 32
    %v3505 = vpop.permute.xlu0 %3504
    %3506 = vrot.lane.b32.xlu0 %v2991, 32
    %v3507 = vpop.permute.xlu0 %3506
    %3508 = vrot.lane.b32.xlu0 %v2992, 32
    %v3509 = vpop.permute.xlu0 %3508
    %vm3567 = vcmask 392450
    %3568 = vst.msk [vmem:[#allocation4 - $0x2] sm:$0xfc] %vm3567, %v3397
    %vm3569 = vcmask 392448
    %3570 = vst.msk [vmem:[#allocation4 + $0x6] sm:$0xff] %vm3569, %v3399
    %3571 = vst.msk [vmem:[#allocation4 + $0xe] sm:$0xff] %vm3569, %v3401
    %3572 = vst.msk [vmem:[#allocation4 + $0x16] sm:$0xff] %vm3569, %v3403
    %3573 = vst.msk [vmem:[#allocation4 + $0x1e] sm:$0xff] %vm3569, %v3405
    %3574 = vst.msk [vmem:[#allocation4 + $0x26] sm:$0xff] %vm3569, %v3407
    %3575 = vst.msk [vmem:[#allocation4 + $0x2e] sm:$0xff] %vm3569, %v3409
    %3576 = vst.msk [vmem:[#allocation4 + $0x36] sm:$0xff] %vm3569, %v3411
    %3577 = vst.msk [vmem:[#allocation4 + $0x3e] sm:$0xff] %vm3569, %v3413
    %3578 = vst.msk [vmem:[#allocation4 + $0x46] sm:$0xff] %vm3569, %v3415
    %3579 = vst.msk [vmem:[#allocation4 + $0x4e] sm:$0xff] %vm3569, %v3417
    %3580 = vst.msk [vmem:[#allocation4 + $0x56] sm:$0xff] %vm3569, %v3419
    %3581 = vst.msk [vmem:[#allocation4 + $0x5e] sm:$0xff] %vm3569, %v3421
    %3582 = vst.msk [vmem:[#allocation4 + $0x66] sm:$0xff] %vm3569, %v3423
    %3583 = vst.msk [vmem:[#allocation4 + $0x6e] sm:$0xff] %vm3569, %v3425
    %3584 = vst.msk [vmem:[#allocation4 + $0x76] sm:$0xff] %vm3569, %v3427
    %3585 = vst.msk [vmem:[#allocation4 + $0x7e] sm:$0xff] %vm3569, %v3429
    %3586 = vst.msk [vmem:[#allocation4 + $0x86] sm:$0xff] %vm3569, %v3431
    %3587 = vst.msk [vmem:[#allocation4 + $0x8e] sm:$0xff] %vm3569, %v3433
    %3588 = vst.msk [vmem:[#allocation4 + $0x96] sm:$0xff] %vm3569, %v3435
    %3589 = vst.msk [vmem:[#allocation4 + $0x9e] sm:$0xff] %vm3569, %v3437
    %3590 = vst.msk [vmem:[#allocation4 + $0xa6] sm:$0xff] %vm3569, %v3439
    %3591 = vst.msk [vmem:[#allocation4 + $0xae] sm:$0xff] %vm3569, %v3441
    %3592 = vst.msk [vmem:[#allocation4 + $0xb6] sm:$0xff] %vm3569, %v3443
    %3593 = vst.msk [vmem:[#allocation4 + $0xbe] sm:$0xff] %vm3569, %v3445
    %3594 = vst.msk [vmem:[#allocation4 + $0xc6] sm:$0xff] %vm3569, %v3447
    %3595 = vst.msk [vmem:[#allocation4 + $0xce] sm:$0xff] %vm3569, %v3449
    %3596 = vst.msk [vmem:[#allocation4 + $0xd6] sm:$0xff] %vm3569, %v3451
    %vm3597 = vcmask 386304
    %3598 = vst.msk [vmem:[#allocation4 + $0xde] sm:$0x3] %vm3597, %v3453
    %3599 = vst.msk [vmem:[#allocation4 + $0xde] sm:$0xfc] %vm3567, %v3455
    %3600 = vst.msk [vmem:[#allocation4 + $0xe6] sm:$0xff] %vm3569, %v3457
    %3601 = vst.msk [vmem:[#allocation4 + $0xee] sm:$0xff] %vm3569, %v3459
    %3602 = vst.msk [vmem:[#allocation4 + $0xf6] sm:$0xff] %vm3569, %v3461
    %3603 = vst.msk [vmem:[#allocation4 + $0xfe] sm:$0xff] %vm3569, %v3463
    %3604 = vst.msk [vmem:[#allocation4 + $0x106] sm:$0xff] %vm3569, %v3465
    %3605 = vst.msk [vmem:[#allocation4 + $0x10e] sm:$0xff] %vm3569, %v3467
    %3606 = vst.msk [vmem:[#allocation4 + $0x116] sm:$0xff] %vm3569, %v3469
    %3607 = vst.msk [vmem:[#allocation4 + $0x11e] sm:$0xff] %vm3569, %v3471
    %3608 = vst.msk [vmem:[#allocation4 + $0x126] sm:$0xff] %vm3569, %v3473
    %3609 = vst.msk [vmem:[#allocation4 + $0x12e] sm:$0xff] %vm3569, %v3475
    %3610 = vst.msk [vmem:[#allocation4 + $0x136] sm:$0xff] %vm3569, %v3477
    %3611 = vst.msk [vmem:[#allocation4 + $0x13e] sm:$0xff] %vm3569, %v3479
    %3612 = vst.msk [vmem:[#allocation4 + $0x146] sm:$0xff] %vm3569, %v3481
    %3613 = vst.msk [vmem:[#allocation4 + $0x14e] sm:$0xff] %vm3569, %v3483
    %3614 = vst.msk [vmem:[#allocation4 + $0x156] sm:$0xff] %vm3569, %v3485
    %3615 = vst.msk [vmem:[#allocation4 + $0x15e] sm:$0xff] %vm3569, %v3487
    %3616 = vst.msk [vmem:[#allocation4 + $0x166] sm:$0xff] %vm3569, %v3489
    %3617 = vst.msk [vmem:[#allocation4 + $0x16e] sm:$0xff] %vm3569, %v3491
    %3618 = vst.msk [vmem:[#allocation4 + $0x176] sm:$0xff] %vm3569, %v3493
    %3619 = vst.msk [vmem:[#allocation4 + $0x17e] sm:$0xff] %vm3569, %v3495
    %3620 = vst.msk [vmem:[#allocation4 + $0x186] sm:$0xff] %vm3569, %v3497
    %3621 = vst.msk [vmem:[#allocation4 + $0x18e] sm:$0xff] %vm3569, %v3499
    %3622 = vst.msk [vmem:[#allocation4 + $0x196] sm:$0xff] %vm3569, %v3501
    %3623 = vst.msk [vmem:[#allocation4 + $0x19e] sm:$0xff] %vm3569, %v3503
    %3624 = vst.msk [vmem:[#allocation4 + $0x1a6] sm:$0xff] %vm3569, %v3505
    %3625 = vst.msk [vmem:[#allocation4 + $0x1ae] sm:$0xff] %vm3569, %v3507
    %3626 = vst.msk [vmem:[#allocation4 + $0x1b6] sm:$0xff] %vm3569, %v3509
    %3627 = vst.msk [vmem:[#allocation4 + $0x1be] sm:$0x3] %vm3597, %v3453
    %3628 = vrot.lane.b32.xlu0 %v2937, 48
    %v3629 = vpop.permute.xlu0 %3628
    %3630 = vrot.lane.b32.xlu0 %v2938, 48
    %v3631 = vpop.permute.xlu0 %3630
    %3632 = vrot.lane.b32.xlu0 %v2939, 48
    %v3633 = vpop.permute.xlu0 %3632
    %3634 = vrot.lane.b32.xlu0 %v2940, 48
    %v3635 = vpop.permute.xlu0 %3634
    %3636 = vrot.lane.b32.xlu0 %v2941, 48
    %v3637 = vpop.permute.xlu0 %3636
    %3638 = vrot.lane.b32.xlu0 %v2942, 48
    %v3639 = vpop.permute.xlu0 %3638
    %3640 = vrot.lane.b32.xlu0 %v2943, 48
    %v3641 = vpop.permute.xlu0 %3640
    %3642 = vrot.lane.b32.xlu0 %v2944, 48
    %v3643 = vpop.permute.xlu0 %3642
    %3644 = vrot.lane.b32.xlu0 %v2945, 48
    %v3645 = vpop.permute.xlu0 %3644
    %3646 = vrot.lane.b32.xlu0 %v2946, 48
    %v3647 = vpop.permute.xlu0 %3646
    %3648 = vrot.lane.b32.xlu0 %v2947, 48
    %v3649 = vpop.permute.xlu0 %3648
    %3650 = vrot.lane.b32.xlu0 %v2948, 48
    %v3651 = vpop.permute.xlu0 %3650
    %3652 = vrot.lane.b32.xlu0 %v2949, 48
    %v3653 = vpop.permute.xlu0 %3652
    %3654 = vrot.lane.b32.xlu0 %v2950, 48
    %v3655 = vpop.permute.xlu0 %3654
    %3656 = vrot.lane.b32.xlu0 %v2951, 48
    %v3657 = vpop.permute.xlu0 %3656
    %3658 = vrot.lane.b32.xlu0 %v2952, 48
    %v3659 = vpop.permute.xlu0 %3658
    %3660 = vrot.lane.b32.xlu0 %v2953, 48
    %v3661 = vpop.permute.xlu0 %3660
    %3662 = vrot.lane.b32.xlu0 %v2954, 48
    %v3663 = vpop.permute.xlu0 %3662
    %3664 = vrot.lane.b32.xlu0 %v2955, 48
    %v3665 = vpop.permute.xlu0 %3664
    %3666 = vrot.lane.b32.xlu0 %v2956, 48
    %v3667 = vpop.permute.xlu0 %3666
    %3668 = vrot.lane.b32.xlu0 %v2957, 48
    %v3669 = vpop.permute.xlu0 %3668
    %3670 = vrot.lane.b32.xlu0 %v2958, 48
    %v3671 = vpop.permute.xlu0 %3670
    %3672 = vrot.lane.b32.xlu0 %v2959, 48
    %v3673 = vpop.permute.xlu0 %3672
    %3674 = vrot.lane.b32.xlu0 %v2960, 48
    %v3675 = vpop.permute.xlu0 %3674
    %3676 = vrot.lane.b32.xlu0 %v2961, 48
    %v3677 = vpop.permute.xlu0 %3676
    %3678 = vrot.lane.b32.xlu0 %v2962, 48
    %v3679 = vpop.permute.xlu0 %3678
    %3680 = vrot.lane.b32.xlu0 %v2963, 48
    %v3681 = vpop.permute.xlu0 %3680
    %3682 = vrot.lane.b32.xlu0 %v2964, 48
    %v3683 = vpop.permute.xlu0 %3682
    %3684 = vrot.lane.b32.xlu0 0.0, 48
    %v3685 = vpop.permute.xlu0 %3684
    %3686 = vrot.lane.b32.xlu0 %v2965, 48
    %v3687 = vpop.permute.xlu0 %3686
    %3688 = vrot.lane.b32.xlu0 %v2966, 48
    %v3689 = vpop.permute.xlu0 %3688
    %3690 = vrot.lane.b32.xlu0 %v2967, 48
    %v3691 = vpop.permute.xlu0 %3690
    %3692 = vrot.lane.b32.xlu0 %v2968, 48
    %v3693 = vpop.permute.xlu0 %3692
    %3694 = vrot.lane.b32.xlu0 %v2969, 48
    %v3695 = vpop.permute.xlu0 %3694
    %3696 = vrot.lane.b32.xlu0 %v2970, 48
    %v3697 = vpop.permute.xlu0 %3696
    %3698 = vrot.lane.b32.xlu0 %v2971, 48
    %v3699 = vpop.permute.xlu0 %3698
    %3700 = vrot.lane.b32.xlu0 %v2972, 48
    %v3701 = vpop.permute.xlu0 %3700
    %3702 = vrot.lane.b32.xlu0 %v2973, 48
    %v3703 = vpop.permute.xlu0 %3702
    %3704 = vrot.lane.b32.xlu0 %v2974, 48
    %v3705 = vpop.permute.xlu0 %3704
    %3706 = vrot.lane.b32.xlu0 %v2975, 48
    %v3707 = vpop.permute.xlu0 %3706
    %3708 = vrot.lane.b32.xlu0 %v2976, 48
    %v3709 = vpop.permute.xlu0 %3708
    %3710 = vrot.lane.b32.xlu0 %v2977, 48
    %v3711 = vpop.permute.xlu0 %3710
    %3712 = vrot.lane.b32.xlu0 %v2978, 48
    %v3713 = vpop.permute.xlu0 %3712
    %3714 = vrot.lane.b32.xlu0 %v2979, 48
    %v3715 = vpop.permute.xlu0 %3714
    %3716 = vrot.lane.b32.xlu0 %v2980, 48
    %v3717 = vpop.permute.xlu0 %3716
    %3718 = vrot.lane.b32.xlu0 %v2981, 48
    %v3719 = vpop.permute.xlu0 %3718
    %3720 = vrot.lane.b32.xlu0 %v2982, 48
    %v3721 = vpop.permute.xlu0 %3720
    %3722 = vrot.lane.b32.xlu0 %v2983, 48
    %v3723 = vpop.permute.xlu0 %3722
    %3724 = vrot.lane.b32.xlu0 %v2984, 48
    %v3725 = vpop.permute.xlu0 %3724
    %3726 = vrot.lane.b32.xlu0 %v2985, 48
    %v3727 = vpop.permute.xlu0 %3726
    %3728 = vrot.lane.b32.xlu0 %v2986, 48
    %v3729 = vpop.permute.xlu0 %3728
    %3730 = vrot.lane.b32.xlu0 %v2987, 48
    %v3731 = vpop.permute.xlu0 %3730
    %3732 = vrot.lane.b32.xlu0 %v2988, 48
    %v3733 = vpop.permute.xlu0 %3732
    %3734 = vrot.lane.b32.xlu0 %v2989, 48
    %v3735 = vpop.permute.xlu0 %3734
    %3736 = vrot.lane.b32.xlu0 %v2990, 48
    %v3737 = vpop.permute.xlu0 %3736
    %3738 = vrot.lane.b32.xlu0 %v2991, 48
    %v3739 = vpop.permute.xlu0 %3738
    %3740 = vrot.lane.b32.xlu0 %v2992, 48
    %v3741 = vpop.permute.xlu0 %3740
    %vm3799 = vcmask 523651
    %3800 = vst.msk [vmem:[#allocation4 - $0x3] sm:$0xf8] %vm3799, %v3629
    %vm3801 = vcmask 523648
    %3802 = vst.msk [vmem:[#allocation4 + $0x5] sm:$0xff] %vm3801, %v3631
    %3803 = vst.msk [vmem:[#allocation4 + $0xd] sm:$0xff] %vm3801, %v3633
    %3804 = vst.msk [vmem:[#allocation4 + $0x15] sm:$0xff] %vm3801, %v3635
    %3805 = vst.msk [vmem:[#allocation4 + $0x1d] sm:$0xff] %vm3801, %v3637
    %3806 = vst.msk [vmem:[#allocation4 + $0x25] sm:$0xff] %vm3801, %v3639
    %3807 = vst.msk [vmem:[#allocation4 + $0x2d] sm:$0xff] %vm3801, %v3641
    %3808 = vst.msk [vmem:[#allocation4 + $0x35] sm:$0xff] %vm3801, %v3643
    %3809 = vst.msk [vmem:[#allocation4 + $0x3d] sm:$0xff] %vm3801, %v3645
    %3810 = vst.msk [vmem:[#allocation4 + $0x45] sm:$0xff] %vm3801, %v3647
    %3811 = vst.msk [vmem:[#allocation4 + $0x4d] sm:$0xff] %vm3801, %v3649
    %3812 = vst.msk [vmem:[#allocation4 + $0x55] sm:$0xff] %vm3801, %v3651
    %3813 = vst.msk [vmem:[#allocation4 + $0x5d] sm:$0xff] %vm3801, %v3653
    %3814 = vst.msk [vmem:[#allocation4 + $0x65] sm:$0xff] %vm3801, %v3655
    %3815 = vst.msk [vmem:[#allocation4 + $0x6d] sm:$0xff] %vm3801, %v3657
    %3816 = vst.msk [vmem:[#allocation4 + $0x75] sm:$0xff] %vm3801, %v3659
    %3817 = vst.msk [vmem:[#allocation4 + $0x7d] sm:$0xff] %vm3801, %v3661
    %3818 = vst.msk [vmem:[#allocation4 + $0x85] sm:$0xff] %vm3801, %v3663
    %3819 = vst.msk [vmem:[#allocation4 + $0x8d] sm:$0xff] %vm3801, %v3665
    %3820 = vst.msk [vmem:[#allocation4 + $0x95] sm:$0xff] %vm3801, %v3667
    %3821 = vst.msk [vmem:[#allocation4 + $0x9d] sm:$0xff] %vm3801, %v3669
    %3822 = vst.msk [vmem:[#allocation4 + $0xa5] sm:$0xff] %vm3801, %v3671
    %3823 = vst.msk [vmem:[#allocation4 + $0xad] sm:$0xff] %vm3801, %v3673
    %3824 = vst.msk [vmem:[#allocation4 + $0xb5] sm:$0xff] %vm3801, %v3675
    %3825 = vst.msk [vmem:[#allocation4 + $0xbd] sm:$0xff] %vm3801, %v3677
    %3826 = vst.msk [vmem:[#allocation4 + $0xc5] sm:$0xff] %vm3801, %v3679
    %3827 = vst.msk [vmem:[#allocation4 + $0xcd] sm:$0xff] %vm3801, %v3681
    %3828 = vst.msk [vmem:[#allocation4 + $0xd5] sm:$0xff] %vm3801, %v3683
    %vm3829 = vcmask 518528
    %3830 = vst.msk [vmem:[#allocation4 + $0xdd] sm:$0x7] %vm3829, %v3685
    %3831 = vst.msk [vmem:[#allocation4 + $0xdd] sm:$0xf8] %vm3799, %v3687
    %3832 = vst.msk [vmem:[#allocation4 + $0xe5] sm:$0xff] %vm3801, %v3689
    %3833 = vst.msk [vmem:[#allocation4 + $0xed] sm:$0xff] %vm3801, %v3691
    %3834 = vst.msk [vmem:[#allocation4 + $0xf5] sm:$0xff] %vm3801, %v3693
    %3835 = vst.msk [vmem:[#allocation4 + $0xfd] sm:$0xff] %vm3801, %v3695
    %3836 = vst.msk [vmem:[#allocation4 + $0x105] sm:$0xff] %vm3801, %v3697
    %3837 = vst.msk [vmem:[#allocation4 + $0x10d] sm:$0xff] %vm3801, %v3699
    %3838 = vst.msk [vmem:[#allocation4 + $0x115] sm:$0xff] %vm3801, %v3701
    %3839 = vst.msk [vmem:[#allocation4 + $0x11d] sm:$0xff] %vm3801, %v3703
    %3840 = vst.msk [vmem:[#allocation4 + $0x125] sm:$0xff] %vm3801, %v3705
    %3841 = vst.msk [vmem:[#allocation4 + $0x12d] sm:$0xff] %vm3801, %v3707
    %3842 = vst.msk [vmem:[#allocation4 + $0x135] sm:$0xff] %vm3801, %v3709
    %3843 = vst.msk [vmem:[#allocation4 + $0x13d] sm:$0xff] %vm3801, %v3711
    %3844 = vst.msk [vmem:[#allocation4 + $0x145] sm:$0xff] %vm3801, %v3713
    %3845 = vst.msk [vmem:[#allocation4 + $0x14d] sm:$0xff] %vm3801, %v3715
    %3846 = vst.msk [vmem:[#allocation4 + $0x155] sm:$0xff] %vm3801, %v3717
    %3847 = vst.msk [vmem:[#allocation4 + $0x15d] sm:$0xff] %vm3801, %v3719
    %3848 = vst.msk [vmem:[#allocation4 + $0x165] sm:$0xff] %vm3801, %v3721
    %3849 = vst.msk [vmem:[#allocation4 + $0x16d] sm:$0xff] %vm3801, %v3723
    %3850 = vst.msk [vmem:[#allocation4 + $0x175] sm:$0xff] %vm3801, %v3725
    %3851 = vst.msk [vmem:[#allocation4 + $0x17d] sm:$0xff] %vm3801, %v3727
    %3852 = vst.msk [vmem:[#allocation4 + $0x185] sm:$0xff] %vm3801, %v3729
    %3853 = vst.msk [vmem:[#allocation4 + $0x18d] sm:$0xff] %vm3801, %v3731
    %3854 = vst.msk [vmem:[#allocation4 + $0x195] sm:$0xff] %vm3801, %v3733
    %3855 = vst.msk [vmem:[#allocation4 + $0x19d] sm:$0xff] %vm3801, %v3735
    %3856 = vst.msk [vmem:[#allocation4 + $0x1a5] sm:$0xff] %vm3801, %v3737
    %3857 = vst.msk [vmem:[#allocation4 + $0x1ad] sm:$0xff] %vm3801, %v3739
    %3858 = vst.msk [vmem:[#allocation4 + $0x1b5] sm:$0xff] %vm3801, %v3741
    %3859 = vst.msk [vmem:[#allocation4 + $0x1bd] sm:$0x7] %vm3829, %v3685
    %3860 = vrot.lane.b32.xlu0 %v2937, 64
    %v3861 = vpop.permute.xlu0 %3860
    %3862 = vrot.lane.b32.xlu0 %v2938, 64
    %v3863 = vpop.permute.xlu0 %3862
    %3864 = vrot.lane.b32.xlu0 %v2939, 64
    %v3865 = vpop.permute.xlu0 %3864
    %3866 = vrot.lane.b32.xlu0 %v2940, 64
    %v3867 = vpop.permute.xlu0 %3866
    %3868 = vrot.lane.b32.xlu0 %v2941, 64
    %v3869 = vpop.permute.xlu0 %3868
    %3870 = vrot.lane.b32.xlu0 %v2942, 64
    %v3871 = vpop.permute.xlu0 %3870
    %3872 = vrot.lane.b32.xlu0 %v2943, 64
    %v3873 = vpop.permute.xlu0 %3872
    %3874 = vrot.lane.b32.xlu0 %v2944, 64
    %v3875 = vpop.permute.xlu0 %3874
    %3876 = vrot.lane.b32.xlu0 %v2945, 64
    %v3877 = vpop.permute.xlu0 %3876
    %3878 = vrot.lane.b32.xlu0 %v2946, 64
    %v3879 = vpop.permute.xlu0 %3878
    %3880 = vrot.lane.b32.xlu0 %v2947, 64
    %v3881 = vpop.permute.xlu0 %3880
    %3882 = vrot.lane.b32.xlu0 %v2948, 64
    %v3883 = vpop.permute.xlu0 %3882
    %3884 = vrot.lane.b32.xlu0 %v2949, 64
    %v3885 = vpop.permute.xlu0 %3884
    %3886 = vrot.lane.b32.xlu0 %v2950, 64
    %v3887 = vpop.permute.xlu0 %3886
    %3888 = vrot.lane.b32.xlu0 %v2951, 64
    %v3889 = vpop.permute.xlu0 %3888
    %3890 = vrot.lane.b32.xlu0 %v2952, 64
    %v3891 = vpop.permute.xlu0 %3890
    %3892 = vrot.lane.b32.xlu0 %v2953, 64
    %v3893 = vpop.permute.xlu0 %3892
    %3894 = vrot.lane.b32.xlu0 %v2954, 64
    %v3895 = vpop.permute.xlu0 %3894
    %3896 = vrot.lane.b32.xlu0 %v2955, 64
    %v3897 = vpop.permute.xlu0 %3896
    %3898 = vrot.lane.b32.xlu0 %v2956, 64
    %v3899 = vpop.permute.xlu0 %3898
    %3900 = vrot.lane.b32.xlu0 %v2957, 64
    %v3901 = vpop.permute.xlu0 %3900
    %3902 = vrot.lane.b32.xlu0 %v2958, 64
    %v3903 = vpop.permute.xlu0 %3902
    %3904 = vrot.lane.b32.xlu0 %v2959, 64
    %v3905 = vpop.permute.xlu0 %3904
    %3906 = vrot.lane.b32.xlu0 %v2960, 64
    %v3907 = vpop.permute.xlu0 %3906
    %3908 = vrot.lane.b32.xlu0 %v2961, 64
    %v3909 = vpop.permute.xlu0 %3908
    %3910 = vrot.lane.b32.xlu0 %v2962, 64
    %v3911 = vpop.permute.xlu0 %3910
    %3912 = vrot.lane.b32.xlu0 %v2963, 64
    %v3913 = vpop.permute.xlu0 %3912
    %3914 = vrot.lane.b32.xlu0 %v2964, 64
    %v3915 = vpop.permute.xlu0 %3914
    %3916 = vrot.lane.b32.xlu0 0.0, 64
    %v3917 = vpop.permute.xlu0 %3916
    %3918 = vrot.lane.b32.xlu0 %v2965, 64
    %v3919 = vpop.permute.xlu0 %3918
    %3920 = vrot.lane.b32.xlu0 %v2966, 64
    %v3921 = vpop.permute.xlu0 %3920
    %3922 = vrot.lane.b32.xlu0 %v2967, 64
    %v3923 = vpop.permute.xlu0 %3922
    %3924 = vrot.lane.b32.xlu0 %v2968, 64
    %v3925 = vpop.permute.xlu0 %3924
    %3926 = vrot.lane.b32.xlu0 %v2969, 64
    %v3927 = vpop.permute.xlu0 %3926
    %3928 = vrot.lane.b32.xlu0 %v2970, 64
    %v3929 = vpop.permute.xlu0 %3928
    %3930 = vrot.lane.b32.xlu0 %v2971, 64
    %v3931 = vpop.permute.xlu0 %3930
    %3932 = vrot.lane.b32.xlu0 %v2972, 64
    %v3933 = vpop.permute.xlu0 %3932
    %3934 = vrot.lane.b32.xlu0 %v2973, 64
    %v3935 = vpop.permute.xlu0 %3934
    %3936 = vrot.lane.b32.xlu0 %v2974, 64
    %v3937 = vpop.permute.xlu0 %3936
    %3938 = vrot.lane.b32.xlu0 %v2975, 64
    %v3939 = vpop.permute.xlu0 %3938
    %3940 = vrot.lane.b32.xlu0 %v2976, 64
    %v3941 = vpop.permute.xlu0 %3940
    %3942 = vrot.lane.b32.xlu0 %v2977, 64
    %v3943 = vpop.permute.xlu0 %3942
    %3944 = vrot.lane.b32.xlu0 %v2978, 64
    %v3945 = vpop.permute.xlu0 %3944
    %3946 = vrot.lane.b32.xlu0 %v2979, 64
    %v3947 = vpop.permute.xlu0 %3946
    %3948 = vrot.lane.b32.xlu0 %v2980, 64
    %v3949 = vpop.permute.xlu0 %3948
    %3950 = vrot.lane.b32.xlu0 %v2981, 64
    %v3951 = vpop.permute.xlu0 %3950
    %3952 = vrot.lane.b32.xlu0 %v2982, 64
    %v3953 = vpop.permute.xlu0 %3952
    %3954 = vrot.lane.b32.xlu0 %v2983, 64
    %v3955 = vpop.permute.xlu0 %3954
    %3956 = vrot.lane.b32.xlu0 %v2984, 64
    %v3957 = vpop.permute.xlu0 %3956
    %3958 = vrot.lane.b32.xlu0 %v2985, 64
    %v3959 = vpop.permute.xlu0 %3958
    %3960 = vrot.lane.b32.xlu0 %v2986, 64
    %v3961 = vpop.permute.xlu0 %3960
    %3962 = vrot.lane.b32.xlu0 %v2987, 64
    %v3963 = vpop.permute.xlu0 %3962
    %3964 = vrot.lane.b32.xlu0 %v2988, 64
    %v3965 = vpop.permute.xlu0 %3964
    %3966 = vrot.lane.b32.xlu0 %v2989, 64
    %v3967 = vpop.permute.xlu0 %3966
    %3968 = vrot.lane.b32.xlu0 %v2990, 64
    %v3969 = vpop.permute.xlu0 %3968
    %3970 = vrot.lane.b32.xlu0 %v2991, 64
    %v3971 = vpop.permute.xlu0 %3970
    %3972 = vrot.lane.b32.xlu0 %v2992, 64
    %v3973 = vpop.permute.xlu0 %3972
    %vm4031 = vcmask 654852
    %4032 = vst.msk [vmem:[#allocation4 - $0x4] sm:$0xf0] %vm4031, %v3861
    %vm4033 = vcmask 654848
    %4034 = vst.msk [vmem:[#allocation4 + $0x4] sm:$0xff] %vm4033, %v3863
    %4035 = vst.msk [vmem:[#allocation4 + $0xc] sm:$0xff] %vm4033, %v3865
    %4036 = vst.msk [vmem:[#allocation4 + $0x14] sm:$0xff] %vm4033, %v3867
    %4037 = vst.msk [vmem:[#allocation4 + $0x1c] sm:$0xff] %vm4033, %v3869
    %4038 = vst.msk [vmem:[#allocation4 + $0x24] sm:$0xff] %vm4033, %v3871
    %4039 = vst.msk [vmem:[#allocation4 + $0x2c] sm:$0xff] %vm4033, %v3873
    %4040 = vst.msk [vmem:[#allocation4 + $0x34] sm:$0xff] %vm4033, %v3875
    %4041 = vst.msk [vmem:[#allocation4 + $0x3c] sm:$0xff] %vm4033, %v3877
    %4042 = vst.msk [vmem:[#allocation4 + $0x44] sm:$0xff] %vm4033, %v3879
    %4043 = vst.msk [vmem:[#allocation4 + $0x4c] sm:$0xff] %vm4033, %v3881
    %4044 = vst.msk [vmem:[#allocation4 + $0x54] sm:$0xff] %vm4033, %v3883
    %4045 = vst.msk [vmem:[#allocation4 + $0x5c] sm:$0xff] %vm4033, %v3885
    %4046 = vst.msk [vmem:[#allocation4 + $0x64] sm:$0xff] %vm4033, %v3887
    %4047 = vst.msk [vmem:[#allocation4 + $0x6c] sm:$0xff] %vm4033, %v3889
    %4048 = vst.msk [vmem:[#allocation4 + $0x74] sm:$0xff] %vm4033, %v3891
    %4049 = vst.msk [vmem:[#allocation4 + $0x7c] sm:$0xff] %vm4033, %v3893
    %4050 = vst.msk [vmem:[#allocation4 + $0x84] sm:$0xff] %vm4033, %v3895
    %4051 = vst.msk [vmem:[#allocation4 + $0x8c] sm:$0xff] %vm4033, %v3897
    %4052 = vst.msk [vmem:[#allocation4 + $0x94] sm:$0xff] %vm4033, %v3899
    %4053 = vst.msk [vmem:[#allocation4 + $0x9c] sm:$0xff] %vm4033, %v3901
    %4054 = vst.msk [vmem:[#allocation4 + $0xa4] sm:$0xff] %vm4033, %v3903
    %4055 = vst.msk [vmem:[#allocation4 + $0xac] sm:$0xff] %vm4033, %v3905
    %4056 = vst.msk [vmem:[#allocation4 + $0xb4] sm:$0xff] %vm4033, %v3907
    %4057 = vst.msk [vmem:[#allocation4 + $0xbc] sm:$0xff] %vm4033, %v3909
    %4058 = vst.msk [vmem:[#allocation4 + $0xc4] sm:$0xff] %vm4033, %v3911
    %4059 = vst.msk [vmem:[#allocation4 + $0xcc] sm:$0xff] %vm4033, %v3913
    %4060 = vst.msk [vmem:[#allocation4 + $0xd4] sm:$0xff] %vm4033, %v3915
    %vm4061 = vcmask 650752
    %4062 = vst.msk [vmem:[#allocation4 + $0xdc] sm:$0xf] %vm4061, %v3917
    %4063 = vst.msk [vmem:[#allocation4 + $0xdc] sm:$0xf0] %vm4031, %v3919
    %4064 = vst.msk [vmem:[#allocation4 + $0xe4] sm:$0xff] %vm4033, %v3921
    %4065 = vst.msk [vmem:[#allocation4 + $0xec] sm:$0xff] %vm4033, %v3923
    %4066 = vst.msk [vmem:[#allocation4 + $0xf4] sm:$0xff] %vm4033, %v3925
    %4067 = vst.msk [vmem:[#allocation4 + $0xfc] sm:$0xff] %vm4033, %v3927
    %4068 = vst.msk [vmem:[#allocation4 + $0x104] sm:$0xff] %vm4033, %v3929
    %4069 = vst.msk [vmem:[#allocation4 + $0x10c] sm:$0xff] %vm4033, %v3931
    %4070 = vst.msk [vmem:[#allocation4 + $0x114] sm:$0xff] %vm4033, %v3933
    %4071 = vst.msk [vmem:[#allocation4 + $0x11c] sm:$0xff] %vm4033, %v3935
    %4072 = vst.msk [vmem:[#allocation4 + $0x124] sm:$0xff] %vm4033, %v3937
    %4073 = vst.msk [vmem:[#allocation4 + $0x12c] sm:$0xff] %vm4033, %v3939
    %4074 = vst.msk [vmem:[#allocation4 + $0x134] sm:$0xff] %vm4033, %v3941
    %4075 = vst.msk [vmem:[#allocation4 + $0x13c] sm:$0xff] %vm4033, %v3943
    %4076 = vst.msk [vmem:[#allocation4 + $0x144] sm:$0xff] %vm4033, %v3945
    %4077 = vst.msk [vmem:[#allocation4 + $0x14c] sm:$0xff] %vm4033, %v3947
    %4078 = vst.msk [vmem:[#allocation4 + $0x154] sm:$0xff] %vm4033, %v3949
    %4079 = vst.msk [vmem:[#allocation4 + $0x15c] sm:$0xff] %vm4033, %v3951
    %4080 = vst.msk [vmem:[#allocation4 + $0x164] sm:$0xff] %vm4033, %v3953
    %4081 = vst.msk [vmem:[#allocation4 + $0x16c] sm:$0xff] %vm4033, %v3955
    %4082 = vst.msk [vmem:[#allocation4 + $0x174] sm:$0xff] %vm4033, %v3957
    %4083 = vst.msk [vmem:[#allocation4 + $0x17c] sm:$0xff] %vm4033, %v3959
    %4084 = vst.msk [vmem:[#allocation4 + $0x184] sm:$0xff] %vm4033, %v3961
    %4085 = vst.msk [vmem:[#allocation4 + $0x18c] sm:$0xff] %vm4033, %v3963
    %4086 = vst.msk [vmem:[#allocation4 + $0x194] sm:$0xff] %vm4033, %v3965
    %4087 = vst.msk [vmem:[#allocation4 + $0x19c] sm:$0xff] %vm4033, %v3967
    %4088 = vst.msk [vmem:[#allocation4 + $0x1a4] sm:$0xff] %vm4033, %v3969
    %4089 = vst.msk [vmem:[#allocation4 + $0x1ac] sm:$0xff] %vm4033, %v3971
    %4090 = vst.msk [vmem:[#allocation4 + $0x1b4] sm:$0xff] %vm4033, %v3973
    %4091 = vst.msk [vmem:[#allocation4 + $0x1bc] sm:$0xf] %vm4061, %v3917
    %v4092 = vld [vmem:[#allocation4] sm:$0xff]
    %v4093 = vld [vmem:[#allocation4 + $0x8] sm:$0xff]
    %v4094 = vld [vmem:[#allocation4 + $0x10] sm:$0xff]
    %v4095 = vld [vmem:[#allocation4 + $0x18] sm:$0xff]
    %v4096 = vld [vmem:[#allocation4 + $0x20] sm:$0xff]
    %v4097 = vld [vmem:[#allocation4 + $0x28] sm:$0xff]
    %v4098 = vld [vmem:[#allocation4 + $0x30] sm:$0xff]
    %v4099 = vld [vmem:[#allocation4 + $0x38] sm:$0xff]
    %v4100 = vld [vmem:[#allocation4 + $0x40] sm:$0xff]
    %v4101 = vld [vmem:[#allocation4 + $0x48] sm:$0xff]
    %v4102 = vld [vmem:[#allocation4 + $0x50] sm:$0xff]
    %v4103 = vld [vmem:[#allocation4 + $0x58] sm:$0xff]
    %v4104 = vld [vmem:[#allocation4 + $0x60] sm:$0xff]
    %v4105 = vld [vmem:[#allocation4 + $0x68] sm:$0xff]
    %v4106 = vld [vmem:[#allocation4 + $0x70] sm:$0xff]
    %v4107 = vld [vmem:[#allocation4 + $0x78] sm:$0xff]
    %v4108 = vld [vmem:[#allocation4 + $0x80] sm:$0xff]
    %v4109 = vld [vmem:[#allocation4 + $0x88] sm:$0xff]
    %v4110 = vld [vmem:[#allocation4 + $0x90] sm:$0xff]
    %v4111 = vld [vmem:[#allocation4 + $0x98] sm:$0xff]
    %v4112 = vld [vmem:[#allocation4 + $0xa0] sm:$0xff]
    %v4113 = vld [vmem:[#allocation4 + $0xa8] sm:$0xff]
    %v4114 = vld [vmem:[#allocation4 + $0xb0] sm:$0xff]
    %v4115 = vld [vmem:[#allocation4 + $0xb8] sm:$0xff]
    %v4116 = vld [vmem:[#allocation4 + $0xc0] sm:$0xff]
    %v4117 = vld [vmem:[#allocation4 + $0xc8] sm:$0xff]
    %v4118 = vld [vmem:[#allocation4 + $0xd0] sm:$0xff]
    %v4119 = vld [vmem:[#allocation4 + $0xd8] sm:$0xff]
    %v4120 = vld [vmem:[#allocation4 + $0xe0] sm:$0xff]
    %v4121 = vld [vmem:[#allocation4 + $0xe8] sm:$0xff]
    %v4122 = vld [vmem:[#allocation4 + $0xf0] sm:$0xff]
    %v4123 = vld [vmem:[#allocation4 + $0xf8] sm:$0xff]
    %v4124 = vld [vmem:[#allocation4 + $0x100] sm:$0xff]
    %v4125 = vld [vmem:[#allocation4 + $0x108] sm:$0xff]
    %v4126 = vld [vmem:[#allocation4 + $0x110] sm:$0xff]
    %v4127 = vld [vmem:[#allocation4 + $0x118] sm:$0xff]
    %v4128 = vld [vmem:[#allocation4 + $0x120] sm:$0xff]
    %v4129 = vld [vmem:[#allocation4 + $0x128] sm:$0xff]
    %v4130 = vld [vmem:[#allocation4 + $0x130] sm:$0xff]
    %v4131 = vld [vmem:[#allocation4 + $0x138] sm:$0xff]
    %v4132 = vld [vmem:[#allocation4 + $0x140] sm:$0xff]
    %v4133 = vld [vmem:[#allocation4 + $0x148] sm:$0xff]
    %v4134 = vld [vmem:[#allocation4 + $0x150] sm:$0xff]
    %v4135 = vld [vmem:[#allocation4 + $0x158] sm:$0xff]
    %v4136 = vld [vmem:[#allocation4 + $0x160] sm:$0xff]
    %v4137 = vld [vmem:[#allocation4 + $0x168] sm:$0xff]
    %v4138 = vld [vmem:[#allocation4 + $0x170] sm:$0xff]
    %v4139 = vld [vmem:[#allocation4 + $0x178] sm:$0xff]
    %v4140 = vld [vmem:[#allocation4 + $0x180] sm:$0xff]
    %v4141 = vld [vmem:[#allocation4 + $0x188] sm:$0xff]
    %v4142 = vld [vmem:[#allocation4 + $0x190] sm:$0xff]
    %v4143 = vld [vmem:[#allocation4 + $0x198] sm:$0xff]
    %v4144 = vld [vmem:[#allocation4 + $0x1a0] sm:$0xff]
    %v4145 = vld [vmem:[#allocation4 + $0x1a8] sm:$0xff]
    %v4146 = vld [vmem:[#allocation4 + $0x1b0] sm:$0xff]
    %v4147 = vld [vmem:[#allocation4 + $0x1b8] sm:$0xff]
    %v4148 = vpack.c.bf16 %v4093, %v4092
    %v4149 = vpack.c.bf16 %v4095, %v4094
    %v4150 = vpack.c.bf16 %v4097, %v4096
    %v4151 = vpack.c.bf16 %v4099, %v4098
    %v4152 = vpack.c.bf16 %v4101, %v4100
    %v4153 = vpack.c.bf16 %v4103, %v4102
    %v4154 = vpack.c.bf16 %v4105, %v4104
    %v4155 = vpack.c.bf16 %v4107, %v4106
    %v4156 = vpack.c.bf16 %v4109, %v4108
    %v4157 = vpack.c.bf16 %v4111, %v4110
    %v4158 = vpack.c.bf16 %v4113, %v4112
    %v4159 = vpack.c.bf16 %v4115, %v4114
    %v4160 = vpack.c.bf16 %v4117, %v4116
    %v4161 = vpack.c.bf16 %v4119, %v4118
    %v4162 = vpack.c.bf16 %v4121, %v4120
    %v4163 = vpack.c.bf16 %v4123, %v4122
    %v4164 = vpack.c.bf16 %v4125, %v4124
    %v4165 = vpack.c.bf16 %v4127, %v4126
    %v4166 = vpack.c.bf16 %v4129, %v4128
    %v4167 = vpack.c.bf16 %v4131, %v4130
    %v4168 = vpack.c.bf16 %v4133, %v4132
    %v4169 = vpack.c.bf16 %v4135, %v4134
    %v4170 = vpack.c.bf16 %v4137, %v4136
    %v4171 = vpack.c.bf16 %v4139, %v4138
    %v4172 = vpack.c.bf16 %v4141, %v4140
    %v4173 = vpack.c.bf16 %v4143, %v4142
    %v4174 = vpack.c.bf16 %v4145, %v4144
    %v4175 = vpack.c.bf16 %v4147, %v4146
    %v4176 = vld [vmem:[%s3] sm:$0xf]
    %v4177 = vld [vmem:[%s3 + $0x4] sm:$0xf]
    %v4178 = vld [vmem:[%s3 + $0x8] sm:$0xf]
    %v4179 = vld [vmem:[%s3 + $0xc] sm:$0xf]
    %v4180 = vld [vmem:[%s3 + $0x10] sm:$0xf]
    %v4181 = vld [vmem:[%s3 + $0x14] sm:$0xf]
    %v4182 = vld [vmem:[%s3 + $0x18] sm:$0xf]
    %v4183 = vld [vmem:[%s3 + $0x1c] sm:$0xf]
    %v4184 = vld [vmem:[%s3 + $0x20] sm:$0xf]
    %v4185 = vld [vmem:[%s3 + $0x24] sm:$0xf]
    %v4186 = vld [vmem:[%s3 + $0x28] sm:$0xf]
    %v4187 = vld [vmem:[%s3 + $0x2c] sm:$0xf]
    %v4188 = vld [vmem:[%s3 + $0x30] sm:$0xf]
    %v4189 = vld [vmem:[%s3 + $0x34] sm:$0xf]
    %v4190 = vld [vmem:[%s3 + $0x38] sm:$0xf]
    %v4191 = vld [vmem:[%s3 + $0x3c] sm:$0xf]
    %s4192 = scalar_lea.vmem %s3, 64
    %v4193 = vld [vmem:[%s4192] sm:$0xf]
    %v4194 = vld [vmem:[%s4192 + $0x4] sm:$0xf]
    %v4195 = vld [vmem:[%s4192 + $0x8] sm:$0xf]
    %v4196 = vld [vmem:[%s4192 + $0xc] sm:$0xf]
    %v4197 = vld [vmem:[%s4192 + $0x10] sm:$0xf]
    %v4198 = vld [vmem:[%s4192 + $0x14] sm:$0xf]
    %v4199 = vld [vmem:[%s4192 + $0x18] sm:$0xf]
    %v4200 = vld [vmem:[%s4192 + $0x1c] sm:$0xf]
    %v4201 = vld [vmem:[%s4192 + $0x20] sm:$0xf]
    %v4202 = vld [vmem:[%s4192 + $0x24] sm:$0xf]
    %v4203 = vld [vmem:[%s4192 + $0x28] sm:$0xf]
    %v4204 = vld [vmem:[%s4192 + $0x2c] sm:$0xf]
    %v4205 = vld [vmem:[%s4192 + $0x30] sm:$0xf]
    %v4206 = vld [vmem:[%s4192 + $0x34] sm:$0xf]
    %v4207 = vld [vmem:[%s4192 + $0x38] sm:$0xf]
    %v4208 = vld [vmem:[%s4192 + $0x3c] sm:$0xf]
    %v4225 = vunpack.c.l.b16 %v4193
    %v4226 = vunpack.c.l.b16 %v4194
    %v4227 = vunpack.c.l.b16 %v4195
    %v4228 = vunpack.c.l.b16 %v4196
    %v4229 = vunpack.c.l.b16 %v4197
    %v4230 = vunpack.c.l.b16 %v4198
    %v4231 = vunpack.c.l.b16 %v4199
    %v4232 = vunpack.c.l.b16 %v4200
    %v4233 = vunpack.c.l.b16 %v4201
    %v4234 = vunpack.c.l.b16 %v4202
    %v4235 = vunpack.c.l.b16 %v4203
    %v4236 = vunpack.c.l.b16 %v4204
    %v4237 = vunpack.c.l.b16 %v4205
    %v4238 = vunpack.c.l.b16 %v4206
    %v4239 = vunpack.c.l.b16 %v4207
    %v4240 = vunpack.c.l.b16 %v4208
    %v4241 = vpack.c.b16 %v4226, %v4225
    %v4242 = vpack.c.b16 %v4228, %v4227
    %v4243 = vpack.c.b16 %v4230, %v4229
    %v4244 = vpack.c.b16 %v4232, %v4231
    %v4245 = vpack.c.b16 %v4234, %v4233
    %v4246 = vpack.c.b16 %v4236, %v4235
    %v4247 = vpack.c.b16 %v4238, %v4237
    %v4248 = vpack.c.b16 %v4240, %v4239
    %4257 = vmatprep.subr.bf16.mxu0 0
    %4258 = vmatpush1.bf16.msra.mxu0 %v4241
    %4259 = vmatprep.subr.bf16.mxu0 0
    %4260 = vmatpush1.bf16.msra.mxu0 %v4242
    %4261 = vmatprep.subr.bf16.mxu0 0
    %4262 = vmatpush1.bf16.msra.mxu0 %v4243
    %4263 = vmatprep.subr.bf16.mxu0 0
    %4264 = vmatpush1.bf16.msra.mxu0 %v4244
    %4265 = vmatprep.subr.bf16.mxu0 0
    %4266 = vmatpush1.bf16.msra.mxu0 %v4245
    %4267 = vmatprep.subr.bf16.mxu0 0
    %4268 = vmatpush1.bf16.msra.mxu0 %v4246
    %4269 = vmatprep.subr.bf16.mxu0 0
    %4270 = vmatpush1.bf16.msra.mxu0 %v4247
    %4271 = vmatprep.subr.bf16.mxu0 0
    %4272 = vmatpush1.bf16.msra.mxu0 %v4248
    %4273 = vmatprep.subr.bf16.mxu0 0
    %4274 = vmatpush1.bf16.msra.mxu0 0
    %4275 = vmatprep.subr.bf16.mxu0 0
    %4276 = vmatpush1.bf16.msra.mxu0 0
    %4277 = vmatprep.subr.bf16.mxu0 0
    %4278 = vmatpush1.bf16.msra.mxu0 0
    %4279 = vmatprep.subr.bf16.mxu0 0
    %4280 = vmatpush1.bf16.msra.mxu0 0
    %4281 = vmatprep.subr.bf16.mxu0 0
    %4282 = vmatpush1.bf16.msra.mxu0 0
    %4283 = vmatprep.subr.bf16.mxu0 0
    %4284 = vmatpush1.bf16.msra.mxu0 0
    %4285 = vmatprep.subr.bf16.mxu0 0
    %4286 = vmatpush1.bf16.msra.mxu0 0
    %4287 = vmatprep.subr.bf16.mxu0 0
    %4288 = vmatpush1.bf16.msra.mxu0 0
    %4289 = vmatprep.mubr.bf16.mxu0 0
    %4290 = vmatmul.mubr.bf16.gmra.mrb[0].mxu0 %v4149
    %v4291 = vpop.f32.mrb[0].mxu0
    %v4292 = vadd.f32 0.0, %v4291
    %v4293 = vpop.f32.mrb[0].mxu0
    %v4294 = vpop.f32.mrb[0].mxu0
    %v4295 = vadd.f32 0.0, %v4294
    %v4296 = vpop.f32.mrb[0].mxu0
    %4297 = vmatprep.mubr.bf16.mxu0 0
    %4298 = vmatmul.mubr.bf16.gmra.mrb[0].mxu0 %v4150
    %v4299 = vpop.f32.mrb[0].mxu0
    %v4300 = vadd.f32 0.0, %v4299
    %v4301 = vpop.f32.mrb[0].mxu0
    %v4302 = vpop.f32.mrb[0].mxu0
    %v4303 = vadd.f32 0.0, %v4302
    %v4304 = vpop.f32.mrb[0].mxu0
    %4305 = vmatprep.mubr.bf16.mxu0 0
    %4306 = vmatmul.mubr.bf16.gmra.mrb[0].mxu0 %v4151
    %v4307 = vpop.f32.mrb[0].mxu0
    %v4308 = vadd.f32 0.0, %v4307
    %v4309 = vpop.f32.mrb[0].mxu0
    %v4310 = vpop.f32.mrb[0].mxu0
    %v4311 = vadd.f32 0.0, %v4310
    %v4312 = vpop.f32.mrb[0].mxu0
    %4313 = vmatprep.mubr.bf16.mxu0 0
    %4314 = vmatmul.mubr.bf16.gmra.mrb[0].mxu0 %v4152
    %v4315 = vpop.f32.mrb[0].mxu0
    %v4316 = vadd.f32 0.0, %v4315
    %v4317 = vpop.f32.mrb[0].mxu0
    %v4318 = vpop.f32.mrb[0].mxu0
    %v4319 = vadd.f32 0.0, %v4318
    %v4320 = vpop.f32.mrb[0].mxu0
    %4321 = vmatprep.mubr.bf16.mxu0 0
    %4322 = vmatmul.mubr.bf16.gmra.mrb[0].mxu0 %v4153
    %v4323 = vpop.f32.mrb[0].mxu0
    %v4324 = vadd.f32 0.0, %v4323
    %v4325 = vpop.f32.mrb[0].mxu0
    %v4326 = vpop.f32.mrb[0].mxu0
    %v4327 = vadd.f32 0.0, %v4326
    %v4328 = vpop.f32.mrb[0].mxu0
    %4329 = vmatprep.mubr.bf16.mxu0 0
    %4330 = vmatmul.mubr.bf16.gmra.mrb[0].mxu0 %v4154
    %v4331 = vpop.f32.mrb[0].mxu0
    %v4332 = vadd.f32 0.0, %v4331
    %v4333 = vpop.f32.mrb[0].mxu0
    %v4334 = vpop.f32.mrb[0].mxu0
    %v4335 = vadd.f32 0.0, %v4334
    %v4336 = vpop.f32.mrb[0].mxu0
    %4337 = vmatprep.mubr.bf16.mxu0 0
    %4338 = vmatmul.mubr.bf16.gmra.mrb[0].mxu0 %v4155
    %v4339 = vpop.f32.mrb[0].mxu0
    %v4340 = vadd.f32 0.0, %v4339
    %v4341 = vpop.f32.mrb[0].mxu0
    %v4342 = vpop.f32.mrb[0].mxu0
    %v4343 = vadd.f32 0.0, %v4342
    %v4344 = vpop.f32.mrb[0].mxu0
    %4345 = vmatprep.mubr.bf16.mxu0 0
    %4346 = vmatmul.mubr.bf16.gmra.mrb[0].mxu0 %v4156
    %v4347 = vpop.f32.mrb[0].mxu0
    %v4348 = vadd.f32 0.0, %v4347
    %v4349 = vpop.f32.mrb[0].mxu0
    %v4350 = vpop.f32.mrb[0].mxu0
    %v4351 = vadd.f32 0.0, %v4350
    %v4352 = vpop.f32.mrb[0].mxu0
    %4353 = vmatprep.mubr.bf16.mxu0 0
    %4354 = vmatmul.mubr.bf16.gmra.mrb[0].mxu0 %v4157
    %v4355 = vpop.f32.mrb[0].mxu0
    %v4356 = vadd.f32 0.0, %v4355
    %v4357 = vpop.f32.mrb[0].mxu0
    %v4358 = vpop.f32.mrb[0].mxu0
    %v4359 = vadd.f32 0.0, %v4358
    %v4360 = vpop.f32.mrb[0].mxu0
    %4361 = vmatprep.mubr.bf16.mxu0 0
    %4362 = vmatmul.mubr.bf16.gmra.mrb[0].mxu0 %v4158
    %v4363 = vpop.f32.mrb[0].mxu0
    %v4364 = vadd.f32 0.0, %v4363
    %v4365 = vpop.f32.mrb[0].mxu0
    %v4366 = vpop.f32.mrb[0].mxu0
    %v4367 = vadd.f32 0.0, %v4366
    %v4368 = vpop.f32.mrb[0].mxu0
    %4369 = vmatprep.mubr.bf16.mxu0 0
    %4370 = vmatmul.mubr.bf16.gmra.mrb[0].mxu0 %v4163
    %v4371 = vpop.f32.mrb[0].mxu0
    %v4372 = vadd.f32 0.0, %v4371
    %v4373 = vpop.f32.mrb[0].mxu0
    %v4374 = vpop.f32.mrb[0].mxu0
    %v4375 = vadd.f32 0.0, %v4374
    %v4376 = vpop.f32.mrb[0].mxu0
    %4377 = vmatprep.mubr.bf16.mxu0 0
    %4378 = vmatmul.mubr.bf16.gmra.mrb[0].mxu0 %v4164
    %v4379 = vpop.f32.mrb[0].mxu0
    %v4380 = vadd.f32 0.0, %v4379
    %v4381 = vpop.f32.mrb[0].mxu0
    %v4382 = vpop.f32.mrb[0].mxu0
    %v4383 = vadd.f32 0.0, %v4382
    %v4384 = vpop.f32.mrb[0].mxu0
    %4385 = vmatprep.mubr.bf16.mxu0 0
    %4386 = vmatmul.mubr.bf16.gmra.mrb[0].mxu0 %v4165
    %v4387 = vpop.f32.mrb[0].mxu0
    %v4388 = vadd.f32 0.0, %v4387
    %v4389 = vpop.f32.mrb[0].mxu0
    %v4390 = vpop.f32.mrb[0].mxu0
    %v4391 = vadd.f32 0.0, %v4390
    %v4392 = vpop.f32.mrb[0].mxu0
    %4393 = vmatprep.mubr.bf16.mxu0 0
    %4394 = vmatmul.mubr.bf16.gmra.mrb[0].mxu0 %v4166
    %v4395 = vpop.f32.mrb[0].mxu0
    %v4396 = vadd.f32 0.0, %v4395
    %v4397 = vpop.f32.mrb[0].mxu0
    %v4398 = vpop.f32.mrb[0].mxu0
    %v4399 = vadd.f32 0.0, %v4398
    %v4400 = vpop.f32.mrb[0].mxu0
    %4401 = vmatprep.mubr.bf16.mxu0 0
    %4402 = vmatmul.mubr.bf16.gmra.mrb[0].mxu0 %v4167
    %v4403 = vpop.f32.mrb[0].mxu0
    %v4404 = vadd.f32 0.0, %v4403
    %v4405 = vpop.f32.mrb[0].mxu0
    %v4406 = vpop.f32.mrb[0].mxu0
    %v4407 = vadd.f32 0.0, %v4406
    %v4408 = vpop.f32.mrb[0].mxu0
    %4409 = vmatprep.mubr.bf16.mxu0 0
    %4410 = vmatmul.mubr.bf16.gmra.mrb[0].mxu0 %v4168
    %v4411 = vpop.f32.mrb[0].mxu0
    %v4412 = vadd.f32 0.0, %v4411
    %v4413 = vpop.f32.mrb[0].mxu0
    %v4414 = vpop.f32.mrb[0].mxu0
    %v4415 = vadd.f32 0.0, %v4414
    %v4416 = vpop.f32.mrb[0].mxu0
    %4417 = vmatprep.mubr.bf16.mxu0 0
    %4418 = vmatmul.mubr.bf16.gmra.mrb[0].mxu0 %v4169
    %v4419 = vpop.f32.mrb[0].mxu0
    %v4420 = vadd.f32 0.0, %v4419
    %v4421 = vpop.f32.mrb[0].mxu0
    %v4422 = vpop.f32.mrb[0].mxu0
    %v4423 = vadd.f32 0.0, %v4422
    %v4424 = vpop.f32.mrb[0].mxu0
    %4425 = vmatprep.mubr.bf16.mxu0 0
    %4426 = vmatmul.mubr.bf16.gmra.mrb[0].mxu0 %v4170
    %v4427 = vpop.f32.mrb[0].mxu0
    %v4428 = vadd.f32 0.0, %v4427
    %v4429 = vpop.f32.mrb[0].mxu0
    %v4430 = vpop.f32.mrb[0].mxu0
    %v4431 = vadd.f32 0.0, %v4430
    %v4432 = vpop.f32.mrb[0].mxu0
    %4433 = vmatprep.mubr.bf16.mxu0 0
    %4434 = vmatmul.mubr.bf16.gmra.mrb[0].mxu0 %v4171
    %v4435 = vpop.f32.mrb[0].mxu0
    %v4436 = vadd.f32 0.0, %v4435
    %v4437 = vpop.f32.mrb[0].mxu0
    %v4438 = vpop.f32.mrb[0].mxu0
    %v4439 = vadd.f32 0.0, %v4438
    %v4440 = vpop.f32.mrb[0].mxu0
    %4441 = vmatprep.mubr.bf16.mxu0 0
    %4442 = vmatmul.mubr.bf16.gmra.mrb[0].mxu0 %v4172
    %v4443 = vpop.f32.mrb[0].mxu0
    %v4444 = vadd.f32 0.0, %v4443
    %v4445 = vpop.f32.mrb[0].mxu0
    %v4446 = vpop.f32.mrb[0].mxu0
    %v4447 = vadd.f32 0.0, %v4446
    %v4448 = vpop.f32.mrb[0].mxu0
    %4449 = vdwg.mxu0
    %v4466 = vunpack.c.l.b16 %v4176
    %v4467 = vunpack.c.l.b16 %v4177
    %v4468 = vunpack.c.l.b16 %v4178
    %v4469 = vunpack.c.l.b16 %v4179
    %v4470 = vunpack.c.l.b16 %v4180
    %v4471 = vunpack.c.l.b16 %v4181
    %v4472 = vunpack.c.l.b16 %v4182
    %v4473 = vunpack.c.l.b16 %v4183
    %v4474 = vunpack.c.l.b16 %v4184
    %v4475 = vunpack.c.l.b16 %v4185
    %v4476 = vunpack.c.l.b16 %v4186
    %v4477 = vunpack.c.l.b16 %v4187
    %v4478 = vunpack.c.l.b16 %v4188
    %v4479 = vunpack.c.l.b16 %v4189
    %v4480 = vunpack.c.l.b16 %v4190
    %v4481 = vunpack.c.l.b16 %v4191
    %v4482 = vpack.c.b16 %v4467, %v4466
    %v4483 = vpack.c.b16 %v4469, %v4468
    %v4484 = vpack.c.b16 %v4471, %v4470
    %v4485 = vpack.c.b16 %v4473, %v4472
    %v4486 = vpack.c.b16 %v4475, %v4474
    %v4487 = vpack.c.b16 %v4477, %v4476
    %v4488 = vpack.c.b16 %v4479, %v4478
    %v4489 = vpack.c.b16 %v4481, %v4480
    %4498 = vmatprep.subr.bf16.mxu0 0
    %4499 = vmatpush1.bf16.msra.mxu0 %v4482
    %4500 = vmatprep.subr.bf16.mxu0 0
    %4501 = vmatpush1.bf16.msra.mxu0 %v4483
    %4502 = vmatprep.subr.bf16.mxu0 0
    %4503 = vmatpush1.bf16.msra.mxu0 %v4484
    %4504 = vmatprep.subr.bf16.mxu0 0
    %4505 = vmatpush1.bf16.msra.mxu0 %v4485
    %4506 = vmatprep.subr.bf16.mxu0 0
    %4507 = vmatpush1.bf16.msra.mxu0 %v4486
    %4508 = vmatprep.subr.bf16.mxu0 0
    %4509 = vmatpush1.bf16.msra.mxu0 %v4487
    %4510 = vmatprep.subr.bf16.mxu0 0
    %4511 = vmatpush1.bf16.msra.mxu0 %v4488
    %4512 = vmatprep.subr.bf16.mxu0 0
    %4513 = vmatpush1.bf16.msra.mxu0 %v4489
    %4514 = vmatprep.subr.bf16.mxu0 0
    %4515 = vmatpush1.bf16.msra.mxu0 0
    %4516 = vmatprep.subr.bf16.mxu0 0
    %4517 = vmatpush1.bf16.msra.mxu0 0
    %4518 = vmatprep.subr.bf16.mxu0 0
    %4519 = vmatpush1.bf16.msra.mxu0 0
    %4520 = vmatprep.subr.bf16.mxu0 0
    %4521 = vmatpush1.bf16.msra.mxu0 0
    %4522 = vmatprep.subr.bf16.mxu0 0
    %4523 = vmatpush1.bf16.msra.mxu0 0
    %4524 = vmatprep.subr.bf16.mxu0 0
    %4525 = vmatpush1.bf16.msra.mxu0 0
    %4526 = vmatprep.subr.bf16.mxu0 0
    %4527 = vmatpush1.bf16.msra.mxu0 0
    %4528 = vmatprep.subr.bf16.mxu0 0
    %4529 = vmatpush1.bf16.msra.mxu0 0
    %4530 = vmatprep.mubr.bf16.mxu0 0
    %4531 = vmatmul.mubr.bf16.gmra.mrb[0].mxu0 %v4148
    %v4532 = vpop.f32.mrb[0].mxu0
    %v4533 = vadd.f32 %v4292, %v4532
    %v4534 = vpop.f32.mrb[0].mxu0
    %v4535 = vpop.f32.mrb[0].mxu0
    %v4536 = vadd.f32 %v4295, %v4535
    %v4537 = vpop.f32.mrb[0].mxu0
    %4538 = vmatprep.mubr.bf16.mxu0 0
    %4539 = vmatmul.mubr.bf16.gmra.mrb[0].mxu0 %v4149
    %v4540 = vpop.f32.mrb[0].mxu0
    %v4541 = vadd.f32 %v4300, %v4540
    %v4542 = vpop.f32.mrb[0].mxu0
    %v4543 = vpop.f32.mrb[0].mxu0
    %v4544 = vadd.f32 %v4303, %v4543
    %v4545 = vpop.f32.mrb[0].mxu0
    %4546 = vmatprep.mubr.bf16.mxu0 0
    %4547 = vmatmul.mubr.bf16.gmra.mrb[0].mxu0 %v4150
    %v4548 = vpop.f32.mrb[0].mxu0
    %v4549 = vadd.f32 %v4308, %v4548
    %v4550 = vpop.f32.mrb[0].mxu0
    %v4551 = vpop.f32.mrb[0].mxu0
    %v4552 = vadd.f32 %v4311, %v4551
    %v4553 = vpop.f32.mrb[0].mxu0
    %4554 = vmatprep.mubr.bf16.mxu0 0
    %4555 = vmatmul.mubr.bf16.gmra.mrb[0].mxu0 %v4151
    %v4556 = vpop.f32.mrb[0].mxu0
    %v4557 = vadd.f32 %v4316, %v4556
    %v4558 = vpop.f32.mrb[0].mxu0
    %v4559 = vpop.f32.mrb[0].mxu0
    %v4560 = vadd.f32 %v4319, %v4559
    %v4561 = vpop.f32.mrb[0].mxu0
    %4562 = vmatprep.mubr.bf16.mxu0 0
    %4563 = vmatmul.mubr.bf16.gmra.mrb[0].mxu0 %v4152
    %v4564 = vpop.f32.mrb[0].mxu0
    %v4565 = vadd.f32 %v4324, %v4564
    %v4566 = vpop.f32.mrb[0].mxu0
    %v4567 = vpop.f32.mrb[0].mxu0
    %v4568 = vadd.f32 %v4327, %v4567
    %v4569 = vpop.f32.mrb[0].mxu0
    %4570 = vmatprep.mubr.bf16.mxu0 0
    %4571 = vmatmul.mubr.bf16.gmra.mrb[0].mxu0 %v4153
    %v4572 = vpop.f32.mrb[0].mxu0
    %v4573 = vadd.f32 %v4332, %v4572
    %v4574 = vpop.f32.mrb[0].mxu0
    %v4575 = vpop.f32.mrb[0].mxu0
    %v4576 = vadd.f32 %v4335, %v4575
    %v4577 = vpop.f32.mrb[0].mxu0
    %4578 = vmatprep.mubr.bf16.mxu0 0
    %4579 = vmatmul.mubr.bf16.gmra.mrb[0].mxu0 %v4154
    %v4580 = vpop.f32.mrb[0].mxu0
    %v4581 = vadd.f32 %v4340, %v4580
    %v4582 = vpop.f32.mrb[0].mxu0
    %v4583 = vpop.f32.mrb[0].mxu0
    %v4584 = vadd.f32 %v4343, %v4583
    %v4585 = vpop.f32.mrb[0].mxu0
    %4586 = vmatprep.mubr.bf16.mxu0 0
    %4587 = vmatmul.mubr.bf16.gmra.mrb[0].mxu0 %v4155
    %v4588 = vpop.f32.mrb[0].mxu0
    %v4589 = vadd.f32 %v4348, %v4588
    %v4590 = vpop.f32.mrb[0].mxu0
    %v4591 = vpop.f32.mrb[0].mxu0
    %v4592 = vadd.f32 %v4351, %v4591
    %v4593 = vpop.f32.mrb[0].mxu0
    %4594 = vmatprep.mubr.bf16.mxu0 0
    %4595 = vmatmul.mubr.bf16.gmra.mrb[0].mxu0 %v4156
    %v4596 = vpop.f32.mrb[0].mxu0
    %v4597 = vadd.f32 %v4356, %v4596
    %v4598 = vpop.f32.mrb[0].mxu0
    %v4599 = vpop.f32.mrb[0].mxu0
    %v4600 = vadd.f32 %v4359, %v4599
    %v4601 = vpop.f32.mrb[0].mxu0
    %4602 = vmatprep.mubr.bf16.mxu0 0
    %4603 = vmatmul.mubr.bf16.gmra.mrb[0].mxu0 %v4157
    %v4604 = vpop.f32.mrb[0].mxu0
    %v4605 = vadd.f32 %v4364, %v4604
    %v4606 = vpop.f32.mrb[0].mxu0
    %v4607 = vpop.f32.mrb[0].mxu0
    %v4608 = vadd.f32 %v4367, %v4607
    %v4609 = vpop.f32.mrb[0].mxu0
    %4610 = vmatprep.mubr.bf16.mxu0 0
    %4611 = vmatmul.mubr.bf16.gmra.mrb[0].mxu0 %v4162
    %v4612 = vpop.f32.mrb[0].mxu0
    %v4613 = vadd.f32 %v4372, %v4612
    %v4614 = vpop.f32.mrb[0].mxu0
    %v4615 = vpop.f32.mrb[0].mxu0
    %v4616 = vadd.f32 %v4375, %v4615
    %v4617 = vpop.f32.mrb[0].mxu0
    %4618 = vmatprep.mubr.bf16.mxu0 0
    %4619 = vmatmul.mubr.bf16.gmra.mrb[0].mxu0 %v4163
    %v4620 = vpop.f32.mrb[0].mxu0
    %v4621 = vadd.f32 %v4380, %v4620
    %v4622 = vpop.f32.mrb[0].mxu0
    %v4623 = vpop.f32.mrb[0].mxu0
    %v4624 = vadd.f32 %v4383, %v4623
    %v4625 = vpop.f32.mrb[0].mxu0
    %4626 = vmatprep.mubr.bf16.mxu0 0
    %4627 = vmatmul.mubr.bf16.gmra.mrb[0].mxu0 %v4164
    %v4628 = vpop.f32.mrb[0].mxu0
    %v4629 = vadd.f32 %v4388, %v4628
    %v4630 = vpop.f32.mrb[0].mxu0
    %v4631 = vpop.f32.mrb[0].mxu0
    %v4632 = vadd.f32 %v4391, %v4631
    %v4633 = vpop.f32.mrb[0].mxu0
    %4634 = vmatprep.mubr.bf16.mxu0 0
    %4635 = vmatmul.mubr.bf16.gmra.mrb[0].mxu0 %v4165
    %v4636 = vpop.f32.mrb[0].mxu0
    %v4637 = vadd.f32 %v4396, %v4636
    %v4638 = vpop.f32.mrb[0].mxu0
    %v4639 = vpop.f32.mrb[0].mxu0
    %v4640 = vadd.f32 %v4399, %v4639
    %v4641 = vpop.f32.mrb[0].mxu0
    %4642 = vmatprep.mubr.bf16.mxu0 0
    %4643 = vmatmul.mubr.bf16.gmra.mrb[0].mxu0 %v4166
    %v4644 = vpop.f32.mrb[0].mxu0
    %v4645 = vadd.f32 %v4404, %v4644
    %v4646 = vpop.f32.mrb[0].mxu0
    %v4647 = vpop.f32.mrb[0].mxu0
    %v4648 = vadd.f32 %v4407, %v4647
    %v4649 = vpop.f32.mrb[0].mxu0
    %4650 = vmatprep.mubr.bf16.mxu0 0
    %4651 = vmatmul.mubr.bf16.gmra.mrb[0].mxu0 %v4167
    %v4652 = vpop.f32.mrb[0].mxu0
    %v4653 = vadd.f32 %v4412, %v4652
    %v4654 = vpop.f32.mrb[0].mxu0
    %v4655 = vpop.f32.mrb[0].mxu0
    %v4656 = vadd.f32 %v4415, %v4655
    %v4657 = vpop.f32.mrb[0].mxu0
    %4658 = vmatprep.mubr.bf16.mxu0 0
    %4659 = vmatmul.mubr.bf16.gmra.mrb[0].mxu0 %v4168
    %v4660 = vpop.f32.mrb[0].mxu0
    %v4661 = vadd.f32 %v4420, %v4660
    %v4662 = vpop.f32.mrb[0].mxu0
    %v4663 = vpop.f32.mrb[0].mxu0
    %v4664 = vadd.f32 %v4423, %v4663
    %v4665 = vpop.f32.mrb[0].mxu0
    %4666 = vmatprep.mubr.bf16.mxu0 0
    %4667 = vmatmul.mubr.bf16.gmra.mrb[0].mxu0 %v4169
    %v4668 = vpop.f32.mrb[0].mxu0
    %v4669 = vadd.f32 %v4428, %v4668
    %v4670 = vpop.f32.mrb[0].mxu0
    %v4671 = vpop.f32.mrb[0].mxu0
    %v4672 = vadd.f32 %v4431, %v4671
    %v4673 = vpop.f32.mrb[0].mxu0
    %4674 = vmatprep.mubr.bf16.mxu0 0
    %4675 = vmatmul.mubr.bf16.gmra.mrb[0].mxu0 %v4170
    %v4676 = vpop.f32.mrb[0].mxu0
    %v4677 = vadd.f32 %v4436, %v4676
    %v4678 = vpop.f32.mrb[0].mxu0
    %v4679 = vpop.f32.mrb[0].mxu0
    %v4680 = vadd.f32 %v4439, %v4679
    %v4681 = vpop.f32.mrb[0].mxu0
    %4682 = vmatprep.mubr.bf16.mxu0 0
    %4683 = vmatmul.mubr.bf16.gmra.mrb[0].mxu0 %v4171
    %v4684 = vpop.f32.mrb[0].mxu0
    %v4685 = vadd.f32 %v4444, %v4684
    %v4686 = vpop.f32.mrb[0].mxu0
    %v4687 = vpop.f32.mrb[0].mxu0
    %v4688 = vadd.f32 %v4447, %v4687
    %v4689 = vpop.f32.mrb[0].mxu0
    %4690 = vdwg.mxu0
    %s4691 = scalar_lea.vmem %s3, 128
    %v4692 = vld [vmem:[%s4691] sm:$0xf]
    %v4693 = vld [vmem:[%s4691 + $0x4] sm:$0xf]
    %v4694 = vld [vmem:[%s4691 + $0x8] sm:$0xf]
    %v4695 = vld [vmem:[%s4691 + $0xc] sm:$0xf]
    %v4696 = vld [vmem:[%s4691 + $0x10] sm:$0xf]
    %v4697 = vld [vmem:[%s4691 + $0x14] sm:$0xf]
    %v4698 = vld [vmem:[%s4691 + $0x18] sm:$0xf]
    %v4699 = vld [vmem:[%s4691 + $0x1c] sm:$0xf]
    %v4700 = vld [vmem:[%s4691 + $0x20] sm:$0xf]
    %v4701 = vld [vmem:[%s4691 + $0x24] sm:$0xf]
    %v4702 = vld [vmem:[%s4691 + $0x28] sm:$0xf]
    %v4703 = vld [vmem:[%s4691 + $0x2c] sm:$0xf]
    %v4704 = vld [vmem:[%s4691 + $0x30] sm:$0xf]
    %v4705 = vld [vmem:[%s4691 + $0x34] sm:$0xf]
    %v4706 = vld [vmem:[%s4691 + $0x38] sm:$0xf]
    %v4707 = vld [vmem:[%s4691 + $0x3c] sm:$0xf]
    %v4724 = vunpack.c.l.b16 %v4692
    %v4725 = vunpack.c.l.b16 %v4693
    %v4726 = vunpack.c.l.b16 %v4694
    %v4727 = vunpack.c.l.b16 %v4695
    %v4728 = vunpack.c.l.b16 %v4696
    %v4729 = vunpack.c.l.b16 %v4697
    %v4730 = vunpack.c.l.b16 %v4698
    %v4731 = vunpack.c.l.b16 %v4699
    %v4732 = vunpack.c.l.b16 %v4700
    %v4733 = vunpack.c.l.b16 %v4701
    %v4734 = vunpack.c.l.b16 %v4702
    %v4735 = vunpack.c.l.b16 %v4703
    %v4736 = vunpack.c.l.b16 %v4704
    %v4737 = vunpack.c.l.b16 %v4705
    %v4738 = vunpack.c.l.b16 %v4706
    %v4739 = vunpack.c.l.b16 %v4707
    %v4740 = vpack.c.b16 %v4725, %v4724
    %v4741 = vpack.c.b16 %v4727, %v4726
    %v4742 = vpack.c.b16 %v4729, %v4728
    %v4743 = vpack.c.b16 %v4731, %v4730
    %v4744 = vpack.c.b16 %v4733, %v4732
    %v4745 = vpack.c.b16 %v4735, %v4734
    %v4746 = vpack.c.b16 %v4737, %v4736
    %v4747 = vpack.c.b16 %v4739, %v4738
    %4756 = vmatprep.subr.bf16.mxu0 0
    %4757 = vmatpush1.bf16.msra.mxu0 %v4740
    %4758 = vmatprep.subr.bf16.mxu0 0
    %4759 = vmatpush1.bf16.msra.mxu0 %v4741
    %4760 = vmatprep.subr.bf16.mxu0 0
    %4761 = vmatpush1.bf16.msra.mxu0 %v4742
    %4762 = vmatprep.subr.bf16.mxu0 0
    %4763 = vmatpush1.bf16.msra.mxu0 %v4743
    %4764 = vmatprep.subr.bf16.mxu0 0
    %4765 = vmatpush1.bf16.msra.mxu0 %v4744
    %4766 = vmatprep.subr.bf16.mxu0 0
    %4767 = vmatpush1.bf16.msra.mxu0 %v4745
    %4768 = vmatprep.subr.bf16.mxu0 0
    %4769 = vmatpush1.bf16.msra.mxu0 %v4746
    %4770 = vmatprep.subr.bf16.mxu0 0
    %4771 = vmatpush1.bf16.msra.mxu0 %v4747
    %4772 = vmatprep.subr.bf16.mxu0 0
    %4773 = vmatpush1.bf16.msra.mxu0 0
    %4774 = vmatprep.subr.bf16.mxu0 0
    %4775 = vmatpush1.bf16.msra.mxu0 0
    %4776 = vmatprep.subr.bf16.mxu0 0
    %4777 = vmatpush1.bf16.msra.mxu0 0
    %4778 = vmatprep.subr.bf16.mxu0 0
    %4779 = vmatpush1.bf16.msra.mxu0 0
    %4780 = vmatprep.subr.bf16.mxu0 0
    %4781 = vmatpush1.bf16.msra.mxu0 0
    %4782 = vmatprep.subr.bf16.mxu0 0
    %4783 = vmatpush1.bf16.msra.mxu0 0
    %4784 = vmatprep.subr.bf16.mxu0 0
    %4785 = vmatpush1.bf16.msra.mxu0 0
    %4786 = vmatprep.subr.bf16.mxu0 0
    %4787 = vmatpush1.bf16.msra.mxu0 0
    %4788 = vmatprep.mubr.bf16.mxu0 0
    %4789 = vmatmul.mubr.bf16.gmra.mrb[0].mxu0 %v4150
    %v4790 = vpop.f32.mrb[0].mxu0
    %v4791 = vadd.f32 0.0, %v4790
    %v4792 = vpop.f32.mrb[0].mxu0
    %v4793 = vpop.f32.mrb[0].mxu0
    %v4794 = vadd.f32 0.0, %v4793
    %v4795 = vpop.f32.mrb[0].mxu0
    %4796 = vmatprep.mubr.bf16.mxu0 0
    %4797 = vmatmul.mubr.bf16.gmra.mrb[0].mxu0 %v4151
    %v4798 = vpop.f32.mrb[0].mxu0
    %v4799 = vadd.f32 0.0, %v4798
    %v4800 = vpop.f32.mrb[0].mxu0
    %v4801 = vpop.f32.mrb[0].mxu0
    %v4802 = vadd.f32 0.0, %v4801
    %v4803 = vpop.f32.mrb[0].mxu0
    %4804 = vmatprep.mubr.bf16.mxu0 0
    %4805 = vmatmul.mubr.bf16.gmra.mrb[0].mxu0 %v4152
    %v4806 = vpop.f32.mrb[0].mxu0
    %v4807 = vadd.f32 0.0, %v4806
    %v4808 = vpop.f32.mrb[0].mxu0
    %v4809 = vpop.f32.mrb[0].mxu0
    %v4810 = vadd.f32 0.0, %v4809
    %v4811 = vpop.f32.mrb[0].mxu0
    %4812 = vmatprep.mubr.bf16.mxu0 0
    %4813 = vmatmul.mubr.bf16.gmra.mrb[0].mxu0 %v4153
    %v4814 = vpop.f32.mrb[0].mxu0
    %v4815 = vadd.f32 0.0, %v4814
    %v4816 = vpop.f32.mrb[0].mxu0
    %v4817 = vpop.f32.mrb[0].mxu0
    %v4818 = vadd.f32 0.0, %v4817
    %v4819 = vpop.f32.mrb[0].mxu0
    %4820 = vmatprep.mubr.bf16.mxu0 0
    %4821 = vmatmul.mubr.bf16.gmra.mrb[0].mxu0 %v4154
    %v4822 = vpop.f32.mrb[0].mxu0
    %v4823 = vadd.f32 0.0, %v4822
    %v4824 = vpop.f32.mrb[0].mxu0
    %v4825 = vpop.f32.mrb[0].mxu0
    %v4826 = vadd.f32 0.0, %v4825
    %v4827 = vpop.f32.mrb[0].mxu0
    %4828 = vmatprep.mubr.bf16.mxu0 0
    %4829 = vmatmul.mubr.bf16.gmra.mrb[0].mxu0 %v4155
    %v4830 = vpop.f32.mrb[0].mxu0
    %v4831 = vadd.f32 0.0, %v4830
    %v4832 = vpop.f32.mrb[0].mxu0
    %v4833 = vpop.f32.mrb[0].mxu0
    %v4834 = vadd.f32 0.0, %v4833
    %v4835 = vpop.f32.mrb[0].mxu0
    %4836 = vmatprep.mubr.bf16.mxu0 0
    %4837 = vmatmul.mubr.bf16.gmra.mrb[0].mxu0 %v4156
    %v4838 = vpop.f32.mrb[0].mxu0
    %v4839 = vadd.f32 0.0, %v4838
    %v4840 = vpop.f32.mrb[0].mxu0
    %v4841 = vpop.f32.mrb[0].mxu0
    %v4842 = vadd.f32 0.0, %v4841
    %v4843 = vpop.f32.mrb[0].mxu0
    %4844 = vmatprep.mubr.bf16.mxu0 0
    %4845 = vmatmul.mubr.bf16.gmra.mrb[0].mxu0 %v4157
    %v4846 = vpop.f32.mrb[0].mxu0
    %v4847 = vadd.f32 0.0, %v4846
    %v4848 = vpop.f32.mrb[0].mxu0
    %v4849 = vpop.f32.mrb[0].mxu0
    %v4850 = vadd.f32 0.0, %v4849
    %v4851 = vpop.f32.mrb[0].mxu0
    %4852 = vmatprep.mubr.bf16.mxu0 0
    %4853 = vmatmul.mubr.bf16.gmra.mrb[0].mxu0 %v4158
    %v4854 = vpop.f32.mrb[0].mxu0
    %v4855 = vadd.f32 0.0, %v4854
    %v4856 = vpop.f32.mrb[0].mxu0
    %v4857 = vpop.f32.mrb[0].mxu0
    %v4858 = vadd.f32 0.0, %v4857
    %v4859 = vpop.f32.mrb[0].mxu0
    %4860 = vmatprep.mubr.bf16.mxu0 0
    %4861 = vmatmul.mubr.bf16.gmra.mrb[0].mxu0 %v4159
    %v4862 = vpop.f32.mrb[0].mxu0
    %v4863 = vadd.f32 0.0, %v4862
    %v4864 = vpop.f32.mrb[0].mxu0
    %v4865 = vpop.f32.mrb[0].mxu0
    %v4866 = vadd.f32 0.0, %v4865
    %v4867 = vpop.f32.mrb[0].mxu0
    %4868 = vmatprep.mubr.bf16.mxu0 0
    %4869 = vmatmul.mubr.bf16.gmra.mrb[0].mxu0 %v4164
    %v4870 = vpop.f32.mrb[0].mxu0
    %v4871 = vadd.f32 0.0, %v4870
    %v4872 = vpop.f32.mrb[0].mxu0
    %v4873 = vpop.f32.mrb[0].mxu0
    %v4874 = vadd.f32 0.0, %v4873
    %v4875 = vpop.f32.mrb[0].mxu0
    %4876 = vmatprep.mubr.bf16.mxu0 0
    %4877 = vmatmul.mubr.bf16.gmra.mrb[0].mxu0 %v4165
    %v4878 = vpop.f32.mrb[0].mxu0
    %v4879 = vadd.f32 0.0, %v4878
    %v4880 = vpop.f32.mrb[0].mxu0
    %v4881 = vpop.f32.mrb[0].mxu0
    %v4882 = vadd.f32 0.0, %v4881
    %v4883 = vpop.f32.mrb[0].mxu0
    %4884 = vmatprep.mubr.bf16.mxu0 0
    %4885 = vmatmul.mubr.bf16.gmra.mrb[0].mxu0 %v4166
    %v4886 = vpop.f32.mrb[0].mxu0
    %v4887 = vadd.f32 0.0, %v4886
    %v4888 = vpop.f32.mrb[0].mxu0
    %v4889 = vpop.f32.mrb[0].mxu0
    %v4890 = vadd.f32 0.0, %v4889
    %v4891 = vpop.f32.mrb[0].mxu0
    %4892 = vmatprep.mubr.bf16.mxu0 0
    %4893 = vmatmul.mubr.bf16.gmra.mrb[0].mxu0 %v4167
    %v4894 = vpop.f32.mrb[0].mxu0
    %v4895 = vadd.f32 0.0, %v4894
    %v4896 = vpop.f32.mrb[0].mxu0
    %v4897 = vpop.f32.mrb[0].mxu0
    %v4898 = vadd.f32 0.0, %v4897
    %v4899 = vpop.f32.mrb[0].mxu0
    %4900 = vmatprep.mubr.bf16.mxu0 0
    %4901 = vmatmul.mubr.bf16.gmra.mrb[0].mxu0 %v4168
    %v4902 = vpop.f32.mrb[0].mxu0
    %v4903 = vadd.f32 0.0, %v4902
    %v4904 = vpop.f32.mrb[0].mxu0
    %v4905 = vpop.f32.mrb[0].mxu0
    %v4906 = vadd.f32 0.0, %v4905
    %v4907 = vpop.f32.mrb[0].mxu0
    %4908 = vmatprep.mubr.bf16.mxu0 0
    %4909 = vmatmul.mubr.bf16.gmra.mrb[0].mxu0 %v4169
    %v4910 = vpop.f32.mrb[0].mxu0
    %v4911 = vadd.f32 0.0, %v4910
    %v4912 = vpop.f32.mrb[0].mxu0
    %v4913 = vpop.f32.mrb[0].mxu0
    %v4914 = vadd.f32 0.0, %v4913
    %v4915 = vpop.f32.mrb[0].mxu0
    %4916 = vmatprep.mubr.bf16.mxu0 0
    %4917 = vmatmul.mubr.bf16.gmra.mrb[0].mxu0 %v4170
    %v4918 = vpop.f32.mrb[0].mxu0
    %v4919 = vadd.f32 0.0, %v4918
    %v4920 = vpop.f32.mrb[0].mxu0
    %v4921 = vpop.f32.mrb[0].mxu0
    %v4922 = vadd.f32 0.0, %v4921
    %v4923 = vpop.f32.mrb[0].mxu0
    %4924 = vmatprep.mubr.bf16.mxu0 0
    %4925 = vmatmul.mubr.bf16.gmra.mrb[0].mxu0 %v4171
    %v4926 = vpop.f32.mrb[0].mxu0
    %v4927 = vadd.f32 0.0, %v4926
    %v4928 = vpop.f32.mrb[0].mxu0
    %v4929 = vpop.f32.mrb[0].mxu0
    %v4930 = vadd.f32 0.0, %v4929
    %v4931 = vpop.f32.mrb[0].mxu0
    %4932 = vmatprep.mubr.bf16.mxu0 0
    %4933 = vmatmul.mubr.bf16.gmra.mrb[0].mxu0 %v4172
    %v4934 = vpop.f32.mrb[0].mxu0
    %v4935 = vadd.f32 0.0, %v4934
    %v4936 = vpop.f32.mrb[0].mxu0
    %v4937 = vpop.f32.mrb[0].mxu0
    %v4938 = vadd.f32 0.0, %v4937
    %v4939 = vpop.f32.mrb[0].mxu0
    %4940 = vmatprep.mubr.bf16.mxu0 0
    %4941 = vmatmul.mubr.bf16.gmra.mrb[0].mxu0 %v4173
    %v4942 = vpop.f32.mrb[0].mxu0
    %v4943 = vadd.f32 0.0, %v4942
    %v4944 = vpop.f32.mrb[0].mxu0
    %v4945 = vpop.f32.mrb[0].mxu0
    %v4946 = vadd.f32 0.0, %v4945
    %v4947 = vpop.f32.mrb[0].mxu0
    %4948 = vdwg.mxu0
    %v4949 = vadd.f32 %v4533, %v4791
    %v4950 = vadd.f32 %v4536, %v4794
    %v4951 = vadd.f32 %v4541, %v4799
    %v4952 = vadd.f32 %v4544, %v4802
    %v4953 = vadd.f32 %v4549, %v4807
    %v4954 = vadd.f32 %v4552, %v4810
    %v4955 = vadd.f32 %v4557, %v4815
    %v4956 = vadd.f32 %v4560, %v4818
    %v4957 = vadd.f32 %v4565, %v4823
    %v4958 = vadd.f32 %v4568, %v4826
    %v4959 = vadd.f32 %v4573, %v4831
    %v4960 = vadd.f32 %v4576, %v4834
    %v4961 = vadd.f32 %v4581, %v4839
    %v4962 = vadd.f32 %v4584, %v4842
    %v4963 = vadd.f32 %v4589, %v4847
    %v4964 = vadd.f32 %v4592, %v4850
    %v4965 = vadd.f32 %v4597, %v4855
    %v4966 = vadd.f32 %v4600, %v4858
    %v4967 = vadd.f32 %v4605, %v4863
    %v4968 = vadd.f32 %v4608, %v4866
    %v4969 = vadd.f32 %v4613, %v4871
    %v4970 = vadd.f32 %v4616, %v4874
    %v4971 = vadd.f32 %v4621, %v4879
    %v4972 = vadd.f32 %v4624, %v4882
    %v4973 = vadd.f32 %v4629, %v4887
    %v4974 = vadd.f32 %v4632, %v4890
    %v4975 = vadd.f32 %v4637, %v4895
    %v4976 = vadd.f32 %v4640, %v4898
    %v4977 = vadd.f32 %v4645, %v4903
    %v4978 = vadd.f32 %v4648, %v4906
    %v4979 = vadd.f32 %v4653, %v4911
    %v4980 = vadd.f32 %v4656, %v4914
    %v4981 = vadd.f32 %v4661, %v4919
    %v4982 = vadd.f32 %v4664, %v4922
    %v4983 = vadd.f32 %v4669, %v4927
    %v4984 = vadd.f32 %v4672, %v4930
    %v4985 = vadd.f32 %v4677, %v4935
    %v4986 = vadd.f32 %v4680, %v4938
    %v4987 = vadd.f32 %v4685, %v4943
    %v4988 = vadd.f32 %v4688, %v4946
    %s4989 = scalar_lea.vmem %s3, 192
    %v4990 = vld [vmem:[%s4989] sm:$0xf]
    %v4991 = vld [vmem:[%s4989 + $0x4] sm:$0xf]
    %v4992 = vld [vmem:[%s4989 + $0x8] sm:$0xf]
    %v4993 = vld [vmem:[%s4989 + $0xc] sm:$0xf]
    %v4994 = vld [vmem:[%s4989 + $0x10] sm:$0xf]
    %v4995 = vld [vmem:[%s4989 + $0x14] sm:$0xf]
    %v4996 = vld [vmem:[%s4989 + $0x18] sm:$0xf]
    %v4997 = vld [vmem:[%s4989 + $0x1c] sm:$0xf]
    %v4998 = vld [vmem:[%s4989 + $0x20] sm:$0xf]
    %v4999 = vld [vmem:[%s4989 + $0x24] sm:$0xf]
    %v5000 = vld [vmem:[%s4989 + $0x28] sm:$0xf]
    %v5001 = vld [vmem:[%s4989 + $0x2c] sm:$0xf]
    %v5002 = vld [vmem:[%s4989 + $0x30] sm:$0xf]
    %v5003 = vld [vmem:[%s4989 + $0x34] sm:$0xf]
    %v5004 = vld [vmem:[%s4989 + $0x38] sm:$0xf]
    %v5005 = vld [vmem:[%s4989 + $0x3c] sm:$0xf]
    %v5022 = vunpack.c.l.b16 %v4990
    %v5023 = vunpack.c.l.b16 %v4991
    %v5024 = vunpack.c.l.b16 %v4992
    %v5025 = vunpack.c.l.b16 %v4993
    %v5026 = vunpack.c.l.b16 %v4994
    %v5027 = vunpack.c.l.b16 %v4995
    %v5028 = vunpack.c.l.b16 %v4996
    %v5029 = vunpack.c.l.b16 %v4997
    %v5030 = vunpack.c.l.b16 %v4998
    %v5031 = vunpack.c.l.b16 %v4999
    %v5032 = vunpack.c.l.b16 %v5000
    %v5033 = vunpack.c.l.b16 %v5001
    %v5034 = vunpack.c.l.b16 %v5002
    %v5035 = vunpack.c.l.b16 %v5003
    %v5036 = vunpack.c.l.b16 %v5004
    %v5037 = vunpack.c.l.b16 %v5005
    %v5038 = vpack.c.b16 %v5023, %v5022
    %v5039 = vpack.c.b16 %v5025, %v5024
    %v5040 = vpack.c.b16 %v5027, %v5026
    %v5041 = vpack.c.b16 %v5029, %v5028
    %v5042 = vpack.c.b16 %v5031, %v5030
    %v5043 = vpack.c.b16 %v5033, %v5032
    %v5044 = vpack.c.b16 %v5035, %v5034
    %v5045 = vpack.c.b16 %v5037, %v5036
    %5054 = vmatprep.subr.bf16.mxu0 0
    %5055 = vmatpush1.bf16.msra.mxu0 %v5038
    %5056 = vmatprep.subr.bf16.mxu0 0
    %5057 = vmatpush1.bf16.msra.mxu0 %v5039
    %5058 = vmatprep.subr.bf16.mxu0 0
    %5059 = vmatpush1.bf16.msra.mxu0 %v5040
    %5060 = vmatprep.subr.bf16.mxu0 0
    %5061 = vmatpush1.bf16.msra.mxu0 %v5041
    %5062 = vmatprep.subr.bf16.mxu0 0
    %5063 = vmatpush1.bf16.msra.mxu0 %v5042
    %5064 = vmatprep.subr.bf16.mxu0 0
    %5065 = vmatpush1.bf16.msra.mxu0 %v5043
    %5066 = vmatprep.subr.bf16.mxu0 0
    %5067 = vmatpush1.bf16.msra.mxu0 %v5044
    %5068 = vmatprep.subr.bf16.mxu0 0
    %5069 = vmatpush1.bf16.msra.mxu0 %v5045
    %5070 = vmatprep.subr.bf16.mxu0 0
    %5071 = vmatpush1.bf16.msra.mxu0 0
    %5072 = vmatprep.subr.bf16.mxu0 0
    %5073 = vmatpush1.bf16.msra.mxu0 0
    %5074 = vmatprep.subr.bf16.mxu0 0
    %5075 = vmatpush1.bf16.msra.mxu0 0
    %5076 = vmatprep.subr.bf16.mxu0 0
    %5077 = vmatpush1.bf16.msra.mxu0 0
    %5078 = vmatprep.subr.bf16.mxu0 0
    %5079 = vmatpush1.bf16.msra.mxu0 0
    %5080 = vmatprep.subr.bf16.mxu0 0
    %5081 = vmatpush1.bf16.msra.mxu0 0
    %5082 = vmatprep.subr.bf16.mxu0 0
    %5083 = vmatpush1.bf16.msra.mxu0 0
    %5084 = vmatprep.subr.bf16.mxu0 0
    %5085 = vmatpush1.bf16.msra.mxu0 0
    %5086 = vmatprep.mubr.bf16.mxu0 0
    %5087 = vmatmul.mubr.bf16.gmra.mrb[0].mxu0 %v4151
    %v5088 = vpop.f32.mrb[0].mxu0
    %v5089 = vadd.f32 0.0, %v5088
    %v5090 = vpop.f32.mrb[0].mxu0
    %v5091 = vpop.f32.mrb[0].mxu0
    %v5092 = vadd.f32 0.0, %v5091
    %v5093 = vpop.f32.mrb[0].mxu0
    %5094 = vmatprep.mubr.bf16.mxu0 0
    %5095 = vmatmul.mubr.bf16.gmra.mrb[0].mxu0 %v4152
    %v5096 = vpop.f32.mrb[0].mxu0
    %v5097 = vadd.f32 0.0, %v5096
    %v5098 = vpop.f32.mrb[0].mxu0
    %v5099 = vpop.f32.mrb[0].mxu0
    %v5100 = vadd.f32 0.0, %v5099
    %v5101 = vpop.f32.mrb[0].mxu0
    %5102 = vmatprep.mubr.bf16.mxu0 0
    %5103 = vmatmul.mubr.bf16.gmra.mrb[0].mxu0 %v4153
    %v5104 = vpop.f32.mrb[0].mxu0
    %v5105 = vadd.f32 0.0, %v5104
    %v5106 = vpop.f32.mrb[0].mxu0
    %v5107 = vpop.f32.mrb[0].mxu0
    %v5108 = vadd.f32 0.0, %v5107
    %v5109 = vpop.f32.mrb[0].mxu0
    %5110 = vmatprep.mubr.bf16.mxu0 0
    %5111 = vmatmul.mubr.bf16.gmra.mrb[0].mxu0 %v4154
    %v5112 = vpop.f32.mrb[0].mxu0
    %v5113 = vadd.f32 0.0, %v5112
    %v5114 = vpop.f32.mrb[0].mxu0
    %v5115 = vpop.f32.mrb[0].mxu0
    %v5116 = vadd.f32 0.0, %v5115
    %v5117 = vpop.f32.mrb[0].mxu0
    %5118 = vmatprep.mubr.bf16.mxu0 0
    %5119 = vmatmul.mubr.bf16.gmra.mrb[0].mxu0 %v4155
    %v5120 = vpop.f32.mrb[0].mxu0
    %v5121 = vadd.f32 0.0, %v5120
    %v5122 = vpop.f32.mrb[0].mxu0
    %v5123 = vpop.f32.mrb[0].mxu0
    %v5124 = vadd.f32 0.0, %v5123
    %v5125 = vpop.f32.mrb[0].mxu0
    %5126 = vmatprep.mubr.bf16.mxu0 0
    %5127 = vmatmul.mubr.bf16.gmra.mrb[0].mxu0 %v4156
    %v5128 = vpop.f32.mrb[0].mxu0
    %v5129 = vadd.f32 0.0, %v5128
    %v5130 = vpop.f32.mrb[0].mxu0
    %v5131 = vpop.f32.mrb[0].mxu0
    %v5132 = vadd.f32 0.0, %v5131
    %v5133 = vpop.f32.mrb[0].mxu0
    %5134 = vmatprep.mubr.bf16.mxu0 0
    %5135 = vmatmul.mubr.bf16.gmra.mrb[0].mxu0 %v4157
    %v5136 = vpop.f32.mrb[0].mxu0
    %v5137 = vadd.f32 0.0, %v5136
    %v5138 = vpop.f32.mrb[0].mxu0
    %v5139 = vpop.f32.mrb[0].mxu0
    %v5140 = vadd.f32 0.0, %v5139
    %v5141 = vpop.f32.mrb[0].mxu0
    %5142 = vmatprep.mubr.bf16.mxu0 0
    %5143 = vmatmul.mubr.bf16.gmra.mrb[0].mxu0 %v4158
    %v5144 = vpop.f32.mrb[0].mxu0
    %v5145 = vadd.f32 0.0, %v5144
    %v5146 = vpop.f32.mrb[0].mxu0
    %v5147 = vpop.f32.mrb[0].mxu0
    %v5148 = vadd.f32 0.0, %v5147
    %v5149 = vpop.f32.mrb[0].mxu0
    %5150 = vmatprep.mubr.bf16.mxu0 0
    %5151 = vmatmul.mubr.bf16.gmra.mrb[0].mxu0 %v4159
    %v5152 = vpop.f32.mrb[0].mxu0
    %v5153 = vadd.f32 0.0, %v5152
    %v5154 = vpop.f32.mrb[0].mxu0
    %v5155 = vpop.f32.mrb[0].mxu0
    %v5156 = vadd.f32 0.0, %v5155
    %v5157 = vpop.f32.mrb[0].mxu0
    %5158 = vmatprep.mubr.bf16.mxu0 0
    %5159 = vmatmul.mubr.bf16.gmra.mrb[0].mxu0 %v4160
    %v5160 = vpop.f32.mrb[0].mxu0
    %v5161 = vadd.f32 0.0, %v5160
    %v5162 = vpop.f32.mrb[0].mxu0
    %v5163 = vpop.f32.mrb[0].mxu0
    %v5164 = vadd.f32 0.0, %v5163
    %v5165 = vpop.f32.mrb[0].mxu0
    %5166 = vmatprep.mubr.bf16.mxu0 0
    %5167 = vmatmul.mubr.bf16.gmra.mrb[0].mxu0 %v4165
    %v5168 = vpop.f32.mrb[0].mxu0
    %v5169 = vadd.f32 0.0, %v5168
    %v5170 = vpop.f32.mrb[0].mxu0
    %v5171 = vpop.f32.mrb[0].mxu0
    %v5172 = vadd.f32 0.0, %v5171
    %v5173 = vpop.f32.mrb[0].mxu0
    %5174 = vmatprep.mubr.bf16.mxu0 0
    %5175 = vmatmul.mubr.bf16.gmra.mrb[0].mxu0 %v4166
    %v5176 = vpop.f32.mrb[0].mxu0
    %v5177 = vadd.f32 0.0, %v5176
    %v5178 = vpop.f32.mrb[0].mxu0
    %v5179 = vpop.f32.mrb[0].mxu0
    %v5180 = vadd.f32 0.0, %v5179
    %v5181 = vpop.f32.mrb[0].mxu0
    %5182 = vmatprep.mubr.bf16.mxu0 0
    %5183 = vmatmul.mubr.bf16.gmra.mrb[0].mxu0 %v4167
    %v5184 = vpop.f32.mrb[0].mxu0
    %v5185 = vadd.f32 0.0, %v5184
    %v5186 = vpop.f32.mrb[0].mxu0
    %v5187 = vpop.f32.mrb[0].mxu0
    %v5188 = vadd.f32 0.0, %v5187
    %v5189 = vpop.f32.mrb[0].mxu0
    %5190 = vmatprep.mubr.bf16.mxu0 0
    %5191 = vmatmul.mubr.bf16.gmra.mrb[0].mxu0 %v4168
    %v5192 = vpop.f32.mrb[0].mxu0
    %v5193 = vadd.f32 0.0, %v5192
    %v5194 = vpop.f32.mrb[0].mxu0
    %v5195 = vpop.f32.mrb[0].mxu0
    %v5196 = vadd.f32 0.0, %v5195
    %v5197 = vpop.f32.mrb[0].mxu0
    %5198 = vmatprep.mubr.bf16.mxu0 0
    %5199 = vmatmul.mubr.bf16.gmra.mrb[0].mxu0 %v4169
    %v5200 = vpop.f32.mrb[0].mxu0
    %v5201 = vadd.f32 0.0, %v5200
    %v5202 = vpop.f32.mrb[0].mxu0
    %v5203 = vpop.f32.mrb[0].mxu0
    %v5204 = vadd.f32 0.0, %v5203
    %v5205 = vpop.f32.mrb[0].mxu0
    %5206 = vmatprep.mubr.bf16.mxu0 0
    %5207 = vmatmul.mubr.bf16.gmra.mrb[0].mxu0 %v4170
    %v5208 = vpop.f32.mrb[0].mxu0
    %v5209 = vadd.f32 0.0, %v5208
    %v5210 = vpop.f32.mrb[0].mxu0
    %v5211 = vpop.f32.mrb[0].mxu0
    %v5212 = vadd.f32 0.0, %v5211
    %v5213 = vpop.f32.mrb[0].mxu0
    %5214 = vmatprep.mubr.bf16.mxu0 0
    %5215 = vmatmul.mubr.bf16.gmra.mrb[0].mxu0 %v4171
    %v5216 = vpop.f32.mrb[0].mxu0
    %v5217 = vadd.f32 0.0, %v5216
    %v5218 = vpop.f32.mrb[0].mxu0
    %v5219 = vpop.f32.mrb[0].mxu0
    %v5220 = vadd.f32 0.0, %v5219
    %v5221 = vpop.f32.mrb[0].mxu0
    %5222 = vmatprep.mubr.bf16.mxu0 0
    %5223 = vmatmul.mubr.bf16.gmra.mrb[0].mxu0 %v4172
    %v5224 = vpop.f32.mrb[0].mxu0
    %v5225 = vadd.f32 0.0, %v5224
    %v5226 = vpop.f32.mrb[0].mxu0
    %v5227 = vpop.f32.mrb[0].mxu0
    %v5228 = vadd.f32 0.0, %v5227
    %v5229 = vpop.f32.mrb[0].mxu0
    %5230 = vmatprep.mubr.bf16.mxu0 0
    %5231 = vmatmul.mubr.bf16.gmra.mrb[0].mxu0 %v4173
    %v5232 = vpop.f32.mrb[0].mxu0
    %v5233 = vadd.f32 0.0, %v5232
    %v5234 = vpop.f32.mrb[0].mxu0
    %v5235 = vpop.f32.mrb[0].mxu0
    %v5236 = vadd.f32 0.0, %v5235
    %v5237 = vpop.f32.mrb[0].mxu0
    %5238 = vmatprep.mubr.bf16.mxu0 0
    %5239 = vmatmul.mubr.bf16.gmra.mrb[0].mxu0 %v4174
    %v5240 = vpop.f32.mrb[0].mxu0
    %v5241 = vadd.f32 0.0, %v5240
    %v5242 = vpop.f32.mrb[0].mxu0
    %v5243 = vpop.f32.mrb[0].mxu0
    %v5244 = vadd.f32 0.0, %v5243
    %v5245 = vpop.f32.mrb[0].mxu0
    %5246 = vdwg.mxu0
    %v5247 = vadd.f32 %v4949, %v5089
    %v5248 = vadd.f32 %v4950, %v5092
    %v5249 = vadd.f32 %v4951, %v5097
    %v5250 = vadd.f32 %v4952, %v5100
    %v5251 = vadd.f32 %v4953, %v5105
    %v5252 = vadd.f32 %v4954, %v5108
    %v5253 = vadd.f32 %v4955, %v5113
    %v5254 = vadd.f32 %v4956, %v5116
    %v5255 = vadd.f32 %v4957, %v5121
    %v5256 = vadd.f32 %v4958, %v5124
    %v5257 = vadd.f32 %v4959, %v5129
    %v5258 = vadd.f32 %v4960, %v5132
    %v5259 = vadd.f32 %v4961, %v5137
    %v5260 = vadd.f32 %v4962, %v5140
    %v5261 = vadd.f32 %v4963, %v5145
    %v5262 = vadd.f32 %v4964, %v5148
    %v5263 = vadd.f32 %v4965, %v5153
    %v5264 = vadd.f32 %v4966, %v5156
    %v5265 = vadd.f32 %v4967, %v5161
    %v5266 = vadd.f32 %v4968, %v5164
    %v5267 = vadd.f32 %v4969, %v5169
    %v5268 = vadd.f32 %v4970, %v5172
    %v5269 = vadd.f32 %v4971, %v5177
    %v5270 = vadd.f32 %v4972, %v5180
    %v5271 = vadd.f32 %v4973, %v5185
    %v5272 = vadd.f32 %v4974, %v5188
    %v5273 = vadd.f32 %v4975, %v5193
    %v5274 = vadd.f32 %v4976, %v5196
    %v5275 = vadd.f32 %v4977, %v5201
    %v5276 = vadd.f32 %v4978, %v5204
    %v5277 = vadd.f32 %v4979, %v5209
    %v5278 = vadd.f32 %v4980, %v5212
    %v5279 = vadd.f32 %v4981, %v5217
    %v5280 = vadd.f32 %v4982, %v5220
    %v5281 = vadd.f32 %v4983, %v5225
    %v5282 = vadd.f32 %v4984, %v5228
    %v5283 = vadd.f32 %v4985, %v5233
    %v5284 = vadd.f32 %v4986, %v5236
    %v5285 = vadd.f32 %v4987, %v5241
    %v5286 = vadd.f32 %v4988, %v5244
    %s5287 = scalar_lea.vmem %s3, 256
    %v5288 = vld [vmem:[%s5287] sm:$0xf]
    %v5289 = vld [vmem:[%s5287 + $0x4] sm:$0xf]
    %v5290 = vld [vmem:[%s5287 + $0x8] sm:$0xf]
    %v5291 = vld [vmem:[%s5287 + $0xc] sm:$0xf]
    %v5292 = vld [vmem:[%s5287 + $0x10] sm:$0xf]
    %v5293 = vld [vmem:[%s5287 + $0x14] sm:$0xf]
    %v5294 = vld [vmem:[%s5287 + $0x18] sm:$0xf]
    %v5295 = vld [vmem:[%s5287 + $0x1c] sm:$0xf]
    %v5296 = vld [vmem:[%s5287 + $0x20] sm:$0xf]
    %v5297 = vld [vmem:[%s5287 + $0x24] sm:$0xf]
    %v5298 = vld [vmem:[%s5287 + $0x28] sm:$0xf]
    %v5299 = vld [vmem:[%s5287 + $0x2c] sm:$0xf]
    %v5300 = vld [vmem:[%s5287 + $0x30] sm:$0xf]
    %v5301 = vld [vmem:[%s5287 + $0x34] sm:$0xf]
    %v5302 = vld [vmem:[%s5287 + $0x38] sm:$0xf]
    %v5303 = vld [vmem:[%s5287 + $0x3c] sm:$0xf]
    %v5320 = vunpack.c.l.b16 %v5288
    %v5321 = vunpack.c.l.b16 %v5289
    %v5322 = vunpack.c.l.b16 %v5290
    %v5323 = vunpack.c.l.b16 %v5291
    %v5324 = vunpack.c.l.b16 %v5292
    %v5325 = vunpack.c.l.b16 %v5293
    %v5326 = vunpack.c.l.b16 %v5294
    %v5327 = vunpack.c.l.b16 %v5295
    %v5328 = vunpack.c.l.b16 %v5296
    %v5329 = vunpack.c.l.b16 %v5297
    %v5330 = vunpack.c.l.b16 %v5298
    %v5331 = vunpack.c.l.b16 %v5299
    %v5332 = vunpack.c.l.b16 %v5300
    %v5333 = vunpack.c.l.b16 %v5301
    %v5334 = vunpack.c.l.b16 %v5302
    %v5335 = vunpack.c.l.b16 %v5303
    %v5336 = vpack.c.b16 %v5321, %v5320
    %v5337 = vpack.c.b16 %v5323, %v5322
    %v5338 = vpack.c.b16 %v5325, %v5324
    %v5339 = vpack.c.b16 %v5327, %v5326
    %v5340 = vpack.c.b16 %v5329, %v5328
    %v5341 = vpack.c.b16 %v5331, %v5330
    %v5342 = vpack.c.b16 %v5333, %v5332
    %v5343 = vpack.c.b16 %v5335, %v5334
    %5352 = vmatprep.subr.bf16.mxu0 0
    %5353 = vmatpush1.bf16.msra.mxu0 %v5336
    %5354 = vmatprep.subr.bf16.mxu0 0
    %5355 = vmatpush1.bf16.msra.mxu0 %v5337
    %5356 = vmatprep.subr.bf16.mxu0 0
    %5357 = vmatpush1.bf16.msra.mxu0 %v5338
    %5358 = vmatprep.subr.bf16.mxu0 0
    %5359 = vmatpush1.bf16.msra.mxu0 %v5339
    %5360 = vmatprep.subr.bf16.mxu0 0
    %5361 = vmatpush1.bf16.msra.mxu0 %v5340
    %5362 = vmatprep.subr.bf16.mxu0 0
    %5363 = vmatpush1.bf16.msra.mxu0 %v5341
    %5364 = vmatprep.subr.bf16.mxu0 0
    %5365 = vmatpush1.bf16.msra.mxu0 %v5342
    %5366 = vmatprep.subr.bf16.mxu0 0
    %5367 = vmatpush1.bf16.msra.mxu0 %v5343
    %5368 = vmatprep.subr.bf16.mxu0 0
    %5369 = vmatpush1.bf16.msra.mxu0 0
    %5370 = vmatprep.subr.bf16.mxu0 0
    %5371 = vmatpush1.bf16.msra.mxu0 0
    %5372 = vmatprep.subr.bf16.mxu0 0
    %5373 = vmatpush1.bf16.msra.mxu0 0
    %5374 = vmatprep.subr.bf16.mxu0 0
    %5375 = vmatpush1.bf16.msra.mxu0 0
    %5376 = vmatprep.subr.bf16.mxu0 0
    %5377 = vmatpush1.bf16.msra.mxu0 0
    %5378 = vmatprep.subr.bf16.mxu0 0
    %5379 = vmatpush1.bf16.msra.mxu0 0
    %5380 = vmatprep.subr.bf16.mxu0 0
    %5381 = vmatpush1.bf16.msra.mxu0 0
    %5382 = vmatprep.subr.bf16.mxu0 0
    %5383 = vmatpush1.bf16.msra.mxu0 0
    %5384 = vmatprep.mubr.bf16.mxu0 0
    %5385 = vmatmul.mubr.bf16.gmra.mrb[0].mxu0 %v4152
    %v5386 = vpop.f32.mrb[0].mxu0
    %v5387 = vadd.f32 0.0, %v5386
    %v5388 = vpop.f32.mrb[0].mxu0
    %v5389 = vpop.f32.mrb[0].mxu0
    %v5390 = vadd.f32 0.0, %v5389
    %v5391 = vpop.f32.mrb[0].mxu0
    %5392 = vmatprep.mubr.bf16.mxu0 0
    %5393 = vmatmul.mubr.bf16.gmra.mrb[0].mxu0 %v4153
    %v5394 = vpop.f32.mrb[0].mxu0
    %v5395 = vadd.f32 0.0, %v5394
    %v5396 = vpop.f32.mrb[0].mxu0
    %v5397 = vpop.f32.mrb[0].mxu0
    %v5398 = vadd.f32 0.0, %v5397
    %v5399 = vpop.f32.mrb[0].mxu0
    %5400 = vmatprep.mubr.bf16.mxu0 0
    %5401 = vmatmul.mubr.bf16.gmra.mrb[0].mxu0 %v4154
    %v5402 = vpop.f32.mrb[0].mxu0
    %v5403 = vadd.f32 0.0, %v5402
    %v5404 = vpop.f32.mrb[0].mxu0
    %v5405 = vpop.f32.mrb[0].mxu0
    %v5406 = vadd.f32 0.0, %v5405
    %v5407 = vpop.f32.mrb[0].mxu0
    %5408 = vmatprep.mubr.bf16.mxu0 0
    %5409 = vmatmul.mubr.bf16.gmra.mrb[0].mxu0 %v4155
    %v5410 = vpop.f32.mrb[0].mxu0
    %v5411 = vadd.f32 0.0, %v5410
    %v5412 = vpop.f32.mrb[0].mxu0
    %v5413 = vpop.f32.mrb[0].mxu0
    %v5414 = vadd.f32 0.0, %v5413
    %v5415 = vpop.f32.mrb[0].mxu0
    %5416 = vmatprep.mubr.bf16.mxu0 0
    %5417 = vmatmul.mubr.bf16.gmra.mrb[0].mxu0 %v4156
    %v5418 = vpop.f32.mrb[0].mxu0
    %v5419 = vadd.f32 0.0, %v5418
    %v5420 = vpop.f32.mrb[0].mxu0
    %v5421 = vpop.f32.mrb[0].mxu0
    %v5422 = vadd.f32 0.0, %v5421
    %v5423 = vpop.f32.mrb[0].mxu0
    %5424 = vmatprep.mubr.bf16.mxu0 0
    %5425 = vmatmul.mubr.bf16.gmra.mrb[0].mxu0 %v4157
    %v5426 = vpop.f32.mrb[0].mxu0
    %v5427 = vadd.f32 0.0, %v5426
    %v5428 = vpop.f32.mrb[0].mxu0
    %v5429 = vpop.f32.mrb[0].mxu0
    %v5430 = vadd.f32 0.0, %v5429
    %v5431 = vpop.f32.mrb[0].mxu0
    %5432 = vmatprep.mubr.bf16.mxu0 0
    %5433 = vmatmul.mubr.bf16.gmra.mrb[0].mxu0 %v4158
    %v5434 = vpop.f32.mrb[0].mxu0
    %v5435 = vadd.f32 0.0, %v5434
    %v5436 = vpop.f32.mrb[0].mxu0
    %v5437 = vpop.f32.mrb[0].mxu0
    %v5438 = vadd.f32 0.0, %v5437
    %v5439 = vpop.f32.mrb[0].mxu0
    %5440 = vmatprep.mubr.bf16.mxu0 0
    %5441 = vmatmul.mubr.bf16.gmra.mrb[0].mxu0 %v4159
    %v5442 = vpop.f32.mrb[0].mxu0
    %v5443 = vadd.f32 0.0, %v5442
    %v5444 = vpop.f32.mrb[0].mxu0
    %v5445 = vpop.f32.mrb[0].mxu0
    %v5446 = vadd.f32 0.0, %v5445
    %v5447 = vpop.f32.mrb[0].mxu0
    %5448 = vmatprep.mubr.bf16.mxu0 0
    %5449 = vmatmul.mubr.bf16.gmra.mrb[0].mxu0 %v4160
    %v5450 = vpop.f32.mrb[0].mxu0
    %v5451 = vadd.f32 0.0, %v5450
    %v5452 = vpop.f32.mrb[0].mxu0
    %v5453 = vpop.f32.mrb[0].mxu0
    %v5454 = vadd.f32 0.0, %v5453
    %v5455 = vpop.f32.mrb[0].mxu0
    %5456 = vmatprep.mubr.bf16.mxu0 0
    %5457 = vmatmul.mubr.bf16.gmra.mrb[0].mxu0 %v4161
    %v5458 = vpop.f32.mrb[0].mxu0
    %v5459 = vadd.f32 0.0, %v5458
    %v5460 = vpop.f32.mrb[0].mxu0
    %v5461 = vpop.f32.mrb[0].mxu0
    %v5462 = vadd.f32 0.0, %v5461
    %v5463 = vpop.f32.mrb[0].mxu0
    %5464 = vmatprep.mubr.bf16.mxu0 0
    %5465 = vmatmul.mubr.bf16.gmra.mrb[0].mxu0 %v4166
    %v5466 = vpop.f32.mrb[0].mxu0
    %v5467 = vadd.f32 0.0, %v5466
    %v5468 = vpop.f32.mrb[0].mxu0
    %v5469 = vpop.f32.mrb[0].mxu0
    %v5470 = vadd.f32 0.0, %v5469
    %v5471 = vpop.f32.mrb[0].mxu0
    %5472 = vmatprep.mubr.bf16.mxu0 0
    %5473 = vmatmul.mubr.bf16.gmra.mrb[0].mxu0 %v4167
    %v5474 = vpop.f32.mrb[0].mxu0
    %v5475 = vadd.f32 0.0, %v5474
    %v5476 = vpop.f32.mrb[0].mxu0
    %v5477 = vpop.f32.mrb[0].mxu0
    %v5478 = vadd.f32 0.0, %v5477
    %v5479 = vpop.f32.mrb[0].mxu0
    %5480 = vmatprep.mubr.bf16.mxu0 0
    %5481 = vmatmul.mubr.bf16.gmra.mrb[0].mxu0 %v4168
    %v5482 = vpop.f32.mrb[0].mxu0
    %v5483 = vadd.f32 0.0, %v5482
    %v5484 = vpop.f32.mrb[0].mxu0
    %v5485 = vpop.f32.mrb[0].mxu0
    %v5486 = vadd.f32 0.0, %v5485
    %v5487 = vpop.f32.mrb[0].mxu0
    %5488 = vmatprep.mubr.bf16.mxu0 0
    %5489 = vmatmul.mubr.bf16.gmra.mrb[0].mxu0 %v4169
    %v5490 = vpop.f32.mrb[0].mxu0
    %v5491 = vadd.f32 0.0, %v5490
    %v5492 = vpop.f32.mrb[0].mxu0
    %v5493 = vpop.f32.mrb[0].mxu0
    %v5494 = vadd.f32 0.0, %v5493
    %v5495 = vpop.f32.mrb[0].mxu0
    %5496 = vmatprep.mubr.bf16.mxu0 0
    %5497 = vmatmul.mubr.bf16.gmra.mrb[0].mxu0 %v4170
    %v5498 = vpop.f32.mrb[0].mxu0
    %v5499 = vadd.f32 0.0, %v5498
    %v5500 = vpop.f32.mrb[0].mxu0
    %v5501 = vpop.f32.mrb[0].mxu0
    %v5502 = vadd.f32 0.0, %v5501
    %v5503 = vpop.f32.mrb[0].mxu0
    %5504 = vmatprep.mubr.bf16.mxu0 0
    %5505 = vmatmul.mubr.bf16.gmra.mrb[0].mxu0 %v4171
    %v5506 = vpop.f32.mrb[0].mxu0
    %v5507 = vadd.f32 0.0, %v5506
    %v5508 = vpop.f32.mrb[0].mxu0
    %v5509 = vpop.f32.mrb[0].mxu0
    %v5510 = vadd.f32 0.0, %v5509
    %v5511 = vpop.f32.mrb[0].mxu0
    %5512 = vmatprep.mubr.bf16.mxu0 0
    %5513 = vmatmul.mubr.bf16.gmra.mrb[0].mxu0 %v4172
    %v5514 = vpop.f32.mrb[0].mxu0
    %v5515 = vadd.f32 0.0, %v5514
    %v5516 = vpop.f32.mrb[0].mxu0
    %v5517 = vpop.f32.mrb[0].mxu0
    %v5518 = vadd.f32 0.0, %v5517
    %v5519 = vpop.f32.mrb[0].mxu0
    %5520 = vmatprep.mubr.bf16.mxu0 0
    %5521 = vmatmul.mubr.bf16.gmra.mrb[0].mxu0 %v4173
    %v5522 = vpop.f32.mrb[0].mxu0
    %v5523 = vadd.f32 0.0, %v5522
    %v5524 = vpop.f32.mrb[0].mxu0
    %v5525 = vpop.f32.mrb[0].mxu0
    %v5526 = vadd.f32 0.0, %v5525
    %v5527 = vpop.f32.mrb[0].mxu0
    %5528 = vmatprep.mubr.bf16.mxu0 0
    %5529 = vmatmul.mubr.bf16.gmra.mrb[0].mxu0 %v4174
    %v5530 = vpop.f32.mrb[0].mxu0
    %v5531 = vadd.f32 0.0, %v5530
    %v5532 = vpop.f32.mrb[0].mxu0
    %v5533 = vpop.f32.mrb[0].mxu0
    %v5534 = vadd.f32 0.0, %v5533
    %v5535 = vpop.f32.mrb[0].mxu0
    %5536 = vmatprep.mubr.bf16.mxu0 0
    %5537 = vmatmul.mubr.bf16.gmra.mrb[0].mxu0 %v4175
    %v5538 = vpop.f32.mrb[0].mxu0
    %v5539 = vadd.f32 0.0, %v5538
    %v5540 = vpop.f32.mrb[0].mxu0
    %v5541 = vpop.f32.mrb[0].mxu0
    %v5542 = vadd.f32 0.0, %v5541
    %v5543 = vpop.f32.mrb[0].mxu0
    %5544 = vdwg.mxu0
    %v5545 = vadd.f32 %v5247, %v5387
    %v5546 = vadd.f32 %v5248, %v5390
    %v5547 = vadd.f32 %v5249, %v5395
    %v5548 = vadd.f32 %v5250, %v5398
    %v5549 = vadd.f32 %v5251, %v5403
    %v5550 = vadd.f32 %v5252, %v5406
    %v5551 = vadd.f32 %v5253, %v5411
    %v5552 = vadd.f32 %v5254, %v5414
    %v5553 = vadd.f32 %v5255, %v5419
    %v5554 = vadd.f32 %v5256, %v5422
    %v5555 = vadd.f32 %v5257, %v5427
    %v5556 = vadd.f32 %v5258, %v5430
    %v5557 = vadd.f32 %v5259, %v5435
    %v5558 = vadd.f32 %v5260, %v5438
    %v5559 = vadd.f32 %v5261, %v5443
    %v5560 = vadd.f32 %v5262, %v5446
    %v5561 = vadd.f32 %v5263, %v5451
    %v5562 = vadd.f32 %v5264, %v5454
    %v5563 = vadd.f32 %v5265, %v5459
    %v5564 = vadd.f32 %v5266, %v5462
    %v5565 = vadd.f32 %v5267, %v5467
    %v5566 = vadd.f32 %v5268, %v5470
    %v5567 = vadd.f32 %v5269, %v5475
    %v5568 = vadd.f32 %v5270, %v5478
    %v5569 = vadd.f32 %v5271, %v5483
    %v5570 = vadd.f32 %v5272, %v5486
    %v5571 = vadd.f32 %v5273, %v5491
    %v5572 = vadd.f32 %v5274, %v5494
    %v5573 = vadd.f32 %v5275, %v5499
    %v5574 = vadd.f32 %v5276, %v5502
    %v5575 = vadd.f32 %v5277, %v5507
    %v5576 = vadd.f32 %v5278, %v5510
    %v5577 = vadd.f32 %v5279, %v5515
    %v5578 = vadd.f32 %v5280, %v5518
    %v5579 = vadd.f32 %v5281, %v5523
    %v5580 = vadd.f32 %v5282, %v5526
    %v5581 = vadd.f32 %v5283, %v5531
    %v5582 = vadd.f32 %v5284, %v5534
    %v5583 = vadd.f32 %v5285, %v5539
    %v5584 = vadd.f32 %v5286, %v5542
    %v5585 = vld [vmem:[%s4] sm:$0x1]
    %v5587 = vlaneseq
    %v5588 = vshrl.u32 %v5587, 7
    %v5589 = vsub.s32 0, %v5588
    %v5590 = vrot.slane %v5585, %v5589
    %v5592 = vadd.f32 %v5545, %v5590
    %v5593 = vadd.f32 %v5546, %v5590
    %v5594 = vadd.f32 %v5547, %v5590
    %v5595 = vadd.f32 %v5548, %v5590
    %v5596 = vadd.f32 %v5549, %v5590
    %v5597 = vadd.f32 %v5550, %v5590
    %v5598 = vadd.f32 %v5551, %v5590
    %v5599 = vadd.f32 %v5552, %v5590
    %v5600 = vadd.f32 %v5553, %v5590
    %v5601 = vadd.f32 %v5554, %v5590
    %v5602 = vadd.f32 %v5555, %v5590
    %v5603 = vadd.f32 %v5556, %v5590
    %v5604 = vadd.f32 %v5557, %v5590
    %v5605 = vadd.f32 %v5558, %v5590
    %v5606 = vadd.f32 %v5559, %v5590
    %v5607 = vadd.f32 %v5560, %v5590
    %v5608 = vadd.f32 %v5561, %v5590
    %v5609 = vadd.f32 %v5562, %v5590
    %v5610 = vadd.f32 %v5563, %v5590
    %v5611 = vadd.f32 %v5564, %v5590
    %v5612 = vadd.f32 %v5565, %v5590
    %v5613 = vadd.f32 %v5566, %v5590
    %v5614 = vadd.f32 %v5567, %v5590
    %v5615 = vadd.f32 %v5568, %v5590
    %v5616 = vadd.f32 %v5569, %v5590
    %v5617 = vadd.f32 %v5570, %v5590
    %v5618 = vadd.f32 %v5571, %v5590
    %v5619 = vadd.f32 %v5572, %v5590
    %v5620 = vadd.f32 %v5573, %v5590
    %v5621 = vadd.f32 %v5574, %v5590
    %v5622 = vadd.f32 %v5575, %v5590
    %v5623 = vadd.f32 %v5576, %v5590
    %v5624 = vadd.f32 %v5577, %v5590
    %v5625 = vadd.f32 %v5578, %v5590
    %v5626 = vadd.f32 %v5579, %v5590
    %v5627 = vadd.f32 %v5580, %v5590
    %v5628 = vadd.f32 %v5581, %v5590
    %v5629 = vadd.f32 %v5582, %v5590
    %v5630 = vadd.f32 %v5583, %v5590
    %v5631 = vadd.f32 %v5584, %v5590
    %v5632 = vmax.f32 %v5592, 0.0
    %v5633 = vmax.f32 %v5593, 0.0
    %v5634 = vmax.f32 %v5594, 0.0
    %v5635 = vmax.f32 %v5595, 0.0
    %v5636 = vmax.f32 %v5596, 0.0
    %v5637 = vmax.f32 %v5597, 0.0
    %v5638 = vmax.f32 %v5598, 0.0
    %v5639 = vmax.f32 %v5599, 0.0
    %v5640 = vmax.f32 %v5600, 0.0
    %v5641 = vmax.f32 %v5601, 0.0
    %v5642 = vmax.f32 %v5602, 0.0
    %v5643 = vmax.f32 %v5603, 0.0
    %v5644 = vmax.f32 %v5604, 0.0
    %v5645 = vmax.f32 %v5605, 0.0
    %v5646 = vmax.f32 %v5606, 0.0
    %v5647 = vmax.f32 %v5607, 0.0
    %v5648 = vmax.f32 %v5608, 0.0
    %v5649 = vmax.f32 %v5609, 0.0
    %v5650 = vmax.f32 %v5610, 0.0
    %v5651 = vmax.f32 %v5611, 0.0
    %v5652 = vmax.f32 %v5612, 0.0
    %v5653 = vmax.f32 %v5613, 0.0
    %v5654 = vmax.f32 %v5614, 0.0
    %v5655 = vmax.f32 %v5615, 0.0
    %v5656 = vmax.f32 %v5616, 0.0
    %v5657 = vmax.f32 %v5617, 0.0
    %v5658 = vmax.f32 %v5618, 0.0
    %v5659 = vmax.f32 %v5619, 0.0
    %v5660 = vmax.f32 %v5620, 0.0
    %v5661 = vmax.f32 %v5621, 0.0
    %v5662 = vmax.f32 %v5622, 0.0
    %v5663 = vmax.f32 %v5623, 0.0
    %v5664 = vmax.f32 %v5624, 0.0
    %v5665 = vmax.f32 %v5625, 0.0
    %v5666 = vmax.f32 %v5626, 0.0
    %v5667 = vmax.f32 %v5627, 0.0
    %v5668 = vmax.f32 %v5628, 0.0
    %v5669 = vmax.f32 %v5629, 0.0
    %v5670 = vmax.f32 %v5630, 0.0
    %v5671 = vmax.f32 %v5631, 0.0
    %5672 = vst [vmem:[#allocation3] sm:$0xff] %v5632
    %5673 = vst [vmem:[#allocation3 + $0x8] sm:$0xff] %v5633
    %5674 = vst [vmem:[#allocation3 + $0x10] sm:$0xff] %v5634
    %5675 = vst [vmem:[#allocation3 + $0x18] sm:$0xff] %v5635
    %5676 = vst [vmem:[#allocation3 + $0x20] sm:$0xff] %v5636
    %5677 = vst [vmem:[#allocation3 + $0x28] sm:$0xff] %v5637
    %5678 = vst [vmem:[#allocation3 + $0x30] sm:$0xff] %v5638
    %5679 = vst [vmem:[#allocation3 + $0x38] sm:$0xff] %v5639
    %5680 = vst [vmem:[#allocation3 + $0x40] sm:$0xff] %v5640
    %5681 = vst [vmem:[#allocation3 + $0x48] sm:$0xff] %v5641
    %5682 = vst [vmem:[#allocation3 + $0x50] sm:$0xff] %v5642
    %5683 = vst [vmem:[#allocation3 + $0x58] sm:$0xff] %v5643
    %5684 = vst [vmem:[#allocation3 + $0x60] sm:$0xff] %v5644
    %5685 = vst [vmem:[#allocation3 + $0x68] sm:$0xff] %v5645
    %5686 = vst [vmem:[#allocation3 + $0x70] sm:$0xff] %v5646
    %5687 = vst [vmem:[#allocation3 + $0x78] sm:$0xff] %v5647
    %5688 = vst [vmem:[#allocation3 + $0x80] sm:$0xff] %v5648
    %5689 = vst [vmem:[#allocation3 + $0x88] sm:$0xff] %v5649
    %5690 = vst [vmem:[#allocation3 + $0x90] sm:$0xff] %v5650
    %5691 = vst [vmem:[#allocation3 + $0x98] sm:$0xff] %v5651
    %5692 = vst [vmem:[#allocation3 + $0xa0] sm:$0xff] %v5652
    %5693 = vst [vmem:[#allocation3 + $0xa8] sm:$0xff] %v5653
    %5694 = vst [vmem:[#allocation3 + $0xb0] sm:$0xff] %v5654
    %5695 = vst [vmem:[#allocation3 + $0xb8] sm:$0xff] %v5655
    %5696 = vst [vmem:[#allocation3 + $0xc0] sm:$0xff] %v5656
    %5697 = vst [vmem:[#allocation3 + $0xc8] sm:$0xff] %v5657
    %5698 = vst [vmem:[#allocation3 + $0xd0] sm:$0xff] %v5658
    %5699 = vst [vmem:[#allocation3 + $0xd8] sm:$0xff] %v5659
    %5700 = vst [vmem:[#allocation3 + $0xe0] sm:$0xff] %v5660
    %5701 = vst [vmem:[#allocation3 + $0xe8] sm:$0xff] %v5661
    %5702 = vst [vmem:[#allocation3 + $0xf0] sm:$0xff] %v5662
    %5703 = vst [vmem:[#allocation3 + $0xf8] sm:$0xff] %v5663
    %5704 = vst [vmem:[#allocation3 + $0x100] sm:$0xff] %v5664
    %5705 = vst [vmem:[#allocation3 + $0x108] sm:$0xff] %v5665
    %5706 = vst [vmem:[#allocation3 + $0x110] sm:$0xff] %v5666
    %5707 = vst [vmem:[#allocation3 + $0x118] sm:$0xff] %v5667
    %5708 = vst [vmem:[#allocation3 + $0x120] sm:$0xff] %v5668
    %5709 = vst [vmem:[#allocation3 + $0x128] sm:$0xff] %v5669
    %5710 = vst [vmem:[#allocation3 + $0x130] sm:$0xff] %v5670
    %5711 = vst [vmem:[#allocation3 + $0x138] sm:$0xff] %v5671
    %v5712 = vld [vmem:[#allocation3] ss:$2 sm:$0xff]
    %s5713 = scalar_lea.vmem [#allocation3], 16
    %v5714 = vld [vmem:[%s5713] ss:$2 sm:$0xff]
    %s5715 = scalar_lea.vmem [#allocation3], 32
    %v5716 = vld [vmem:[%s5715] ss:$2 sm:$0xff]
    %s5717 = scalar_lea.vmem [#allocation3], 48
    %v5718 = vld [vmem:[%s5717] ss:$2 sm:$0xff]
    %s5719 = scalar_lea.vmem [#allocation3], 64
    %v5720 = vld [vmem:[%s5719] ss:$2 sm:$0xff]
    %s5721 = scalar_lea.vmem [#allocation3], 80
    %v5722 = vld [vmem:[%s5721] ss:$2 sm:$0xff]
    %s5723 = scalar_lea.vmem [#allocation3], 96
    %v5724 = vld [vmem:[%s5723] ss:$2 sm:$0xff]
    %s5725 = scalar_lea.vmem [#allocation3], 112
    %v5726 = vld [vmem:[%s5725] ss:$2 sm:$0xff]
    %s5727 = scalar_lea.vmem [#allocation3], 128
    %v5728 = vld [vmem:[%s5727] ss:$2 sm:$0xff]
    %s5729 = scalar_lea.vmem [#allocation3], 144
    %v5730 = vld [vmem:[%s5729] ss:$2 sm:$0xff]
    %s5731 = scalar_lea.vmem [#allocation3], 160
    %v5732 = vld [vmem:[%s5731] ss:$2 sm:$0xff]
    %s5733 = scalar_lea.vmem [#allocation3], 176
    %v5734 = vld [vmem:[%s5733] ss:$2 sm:$0xff]
    %s5735 = scalar_lea.vmem [#allocation3], 192
    %v5736 = vld [vmem:[%s5735] ss:$2 sm:$0xff]
    %s5737 = scalar_lea.vmem [#allocation3], 208
    %v5738 = vld [vmem:[%s5737] ss:$2 sm:$0xff]
    %s5739 = scalar_lea.vmem [#allocation3], 224
    %v5740 = vld [vmem:[%s5739] ss:$2 sm:$0xff]
    %s5741 = scalar_lea.vmem [#allocation3], 240
    %v5742 = vld [vmem:[%s5741] ss:$2 sm:$0xff]
    %s5743 = scalar_lea.vmem [#allocation3], 256
    %v5744 = vld [vmem:[%s5743] ss:$2 sm:$0xff]
    %s5745 = scalar_lea.vmem [#allocation3], 272
    %v5746 = vld [vmem:[%s5745] ss:$2 sm:$0xff]
    %s5747 = scalar_lea.vmem [#allocation3], 288
    %v5748 = vld [vmem:[%s5747] ss:$2 sm:$0xff]
    %s5749 = scalar_lea.vmem [#allocation3], 304
    %v5750 = vld [vmem:[%s5749] ss:$2 sm:$0xff]
    %s5751 = scalar_lea.vmem [#allocation3], 1
    %v5752 = vld [vmem:[%s5751] ss:$2 sm:$0xff]
    %s5753 = scalar_lea.vmem [#allocation3], 17
    %v5754 = vld [vmem:[%s5753] ss:$2 sm:$0xff]
    %s5755 = scalar_lea.vmem [#allocation3], 33
    %v5756 = vld [vmem:[%s5755] ss:$2 sm:$0xff]
    %s5757 = scalar_lea.vmem [#allocation3], 49
    %v5758 = vld [vmem:[%s5757] ss:$2 sm:$0xff]
    %s5759 = scalar_lea.vmem [#allocation3], 65
    %v5760 = vld [vmem:[%s5759] ss:$2 sm:$0xff]
    %s5761 = scalar_lea.vmem [#allocation3], 81
    %v5762 = vld [vmem:[%s5761] ss:$2 sm:$0xff]
    %s5763 = scalar_lea.vmem [#allocation3], 97
    %v5764 = vld [vmem:[%s5763] ss:$2 sm:$0xff]
    %s5765 = scalar_lea.vmem [#allocation3], 113
    %v5766 = vld [vmem:[%s5765] ss:$2 sm:$0xff]
    %s5767 = scalar_lea.vmem [#allocation3], 129
    %v5768 = vld [vmem:[%s5767] ss:$2 sm:$0xff]
    %s5769 = scalar_lea.vmem [#allocation3], 145
    %v5770 = vld [vmem:[%s5769] ss:$2 sm:$0xff]
    %s5771 = scalar_lea.vmem [#allocation3], 161
    %v5772 = vld [vmem:[%s5771] ss:$2 sm:$0xff]
    %s5773 = scalar_lea.vmem [#allocation3], 177
    %v5774 = vld [vmem:[%s5773] ss:$2 sm:$0xff]
    %s5775 = scalar_lea.vmem [#allocation3], 193
    %v5776 = vld [vmem:[%s5775] ss:$2 sm:$0xff]
    %s5777 = scalar_lea.vmem [#allocation3], 209
    %v5778 = vld [vmem:[%s5777] ss:$2 sm:$0xff]
    %s5779 = scalar_lea.vmem [#allocation3], 225
    %v5780 = vld [vmem:[%s5779] ss:$2 sm:$0xff]
    %s5781 = scalar_lea.vmem [#allocation3], 241
    %v5782 = vld [vmem:[%s5781] ss:$2 sm:$0xff]
    %s5783 = scalar_lea.vmem [#allocation3], 257
    %v5784 = vld [vmem:[%s5783] ss:$2 sm:$0xff]
    %s5785 = scalar_lea.vmem [#allocation3], 273
    %v5786 = vld [vmem:[%s5785] ss:$2 sm:$0xff]
    %s5787 = scalar_lea.vmem [#allocation3], 289
    %v5788 = vld [vmem:[%s5787] ss:$2 sm:$0xff]
    %s5789 = scalar_lea.vmem [#allocation3], 305
    %v5790 = vld [vmem:[%s5789] ss:$2 sm:$0xff]
    %v5791 = vmax.f32 %v5712, %v5752
    %v5792 = vmax.f32 %v5714, %v5754
    %v5793 = vmax.f32 %v5716, %v5756
    %v5794 = vmax.f32 %v5718, %v5758
    %v5795 = vmax.f32 %v5720, %v5760
    %v5796 = vmax.f32 %v5722, %v5762
    %v5797 = vmax.f32 %v5724, %v5764
    %v5798 = vmax.f32 %v5726, %v5766
    %v5799 = vmax.f32 %v5728, %v5768
    %v5800 = vmax.f32 %v5730, %v5770
    %v5801 = vmax.f32 %v5732, %v5772
    %v5802 = vmax.f32 %v5734, %v5774
    %v5803 = vmax.f32 %v5736, %v5776
    %v5804 = vmax.f32 %v5738, %v5778
    %v5805 = vmax.f32 %v5740, %v5780
    %v5806 = vmax.f32 %v5742, %v5782
    %v5807 = vmax.f32 %v5744, %v5784
    %v5808 = vmax.f32 %v5746, %v5786
    %v5809 = vmax.f32 %v5748, %v5788
    %v5810 = vmax.f32 %v5750, %v5790
    %v5811 = vmax.f32 %v5791, %v5792
    %v5812 = vmax.f32 %v5793, %v5794
    %v5813 = vmax.f32 %v5795, %v5796
    %v5814 = vmax.f32 %v5797, %v5798
    %v5815 = vmax.f32 %v5799, %v5800
    %v5816 = vmax.f32 %v5801, %v5802
    %v5817 = vmax.f32 %v5803, %v5804
    %v5818 = vmax.f32 %v5805, %v5806
    %v5819 = vmax.f32 %v5807, %v5808
    %v5820 = vmax.f32 %v5809, %v5810
    %v5821 = vpack.c.bf16 %v5811, %v5811
    %v5822 = vpack.c.bf16 %v5812, %v5812
    %v5823 = vpack.c.bf16 %v5813, %v5813
    %v5824 = vpack.c.bf16 %v5814, %v5814
    %v5825 = vpack.c.bf16 %v5815, %v5815
    %v5826 = vpack.c.bf16 %v5816, %v5816
    %v5827 = vpack.c.bf16 %v5817, %v5817
    %v5828 = vpack.c.bf16 %v5818, %v5818
    %v5829 = vpack.c.bf16 %v5819, %v5819
    %v5830 = vpack.c.bf16 %v5820, %v5820
    %v5831 = vld [vmem:[%s5] sm:$0xf]
    %v5832 = vld [vmem:[%s5 + $0x4] sm:$0xf]
    %v5833 = vld [vmem:[%s5 + $0x8] sm:$0xf]
    %v5834 = vld [vmem:[%s5 + $0xc] sm:$0xf]
    %v5835 = vld [vmem:[%s5 + $0x10] sm:$0xf]
    %v5836 = vld [vmem:[%s5 + $0x14] sm:$0xf]
    %v5837 = vld [vmem:[%s5 + $0x18] sm:$0xf]
    %v5838 = vld [vmem:[%s5 + $0x1c] sm:$0xf]
    %v5839 = vld [vmem:[%s5 + $0x20] sm:$0xf]
    %v5840 = vld [vmem:[%s5 + $0x24] sm:$0xf]
    %v5841 = vld [vmem:[%s5 + $0x28] sm:$0xf]
    %v5842 = vld [vmem:[%s5 + $0x2c] sm:$0xf]
    %v5843 = vld [vmem:[%s5 + $0x30] sm:$0xf]
    %v5844 = vld [vmem:[%s5 + $0x34] sm:$0xf]
    %v5845 = vld [vmem:[%s5 + $0x38] sm:$0xf]
    %v5846 = vld [vmem:[%s5 + $0x3c] sm:$0xf]
    %s5847 = scalar_lea.vmem %s5, 64
    %v5848 = vld [vmem:[%s5847] sm:$0xf]
    %v5849 = vld [vmem:[%s5847 + $0x4] sm:$0xf]
    %v5850 = vld [vmem:[%s5847 + $0x8] sm:$0xf]
    %v5851 = vld [vmem:[%s5847 + $0xc] sm:$0xf]
    %v5852 = vld [vmem:[%s5847 + $0x10] sm:$0xf]
    %v5853 = vld [vmem:[%s5847 + $0x14] sm:$0xf]
    %v5854 = vld [vmem:[%s5847 + $0x18] sm:$0xf]
    %v5855 = vld [vmem:[%s5847 + $0x1c] sm:$0xf]
    %v5856 = vld [vmem:[%s5847 + $0x20] sm:$0xf]
    %v5857 = vld [vmem:[%s5847 + $0x24] sm:$0xf]
    %v5858 = vld [vmem:[%s5847 + $0x28] sm:$0xf]
    %v5859 = vld [vmem:[%s5847 + $0x2c] sm:$0xf]
    %v5860 = vld [vmem:[%s5847 + $0x30] sm:$0xf]
    %v5861 = vld [vmem:[%s5847 + $0x34] sm:$0xf]
    %v5862 = vld [vmem:[%s5847 + $0x38] sm:$0xf]
    %v5863 = vld [vmem:[%s5847 + $0x3c] sm:$0xf]
    %v5866 = vunpack.c.l.b16 %v5821
    %v5867 = vunpack.c.l.b16 %v5826
    %v5868 = vrot.slane %v5866, 1
    %vm5869 = vcmask 1041409
    %v5870 = vsel %vm5869, %v5867, %v5868
    %v5871 = vpack.c.b16 %v5870, %v5870
    %v5889 = vunpack.c.l.b16 %v5848
    %v5890 = vunpack.c.l.b16 %v5849
    %v5891 = vunpack.c.l.b16 %v5850
    %v5892 = vunpack.c.l.b16 %v5851
    %v5893 = vunpack.c.l.b16 %v5852
    %v5894 = vunpack.c.l.b16 %v5853
    %v5895 = vunpack.c.l.b16 %v5854
    %v5896 = vunpack.c.l.b16 %v5855
    %v5897 = vunpack.c.l.b16 %v5856
    %v5898 = vunpack.c.l.b16 %v5857
    %v5899 = vunpack.c.l.b16 %v5858
    %v5900 = vunpack.c.l.b16 %v5859
    %v5901 = vunpack.c.l.b16 %v5860
    %v5902 = vunpack.c.l.b16 %v5861
    %v5903 = vunpack.c.l.b16 %v5862
    %v5904 = vunpack.c.l.b16 %v5863
    %v5905 = vpack.c.b16 %v5890, %v5889
    %v5906 = vpack.c.b16 %v5892, %v5891
    %v5907 = vpack.c.b16 %v5894, %v5893
    %v5908 = vpack.c.b16 %v5896, %v5895
    %v5909 = vpack.c.b16 %v5898, %v5897
    %v5910 = vpack.c.b16 %v5900, %v5899
    %v5911 = vpack.c.b16 %v5902, %v5901
    %v5912 = vpack.c.b16 %v5904, %v5903
    %5921 = vmatprep.subr.bf16.mxu0 0
    %5922 = vmatpush1.bf16.msra.mxu0 %v5905
    %5923 = vmatprep.subr.bf16.mxu0 0
    %5924 = vmatpush1.bf16.msra.mxu0 %v5906
    %5925 = vmatprep.subr.bf16.mxu0 0
    %5926 = vmatpush1.bf16.msra.mxu0 %v5907
    %5927 = vmatprep.subr.bf16.mxu0 0
    %5928 = vmatpush1.bf16.msra.mxu0 %v5908
    %5929 = vmatprep.subr.bf16.mxu0 0
    %5930 = vmatpush1.bf16.msra.mxu0 %v5909
    %5931 = vmatprep.subr.bf16.mxu0 0
    %5932 = vmatpush1.bf16.msra.mxu0 %v5910
    %5933 = vmatprep.subr.bf16.mxu0 0
    %5934 = vmatpush1.bf16.msra.mxu0 %v5911
    %5935 = vmatprep.subr.bf16.mxu0 0
    %5936 = vmatpush1.bf16.msra.mxu0 %v5912
    %5937 = vmatprep.subr.bf16.mxu0 0
    %5938 = vmatpush1.bf16.msra.mxu0 0
    %5939 = vmatprep.subr.bf16.mxu0 0
    %5940 = vmatpush1.bf16.msra.mxu0 0
    %5941 = vmatprep.subr.bf16.mxu0 0
    %5942 = vmatpush1.bf16.msra.mxu0 0
    %5943 = vmatprep.subr.bf16.mxu0 0
    %5944 = vmatpush1.bf16.msra.mxu0 0
    %5945 = vmatprep.subr.bf16.mxu0 0
    %5946 = vmatpush1.bf16.msra.mxu0 0
    %5947 = vmatprep.subr.bf16.mxu0 0
    %5948 = vmatpush1.bf16.msra.mxu0 0
    %5949 = vmatprep.subr.bf16.mxu0 0
    %5950 = vmatpush1.bf16.msra.mxu0 0
    %5951 = vmatprep.subr.bf16.mxu0 0
    %5952 = vmatpush1.bf16.msra.mxu0 0
    %5953 = vmatprep.mubr.bf16.mxu0 0
    %5954 = vmatmul.mubr.bf16.gmra.mrb[0].mxu0 %v5871
    %v5955 = vpop.f32.mrb[0].mxu0
    %v5956 = vadd.f32 0.0, %v5955
    %v5957 = vpop.f32.mrb[0].mxu0
    %v5958 = vpop.f32.mrb[0].mxu0
    %v5959 = vpop.f32.mrb[0].mxu0
    %5960 = vdwg.mxu0
    %v5961 = vrot.slane %v5867, 7
    %v5962 = vsel %vm5869, %v5961, %v5866
    %v5963 = vpack.c.b16 %v5962, %v5962
    %v5981 = vunpack.c.l.b16 %v5831
    %v5982 = vunpack.c.l.b16 %v5832
    %v5983 = vunpack.c.l.b16 %v5833
    %v5984 = vunpack.c.l.b16 %v5834
    %v5985 = vunpack.c.l.b16 %v5835
    %v5986 = vunpack.c.l.b16 %v5836
    %v5987 = vunpack.c.l.b16 %v5837
    %v5988 = vunpack.c.l.b16 %v5838
    %v5989 = vunpack.c.l.b16 %v5839
    %v5990 = vunpack.c.l.b16 %v5840
    %v5991 = vunpack.c.l.b16 %v5841
    %v5992 = vunpack.c.l.b16 %v5842
    %v5993 = vunpack.c.l.b16 %v5843
    %v5994 = vunpack.c.l.b16 %v5844
    %v5995 = vunpack.c.l.b16 %v5845
    %v5996 = vunpack.c.l.b16 %v5846
    %v5997 = vpack.c.b16 %v5982, %v5981
    %v5998 = vpack.c.b16 %v5984, %v5983
    %v5999 = vpack.c.b16 %v5986, %v5985
    %v6000 = vpack.c.b16 %v5988, %v5987
    %v6001 = vpack.c.b16 %v5990, %v5989
    %v6002 = vpack.c.b16 %v5992, %v5991
    %v6003 = vpack.c.b16 %v5994, %v5993
    %v6004 = vpack.c.b16 %v5996, %v5995
    %6013 = vmatprep.subr.bf16.mxu0 0
    %6014 = vmatpush1.bf16.msra.mxu0 %v5997
    %6015 = vmatprep.subr.bf16.mxu0 0
    %6016 = vmatpush1.bf16.msra.mxu0 %v5998
    %6017 = vmatprep.subr.bf16.mxu0 0
    %6018 = vmatpush1.bf16.msra.mxu0 %v5999
    %6019 = vmatprep.subr.bf16.mxu0 0
    %6020 = vmatpush1.bf16.msra.mxu0 %v6000
    %6021 = vmatprep.subr.bf16.mxu0 0
    %6022 = vmatpush1.bf16.msra.mxu0 %v6001
    %6023 = vmatprep.subr.bf16.mxu0 0
    %6024 = vmatpush1.bf16.msra.mxu0 %v6002
    %6025 = vmatprep.subr.bf16.mxu0 0
    %6026 = vmatpush1.bf16.msra.mxu0 %v6003
    %6027 = vmatprep.subr.bf16.mxu0 0
    %6028 = vmatpush1.bf16.msra.mxu0 %v6004
    %6029 = vmatprep.subr.bf16.mxu0 0
    %6030 = vmatpush1.bf16.msra.mxu0 0
    %6031 = vmatprep.subr.bf16.mxu0 0
    %6032 = vmatpush1.bf16.msra.mxu0 0
    %6033 = vmatprep.subr.bf16.mxu0 0
    %6034 = vmatpush1.bf16.msra.mxu0 0
    %6035 = vmatprep.subr.bf16.mxu0 0
    %6036 = vmatpush1.bf16.msra.mxu0 0
    %6037 = vmatprep.subr.bf16.mxu0 0
    %6038 = vmatpush1.bf16.msra.mxu0 0
    %6039 = vmatprep.subr.bf16.mxu0 0
    %6040 = vmatpush1.bf16.msra.mxu0 0
    %6041 = vmatprep.subr.bf16.mxu0 0
    %6042 = vmatpush1.bf16.msra.mxu0 0
    %6043 = vmatprep.subr.bf16.mxu0 0
    %6044 = vmatpush1.bf16.msra.mxu0 0
    %6045 = vmatprep.mubr.bf16.mxu0 0
    %6046 = vmatmul.mubr.bf16.gmra.mrb[0].mxu0 %v5963
    %v6047 = vpop.f32.mrb[0].mxu0
    %v6048 = vadd.f32 %v5956, %v6047
    %v6049 = vpop.f32.mrb[0].mxu0
    %v6050 = vpop.f32.mrb[0].mxu0
    %v6051 = vpop.f32.mrb[0].mxu0
    %6052 = vdwg.mxu0
    %s6053 = scalar_lea.vmem %s5, 128
    %v6054 = vld [vmem:[%s6053] sm:$0xf]
    %v6055 = vld [vmem:[%s6053 + $0x4] sm:$0xf]
    %v6056 = vld [vmem:[%s6053 + $0x8] sm:$0xf]
    %v6057 = vld [vmem:[%s6053 + $0xc] sm:$0xf]
    %v6058 = vld [vmem:[%s6053 + $0x10] sm:$0xf]
    %v6059 = vld [vmem:[%s6053 + $0x14] sm:$0xf]
    %v6060 = vld [vmem:[%s6053 + $0x18] sm:$0xf]
    %v6061 = vld [vmem:[%s6053 + $0x1c] sm:$0xf]
    %v6062 = vld [vmem:[%s6053 + $0x20] sm:$0xf]
    %v6063 = vld [vmem:[%s6053 + $0x24] sm:$0xf]
    %v6064 = vld [vmem:[%s6053 + $0x28] sm:$0xf]
    %v6065 = vld [vmem:[%s6053 + $0x2c] sm:$0xf]
    %v6066 = vld [vmem:[%s6053 + $0x30] sm:$0xf]
    %v6067 = vld [vmem:[%s6053 + $0x34] sm:$0xf]
    %v6068 = vld [vmem:[%s6053 + $0x38] sm:$0xf]
    %v6069 = vld [vmem:[%s6053 + $0x3c] sm:$0xf]
    %v6070 = vrot.slane %v5866, 2
    %v6071 = vrot.slane %v5867, 1
    %v6072 = vsel %vm5869, %v6071, %v6070
    %v6073 = vpack.c.b16 %v6072, %v6072
    %v6091 = vunpack.c.l.b16 %v6054
    %v6092 = vunpack.c.l.b16 %v6055
    %v6093 = vunpack.c.l.b16 %v6056
    %v6094 = vunpack.c.l.b16 %v6057
    %v6095 = vunpack.c.l.b16 %v6058
    %v6096 = vunpack.c.l.b16 %v6059
    %v6097 = vunpack.c.l.b16 %v6060
    %v6098 = vunpack.c.l.b16 %v6061
    %v6099 = vunpack.c.l.b16 %v6062
    %v6100 = vunpack.c.l.b16 %v6063
    %v6101 = vunpack.c.l.b16 %v6064
    %v6102 = vunpack.c.l.b16 %v6065
    %v6103 = vunpack.c.l.b16 %v6066
    %v6104 = vunpack.c.l.b16 %v6067
    %v6105 = vunpack.c.l.b16 %v6068
    %v6106 = vunpack.c.l.b16 %v6069
    %v6107 = vpack.c.b16 %v6092, %v6091
    %v6108 = vpack.c.b16 %v6094, %v6093
    %v6109 = vpack.c.b16 %v6096, %v6095
    %v6110 = vpack.c.b16 %v6098, %v6097
    %v6111 = vpack.c.b16 %v6100, %v6099
    %v6112 = vpack.c.b16 %v6102, %v6101
    %v6113 = vpack.c.b16 %v6104, %v6103
    %v6114 = vpack.c.b16 %v6106, %v6105
    %6123 = vmatprep.subr.bf16.mxu0 0
    %6124 = vmatpush1.bf16.msra.mxu0 %v6107
    %6125 = vmatprep.subr.bf16.mxu0 0
    %6126 = vmatpush1.bf16.msra.mxu0 %v6108
    %6127 = vmatprep.subr.bf16.mxu0 0
    %6128 = vmatpush1.bf16.msra.mxu0 %v6109
    %6129 = vmatprep.subr.bf16.mxu0 0
    %6130 = vmatpush1.bf16.msra.mxu0 %v6110
    %6131 = vmatprep.subr.bf16.mxu0 0
    %6132 = vmatpush1.bf16.msra.mxu0 %v6111
    %6133 = vmatprep.subr.bf16.mxu0 0
    %6134 = vmatpush1.bf16.msra.mxu0 %v6112
    %6135 = vmatprep.subr.bf16.mxu0 0
    %6136 = vmatpush1.bf16.msra.mxu0 %v6113
    %6137 = vmatprep.subr.bf16.mxu0 0
    %6138 = vmatpush1.bf16.msra.mxu0 %v6114
    %6139 = vmatprep.subr.bf16.mxu0 0
    %6140 = vmatpush1.bf16.msra.mxu0 0
    %6141 = vmatprep.subr.bf16.mxu0 0
    %6142 = vmatpush1.bf16.msra.mxu0 0
    %6143 = vmatprep.subr.bf16.mxu0 0
    %6144 = vmatpush1.bf16.msra.mxu0 0
    %6145 = vmatprep.subr.bf16.mxu0 0
    %6146 = vmatpush1.bf16.msra.mxu0 0
    %6147 = vmatprep.subr.bf16.mxu0 0
    %6148 = vmatpush1.bf16.msra.mxu0 0
    %6149 = vmatprep.subr.bf16.mxu0 0
    %6150 = vmatpush1.bf16.msra.mxu0 0
    %6151 = vmatprep.subr.bf16.mxu0 0
    %6152 = vmatpush1.bf16.msra.mxu0 0
    %6153 = vmatprep.subr.bf16.mxu0 0
    %6154 = vmatpush1.bf16.msra.mxu0 0
    %6155 = vmatprep.mubr.bf16.mxu0 0
    %6156 = vmatmul.mubr.bf16.gmra.mrb[0].mxu0 %v6073
    %v6157 = vpop.f32.mrb[0].mxu0
    %v6158 = vadd.f32 0.0, %v6157
    %v6159 = vpop.f32.mrb[0].mxu0
    %v6160 = vpop.f32.mrb[0].mxu0
    %v6161 = vpop.f32.mrb[0].mxu0
    %6162 = vdwg.mxu0
    %v6163 = vadd.f32 %v6048, %v6158
    %s6164 = scalar_lea.vmem %s5, 192
    %v6165 = vld [vmem:[%s6164] sm:$0xf]
    %v6166 = vld [vmem:[%s6164 + $0x4] sm:$0xf]
    %v6167 = vld [vmem:[%s6164 + $0x8] sm:$0xf]
    %v6168 = vld [vmem:[%s6164 + $0xc] sm:$0xf]
    %v6169 = vld [vmem:[%s6164 + $0x10] sm:$0xf]
    %v6170 = vld [vmem:[%s6164 + $0x14] sm:$0xf]
    %v6171 = vld [vmem:[%s6164 + $0x18] sm:$0xf]
    %v6172 = vld [vmem:[%s6164 + $0x1c] sm:$0xf]
    %v6173 = vld [vmem:[%s6164 + $0x20] sm:$0xf]
    %v6174 = vld [vmem:[%s6164 + $0x24] sm:$0xf]
    %v6175 = vld [vmem:[%s6164 + $0x28] sm:$0xf]
    %v6176 = vld [vmem:[%s6164 + $0x2c] sm:$0xf]
    %v6177 = vld [vmem:[%s6164 + $0x30] sm:$0xf]
    %v6178 = vld [vmem:[%s6164 + $0x34] sm:$0xf]
    %v6179 = vld [vmem:[%s6164 + $0x38] sm:$0xf]
    %v6180 = vld [vmem:[%s6164 + $0x3c] sm:$0xf]
    %v6181 = vrot.slane %v5866, 3
    %v6182 = vrot.slane %v5867, 2
    %v6183 = vsel %vm5869, %v6182, %v6181
    %v6184 = vpack.c.b16 %v6183, %v6183
    %v6202 = vunpack.c.l.b16 %v6165
    %v6203 = vunpack.c.l.b16 %v6166
    %v6204 = vunpack.c.l.b16 %v6167
    %v6205 = vunpack.c.l.b16 %v6168
    %v6206 = vunpack.c.l.b16 %v6169
    %v6207 = vunpack.c.l.b16 %v6170
    %v6208 = vunpack.c.l.b16 %v6171
    %v6209 = vunpack.c.l.b16 %v6172
    %v6210 = vunpack.c.l.b16 %v6173
    %v6211 = vunpack.c.l.b16 %v6174
    %v6212 = vunpack.c.l.b16 %v6175
    %v6213 = vunpack.c.l.b16 %v6176
    %v6214 = vunpack.c.l.b16 %v6177
    %v6215 = vunpack.c.l.b16 %v6178
    %v6216 = vunpack.c.l.b16 %v6179
    %v6217 = vunpack.c.l.b16 %v6180
    %v6218 = vpack.c.b16 %v6203, %v6202
    %v6219 = vpack.c.b16 %v6205, %v6204
    %v6220 = vpack.c.b16 %v6207, %v6206
    %v6221 = vpack.c.b16 %v6209, %v6208
    %v6222 = vpack.c.b16 %v6211, %v6210
    %v6223 = vpack.c.b16 %v6213, %v6212
    %v6224 = vpack.c.b16 %v6215, %v6214
    %v6225 = vpack.c.b16 %v6217, %v6216
    %6234 = vmatprep.subr.bf16.mxu0 0
    %6235 = vmatpush1.bf16.msra.mxu0 %v6218
    %6236 = vmatprep.subr.bf16.mxu0 0
    %6237 = vmatpush1.bf16.msra.mxu0 %v6219
    %6238 = vmatprep.subr.bf16.mxu0 0
    %6239 = vmatpush1.bf16.msra.mxu0 %v6220
    %6240 = vmatprep.subr.bf16.mxu0 0
    %6241 = vmatpush1.bf16.msra.mxu0 %v6221
    %6242 = vmatprep.subr.bf16.mxu0 0
    %6243 = vmatpush1.bf16.msra.mxu0 %v6222
    %6244 = vmatprep.subr.bf16.mxu0 0
    %6245 = vmatpush1.bf16.msra.mxu0 %v6223
    %6246 = vmatprep.subr.bf16.mxu0 0
    %6247 = vmatpush1.bf16.msra.mxu0 %v6224
    %6248 = vmatprep.subr.bf16.mxu0 0
    %6249 = vmatpush1.bf16.msra.mxu0 %v6225
    %6250 = vmatprep.subr.bf16.mxu0 0
    %6251 = vmatpush1.bf16.msra.mxu0 0
    %6252 = vmatprep.subr.bf16.mxu0 0
    %6253 = vmatpush1.bf16.msra.mxu0 0
    %6254 = vmatprep.subr.bf16.mxu0 0
    %6255 = vmatpush1.bf16.msra.mxu0 0
    %6256 = vmatprep.subr.bf16.mxu0 0
    %6257 = vmatpush1.bf16.msra.mxu0 0
    %6258 = vmatprep.subr.bf16.mxu0 0
    %6259 = vmatpush1.bf16.msra.mxu0 0
    %6260 = vmatprep.subr.bf16.mxu0 0
    %6261 = vmatpush1.bf16.msra.mxu0 0
    %6262 = vmatprep.subr.bf16.mxu0 0
    %6263 = vmatpush1.bf16.msra.mxu0 0
    %6264 = vmatprep.subr.bf16.mxu0 0
    %6265 = vmatpush1.bf16.msra.mxu0 0
    %6266 = vmatprep.mubr.bf16.mxu0 0
    %6267 = vmatmul.mubr.bf16.gmra.mrb[0].mxu0 %v6184
    %v6268 = vpop.f32.mrb[0].mxu0
    %v6269 = vadd.f32 0.0, %v6268
    %v6270 = vpop.f32.mrb[0].mxu0
    %v6271 = vpop.f32.mrb[0].mxu0
    %v6272 = vpop.f32.mrb[0].mxu0
    %6273 = vdwg.mxu0
    %v6274 = vadd.f32 %v6163, %v6269
    %s6275 = scalar_lea.vmem %s5, 256
    %v6276 = vld [vmem:[%s6275] sm:$0xf]
    %v6277 = vld [vmem:[%s6275 + $0x4] sm:$0xf]
    %v6278 = vld [vmem:[%s6275 + $0x8] sm:$0xf]
    %v6279 = vld [vmem:[%s6275 + $0xc] sm:$0xf]
    %v6280 = vld [vmem:[%s6275 + $0x10] sm:$0xf]
    %v6281 = vld [vmem:[%s6275 + $0x14] sm:$0xf]
    %v6282 = vld [vmem:[%s6275 + $0x18] sm:$0xf]
    %v6283 = vld [vmem:[%s6275 + $0x1c] sm:$0xf]
    %v6284 = vld [vmem:[%s6275 + $0x20] sm:$0xf]
    %v6285 = vld [vmem:[%s6275 + $0x24] sm:$0xf]
    %v6286 = vld [vmem:[%s6275 + $0x28] sm:$0xf]
    %v6287 = vld [vmem:[%s6275 + $0x2c] sm:$0xf]
    %v6288 = vld [vmem:[%s6275 + $0x30] sm:$0xf]
    %v6289 = vld [vmem:[%s6275 + $0x34] sm:$0xf]
    %v6290 = vld [vmem:[%s6275 + $0x38] sm:$0xf]
    %v6291 = vld [vmem:[%s6275 + $0x3c] sm:$0xf]
    %v6292 = vrot.slane %v5866, 4
    %v6293 = vrot.slane %v5867, 3
    %v6294 = vsel %vm5869, %v6293, %v6292
    %v6295 = vpack.c.b16 %v6294, %v6294
    %v6313 = vunpack.c.l.b16 %v6276
    %v6314 = vunpack.c.l.b16 %v6277
    %v6315 = vunpack.c.l.b16 %v6278
    %v6316 = vunpack.c.l.b16 %v6279
    %v6317 = vunpack.c.l.b16 %v6280
    %v6318 = vunpack.c.l.b16 %v6281
    %v6319 = vunpack.c.l.b16 %v6282
    %v6320 = vunpack.c.l.b16 %v6283
    %v6321 = vunpack.c.l.b16 %v6284
    %v6322 = vunpack.c.l.b16 %v6285
    %v6323 = vunpack.c.l.b16 %v6286
    %v6324 = vunpack.c.l.b16 %v6287
    %v6325 = vunpack.c.l.b16 %v6288
    %v6326 = vunpack.c.l.b16 %v6289
    %v6327 = vunpack.c.l.b16 %v6290
    %v6328 = vunpack.c.l.b16 %v6291
    %v6329 = vpack.c.b16 %v6314, %v6313
    %v6330 = vpack.c.b16 %v6316, %v6315
    %v6331 = vpack.c.b16 %v6318, %v6317
    %v6332 = vpack.c.b16 %v6320, %v6319
    %v6333 = vpack.c.b16 %v6322, %v6321
    %v6334 = vpack.c.b16 %v6324, %v6323
    %v6335 = vpack.c.b16 %v6326, %v6325
    %v6336 = vpack.c.b16 %v6328, %v6327
    %6345 = vmatprep.subr.bf16.mxu0 0
    %6346 = vmatpush1.bf16.msra.mxu0 %v6329
    %6347 = vmatprep.subr.bf16.mxu0 0
    %6348 = vmatpush1.bf16.msra.mxu0 %v6330
    %6349 = vmatprep.subr.bf16.mxu0 0
    %6350 = vmatpush1.bf16.msra.mxu0 %v6331
    %6351 = vmatprep.subr.bf16.mxu0 0
    %6352 = vmatpush1.bf16.msra.mxu0 %v6332
    %6353 = vmatprep.subr.bf16.mxu0 0
    %6354 = vmatpush1.bf16.msra.mxu0 %v6333
    %6355 = vmatprep.subr.bf16.mxu0 0
    %6356 = vmatpush1.bf16.msra.mxu0 %v6334
    %6357 = vmatprep.subr.bf16.mxu0 0
    %6358 = vmatpush1.bf16.msra.mxu0 %v6335
    %6359 = vmatprep.subr.bf16.mxu0 0
    %6360 = vmatpush1.bf16.msra.mxu0 %v6336
    %6361 = vmatprep.subr.bf16.mxu0 0
    %6362 = vmatpush1.bf16.msra.mxu0 0
    %6363 = vmatprep.subr.bf16.mxu0 0
    %6364 = vmatpush1.bf16.msra.mxu0 0
    %6365 = vmatprep.subr.bf16.mxu0 0
    %6366 = vmatpush1.bf16.msra.mxu0 0
    %6367 = vmatprep.subr.bf16.mxu0 0
    %6368 = vmatpush1.bf16.msra.mxu0 0
    %6369 = vmatprep.subr.bf16.mxu0 0
    %6370 = vmatpush1.bf16.msra.mxu0 0
    %6371 = vmatprep.subr.bf16.mxu0 0
    %6372 = vmatpush1.bf16.msra.mxu0 0
    %6373 = vmatprep.subr.bf16.mxu0 0
    %6374 = vmatpush1.bf16.msra.mxu0 0
    %6375 = vmatprep.subr.bf16.mxu0 0
    %6376 = vmatpush1.bf16.msra.mxu0 0
    %6377 = vmatprep.mubr.bf16.mxu0 0
    %6378 = vmatmul.mubr.bf16.gmra.mrb[0].mxu0 %v6295
    %v6379 = vpop.f32.mrb[0].mxu0
    %v6380 = vadd.f32 0.0, %v6379
    %v6381 = vpop.f32.mrb[0].mxu0
    %v6382 = vpop.f32.mrb[0].mxu0
    %v6383 = vpop.f32.mrb[0].mxu0
    %6384 = vdwg.mxu0
    %v6385 = vadd.f32 %v6274, %v6380
    %s6386 = scalar_lea.vmem %s5, 320
    %v6387 = vld [vmem:[%s6386] sm:$0xf]
    %v6388 = vld [vmem:[%s6386 + $0x4] sm:$0xf]
    %v6389 = vld [vmem:[%s6386 + $0x8] sm:$0xf]
    %v6390 = vld [vmem:[%s6386 + $0xc] sm:$0xf]
    %v6391 = vld [vmem:[%s6386 + $0x10] sm:$0xf]
    %v6392 = vld [vmem:[%s6386 + $0x14] sm:$0xf]
    %v6393 = vld [vmem:[%s6386 + $0x18] sm:$0xf]
    %v6394 = vld [vmem:[%s6386 + $0x1c] sm:$0xf]
    %v6395 = vld [vmem:[%s6386 + $0x20] sm:$0xf]
    %v6396 = vld [vmem:[%s6386 + $0x24] sm:$0xf]
    %v6397 = vld [vmem:[%s6386 + $0x28] sm:$0xf]
    %v6398 = vld [vmem:[%s6386 + $0x2c] sm:$0xf]
    %v6399 = vld [vmem:[%s6386 + $0x30] sm:$0xf]
    %v6400 = vld [vmem:[%s6386 + $0x34] sm:$0xf]
    %v6401 = vld [vmem:[%s6386 + $0x38] sm:$0xf]
    %v6402 = vld [vmem:[%s6386 + $0x3c] sm:$0xf]
    %v6405 = vunpack.c.l.b16 %v5822
    %v6406 = vunpack.c.l.b16 %v5827
    %v6407 = vrot.slane %v6406, 7
    %v6408 = vsel %vm5869, %v6407, %v6405
    %v6409 = vpack.c.b16 %v6408, %v6408
    %v6427 = vunpack.c.l.b16 %v6387
    %v6428 = vunpack.c.l.b16 %v6388
    %v6429 = vunpack.c.l.b16 %v6389
    %v6430 = vunpack.c.l.b16 %v6390
    %v6431 = vunpack.c.l.b16 %v6391
    %v6432 = vunpack.c.l.b16 %v6392
    %v6433 = vunpack.c.l.b16 %v6393
    %v6434 = vunpack.c.l.b16 %v6394
    %v6435 = vunpack.c.l.b16 %v6395
    %v6436 = vunpack.c.l.b16 %v6396
    %v6437 = vunpack.c.l.b16 %v6397
    %v6438 = vunpack.c.l.b16 %v6398
    %v6439 = vunpack.c.l.b16 %v6399
    %v6440 = vunpack.c.l.b16 %v6400
    %v6441 = vunpack.c.l.b16 %v6401
    %v6442 = vunpack.c.l.b16 %v6402
    %v6443 = vpack.c.b16 %v6428, %v6427
    %v6444 = vpack.c.b16 %v6430, %v6429
    %v6445 = vpack.c.b16 %v6432, %v6431
    %v6446 = vpack.c.b16 %v6434, %v6433
    %v6447 = vpack.c.b16 %v6436, %v6435
    %v6448 = vpack.c.b16 %v6438, %v6437
    %v6449 = vpack.c.b16 %v6440, %v6439
    %v6450 = vpack.c.b16 %v6442, %v6441
    %6459 = vmatprep.subr.bf16.mxu0 0
    %6460 = vmatpush1.bf16.msra.mxu0 %v6443
    %6461 = vmatprep.subr.bf16.mxu0 0
    %6462 = vmatpush1.bf16.msra.mxu0 %v6444
    %6463 = vmatprep.subr.bf16.mxu0 0
    %6464 = vmatpush1.bf16.msra.mxu0 %v6445
    %6465 = vmatprep.subr.bf16.mxu0 0
    %6466 = vmatpush1.bf16.msra.mxu0 %v6446
    %6467 = vmatprep.subr.bf16.mxu0 0
    %6468 = vmatpush1.bf16.msra.mxu0 %v6447
    %6469 = vmatprep.subr.bf16.mxu0 0
    %6470 = vmatpush1.bf16.msra.mxu0 %v6448
    %6471 = vmatprep.subr.bf16.mxu0 0
    %6472 = vmatpush1.bf16.msra.mxu0 %v6449
    %6473 = vmatprep.subr.bf16.mxu0 0
    %6474 = vmatpush1.bf16.msra.mxu0 %v6450
    %6475 = vmatprep.subr.bf16.mxu0 0
    %6476 = vmatpush1.bf16.msra.mxu0 0
    %6477 = vmatprep.subr.bf16.mxu0 0
    %6478 = vmatpush1.bf16.msra.mxu0 0
    %6479 = vmatprep.subr.bf16.mxu0 0
    %6480 = vmatpush1.bf16.msra.mxu0 0
    %6481 = vmatprep.subr.bf16.mxu0 0
    %6482 = vmatpush1.bf16.msra.mxu0 0
    %6483 = vmatprep.subr.bf16.mxu0 0
    %6484 = vmatpush1.bf16.msra.mxu0 0
    %6485 = vmatprep.subr.bf16.mxu0 0
    %6486 = vmatpush1.bf16.msra.mxu0 0
    %6487 = vmatprep.subr.bf16.mxu0 0
    %6488 = vmatpush1.bf16.msra.mxu0 0
    %6489 = vmatprep.subr.bf16.mxu0 0
    %6490 = vmatpush1.bf16.msra.mxu0 0
    %6491 = vmatprep.mubr.bf16.mxu0 0
    %6492 = vmatmul.mubr.bf16.gmra.mrb[0].mxu0 %v6409
    %v6493 = vpop.f32.mrb[0].mxu0
    %v6494 = vadd.f32 0.0, %v6493
    %v6495 = vpop.f32.mrb[0].mxu0
    %v6496 = vpop.f32.mrb[0].mxu0
    %v6497 = vpop.f32.mrb[0].mxu0
    %6498 = vdwg.mxu0
    %v6499 = vadd.f32 %v6385, %v6494
    %s6500 = scalar_lea.vmem %s5, 384
    %v6501 = vld [vmem:[%s6500] sm:$0xf]
    %v6502 = vld [vmem:[%s6500 + $0x4] sm:$0xf]
    %v6503 = vld [vmem:[%s6500 + $0x8] sm:$0xf]
    %v6504 = vld [vmem:[%s6500 + $0xc] sm:$0xf]
    %v6505 = vld [vmem:[%s6500 + $0x10] sm:$0xf]
    %v6506 = vld [vmem:[%s6500 + $0x14] sm:$0xf]
    %v6507 = vld [vmem:[%s6500 + $0x18] sm:$0xf]
    %v6508 = vld [vmem:[%s6500 + $0x1c] sm:$0xf]
    %v6509 = vld [vmem:[%s6500 + $0x20] sm:$0xf]
    %v6510 = vld [vmem:[%s6500 + $0x24] sm:$0xf]
    %v6511 = vld [vmem:[%s6500 + $0x28] sm:$0xf]
    %v6512 = vld [vmem:[%s6500 + $0x2c] sm:$0xf]
    %v6513 = vld [vmem:[%s6500 + $0x30] sm:$0xf]
    %v6514 = vld [vmem:[%s6500 + $0x34] sm:$0xf]
    %v6515 = vld [vmem:[%s6500 + $0x38] sm:$0xf]
    %v6516 = vld [vmem:[%s6500 + $0x3c] sm:$0xf]
    %v6517 = vrot.slane %v6405, 1
    %v6518 = vsel %vm5869, %v6406, %v6517
    %v6519 = vpack.c.b16 %v6518, %v6518
    %v6537 = vunpack.c.l.b16 %v6501
    %v6538 = vunpack.c.l.b16 %v6502
    %v6539 = vunpack.c.l.b16 %v6503
    %v6540 = vunpack.c.l.b16 %v6504
    %v6541 = vunpack.c.l.b16 %v6505
    %v6542 = vunpack.c.l.b16 %v6506
    %v6543 = vunpack.c.l.b16 %v6507
    %v6544 = vunpack.c.l.b16 %v6508
    %v6545 = vunpack.c.l.b16 %v6509
    %v6546 = vunpack.c.l.b16 %v6510
    %v6547 = vunpack.c.l.b16 %v6511
    %v6548 = vunpack.c.l.b16 %v6512
    %v6549 = vunpack.c.l.b16 %v6513
    %v6550 = vunpack.c.l.b16 %v6514
    %v6551 = vunpack.c.l.b16 %v6515
    %v6552 = vunpack.c.l.b16 %v6516
    %v6553 = vpack.c.b16 %v6538, %v6537
    %v6554 = vpack.c.b16 %v6540, %v6539
    %v6555 = vpack.c.b16 %v6542, %v6541
    %v6556 = vpack.c.b16 %v6544, %v6543
    %v6557 = vpack.c.b16 %v6546, %v6545
    %v6558 = vpack.c.b16 %v6548, %v6547
    %v6559 = vpack.c.b16 %v6550, %v6549
    %v6560 = vpack.c.b16 %v6552, %v6551
    %6569 = vmatprep.subr.bf16.mxu0 0
    %6570 = vmatpush1.bf16.msra.mxu0 %v6553
    %6571 = vmatprep.subr.bf16.mxu0 0
    %6572 = vmatpush1.bf16.msra.mxu0 %v6554
    %6573 = vmatprep.subr.bf16.mxu0 0
    %6574 = vmatpush1.bf16.msra.mxu0 %v6555
    %6575 = vmatprep.subr.bf16.mxu0 0
    %6576 = vmatpush1.bf16.msra.mxu0 %v6556
    %6577 = vmatprep.subr.bf16.mxu0 0
    %6578 = vmatpush1.bf16.msra.mxu0 %v6557
    %6579 = vmatprep.subr.bf16.mxu0 0
    %6580 = vmatpush1.bf16.msra.mxu0 %v6558
    %6581 = vmatprep.subr.bf16.mxu0 0
    %6582 = vmatpush1.bf16.msra.mxu0 %v6559
    %6583 = vmatprep.subr.bf16.mxu0 0
    %6584 = vmatpush1.bf16.msra.mxu0 %v6560
    %6585 = vmatprep.subr.bf16.mxu0 0
    %6586 = vmatpush1.bf16.msra.mxu0 0
    %6587 = vmatprep.subr.bf16.mxu0 0
    %6588 = vmatpush1.bf16.msra.mxu0 0
    %6589 = vmatprep.subr.bf16.mxu0 0
    %6590 = vmatpush1.bf16.msra.mxu0 0
    %6591 = vmatprep.subr.bf16.mxu0 0
    %6592 = vmatpush1.bf16.msra.mxu0 0
    %6593 = vmatprep.subr.bf16.mxu0 0
    %6594 = vmatpush1.bf16.msra.mxu0 0
    %6595 = vmatprep.subr.bf16.mxu0 0
    %6596 = vmatpush1.bf16.msra.mxu0 0
    %6597 = vmatprep.subr.bf16.mxu0 0
    %6598 = vmatpush1.bf16.msra.mxu0 0
    %6599 = vmatprep.subr.bf16.mxu0 0
    %6600 = vmatpush1.bf16.msra.mxu0 0
    %6601 = vmatprep.mubr.bf16.mxu0 0
    %6602 = vmatmul.mubr.bf16.gmra.mrb[0].mxu0 %v6519
    %v6603 = vpop.f32.mrb[0].mxu0
    %v6604 = vadd.f32 0.0, %v6603
    %v6605 = vpop.f32.mrb[0].mxu0
    %v6606 = vpop.f32.mrb[0].mxu0
    %v6607 = vpop.f32.mrb[0].mxu0
    %6608 = vdwg.mxu0
    %v6609 = vadd.f32 %v6499, %v6604
    %s6610 = scalar_lea.vmem %s5, 448
    %v6611 = vld [vmem:[%s6610] sm:$0xf]
    %v6612 = vld [vmem:[%s6610 + $0x4] sm:$0xf]
    %v6613 = vld [vmem:[%s6610 + $0x8] sm:$0xf]
    %v6614 = vld [vmem:[%s6610 + $0xc] sm:$0xf]
    %v6615 = vld [vmem:[%s6610 + $0x10] sm:$0xf]
    %v6616 = vld [vmem:[%s6610 + $0x14] sm:$0xf]
    %v6617 = vld [vmem:[%s6610 + $0x18] sm:$0xf]
    %v6618 = vld [vmem:[%s6610 + $0x1c] sm:$0xf]
    %v6619 = vld [vmem:[%s6610 + $0x20] sm:$0xf]
    %v6620 = vld [vmem:[%s6610 + $0x24] sm:$0xf]
    %v6621 = vld [vmem:[%s6610 + $0x28] sm:$0xf]
    %v6622 = vld [vmem:[%s6610 + $0x2c] sm:$0xf]
    %v6623 = vld [vmem:[%s6610 + $0x30] sm:$0xf]
    %v6624 = vld [vmem:[%s6610 + $0x34] sm:$0xf]
    %v6625 = vld [vmem:[%s6610 + $0x38] sm:$0xf]
    %v6626 = vld [vmem:[%s6610 + $0x3c] sm:$0xf]
    %v6627 = vrot.slane %v6405, 2
    %v6628 = vrot.slane %v6406, 1
    %v6629 = vsel %vm5869, %v6628, %v6627
    %v6630 = vpack.c.b16 %v6629, %v6629
    %v6648 = vunpack.c.l.b16 %v6611
    %v6649 = vunpack.c.l.b16 %v6612
    %v6650 = vunpack.c.l.b16 %v6613
    %v6651 = vunpack.c.l.b16 %v6614
    %v6652 = vunpack.c.l.b16 %v6615
    %v6653 = vunpack.c.l.b16 %v6616
    %v6654 = vunpack.c.l.b16 %v6617
    %v6655 = vunpack.c.l.b16 %v6618
    %v6656 = vunpack.c.l.b16 %v6619
    %v6657 = vunpack.c.l.b16 %v6620
    %v6658 = vunpack.c.l.b16 %v6621
    %v6659 = vunpack.c.l.b16 %v6622
    %v6660 = vunpack.c.l.b16 %v6623
    %v6661 = vunpack.c.l.b16 %v6624
    %v6662 = vunpack.c.l.b16 %v6625
    %v6663 = vunpack.c.l.b16 %v6626
    %v6664 = vpack.c.b16 %v6649, %v6648
    %v6665 = vpack.c.b16 %v6651, %v6650
    %v6666 = vpack.c.b16 %v6653, %v6652
    %v6667 = vpack.c.b16 %v6655, %v6654
    %v6668 = vpack.c.b16 %v6657, %v6656
    %v6669 = vpack.c.b16 %v6659, %v6658
    %v6670 = vpack.c.b16 %v6661, %v6660
    %v6671 = vpack.c.b16 %v6663, %v6662
    %6680 = vmatprep.subr.bf16.mxu0 0
    %6681 = vmatpush1.bf16.msra.mxu0 %v6664
    %6682 = vmatprep.subr.bf16.mxu0 0
    %6683 = vmatpush1.bf16.msra.mxu0 %v6665
    %6684 = vmatprep.subr.bf16.mxu0 0
    %6685 = vmatpush1.bf16.msra.mxu0 %v6666
    %6686 = vmatprep.subr.bf16.mxu0 0
    %6687 = vmatpush1.bf16.msra.mxu0 %v6667
    %6688 = vmatprep.subr.bf16.mxu0 0
    %6689 = vmatpush1.bf16.msra.mxu0 %v6668
    %6690 = vmatprep.subr.bf16.mxu0 0
    %6691 = vmatpush1.bf16.msra.mxu0 %v6669
    %6692 = vmatprep.subr.bf16.mxu0 0
    %6693 = vmatpush1.bf16.msra.mxu0 %v6670
    %6694 = vmatprep.subr.bf16.mxu0 0
    %6695 = vmatpush1.bf16.msra.mxu0 %v6671
    %6696 = vmatprep.subr.bf16.mxu0 0
    %6697 = vmatpush1.bf16.msra.mxu0 0
    %6698 = vmatprep.subr.bf16.mxu0 0
    %6699 = vmatpush1.bf16.msra.mxu0 0
    %6700 = vmatprep.subr.bf16.mxu0 0
    %6701 = vmatpush1.bf16.msra.mxu0 0
    %6702 = vmatprep.subr.bf16.mxu0 0
    %6703 = vmatpush1.bf16.msra.mxu0 0
    %6704 = vmatprep.subr.bf16.mxu0 0
    %6705 = vmatpush1.bf16.msra.mxu0 0
    %6706 = vmatprep.subr.bf16.mxu0 0
    %6707 = vmatpush1.bf16.msra.mxu0 0
    %6708 = vmatprep.subr.bf16.mxu0 0
    %6709 = vmatpush1.bf16.msra.mxu0 0
    %6710 = vmatprep.subr.bf16.mxu0 0
    %6711 = vmatpush1.bf16.msra.mxu0 0
    %6712 = vmatprep.mubr.bf16.mxu0 0
    %6713 = vmatmul.mubr.bf16.gmra.mrb[0].mxu0 %v6630
    %v6714 = vpop.f32.mrb[0].mxu0
    %v6715 = vadd.f32 0.0, %v6714
    %v6716 = vpop.f32.mrb[0].mxu0
    %v6717 = vpop.f32.mrb[0].mxu0
    %v6718 = vpop.f32.mrb[0].mxu0
    %6719 = vdwg.mxu0
    %v6720 = vadd.f32 %v6609, %v6715
    %s6721 = scalar_lea.vmem %s5, 512
    %v6722 = vld [vmem:[%s6721] sm:$0xf]
    %v6723 = vld [vmem:[%s6721 + $0x4] sm:$0xf]
    %v6724 = vld [vmem:[%s6721 + $0x8] sm:$0xf]
    %v6725 = vld [vmem:[%s6721 + $0xc] sm:$0xf]
    %v6726 = vld [vmem:[%s6721 + $0x10] sm:$0xf]
    %v6727 = vld [vmem:[%s6721 + $0x14] sm:$0xf]
    %v6728 = vld [vmem:[%s6721 + $0x18] sm:$0xf]
    %v6729 = vld [vmem:[%s6721 + $0x1c] sm:$0xf]
    %v6730 = vld [vmem:[%s6721 + $0x20] sm:$0xf]
    %v6731 = vld [vmem:[%s6721 + $0x24] sm:$0xf]
    %v6732 = vld [vmem:[%s6721 + $0x28] sm:$0xf]
    %v6733 = vld [vmem:[%s6721 + $0x2c] sm:$0xf]
    %v6734 = vld [vmem:[%s6721 + $0x30] sm:$0xf]
    %v6735 = vld [vmem:[%s6721 + $0x34] sm:$0xf]
    %v6736 = vld [vmem:[%s6721 + $0x38] sm:$0xf]
    %v6737 = vld [vmem:[%s6721 + $0x3c] sm:$0xf]
    %v6738 = vrot.slane %v6405, 3
    %v6739 = vrot.slane %v6406, 2
    %v6740 = vsel %vm5869, %v6739, %v6738
    %v6741 = vpack.c.b16 %v6740, %v6740
    %v6759 = vunpack.c.l.b16 %v6722
    %v6760 = vunpack.c.l.b16 %v6723
    %v6761 = vunpack.c.l.b16 %v6724
    %v6762 = vunpack.c.l.b16 %v6725
    %v6763 = vunpack.c.l.b16 %v6726
    %v6764 = vunpack.c.l.b16 %v6727
    %v6765 = vunpack.c.l.b16 %v6728
    %v6766 = vunpack.c.l.b16 %v6729
    %v6767 = vunpack.c.l.b16 %v6730
    %v6768 = vunpack.c.l.b16 %v6731
    %v6769 = vunpack.c.l.b16 %v6732
    %v6770 = vunpack.c.l.b16 %v6733
    %v6771 = vunpack.c.l.b16 %v6734
    %v6772 = vunpack.c.l.b16 %v6735
    %v6773 = vunpack.c.l.b16 %v6736
    %v6774 = vunpack.c.l.b16 %v6737
    %v6775 = vpack.c.b16 %v6760, %v6759
    %v6776 = vpack.c.b16 %v6762, %v6761
    %v6777 = vpack.c.b16 %v6764, %v6763
    %v6778 = vpack.c.b16 %v6766, %v6765
    %v6779 = vpack.c.b16 %v6768, %v6767
    %v6780 = vpack.c.b16 %v6770, %v6769
    %v6781 = vpack.c.b16 %v6772, %v6771
    %v6782 = vpack.c.b16 %v6774, %v6773
    %6791 = vmatprep.subr.bf16.mxu0 0
    %6792 = vmatpush1.bf16.msra.mxu0 %v6775
    %6793 = vmatprep.subr.bf16.mxu0 0
    %6794 = vmatpush1.bf16.msra.mxu0 %v6776
    %6795 = vmatprep.subr.bf16.mxu0 0
    %6796 = vmatpush1.bf16.msra.mxu0 %v6777
    %6797 = vmatprep.subr.bf16.mxu0 0
    %6798 = vmatpush1.bf16.msra.mxu0 %v6778
    %6799 = vmatprep.subr.bf16.mxu0 0
    %6800 = vmatpush1.bf16.msra.mxu0 %v6779
    %6801 = vmatprep.subr.bf16.mxu0 0
    %6802 = vmatpush1.bf16.msra.mxu0 %v6780
    %6803 = vmatprep.subr.bf16.mxu0 0
    %6804 = vmatpush1.bf16.msra.mxu0 %v6781
    %6805 = vmatprep.subr.bf16.mxu0 0
    %6806 = vmatpush1.bf16.msra.mxu0 %v6782
    %6807 = vmatprep.subr.bf16.mxu0 0
    %6808 = vmatpush1.bf16.msra.mxu0 0
    %6809 = vmatprep.subr.bf16.mxu0 0
    %6810 = vmatpush1.bf16.msra.mxu0 0
    %6811 = vmatprep.subr.bf16.mxu0 0
    %6812 = vmatpush1.bf16.msra.mxu0 0
    %6813 = vmatprep.subr.bf16.mxu0 0
    %6814 = vmatpush1.bf16.msra.mxu0 0
    %6815 = vmatprep.subr.bf16.mxu0 0
    %6816 = vmatpush1.bf16.msra.mxu0 0
    %6817 = vmatprep.subr.bf16.mxu0 0
    %6818 = vmatpush1.bf16.msra.mxu0 0
    %6819 = vmatprep.subr.bf16.mxu0 0
    %6820 = vmatpush1.bf16.msra.mxu0 0
    %6821 = vmatprep.subr.bf16.mxu0 0
    %6822 = vmatpush1.bf16.msra.mxu0 0
    %6823 = vmatprep.mubr.bf16.mxu0 0
    %6824 = vmatmul.mubr.bf16.gmra.mrb[0].mxu0 %v6741
    %v6825 = vpop.f32.mrb[0].mxu0
    %v6826 = vadd.f32 0.0, %v6825
    %v6827 = vpop.f32.mrb[0].mxu0
    %v6828 = vpop.f32.mrb[0].mxu0
    %v6829 = vpop.f32.mrb[0].mxu0
    %6830 = vdwg.mxu0
    %v6831 = vadd.f32 %v6720, %v6826
    %s6832 = scalar_lea.vmem %s5, 576
    %v6833 = vld [vmem:[%s6832] sm:$0xf]
    %v6834 = vld [vmem:[%s6832 + $0x4] sm:$0xf]
    %v6835 = vld [vmem:[%s6832 + $0x8] sm:$0xf]
    %v6836 = vld [vmem:[%s6832 + $0xc] sm:$0xf]
    %v6837 = vld [vmem:[%s6832 + $0x10] sm:$0xf]
    %v6838 = vld [vmem:[%s6832 + $0x14] sm:$0xf]
    %v6839 = vld [vmem:[%s6832 + $0x18] sm:$0xf]
    %v6840 = vld [vmem:[%s6832 + $0x1c] sm:$0xf]
    %v6841 = vld [vmem:[%s6832 + $0x20] sm:$0xf]
    %v6842 = vld [vmem:[%s6832 + $0x24] sm:$0xf]
    %v6843 = vld [vmem:[%s6832 + $0x28] sm:$0xf]
    %v6844 = vld [vmem:[%s6832 + $0x2c] sm:$0xf]
    %v6845 = vld [vmem:[%s6832 + $0x30] sm:$0xf]
    %v6846 = vld [vmem:[%s6832 + $0x34] sm:$0xf]
    %v6847 = vld [vmem:[%s6832 + $0x38] sm:$0xf]
    %v6848 = vld [vmem:[%s6832 + $0x3c] sm:$0xf]
    %v6849 = vrot.slane %v6405, 4
    %v6850 = vrot.slane %v6406, 3
    %v6851 = vsel %vm5869, %v6850, %v6849
    %v6852 = vpack.c.b16 %v6851, %v6851
    %v6870 = vunpack.c.l.b16 %v6833
    %v6871 = vunpack.c.l.b16 %v6834
    %v6872 = vunpack.c.l.b16 %v6835
    %v6873 = vunpack.c.l.b16 %v6836
    %v6874 = vunpack.c.l.b16 %v6837
    %v6875 = vunpack.c.l.b16 %v6838
    %v6876 = vunpack.c.l.b16 %v6839
    %v6877 = vunpack.c.l.b16 %v6840
    %v6878 = vunpack.c.l.b16 %v6841
    %v6879 = vunpack.c.l.b16 %v6842
    %v6880 = vunpack.c.l.b16 %v6843
    %v6881 = vunpack.c.l.b16 %v6844
    %v6882 = vunpack.c.l.b16 %v6845
    %v6883 = vunpack.c.l.b16 %v6846
    %v6884 = vunpack.c.l.b16 %v6847
    %v6885 = vunpack.c.l.b16 %v6848
    %v6886 = vpack.c.b16 %v6871, %v6870
    %v6887 = vpack.c.b16 %v6873, %v6872
    %v6888 = vpack.c.b16 %v6875, %v6874
    %v6889 = vpack.c.b16 %v6877, %v6876
    %v6890 = vpack.c.b16 %v6879, %v6878
    %v6891 = vpack.c.b16 %v6881, %v6880
    %v6892 = vpack.c.b16 %v6883, %v6882
    %v6893 = vpack.c.b16 %v6885, %v6884
    %6902 = vmatprep.subr.bf16.mxu0 0
    %6903 = vmatpush1.bf16.msra.mxu0 %v6886
    %6904 = vmatprep.subr.bf16.mxu0 0
    %6905 = vmatpush1.bf16.msra.mxu0 %v6887
    %6906 = vmatprep.subr.bf16.mxu0 0
    %6907 = vmatpush1.bf16.msra.mxu0 %v6888
    %6908 = vmatprep.subr.bf16.mxu0 0
    %6909 = vmatpush1.bf16.msra.mxu0 %v6889
    %6910 = vmatprep.subr.bf16.mxu0 0
    %6911 = vmatpush1.bf16.msra.mxu0 %v6890
    %6912 = vmatprep.subr.bf16.mxu0 0
    %6913 = vmatpush1.bf16.msra.mxu0 %v6891
    %6914 = vmatprep.subr.bf16.mxu0 0
    %6915 = vmatpush1.bf16.msra.mxu0 %v6892
    %6916 = vmatprep.subr.bf16.mxu0 0
    %6917 = vmatpush1.bf16.msra.mxu0 %v6893
    %6918 = vmatprep.subr.bf16.mxu0 0
    %6919 = vmatpush1.bf16.msra.mxu0 0
    %6920 = vmatprep.subr.bf16.mxu0 0
    %6921 = vmatpush1.bf16.msra.mxu0 0
    %6922 = vmatprep.subr.bf16.mxu0 0
    %6923 = vmatpush1.bf16.msra.mxu0 0
    %6924 = vmatprep.subr.bf16.mxu0 0
    %6925 = vmatpush1.bf16.msra.mxu0 0
    %6926 = vmatprep.subr.bf16.mxu0 0
    %6927 = vmatpush1.bf16.msra.mxu0 0
    %6928 = vmatprep.subr.bf16.mxu0 0
    %6929 = vmatpush1.bf16.msra.mxu0 0
    %6930 = vmatprep.subr.bf16.mxu0 0
    %6931 = vmatpush1.bf16.msra.mxu0 0
    %6932 = vmatprep.subr.bf16.mxu0 0
    %6933 = vmatpush1.bf16.msra.mxu0 0
    %6934 = vmatprep.mubr.bf16.mxu0 0
    %6935 = vmatmul.mubr.bf16.gmra.mrb[0].mxu0 %v6852
    %v6936 = vpop.f32.mrb[0].mxu0
    %v6937 = vadd.f32 0.0, %v6936
    %v6938 = vpop.f32.mrb[0].mxu0
    %v6939 = vpop.f32.mrb[0].mxu0
    %v6940 = vpop.f32.mrb[0].mxu0
    %6941 = vdwg.mxu0
    %v6942 = vadd.f32 %v6831, %v6937
    %s6943 = scalar_lea.vmem %s5, 640
    %v6944 = vld [vmem:[%s6943] sm:$0xf]
    %v6945 = vld [vmem:[%s6943 + $0x4] sm:$0xf]
    %v6946 = vld [vmem:[%s6943 + $0x8] sm:$0xf]
    %v6947 = vld [vmem:[%s6943 + $0xc] sm:$0xf]
    %v6948 = vld [vmem:[%s6943 + $0x10] sm:$0xf]
    %v6949 = vld [vmem:[%s6943 + $0x14] sm:$0xf]
    %v6950 = vld [vmem:[%s6943 + $0x18] sm:$0xf]
    %v6951 = vld [vmem:[%s6943 + $0x1c] sm:$0xf]
    %v6952 = vld [vmem:[%s6943 + $0x20] sm:$0xf]
    %v6953 = vld [vmem:[%s6943 + $0x24] sm:$0xf]
    %v6954 = vld [vmem:[%s6943 + $0x28] sm:$0xf]
    %v6955 = vld [vmem:[%s6943 + $0x2c] sm:$0xf]
    %v6956 = vld [vmem:[%s6943 + $0x30] sm:$0xf]
    %v6957 = vld [vmem:[%s6943 + $0x34] sm:$0xf]
    %v6958 = vld [vmem:[%s6943 + $0x38] sm:$0xf]
    %v6959 = vld [vmem:[%s6943 + $0x3c] sm:$0xf]
    %v6962 = vunpack.c.l.b16 %v5823
    %v6963 = vunpack.c.l.b16 %v5828
    %v6964 = vrot.slane %v6963, 7
    %v6965 = vsel %vm5869, %v6964, %v6962
    %v6966 = vpack.c.b16 %v6965, %v6965
    %v6984 = vunpack.c.l.b16 %v6944
    %v6985 = vunpack.c.l.b16 %v6945
    %v6986 = vunpack.c.l.b16 %v6946
    %v6987 = vunpack.c.l.b16 %v6947
    %v6988 = vunpack.c.l.b16 %v6948
    %v6989 = vunpack.c.l.b16 %v6949
    %v6990 = vunpack.c.l.b16 %v6950
    %v6991 = vunpack.c.l.b16 %v6951
    %v6992 = vunpack.c.l.b16 %v6952
    %v6993 = vunpack.c.l.b16 %v6953
    %v6994 = vunpack.c.l.b16 %v6954
    %v6995 = vunpack.c.l.b16 %v6955
    %v6996 = vunpack.c.l.b16 %v6956
    %v6997 = vunpack.c.l.b16 %v6957
    %v6998 = vunpack.c.l.b16 %v6958
    %v6999 = vunpack.c.l.b16 %v6959
    %v7000 = vpack.c.b16 %v6985, %v6984
    %v7001 = vpack.c.b16 %v6987, %v6986
    %v7002 = vpack.c.b16 %v6989, %v6988
    %v7003 = vpack.c.b16 %v6991, %v6990
    %v7004 = vpack.c.b16 %v6993, %v6992
    %v7005 = vpack.c.b16 %v6995, %v6994
    %v7006 = vpack.c.b16 %v6997, %v6996
    %v7007 = vpack.c.b16 %v6999, %v6998
    %7016 = vmatprep.subr.bf16.mxu0 0
    %7017 = vmatpush1.bf16.msra.mxu0 %v7000
    %7018 = vmatprep.subr.bf16.mxu0 0
    %7019 = vmatpush1.bf16.msra.mxu0 %v7001
    %7020 = vmatprep.subr.bf16.mxu0 0
    %7021 = vmatpush1.bf16.msra.mxu0 %v7002
    %7022 = vmatprep.subr.bf16.mxu0 0
    %7023 = vmatpush1.bf16.msra.mxu0 %v7003
    %7024 = vmatprep.subr.bf16.mxu0 0
    %7025 = vmatpush1.bf16.msra.mxu0 %v7004
    %7026 = vmatprep.subr.bf16.mxu0 0
    %7027 = vmatpush1.bf16.msra.mxu0 %v7005
    %7028 = vmatprep.subr.bf16.mxu0 0
    %7029 = vmatpush1.bf16.msra.mxu0 %v7006
    %7030 = vmatprep.subr.bf16.mxu0 0
    %7031 = vmatpush1.bf16.msra.mxu0 %v7007
    %7032 = vmatprep.subr.bf16.mxu0 0
    %7033 = vmatpush1.bf16.msra.mxu0 0
    %7034 = vmatprep.subr.bf16.mxu0 0
    %7035 = vmatpush1.bf16.msra.mxu0 0
    %7036 = vmatprep.subr.bf16.mxu0 0
    %7037 = vmatpush1.bf16.msra.mxu0 0
    %7038 = vmatprep.subr.bf16.mxu0 0
    %7039 = vmatpush1.bf16.msra.mxu0 0
    %7040 = vmatprep.subr.bf16.mxu0 0
    %7041 = vmatpush1.bf16.msra.mxu0 0
    %7042 = vmatprep.subr.bf16.mxu0 0
    %7043 = vmatpush1.bf16.msra.mxu0 0
    %7044 = vmatprep.subr.bf16.mxu0 0
    %7045 = vmatpush1.bf16.msra.mxu0 0
    %7046 = vmatprep.subr.bf16.mxu0 0
    %7047 = vmatpush1.bf16.msra.mxu0 0
    %7048 = vmatprep.mubr.bf16.mxu0 0
    %7049 = vmatmul.mubr.bf16.gmra.mrb[0].mxu0 %v6966
    %v7050 = vpop.f32.mrb[0].mxu0
    %v7051 = vadd.f32 0.0, %v7050
    %v7052 = vpop.f32.mrb[0].mxu0
    %v7053 = vpop.f32.mrb[0].mxu0
    %v7054 = vpop.f32.mrb[0].mxu0
    %7055 = vdwg.mxu0
    %v7056 = vadd.f32 %v6942, %v7051
    %s7057 = scalar_lea.vmem %s5, 704
    %v7058 = vld [vmem:[%s7057] sm:$0xf]
    %v7059 = vld [vmem:[%s7057 + $0x4] sm:$0xf]
    %v7060 = vld [vmem:[%s7057 + $0x8] sm:$0xf]
    %v7061 = vld [vmem:[%s7057 + $0xc] sm:$0xf]
    %v7062 = vld [vmem:[%s7057 + $0x10] sm:$0xf]
    %v7063 = vld [vmem:[%s7057 + $0x14] sm:$0xf]
    %v7064 = vld [vmem:[%s7057 + $0x18] sm:$0xf]
    %v7065 = vld [vmem:[%s7057 + $0x1c] sm:$0xf]
    %v7066 = vld [vmem:[%s7057 + $0x20] sm:$0xf]
    %v7067 = vld [vmem:[%s7057 + $0x24] sm:$0xf]
    %v7068 = vld [vmem:[%s7057 + $0x28] sm:$0xf]
    %v7069 = vld [vmem:[%s7057 + $0x2c] sm:$0xf]
    %v7070 = vld [vmem:[%s7057 + $0x30] sm:$0xf]
    %v7071 = vld [vmem:[%s7057 + $0x34] sm:$0xf]
    %v7072 = vld [vmem:[%s7057 + $0x38] sm:$0xf]
    %v7073 = vld [vmem:[%s7057 + $0x3c] sm:$0xf]
    %v7074 = vrot.slane %v6962, 1
    %v7075 = vsel %vm5869, %v6963, %v7074
    %v7076 = vpack.c.b16 %v7075, %v7075
    %v7094 = vunpack.c.l.b16 %v7058
    %v7095 = vunpack.c.l.b16 %v7059
    %v7096 = vunpack.c.l.b16 %v7060
    %v7097 = vunpack.c.l.b16 %v7061
    %v7098 = vunpack.c.l.b16 %v7062
    %v7099 = vunpack.c.l.b16 %v7063
    %v7100 = vunpack.c.l.b16 %v7064
    %v7101 = vunpack.c.l.b16 %v7065
    %v7102 = vunpack.c.l.b16 %v7066
    %v7103 = vunpack.c.l.b16 %v7067
    %v7104 = vunpack.c.l.b16 %v7068
    %v7105 = vunpack.c.l.b16 %v7069
    %v7106 = vunpack.c.l.b16 %v7070
    %v7107 = vunpack.c.l.b16 %v7071
    %v7108 = vunpack.c.l.b16 %v7072
    %v7109 = vunpack.c.l.b16 %v7073
    %v7110 = vpack.c.b16 %v7095, %v7094
    %v7111 = vpack.c.b16 %v7097, %v7096
    %v7112 = vpack.c.b16 %v7099, %v7098
    %v7113 = vpack.c.b16 %v7101, %v7100
    %v7114 = vpack.c.b16 %v7103, %v7102
    %v7115 = vpack.c.b16 %v7105, %v7104
    %v7116 = vpack.c.b16 %v7107, %v7106
    %v7117 = vpack.c.b16 %v7109, %v7108
    %7126 = vmatprep.subr.bf16.mxu0 0
    %7127 = vmatpush1.bf16.msra.mxu0 %v7110
    %7128 = vmatprep.subr.bf16.mxu0 0
    %7129 = vmatpush1.bf16.msra.mxu0 %v7111
    %7130 = vmatprep.subr.bf16.mxu0 0
    %7131 = vmatpush1.bf16.msra.mxu0 %v7112
    %7132 = vmatprep.subr.bf16.mxu0 0
    %7133 = vmatpush1.bf16.msra.mxu0 %v7113
    %7134 = vmatprep.subr.bf16.mxu0 0
    %7135 = vmatpush1.bf16.msra.mxu0 %v7114
    %7136 = vmatprep.subr.bf16.mxu0 0
    %7137 = vmatpush1.bf16.msra.mxu0 %v7115
    %7138 = vmatprep.subr.bf16.mxu0 0
    %7139 = vmatpush1.bf16.msra.mxu0 %v7116
    %7140 = vmatprep.subr.bf16.mxu0 0
    %7141 = vmatpush1.bf16.msra.mxu0 %v7117
    %7142 = vmatprep.subr.bf16.mxu0 0
    %7143 = vmatpush1.bf16.msra.mxu0 0
    %7144 = vmatprep.subr.bf16.mxu0 0
    %7145 = vmatpush1.bf16.msra.mxu0 0
    %7146 = vmatprep.subr.bf16.mxu0 0
    %7147 = vmatpush1.bf16.msra.mxu0 0
    %7148 = vmatprep.subr.bf16.mxu0 0
    %7149 = vmatpush1.bf16.msra.mxu0 0
    %7150 = vmatprep.subr.bf16.mxu0 0
    %7151 = vmatpush1.bf16.msra.mxu0 0
    %7152 = vmatprep.subr.bf16.mxu0 0
    %7153 = vmatpush1.bf16.msra.mxu0 0
    %7154 = vmatprep.subr.bf16.mxu0 0
    %7155 = vmatpush1.bf16.msra.mxu0 0
    %7156 = vmatprep.subr.bf16.mxu0 0
    %7157 = vmatpush1.bf16.msra.mxu0 0
    %7158 = vmatprep.mubr.bf16.mxu0 0
    %7159 = vmatmul.mubr.bf16.gmra.mrb[0].mxu0 %v7076
    %v7160 = vpop.f32.mrb[0].mxu0
    %v7161 = vadd.f32 0.0, %v7160
    %v7162 = vpop.f32.mrb[0].mxu0
    %v7163 = vpop.f32.mrb[0].mxu0
    %v7164 = vpop.f32.mrb[0].mxu0
    %7165 = vdwg.mxu0
    %v7166 = vadd.f32 %v7056, %v7161
    %s7167 = scalar_lea.vmem %s5, 768
    %v7168 = vld [vmem:[%s7167] sm:$0xf]
    %v7169 = vld [vmem:[%s7167 + $0x4] sm:$0xf]
    %v7170 = vld [vmem:[%s7167 + $0x8] sm:$0xf]
    %v7171 = vld [vmem:[%s7167 + $0xc] sm:$0xf]
    %v7172 = vld [vmem:[%s7167 + $0x10] sm:$0xf]
    %v7173 = vld [vmem:[%s7167 + $0x14] sm:$0xf]
    %v7174 = vld [vmem:[%s7167 + $0x18] sm:$0xf]
    %v7175 = vld [vmem:[%s7167 + $0x1c] sm:$0xf]
    %v7176 = vld [vmem:[%s7167 + $0x20] sm:$0xf]
    %v7177 = vld [vmem:[%s7167 + $0x24] sm:$0xf]
    %v7178 = vld [vmem:[%s7167 + $0x28] sm:$0xf]
    %v7179 = vld [vmem:[%s7167 + $0x2c] sm:$0xf]
    %v7180 = vld [vmem:[%s7167 + $0x30] sm:$0xf]
    %v7181 = vld [vmem:[%s7167 + $0x34] sm:$0xf]
    %v7182 = vld [vmem:[%s7167 + $0x38] sm:$0xf]
    %v7183 = vld [vmem:[%s7167 + $0x3c] sm:$0xf]
    %v7184 = vrot.slane %v6962, 2
    %v7185 = vrot.slane %v6963, 1
    %v7186 = vsel %vm5869, %v7185, %v7184
    %v7187 = vpack.c.b16 %v7186, %v7186
    %v7205 = vunpack.c.l.b16 %v7168
    %v7206 = vunpack.c.l.b16 %v7169
    %v7207 = vunpack.c.l.b16 %v7170
    %v7208 = vunpack.c.l.b16 %v7171
    %v7209 = vunpack.c.l.b16 %v7172
    %v7210 = vunpack.c.l.b16 %v7173
    %v7211 = vunpack.c.l.b16 %v7174
    %v7212 = vunpack.c.l.b16 %v7175
    %v7213 = vunpack.c.l.b16 %v7176
    %v7214 = vunpack.c.l.b16 %v7177
    %v7215 = vunpack.c.l.b16 %v7178
    %v7216 = vunpack.c.l.b16 %v7179
    %v7217 = vunpack.c.l.b16 %v7180
    %v7218 = vunpack.c.l.b16 %v7181
    %v7219 = vunpack.c.l.b16 %v7182
    %v7220 = vunpack.c.l.b16 %v7183
    %v7221 = vpack.c.b16 %v7206, %v7205
    %v7222 = vpack.c.b16 %v7208, %v7207
    %v7223 = vpack.c.b16 %v7210, %v7209
    %v7224 = vpack.c.b16 %v7212, %v7211
    %v7225 = vpack.c.b16 %v7214, %v7213
    %v7226 = vpack.c.b16 %v7216, %v7215
    %v7227 = vpack.c.b16 %v7218, %v7217
    %v7228 = vpack.c.b16 %v7220, %v7219
    %7237 = vmatprep.subr.bf16.mxu0 0
    %7238 = vmatpush1.bf16.msra.mxu0 %v7221
    %7239 = vmatprep.subr.bf16.mxu0 0
    %7240 = vmatpush1.bf16.msra.mxu0 %v7222
    %7241 = vmatprep.subr.bf16.mxu0 0
    %7242 = vmatpush1.bf16.msra.mxu0 %v7223
    %7243 = vmatprep.subr.bf16.mxu0 0
    %7244 = vmatpush1.bf16.msra.mxu0 %v7224
    %7245 = vmatprep.subr.bf16.mxu0 0
    %7246 = vmatpush1.bf16.msra.mxu0 %v7225
    %7247 = vmatprep.subr.bf16.mxu0 0
    %7248 = vmatpush1.bf16.msra.mxu0 %v7226
    %7249 = vmatprep.subr.bf16.mxu0 0
    %7250 = vmatpush1.bf16.msra.mxu0 %v7227
    %7251 = vmatprep.subr.bf16.mxu0 0
    %7252 = vmatpush1.bf16.msra.mxu0 %v7228
    %7253 = vmatprep.subr.bf16.mxu0 0
    %7254 = vmatpush1.bf16.msra.mxu0 0
    %7255 = vmatprep.subr.bf16.mxu0 0
    %7256 = vmatpush1.bf16.msra.mxu0 0
    %7257 = vmatprep.subr.bf16.mxu0 0
    %7258 = vmatpush1.bf16.msra.mxu0 0
    %7259 = vmatprep.subr.bf16.mxu0 0
    %7260 = vmatpush1.bf16.msra.mxu0 0
    %7261 = vmatprep.subr.bf16.mxu0 0
    %7262 = vmatpush1.bf16.msra.mxu0 0
    %7263 = vmatprep.subr.bf16.mxu0 0
    %7264 = vmatpush1.bf16.msra.mxu0 0
    %7265 = vmatprep.subr.bf16.mxu0 0
    %7266 = vmatpush1.bf16.msra.mxu0 0
    %7267 = vmatprep.subr.bf16.mxu0 0
    %7268 = vmatpush1.bf16.msra.mxu0 0
    %7269 = vmatprep.mubr.bf16.mxu0 0
    %7270 = vmatmul.mubr.bf16.gmra.mrb[0].mxu0 %v7187
    %v7271 = vpop.f32.mrb[0].mxu0
    %v7272 = vadd.f32 0.0, %v7271
    %v7273 = vpop.f32.mrb[0].mxu0
    %v7274 = vpop.f32.mrb[0].mxu0
    %v7275 = vpop.f32.mrb[0].mxu0
    %7276 = vdwg.mxu0
    %v7277 = vadd.f32 %v7166, %v7272
    %s7278 = scalar_lea.vmem %s5, 832
    %v7279 = vld [vmem:[%s7278] sm:$0xf]
    %v7280 = vld [vmem:[%s7278 + $0x4] sm:$0xf]
    %v7281 = vld [vmem:[%s7278 + $0x8] sm:$0xf]
    %v7282 = vld [vmem:[%s7278 + $0xc] sm:$0xf]
    %v7283 = vld [vmem:[%s7278 + $0x10] sm:$0xf]
    %v7284 = vld [vmem:[%s7278 + $0x14] sm:$0xf]
    %v7285 = vld [vmem:[%s7278 + $0x18] sm:$0xf]
    %v7286 = vld [vmem:[%s7278 + $0x1c] sm:$0xf]
    %v7287 = vld [vmem:[%s7278 + $0x20] sm:$0xf]
    %v7288 = vld [vmem:[%s7278 + $0x24] sm:$0xf]
    %v7289 = vld [vmem:[%s7278 + $0x28] sm:$0xf]
    %v7290 = vld [vmem:[%s7278 + $0x2c] sm:$0xf]
    %v7291 = vld [vmem:[%s7278 + $0x30] sm:$0xf]
    %v7292 = vld [vmem:[%s7278 + $0x34] sm:$0xf]
    %v7293 = vld [vmem:[%s7278 + $0x38] sm:$0xf]
    %v7294 = vld [vmem:[%s7278 + $0x3c] sm:$0xf]
    %v7295 = vrot.slane %v6962, 3
    %v7296 = vrot.slane %v6963, 2
    %v7297 = vsel %vm5869, %v7296, %v7295
    %v7298 = vpack.c.b16 %v7297, %v7297
    %v7316 = vunpack.c.l.b16 %v7279
    %v7317 = vunpack.c.l.b16 %v7280
    %v7318 = vunpack.c.l.b16 %v7281
    %v7319 = vunpack.c.l.b16 %v7282
    %v7320 = vunpack.c.l.b16 %v7283
    %v7321 = vunpack.c.l.b16 %v7284
    %v7322 = vunpack.c.l.b16 %v7285
    %v7323 = vunpack.c.l.b16 %v7286
    %v7324 = vunpack.c.l.b16 %v7287
    %v7325 = vunpack.c.l.b16 %v7288
    %v7326 = vunpack.c.l.b16 %v7289
    %v7327 = vunpack.c.l.b16 %v7290
    %v7328 = vunpack.c.l.b16 %v7291
    %v7329 = vunpack.c.l.b16 %v7292
    %v7330 = vunpack.c.l.b16 %v7293
    %v7331 = vunpack.c.l.b16 %v7294
    %v7332 = vpack.c.b16 %v7317, %v7316
    %v7333 = vpack.c.b16 %v7319, %v7318
    %v7334 = vpack.c.b16 %v7321, %v7320
    %v7335 = vpack.c.b16 %v7323, %v7322
    %v7336 = vpack.c.b16 %v7325, %v7324
    %v7337 = vpack.c.b16 %v7327, %v7326
    %v7338 = vpack.c.b16 %v7329, %v7328
    %v7339 = vpack.c.b16 %v7331, %v7330
    %7348 = vmatprep.subr.bf16.mxu0 0
    %7349 = vmatpush1.bf16.msra.mxu0 %v7332
    %7350 = vmatprep.subr.bf16.mxu0 0
    %7351 = vmatpush1.bf16.msra.mxu0 %v7333
    %7352 = vmatprep.subr.bf16.mxu0 0
    %7353 = vmatpush1.bf16.msra.mxu0 %v7334
    %7354 = vmatprep.subr.bf16.mxu0 0
    %7355 = vmatpush1.bf16.msra.mxu0 %v7335
    %7356 = vmatprep.subr.bf16.mxu0 0
    %7357 = vmatpush1.bf16.msra.mxu0 %v7336
    %7358 = vmatprep.subr.bf16.mxu0 0
    %7359 = vmatpush1.bf16.msra.mxu0 %v7337
    %7360 = vmatprep.subr.bf16.mxu0 0
    %7361 = vmatpush1.bf16.msra.mxu0 %v7338
    %7362 = vmatprep.subr.bf16.mxu0 0
    %7363 = vmatpush1.bf16.msra.mxu0 %v7339
    %7364 = vmatprep.subr.bf16.mxu0 0
    %7365 = vmatpush1.bf16.msra.mxu0 0
    %7366 = vmatprep.subr.bf16.mxu0 0
    %7367 = vmatpush1.bf16.msra.mxu0 0
    %7368 = vmatprep.subr.bf16.mxu0 0
    %7369 = vmatpush1.bf16.msra.mxu0 0
    %7370 = vmatprep.subr.bf16.mxu0 0
    %7371 = vmatpush1.bf16.msra.mxu0 0
    %7372 = vmatprep.subr.bf16.mxu0 0
    %7373 = vmatpush1.bf16.msra.mxu0 0
    %7374 = vmatprep.subr.bf16.mxu0 0
    %7375 = vmatpush1.bf16.msra.mxu0 0
    %7376 = vmatprep.subr.bf16.mxu0 0
    %7377 = vmatpush1.bf16.msra.mxu0 0
    %7378 = vmatprep.subr.bf16.mxu0 0
    %7379 = vmatpush1.bf16.msra.mxu0 0
    %7380 = vmatprep.mubr.bf16.mxu0 0
    %7381 = vmatmul.mubr.bf16.gmra.mrb[0].mxu0 %v7298
    %v7382 = vpop.f32.mrb[0].mxu0
    %v7383 = vadd.f32 0.0, %v7382
    %v7384 = vpop.f32.mrb[0].mxu0
    %v7385 = vpop.f32.mrb[0].mxu0
    %v7386 = vpop.f32.mrb[0].mxu0
    %7387 = vdwg.mxu0
    %v7388 = vadd.f32 %v7277, %v7383
    %s7389 = scalar_lea.vmem %s5, 896
    %v7390 = vld [vmem:[%s7389] sm:$0xf]
    %v7391 = vld [vmem:[%s7389 + $0x4] sm:$0xf]
    %v7392 = vld [vmem:[%s7389 + $0x8] sm:$0xf]
    %v7393 = vld [vmem:[%s7389 + $0xc] sm:$0xf]
    %v7394 = vld [vmem:[%s7389 + $0x10] sm:$0xf]
    %v7395 = vld [vmem:[%s7389 + $0x14] sm:$0xf]
    %v7396 = vld [vmem:[%s7389 + $0x18] sm:$0xf]
    %v7397 = vld [vmem:[%s7389 + $0x1c] sm:$0xf]
    %v7398 = vld [vmem:[%s7389 + $0x20] sm:$0xf]
    %v7399 = vld [vmem:[%s7389 + $0x24] sm:$0xf]
    %v7400 = vld [vmem:[%s7389 + $0x28] sm:$0xf]
    %v7401 = vld [vmem:[%s7389 + $0x2c] sm:$0xf]
    %v7402 = vld [vmem:[%s7389 + $0x30] sm:$0xf]
    %v7403 = vld [vmem:[%s7389 + $0x34] sm:$0xf]
    %v7404 = vld [vmem:[%s7389 + $0x38] sm:$0xf]
    %v7405 = vld [vmem:[%s7389 + $0x3c] sm:$0xf]
    %v7406 = vrot.slane %v6962, 4
    %v7407 = vrot.slane %v6963, 3
    %v7408 = vsel %vm5869, %v7407, %v7406
    %v7409 = vpack.c.b16 %v7408, %v7408
    %v7427 = vunpack.c.l.b16 %v7390
    %v7428 = vunpack.c.l.b16 %v7391
    %v7429 = vunpack.c.l.b16 %v7392
    %v7430 = vunpack.c.l.b16 %v7393
    %v7431 = vunpack.c.l.b16 %v7394
    %v7432 = vunpack.c.l.b16 %v7395
    %v7433 = vunpack.c.l.b16 %v7396
    %v7434 = vunpack.c.l.b16 %v7397
    %v7435 = vunpack.c.l.b16 %v7398
    %v7436 = vunpack.c.l.b16 %v7399
    %v7437 = vunpack.c.l.b16 %v7400
    %v7438 = vunpack.c.l.b16 %v7401
    %v7439 = vunpack.c.l.b16 %v7402
    %v7440 = vunpack.c.l.b16 %v7403
    %v7441 = vunpack.c.l.b16 %v7404
    %v7442 = vunpack.c.l.b16 %v7405
    %v7443 = vpack.c.b16 %v7428, %v7427
    %v7444 = vpack.c.b16 %v7430, %v7429
    %v7445 = vpack.c.b16 %v7432, %v7431
    %v7446 = vpack.c.b16 %v7434, %v7433
    %v7447 = vpack.c.b16 %v7436, %v7435
    %v7448 = vpack.c.b16 %v7438, %v7437
    %v7449 = vpack.c.b16 %v7440, %v7439
    %v7450 = vpack.c.b16 %v7442, %v7441
    %7459 = vmatprep.subr.bf16.mxu0 0
    %7460 = vmatpush1.bf16.msra.mxu0 %v7443
    %7461 = vmatprep.subr.bf16.mxu0 0
    %7462 = vmatpush1.bf16.msra.mxu0 %v7444
    %7463 = vmatprep.subr.bf16.mxu0 0
    %7464 = vmatpush1.bf16.msra.mxu0 %v7445
    %7465 = vmatprep.subr.bf16.mxu0 0
    %7466 = vmatpush1.bf16.msra.mxu0 %v7446
    %7467 = vmatprep.subr.bf16.mxu0 0
    %7468 = vmatpush1.bf16.msra.mxu0 %v7447
    %7469 = vmatprep.subr.bf16.mxu0 0
    %7470 = vmatpush1.bf16.msra.mxu0 %v7448
    %7471 = vmatprep.subr.bf16.mxu0 0
    %7472 = vmatpush1.bf16.msra.mxu0 %v7449
    %7473 = vmatprep.subr.bf16.mxu0 0
    %7474 = vmatpush1.bf16.msra.mxu0 %v7450
    %7475 = vmatprep.subr.bf16.mxu0 0
    %7476 = vmatpush1.bf16.msra.mxu0 0
    %7477 = vmatprep.subr.bf16.mxu0 0
    %7478 = vmatpush1.bf16.msra.mxu0 0
    %7479 = vmatprep.subr.bf16.mxu0 0
    %7480 = vmatpush1.bf16.msra.mxu0 0
    %7481 = vmatprep.subr.bf16.mxu0 0
    %7482 = vmatpush1.bf16.msra.mxu0 0
    %7483 = vmatprep.subr.bf16.mxu0 0
    %7484 = vmatpush1.bf16.msra.mxu0 0
    %7485 = vmatprep.subr.bf16.mxu0 0
    %7486 = vmatpush1.bf16.msra.mxu0 0
    %7487 = vmatprep.subr.bf16.mxu0 0
    %7488 = vmatpush1.bf16.msra.mxu0 0
    %7489 = vmatprep.subr.bf16.mxu0 0
    %7490 = vmatpush1.bf16.msra.mxu0 0
    %7491 = vmatprep.mubr.bf16.mxu0 0
    %7492 = vmatmul.mubr.bf16.gmra.mrb[0].mxu0 %v7409
    %v7493 = vpop.f32.mrb[0].mxu0
    %v7494 = vadd.f32 0.0, %v7493
    %v7495 = vpop.f32.mrb[0].mxu0
    %v7496 = vpop.f32.mrb[0].mxu0
    %v7497 = vpop.f32.mrb[0].mxu0
    %7498 = vdwg.mxu0
    %v7499 = vadd.f32 %v7388, %v7494
    %s7500 = scalar_lea.vmem %s5, 960
    %v7501 = vld [vmem:[%s7500] sm:$0xf]
    %v7502 = vld [vmem:[%s7500 + $0x4] sm:$0xf]
    %v7503 = vld [vmem:[%s7500 + $0x8] sm:$0xf]
    %v7504 = vld [vmem:[%s7500 + $0xc] sm:$0xf]
    %v7505 = vld [vmem:[%s7500 + $0x10] sm:$0xf]
    %v7506 = vld [vmem:[%s7500 + $0x14] sm:$0xf]
    %v7507 = vld [vmem:[%s7500 + $0x18] sm:$0xf]
    %v7508 = vld [vmem:[%s7500 + $0x1c] sm:$0xf]
    %v7509 = vld [vmem:[%s7500 + $0x20] sm:$0xf]
    %v7510 = vld [vmem:[%s7500 + $0x24] sm:$0xf]
    %v7511 = vld [vmem:[%s7500 + $0x28] sm:$0xf]
    %v7512 = vld [vmem:[%s7500 + $0x2c] sm:$0xf]
    %v7513 = vld [vmem:[%s7500 + $0x30] sm:$0xf]
    %v7514 = vld [vmem:[%s7500 + $0x34] sm:$0xf]
    %v7515 = vld [vmem:[%s7500 + $0x38] sm:$0xf]
    %v7516 = vld [vmem:[%s7500 + $0x3c] sm:$0xf]
    %v7519 = vunpack.c.l.b16 %v5824
    %v7520 = vunpack.c.l.b16 %v5829
    %v7521 = vrot.slane %v7520, 7
    %v7522 = vsel %vm5869, %v7521, %v7519
    %v7523 = vpack.c.b16 %v7522, %v7522
    %v7541 = vunpack.c.l.b16 %v7501
    %v7542 = vunpack.c.l.b16 %v7502
    %v7543 = vunpack.c.l.b16 %v7503
    %v7544 = vunpack.c.l.b16 %v7504
    %v7545 = vunpack.c.l.b16 %v7505
    %v7546 = vunpack.c.l.b16 %v7506
    %v7547 = vunpack.c.l.b16 %v7507
    %v7548 = vunpack.c.l.b16 %v7508
    %v7549 = vunpack.c.l.b16 %v7509
    %v7550 = vunpack.c.l.b16 %v7510
    %v7551 = vunpack.c.l.b16 %v7511
    %v7552 = vunpack.c.l.b16 %v7512
    %v7553 = vunpack.c.l.b16 %v7513
    %v7554 = vunpack.c.l.b16 %v7514
    %v7555 = vunpack.c.l.b16 %v7515
    %v7556 = vunpack.c.l.b16 %v7516
    %v7557 = vpack.c.b16 %v7542, %v7541
    %v7558 = vpack.c.b16 %v7544, %v7543
    %v7559 = vpack.c.b16 %v7546, %v7545
    %v7560 = vpack.c.b16 %v7548, %v7547
    %v7561 = vpack.c.b16 %v7550, %v7549
    %v7562 = vpack.c.b16 %v7552, %v7551
    %v7563 = vpack.c.b16 %v7554, %v7553
    %v7564 = vpack.c.b16 %v7556, %v7555
    %7573 = vmatprep.subr.bf16.mxu0 0
    %7574 = vmatpush1.bf16.msra.mxu0 %v7557
    %7575 = vmatprep.subr.bf16.mxu0 0
    %7576 = vmatpush1.bf16.msra.mxu0 %v7558
    %7577 = vmatprep.subr.bf16.mxu0 0
    %7578 = vmatpush1.bf16.msra.mxu0 %v7559
    %7579 = vmatprep.subr.bf16.mxu0 0
    %7580 = vmatpush1.bf16.msra.mxu0 %v7560
    %7581 = vmatprep.subr.bf16.mxu0 0
    %7582 = vmatpush1.bf16.msra.mxu0 %v7561
    %7583 = vmatprep.subr.bf16.mxu0 0
    %7584 = vmatpush1.bf16.msra.mxu0 %v7562
    %7585 = vmatprep.subr.bf16.mxu0 0
    %7586 = vmatpush1.bf16.msra.mxu0 %v7563
    %7587 = vmatprep.subr.bf16.mxu0 0
    %7588 = vmatpush1.bf16.msra.mxu0 %v7564
    %7589 = vmatprep.subr.bf16.mxu0 0
    %7590 = vmatpush1.bf16.msra.mxu0 0
    %7591 = vmatprep.subr.bf16.mxu0 0
    %7592 = vmatpush1.bf16.msra.mxu0 0
    %7593 = vmatprep.subr.bf16.mxu0 0
    %7594 = vmatpush1.bf16.msra.mxu0 0
    %7595 = vmatprep.subr.bf16.mxu0 0
    %7596 = vmatpush1.bf16.msra.mxu0 0
    %7597 = vmatprep.subr.bf16.mxu0 0
    %7598 = vmatpush1.bf16.msra.mxu0 0
    %7599 = vmatprep.subr.bf16.mxu0 0
    %7600 = vmatpush1.bf16.msra.mxu0 0
    %7601 = vmatprep.subr.bf16.mxu0 0
    %7602 = vmatpush1.bf16.msra.mxu0 0
    %7603 = vmatprep.subr.bf16.mxu0 0
    %7604 = vmatpush1.bf16.msra.mxu0 0
    %7605 = vmatprep.mubr.bf16.mxu0 0
    %7606 = vmatmul.mubr.bf16.gmra.mrb[0].mxu0 %v7523
    %v7607 = vpop.f32.mrb[0].mxu0
    %v7608 = vadd.f32 0.0, %v7607
    %v7609 = vpop.f32.mrb[0].mxu0
    %v7610 = vpop.f32.mrb[0].mxu0
    %v7611 = vpop.f32.mrb[0].mxu0
    %7612 = vdwg.mxu0
    %v7613 = vadd.f32 %v7499, %v7608
    %s7614 = scalar_lea.vmem %s5, 1024
    %v7615 = vld [vmem:[%s7614] sm:$0xf]
    %v7616 = vld [vmem:[%s7614 + $0x4] sm:$0xf]
    %v7617 = vld [vmem:[%s7614 + $0x8] sm:$0xf]
    %v7618 = vld [vmem:[%s7614 + $0xc] sm:$0xf]
    %v7619 = vld [vmem:[%s7614 + $0x10] sm:$0xf]
    %v7620 = vld [vmem:[%s7614 + $0x14] sm:$0xf]
    %v7621 = vld [vmem:[%s7614 + $0x18] sm:$0xf]
    %v7622 = vld [vmem:[%s7614 + $0x1c] sm:$0xf]
    %v7623 = vld [vmem:[%s7614 + $0x20] sm:$0xf]
    %v7624 = vld [vmem:[%s7614 + $0x24] sm:$0xf]
    %v7625 = vld [vmem:[%s7614 + $0x28] sm:$0xf]
    %v7626 = vld [vmem:[%s7614 + $0x2c] sm:$0xf]
    %v7627 = vld [vmem:[%s7614 + $0x30] sm:$0xf]
    %v7628 = vld [vmem:[%s7614 + $0x34] sm:$0xf]
    %v7629 = vld [vmem:[%s7614 + $0x38] sm:$0xf]
    %v7630 = vld [vmem:[%s7614 + $0x3c] sm:$0xf]
    %v7631 = vrot.slane %v7519, 1
    %v7632 = vsel %vm5869, %v7520, %v7631
    %v7633 = vpack.c.b16 %v7632, %v7632
    %v7651 = vunpack.c.l.b16 %v7615
    %v7652 = vunpack.c.l.b16 %v7616
    %v7653 = vunpack.c.l.b16 %v7617
    %v7654 = vunpack.c.l.b16 %v7618
    %v7655 = vunpack.c.l.b16 %v7619
    %v7656 = vunpack.c.l.b16 %v7620
    %v7657 = vunpack.c.l.b16 %v7621
    %v7658 = vunpack.c.l.b16 %v7622
    %v7659 = vunpack.c.l.b16 %v7623
    %v7660 = vunpack.c.l.b16 %v7624
    %v7661 = vunpack.c.l.b16 %v7625
    %v7662 = vunpack.c.l.b16 %v7626
    %v7663 = vunpack.c.l.b16 %v7627
    %v7664 = vunpack.c.l.b16 %v7628
    %v7665 = vunpack.c.l.b16 %v7629
    %v7666 = vunpack.c.l.b16 %v7630
    %v7667 = vpack.c.b16 %v7652, %v7651
    %v7668 = vpack.c.b16 %v7654, %v7653
    %v7669 = vpack.c.b16 %v7656, %v7655
    %v7670 = vpack.c.b16 %v7658, %v7657
    %v7671 = vpack.c.b16 %v7660, %v7659
    %v7672 = vpack.c.b16 %v7662, %v7661
    %v7673 = vpack.c.b16 %v7664, %v7663
    %v7674 = vpack.c.b16 %v7666, %v7665
    %7683 = vmatprep.subr.bf16.mxu0 0
    %7684 = vmatpush1.bf16.msra.mxu0 %v7667
    %7685 = vmatprep.subr.bf16.mxu0 0
    %7686 = vmatpush1.bf16.msra.mxu0 %v7668
    %7687 = vmatprep.subr.bf16.mxu0 0
    %7688 = vmatpush1.bf16.msra.mxu0 %v7669
    %7689 = vmatprep.subr.bf16.mxu0 0
    %7690 = vmatpush1.bf16.msra.mxu0 %v7670
    %7691 = vmatprep.subr.bf16.mxu0 0
    %7692 = vmatpush1.bf16.msra.mxu0 %v7671
    %7693 = vmatprep.subr.bf16.mxu0 0
    %7694 = vmatpush1.bf16.msra.mxu0 %v7672
    %7695 = vmatprep.subr.bf16.mxu0 0
    %7696 = vmatpush1.bf16.msra.mxu0 %v7673
    %7697 = vmatprep.subr.bf16.mxu0 0
    %7698 = vmatpush1.bf16.msra.mxu0 %v7674
    %7699 = vmatprep.subr.bf16.mxu0 0
    %7700 = vmatpush1.bf16.msra.mxu0 0
    %7701 = vmatprep.subr.bf16.mxu0 0
    %7702 = vmatpush1.bf16.msra.mxu0 0
    %7703 = vmatprep.subr.bf16.mxu0 0
    %7704 = vmatpush1.bf16.msra.mxu0 0
    %7705 = vmatprep.subr.bf16.mxu0 0
    %7706 = vmatpush1.bf16.msra.mxu0 0
    %7707 = vmatprep.subr.bf16.mxu0 0
    %7708 = vmatpush1.bf16.msra.mxu0 0
    %7709 = vmatprep.subr.bf16.mxu0 0
    %7710 = vmatpush1.bf16.msra.mxu0 0
    %7711 = vmatprep.subr.bf16.mxu0 0
    %7712 = vmatpush1.bf16.msra.mxu0 0
    %7713 = vmatprep.subr.bf16.mxu0 0
    %7714 = vmatpush1.bf16.msra.mxu0 0
    %7715 = vmatprep.mubr.bf16.mxu0 0
    %7716 = vmatmul.mubr.bf16.gmra.mrb[0].mxu0 %v7633
    %v7717 = vpop.f32.mrb[0].mxu0
    %v7718 = vadd.f32 0.0, %v7717
    %v7719 = vpop.f32.mrb[0].mxu0
    %v7720 = vpop.f32.mrb[0].mxu0
    %v7721 = vpop.f32.mrb[0].mxu0
    %7722 = vdwg.mxu0
    %v7723 = vadd.f32 %v7613, %v7718
    %s7724 = scalar_lea.vmem %s5, 1088
    %v7725 = vld [vmem:[%s7724] sm:$0xf]
    %v7726 = vld [vmem:[%s7724 + $0x4] sm:$0xf]
    %v7727 = vld [vmem:[%s7724 + $0x8] sm:$0xf]
    %v7728 = vld [vmem:[%s7724 + $0xc] sm:$0xf]
    %v7729 = vld [vmem:[%s7724 + $0x10] sm:$0xf]
    %v7730 = vld [vmem:[%s7724 + $0x14] sm:$0xf]
    %v7731 = vld [vmem:[%s7724 + $0x18] sm:$0xf]
    %v7732 = vld [vmem:[%s7724 + $0x1c] sm:$0xf]
    %v7733 = vld [vmem:[%s7724 + $0x20] sm:$0xf]
    %v7734 = vld [vmem:[%s7724 + $0x24] sm:$0xf]
    %v7735 = vld [vmem:[%s7724 + $0x28] sm:$0xf]
    %v7736 = vld [vmem:[%s7724 + $0x2c] sm:$0xf]
    %v7737 = vld [vmem:[%s7724 + $0x30] sm:$0xf]
    %v7738 = vld [vmem:[%s7724 + $0x34] sm:$0xf]
    %v7739 = vld [vmem:[%s7724 + $0x38] sm:$0xf]
    %v7740 = vld [vmem:[%s7724 + $0x3c] sm:$0xf]
    %v7741 = vrot.slane %v7519, 2
    %v7742 = vrot.slane %v7520, 1
    %v7743 = vsel %vm5869, %v7742, %v7741
    %v7744 = vpack.c.b16 %v7743, %v7743
    %v7762 = vunpack.c.l.b16 %v7725
    %v7763 = vunpack.c.l.b16 %v7726
    %v7764 = vunpack.c.l.b16 %v7727
    %v7765 = vunpack.c.l.b16 %v7728
    %v7766 = vunpack.c.l.b16 %v7729
    %v7767 = vunpack.c.l.b16 %v7730
    %v7768 = vunpack.c.l.b16 %v7731
    %v7769 = vunpack.c.l.b16 %v7732
    %v7770 = vunpack.c.l.b16 %v7733
    %v7771 = vunpack.c.l.b16 %v7734
    %v7772 = vunpack.c.l.b16 %v7735
    %v7773 = vunpack.c.l.b16 %v7736
    %v7774 = vunpack.c.l.b16 %v7737
    %v7775 = vunpack.c.l.b16 %v7738
    %v7776 = vunpack.c.l.b16 %v7739
    %v7777 = vunpack.c.l.b16 %v7740
    %v7778 = vpack.c.b16 %v7763, %v7762
    %v7779 = vpack.c.b16 %v7765, %v7764
    %v7780 = vpack.c.b16 %v7767, %v7766
    %v7781 = vpack.c.b16 %v7769, %v7768
    %v7782 = vpack.c.b16 %v7771, %v7770
    %v7783 = vpack.c.b16 %v7773, %v7772
    %v7784 = vpack.c.b16 %v7775, %v7774
    %v7785 = vpack.c.b16 %v7777, %v7776
    %7794 = vmatprep.subr.bf16.mxu0 0
    %7795 = vmatpush1.bf16.msra.mxu0 %v7778
    %7796 = vmatprep.subr.bf16.mxu0 0
    %7797 = vmatpush1.bf16.msra.mxu0 %v7779
    %7798 = vmatprep.subr.bf16.mxu0 0
    %7799 = vmatpush1.bf16.msra.mxu0 %v7780
    %7800 = vmatprep.subr.bf16.mxu0 0
    %7801 = vmatpush1.bf16.msra.mxu0 %v7781
    %7802 = vmatprep.subr.bf16.mxu0 0
    %7803 = vmatpush1.bf16.msra.mxu0 %v7782
    %7804 = vmatprep.subr.bf16.mxu0 0
    %7805 = vmatpush1.bf16.msra.mxu0 %v7783
    %7806 = vmatprep.subr.bf16.mxu0 0
    %7807 = vmatpush1.bf16.msra.mxu0 %v7784
    %7808 = vmatprep.subr.bf16.mxu0 0
    %7809 = vmatpush1.bf16.msra.mxu0 %v7785
    %7810 = vmatprep.subr.bf16.mxu0 0
    %7811 = vmatpush1.bf16.msra.mxu0 0
    %7812 = vmatprep.subr.bf16.mxu0 0
    %7813 = vmatpush1.bf16.msra.mxu0 0
    %7814 = vmatprep.subr.bf16.mxu0 0
    %7815 = vmatpush1.bf16.msra.mxu0 0
    %7816 = vmatprep.subr.bf16.mxu0 0
    %7817 = vmatpush1.bf16.msra.mxu0 0
    %7818 = vmatprep.subr.bf16.mxu0 0
    %7819 = vmatpush1.bf16.msra.mxu0 0
    %7820 = vmatprep.subr.bf16.mxu0 0
    %7821 = vmatpush1.bf16.msra.mxu0 0
    %7822 = vmatprep.subr.bf16.mxu0 0
    %7823 = vmatpush1.bf16.msra.mxu0 0
    %7824 = vmatprep.subr.bf16.mxu0 0
    %7825 = vmatpush1.bf16.msra.mxu0 0
    %7826 = vmatprep.mubr.bf16.mxu0 0
    %7827 = vmatmul.mubr.bf16.gmra.mrb[0].mxu0 %v7744
    %v7828 = vpop.f32.mrb[0].mxu0
    %v7829 = vadd.f32 0.0, %v7828
    %v7830 = vpop.f32.mrb[0].mxu0
    %v7831 = vpop.f32.mrb[0].mxu0
    %v7832 = vpop.f32.mrb[0].mxu0
    %7833 = vdwg.mxu0
    %v7834 = vadd.f32 %v7723, %v7829
    %s7835 = scalar_lea.vmem %s5, 1152
    %v7836 = vld [vmem:[%s7835] sm:$0xf]
    %v7837 = vld [vmem:[%s7835 + $0x4] sm:$0xf]
    %v7838 = vld [vmem:[%s7835 + $0x8] sm:$0xf]
    %v7839 = vld [vmem:[%s7835 + $0xc] sm:$0xf]
    %v7840 = vld [vmem:[%s7835 + $0x10] sm:$0xf]
    %v7841 = vld [vmem:[%s7835 + $0x14] sm:$0xf]
    %v7842 = vld [vmem:[%s7835 + $0x18] sm:$0xf]
    %v7843 = vld [vmem:[%s7835 + $0x1c] sm:$0xf]
    %v7844 = vld [vmem:[%s7835 + $0x20] sm:$0xf]
    %v7845 = vld [vmem:[%s7835 + $0x24] sm:$0xf]
    %v7846 = vld [vmem:[%s7835 + $0x28] sm:$0xf]
    %v7847 = vld [vmem:[%s7835 + $0x2c] sm:$0xf]
    %v7848 = vld [vmem:[%s7835 + $0x30] sm:$0xf]
    %v7849 = vld [vmem:[%s7835 + $0x34] sm:$0xf]
    %v7850 = vld [vmem:[%s7835 + $0x38] sm:$0xf]
    %v7851 = vld [vmem:[%s7835 + $0x3c] sm:$0xf]
    %v7852 = vrot.slane %v7519, 3
    %v7853 = vrot.slane %v7520, 2
    %v7854 = vsel %vm5869, %v7853, %v7852
    %v7855 = vpack.c.b16 %v7854, %v7854
    %v7873 = vunpack.c.l.b16 %v7836
    %v7874 = vunpack.c.l.b16 %v7837
    %v7875 = vunpack.c.l.b16 %v7838
    %v7876 = vunpack.c.l.b16 %v7839
    %v7877 = vunpack.c.l.b16 %v7840
    %v7878 = vunpack.c.l.b16 %v7841
    %v7879 = vunpack.c.l.b16 %v7842
    %v7880 = vunpack.c.l.b16 %v7843
    %v7881 = vunpack.c.l.b16 %v7844
    %v7882 = vunpack.c.l.b16 %v7845
    %v7883 = vunpack.c.l.b16 %v7846
    %v7884 = vunpack.c.l.b16 %v7847
    %v7885 = vunpack.c.l.b16 %v7848
    %v7886 = vunpack.c.l.b16 %v7849
    %v7887 = vunpack.c.l.b16 %v7850
    %v7888 = vunpack.c.l.b16 %v7851
    %v7889 = vpack.c.b16 %v7874, %v7873
    %v7890 = vpack.c.b16 %v7876, %v7875
    %v7891 = vpack.c.b16 %v7878, %v7877
    %v7892 = vpack.c.b16 %v7880, %v7879
    %v7893 = vpack.c.b16 %v7882, %v7881
    %v7894 = vpack.c.b16 %v7884, %v7883
    %v7895 = vpack.c.b16 %v7886, %v7885
    %v7896 = vpack.c.b16 %v7888, %v7887
    %7905 = vmatprep.subr.bf16.mxu0 0
    %7906 = vmatpush1.bf16.msra.mxu0 %v7889
    %7907 = vmatprep.subr.bf16.mxu0 0
    %7908 = vmatpush1.bf16.msra.mxu0 %v7890
    %7909 = vmatprep.subr.bf16.mxu0 0
    %7910 = vmatpush1.bf16.msra.mxu0 %v7891
    %7911 = vmatprep.subr.bf16.mxu0 0
    %7912 = vmatpush1.bf16.msra.mxu0 %v7892
    %7913 = vmatprep.subr.bf16.mxu0 0
    %7914 = vmatpush1.bf16.msra.mxu0 %v7893
    %7915 = vmatprep.subr.bf16.mxu0 0
    %7916 = vmatpush1.bf16.msra.mxu0 %v7894
    %7917 = vmatprep.subr.bf16.mxu0 0
    %7918 = vmatpush1.bf16.msra.mxu0 %v7895
    %7919 = vmatprep.subr.bf16.mxu0 0
    %7920 = vmatpush1.bf16.msra.mxu0 %v7896
    %7921 = vmatprep.subr.bf16.mxu0 0
    %7922 = vmatpush1.bf16.msra.mxu0 0
    %7923 = vmatprep.subr.bf16.mxu0 0
    %7924 = vmatpush1.bf16.msra.mxu0 0
    %7925 = vmatprep.subr.bf16.mxu0 0
    %7926 = vmatpush1.bf16.msra.mxu0 0
    %7927 = vmatprep.subr.bf16.mxu0 0
    %7928 = vmatpush1.bf16.msra.mxu0 0
    %7929 = vmatprep.subr.bf16.mxu0 0
    %7930 = vmatpush1.bf16.msra.mxu0 0
    %7931 = vmatprep.subr.bf16.mxu0 0
    %7932 = vmatpush1.bf16.msra.mxu0 0
    %7933 = vmatprep.subr.bf16.mxu0 0
    %7934 = vmatpush1.bf16.msra.mxu0 0
    %7935 = vmatprep.subr.bf16.mxu0 0
    %7936 = vmatpush1.bf16.msra.mxu0 0
    %7937 = vmatprep.mubr.bf16.mxu0 0
    %7938 = vmatmul.mubr.bf16.gmra.mrb[0].mxu0 %v7855
    %v7939 = vpop.f32.mrb[0].mxu0
    %v7940 = vadd.f32 0.0, %v7939
    %v7941 = vpop.f32.mrb[0].mxu0
    %v7942 = vpop.f32.mrb[0].mxu0
    %v7943 = vpop.f32.mrb[0].mxu0
    %7944 = vdwg.mxu0
    %v7945 = vadd.f32 %v7834, %v7940
    %s7946 = scalar_lea.vmem %s5, 1216
    %v7947 = vld [vmem:[%s7946] sm:$0xf]
    %v7948 = vld [vmem:[%s7946 + $0x4] sm:$0xf]
    %v7949 = vld [vmem:[%s7946 + $0x8] sm:$0xf]
    %v7950 = vld [vmem:[%s7946 + $0xc] sm:$0xf]
    %v7951 = vld [vmem:[%s7946 + $0x10] sm:$0xf]
    %v7952 = vld [vmem:[%s7946 + $0x14] sm:$0xf]
    %v7953 = vld [vmem:[%s7946 + $0x18] sm:$0xf]
    %v7954 = vld [vmem:[%s7946 + $0x1c] sm:$0xf]
    %v7955 = vld [vmem:[%s7946 + $0x20] sm:$0xf]
    %v7956 = vld [vmem:[%s7946 + $0x24] sm:$0xf]
    %v7957 = vld [vmem:[%s7946 + $0x28] sm:$0xf]
    %v7958 = vld [vmem:[%s7946 + $0x2c] sm:$0xf]
    %v7959 = vld [vmem:[%s7946 + $0x30] sm:$0xf]
    %v7960 = vld [vmem:[%s7946 + $0x34] sm:$0xf]
    %v7961 = vld [vmem:[%s7946 + $0x38] sm:$0xf]
    %v7962 = vld [vmem:[%s7946 + $0x3c] sm:$0xf]
    %v7963 = vrot.slane %v7519, 4
    %v7964 = vrot.slane %v7520, 3
    %v7965 = vsel %vm5869, %v7964, %v7963
    %v7966 = vpack.c.b16 %v7965, %v7965
    %v7984 = vunpack.c.l.b16 %v7947
    %v7985 = vunpack.c.l.b16 %v7948
    %v7986 = vunpack.c.l.b16 %v7949
    %v7987 = vunpack.c.l.b16 %v7950
    %v7988 = vunpack.c.l.b16 %v7951
    %v7989 = vunpack.c.l.b16 %v7952
    %v7990 = vunpack.c.l.b16 %v7953
    %v7991 = vunpack.c.l.b16 %v7954
    %v7992 = vunpack.c.l.b16 %v7955
    %v7993 = vunpack.c.l.b16 %v7956
    %v7994 = vunpack.c.l.b16 %v7957
    %v7995 = vunpack.c.l.b16 %v7958
    %v7996 = vunpack.c.l.b16 %v7959
    %v7997 = vunpack.c.l.b16 %v7960
    %v7998 = vunpack.c.l.b16 %v7961
    %v7999 = vunpack.c.l.b16 %v7962
    %v8000 = vpack.c.b16 %v7985, %v7984
    %v8001 = vpack.c.b16 %v7987, %v7986
    %v8002 = vpack.c.b16 %v7989, %v7988
    %v8003 = vpack.c.b16 %v7991, %v7990
    %v8004 = vpack.c.b16 %v7993, %v7992
    %v8005 = vpack.c.b16 %v7995, %v7994
    %v8006 = vpack.c.b16 %v7997, %v7996
    %v8007 = vpack.c.b16 %v7999, %v7998
    %8016 = vmatprep.subr.bf16.mxu0 0
    %8017 = vmatpush1.bf16.msra.mxu0 %v8000
    %8018 = vmatprep.subr.bf16.mxu0 0
    %8019 = vmatpush1.bf16.msra.mxu0 %v8001
    %8020 = vmatprep.subr.bf16.mxu0 0
    %8021 = vmatpush1.bf16.msra.mxu0 %v8002
    %8022 = vmatprep.subr.bf16.mxu0 0
    %8023 = vmatpush1.bf16.msra.mxu0 %v8003
    %8024 = vmatprep.subr.bf16.mxu0 0
    %8025 = vmatpush1.bf16.msra.mxu0 %v8004
    %8026 = vmatprep.subr.bf16.mxu0 0
    %8027 = vmatpush1.bf16.msra.mxu0 %v8005
    %8028 = vmatprep.subr.bf16.mxu0 0
    %8029 = vmatpush1.bf16.msra.mxu0 %v8006
    %8030 = vmatprep.subr.bf16.mxu0 0
    %8031 = vmatpush1.bf16.msra.mxu0 %v8007
    %8032 = vmatprep.subr.bf16.mxu0 0
    %8033 = vmatpush1.bf16.msra.mxu0 0
    %8034 = vmatprep.subr.bf16.mxu0 0
    %8035 = vmatpush1.bf16.msra.mxu0 0
    %8036 = vmatprep.subr.bf16.mxu0 0
    %8037 = vmatpush1.bf16.msra.mxu0 0
    %8038 = vmatprep.subr.bf16.mxu0 0
    %8039 = vmatpush1.bf16.msra.mxu0 0
    %8040 = vmatprep.subr.bf16.mxu0 0
    %8041 = vmatpush1.bf16.msra.mxu0 0
    %8042 = vmatprep.subr.bf16.mxu0 0
    %8043 = vmatpush1.bf16.msra.mxu0 0
    %8044 = vmatprep.subr.bf16.mxu0 0
    %8045 = vmatpush1.bf16.msra.mxu0 0
    %8046 = vmatprep.subr.bf16.mxu0 0
    %8047 = vmatpush1.bf16.msra.mxu0 0
    %8048 = vmatprep.mubr.bf16.mxu0 0
    %8049 = vmatmul.mubr.bf16.gmra.mrb[0].mxu0 %v7966
    %v8050 = vpop.f32.mrb[0].mxu0
    %v8051 = vadd.f32 0.0, %v8050
    %v8052 = vpop.f32.mrb[0].mxu0
    %v8053 = vpop.f32.mrb[0].mxu0
    %v8054 = vpop.f32.mrb[0].mxu0
    %8055 = vdwg.mxu0
    %v8056 = vadd.f32 %v7945, %v8051
    %s8057 = scalar_lea.vmem %s5, 1280
    %v8058 = vld [vmem:[%s8057] sm:$0xf]
    %v8059 = vld [vmem:[%s8057 + $0x4] sm:$0xf]
    %v8060 = vld [vmem:[%s8057 + $0x8] sm:$0xf]
    %v8061 = vld [vmem:[%s8057 + $0xc] sm:$0xf]
    %v8062 = vld [vmem:[%s8057 + $0x10] sm:$0xf]
    %v8063 = vld [vmem:[%s8057 + $0x14] sm:$0xf]
    %v8064 = vld [vmem:[%s8057 + $0x18] sm:$0xf]
    %v8065 = vld [vmem:[%s8057 + $0x1c] sm:$0xf]
    %v8066 = vld [vmem:[%s8057 + $0x20] sm:$0xf]
    %v8067 = vld [vmem:[%s8057 + $0x24] sm:$0xf]
    %v8068 = vld [vmem:[%s8057 + $0x28] sm:$0xf]
    %v8069 = vld [vmem:[%s8057 + $0x2c] sm:$0xf]
    %v8070 = vld [vmem:[%s8057 + $0x30] sm:$0xf]
    %v8071 = vld [vmem:[%s8057 + $0x34] sm:$0xf]
    %v8072 = vld [vmem:[%s8057 + $0x38] sm:$0xf]
    %v8073 = vld [vmem:[%s8057 + $0x3c] sm:$0xf]
    %v8076 = vunpack.c.l.b16 %v5825
    %v8077 = vunpack.c.l.b16 %v5830
    %v8078 = vrot.slane %v8077, 7
    %v8079 = vsel %vm5869, %v8078, %v8076
    %v8080 = vpack.c.b16 %v8079, %v8079
    %v8098 = vunpack.c.l.b16 %v8058
    %v8099 = vunpack.c.l.b16 %v8059
    %v8100 = vunpack.c.l.b16 %v8060
    %v8101 = vunpack.c.l.b16 %v8061
    %v8102 = vunpack.c.l.b16 %v8062
    %v8103 = vunpack.c.l.b16 %v8063
    %v8104 = vunpack.c.l.b16 %v8064
    %v8105 = vunpack.c.l.b16 %v8065
    %v8106 = vunpack.c.l.b16 %v8066
    %v8107 = vunpack.c.l.b16 %v8067
    %v8108 = vunpack.c.l.b16 %v8068
    %v8109 = vunpack.c.l.b16 %v8069
    %v8110 = vunpack.c.l.b16 %v8070
    %v8111 = vunpack.c.l.b16 %v8071
    %v8112 = vunpack.c.l.b16 %v8072
    %v8113 = vunpack.c.l.b16 %v8073
    %v8114 = vpack.c.b16 %v8099, %v8098
    %v8115 = vpack.c.b16 %v8101, %v8100
    %v8116 = vpack.c.b16 %v8103, %v8102
    %v8117 = vpack.c.b16 %v8105, %v8104
    %v8118 = vpack.c.b16 %v8107, %v8106
    %v8119 = vpack.c.b16 %v8109, %v8108
    %v8120 = vpack.c.b16 %v8111, %v8110
    %v8121 = vpack.c.b16 %v8113, %v8112
    %8130 = vmatprep.subr.bf16.mxu0 0
    %8131 = vmatpush1.bf16.msra.mxu0 %v8114
    %8132 = vmatprep.subr.bf16.mxu0 0
    %8133 = vmatpush1.bf16.msra.mxu0 %v8115
    %8134 = vmatprep.subr.bf16.mxu0 0
    %8135 = vmatpush1.bf16.msra.mxu0 %v8116
    %8136 = vmatprep.subr.bf16.mxu0 0
    %8137 = vmatpush1.bf16.msra.mxu0 %v8117
    %8138 = vmatprep.subr.bf16.mxu0 0
    %8139 = vmatpush1.bf16.msra.mxu0 %v8118
    %8140 = vmatprep.subr.bf16.mxu0 0
    %8141 = vmatpush1.bf16.msra.mxu0 %v8119
    %8142 = vmatprep.subr.bf16.mxu0 0
    %8143 = vmatpush1.bf16.msra.mxu0 %v8120
    %8144 = vmatprep.subr.bf16.mxu0 0
    %8145 = vmatpush1.bf16.msra.mxu0 %v8121
    %8146 = vmatprep.subr.bf16.mxu0 0
    %8147 = vmatpush1.bf16.msra.mxu0 0
    %8148 = vmatprep.subr.bf16.mxu0 0
    %8149 = vmatpush1.bf16.msra.mxu0 0
    %8150 = vmatprep.subr.bf16.mxu0 0
    %8151 = vmatpush1.bf16.msra.mxu0 0
    %8152 = vmatprep.subr.bf16.mxu0 0
    %8153 = vmatpush1.bf16.msra.mxu0 0
    %8154 = vmatprep.subr.bf16.mxu0 0
    %8155 = vmatpush1.bf16.msra.mxu0 0
    %8156 = vmatprep.subr.bf16.mxu0 0
    %8157 = vmatpush1.bf16.msra.mxu0 0
    %8158 = vmatprep.subr.bf16.mxu0 0
    %8159 = vmatpush1.bf16.msra.mxu0 0
    %8160 = vmatprep.subr.bf16.mxu0 0
    %8161 = vmatpush1.bf16.msra.mxu0 0
    %8162 = vmatprep.mubr.bf16.mxu0 0
    %8163 = vmatmul.mubr.bf16.gmra.mrb[0].mxu0 %v8080
    %v8164 = vpop.f32.mrb[0].mxu0
    %v8165 = vadd.f32 0.0, %v8164
    %v8166 = vpop.f32.mrb[0].mxu0
    %v8167 = vpop.f32.mrb[0].mxu0
    %v8168 = vpop.f32.mrb[0].mxu0
    %8169 = vdwg.mxu0
    %v8170 = vadd.f32 %v8056, %v8165
    %s8171 = scalar_lea.vmem %s5, 1344
    %v8172 = vld [vmem:[%s8171] sm:$0xf]
    %v8173 = vld [vmem:[%s8171 + $0x4] sm:$0xf]
    %v8174 = vld [vmem:[%s8171 + $0x8] sm:$0xf]
    %v8175 = vld [vmem:[%s8171 + $0xc] sm:$0xf]
    %v8176 = vld [vmem:[%s8171 + $0x10] sm:$0xf]
    %v8177 = vld [vmem:[%s8171 + $0x14] sm:$0xf]
    %v8178 = vld [vmem:[%s8171 + $0x18] sm:$0xf]
    %v8179 = vld [vmem:[%s8171 + $0x1c] sm:$0xf]
    %v8180 = vld [vmem:[%s8171 + $0x20] sm:$0xf]
    %v8181 = vld [vmem:[%s8171 + $0x24] sm:$0xf]
    %v8182 = vld [vmem:[%s8171 + $0x28] sm:$0xf]
    %v8183 = vld [vmem:[%s8171 + $0x2c] sm:$0xf]
    %v8184 = vld [vmem:[%s8171 + $0x30] sm:$0xf]
    %v8185 = vld [vmem:[%s8171 + $0x34] sm:$0xf]
    %v8186 = vld [vmem:[%s8171 + $0x38] sm:$0xf]
    %v8187 = vld [vmem:[%s8171 + $0x3c] sm:$0xf]
    %v8188 = vrot.slane %v8076, 1
    %v8189 = vsel %vm5869, %v8077, %v8188
    %v8190 = vpack.c.b16 %v8189, %v8189
    %v8208 = vunpack.c.l.b16 %v8172
    %v8209 = vunpack.c.l.b16 %v8173
    %v8210 = vunpack.c.l.b16 %v8174
    %v8211 = vunpack.c.l.b16 %v8175
    %v8212 = vunpack.c.l.b16 %v8176
    %v8213 = vunpack.c.l.b16 %v8177
    %v8214 = vunpack.c.l.b16 %v8178
    %v8215 = vunpack.c.l.b16 %v8179
    %v8216 = vunpack.c.l.b16 %v8180
    %v8217 = vunpack.c.l.b16 %v8181
    %v8218 = vunpack.c.l.b16 %v8182
    %v8219 = vunpack.c.l.b16 %v8183
    %v8220 = vunpack.c.l.b16 %v8184
    %v8221 = vunpack.c.l.b16 %v8185
    %v8222 = vunpack.c.l.b16 %v8186
    %v8223 = vunpack.c.l.b16 %v8187
    %v8224 = vpack.c.b16 %v8209, %v8208
    %v8225 = vpack.c.b16 %v8211, %v8210
    %v8226 = vpack.c.b16 %v8213, %v8212
    %v8227 = vpack.c.b16 %v8215, %v8214
    %v8228 = vpack.c.b16 %v8217, %v8216
    %v8229 = vpack.c.b16 %v8219, %v8218
    %v8230 = vpack.c.b16 %v8221, %v8220
    %v8231 = vpack.c.b16 %v8223, %v8222
    %8240 = vmatprep.subr.bf16.mxu0 0
    %8241 = vmatpush1.bf16.msra.mxu0 %v8224
    %8242 = vmatprep.subr.bf16.mxu0 0
    %8243 = vmatpush1.bf16.msra.mxu0 %v8225
    %8244 = vmatprep.subr.bf16.mxu0 0
    %8245 = vmatpush1.bf16.msra.mxu0 %v8226
    %8246 = vmatprep.subr.bf16.mxu0 0
    %8247 = vmatpush1.bf16.msra.mxu0 %v8227
    %8248 = vmatprep.subr.bf16.mxu0 0
    %8249 = vmatpush1.bf16.msra.mxu0 %v8228
    %8250 = vmatprep.subr.bf16.mxu0 0
    %8251 = vmatpush1.bf16.msra.mxu0 %v8229
    %8252 = vmatprep.subr.bf16.mxu0 0
    %8253 = vmatpush1.bf16.msra.mxu0 %v8230
    %8254 = vmatprep.subr.bf16.mxu0 0
    %8255 = vmatpush1.bf16.msra.mxu0 %v8231
    %8256 = vmatprep.subr.bf16.mxu0 0
    %8257 = vmatpush1.bf16.msra.mxu0 0
    %8258 = vmatprep.subr.bf16.mxu0 0
    %8259 = vmatpush1.bf16.msra.mxu0 0
    %8260 = vmatprep.subr.bf16.mxu0 0
    %8261 = vmatpush1.bf16.msra.mxu0 0
    %8262 = vmatprep.subr.bf16.mxu0 0
    %8263 = vmatpush1.bf16.msra.mxu0 0
    %8264 = vmatprep.subr.bf16.mxu0 0
    %8265 = vmatpush1.bf16.msra.mxu0 0
    %8266 = vmatprep.subr.bf16.mxu0 0
    %8267 = vmatpush1.bf16.msra.mxu0 0
    %8268 = vmatprep.subr.bf16.mxu0 0
    %8269 = vmatpush1.bf16.msra.mxu0 0
    %8270 = vmatprep.subr.bf16.mxu0 0
    %8271 = vmatpush1.bf16.msra.mxu0 0
    %8272 = vmatprep.mubr.bf16.mxu0 0
    %8273 = vmatmul.mubr.bf16.gmra.mrb[0].mxu0 %v8190
    %v8274 = vpop.f32.mrb[0].mxu0
    %v8275 = vadd.f32 0.0, %v8274
    %v8276 = vpop.f32.mrb[0].mxu0
    %v8277 = vpop.f32.mrb[0].mxu0
    %v8278 = vpop.f32.mrb[0].mxu0
    %8279 = vdwg.mxu0
    %v8280 = vadd.f32 %v8170, %v8275
    %s8281 = scalar_lea.vmem %s5, 1408
    %v8282 = vld [vmem:[%s8281] sm:$0xf]
    %v8283 = vld [vmem:[%s8281 + $0x4] sm:$0xf]
    %v8284 = vld [vmem:[%s8281 + $0x8] sm:$0xf]
    %v8285 = vld [vmem:[%s8281 + $0xc] sm:$0xf]
    %v8286 = vld [vmem:[%s8281 + $0x10] sm:$0xf]
    %v8287 = vld [vmem:[%s8281 + $0x14] sm:$0xf]
    %v8288 = vld [vmem:[%s8281 + $0x18] sm:$0xf]
    %v8289 = vld [vmem:[%s8281 + $0x1c] sm:$0xf]
    %v8290 = vld [vmem:[%s8281 + $0x20] sm:$0xf]
    %v8291 = vld [vmem:[%s8281 + $0x24] sm:$0xf]
    %v8292 = vld [vmem:[%s8281 + $0x28] sm:$0xf]
    %v8293 = vld [vmem:[%s8281 + $0x2c] sm:$0xf]
    %v8294 = vld [vmem:[%s8281 + $0x30] sm:$0xf]
    %v8295 = vld [vmem:[%s8281 + $0x34] sm:$0xf]
    %v8296 = vld [vmem:[%s8281 + $0x38] sm:$0xf]
    %v8297 = vld [vmem:[%s8281 + $0x3c] sm:$0xf]
    %v8298 = vrot.slane %v8076, 2
    %v8299 = vrot.slane %v8077, 1
    %v8300 = vsel %vm5869, %v8299, %v8298
    %v8301 = vpack.c.b16 %v8300, %v8300
    %v8319 = vunpack.c.l.b16 %v8282
    %v8320 = vunpack.c.l.b16 %v8283
    %v8321 = vunpack.c.l.b16 %v8284
    %v8322 = vunpack.c.l.b16 %v8285
    %v8323 = vunpack.c.l.b16 %v8286
    %v8324 = vunpack.c.l.b16 %v8287
    %v8325 = vunpack.c.l.b16 %v8288
    %v8326 = vunpack.c.l.b16 %v8289
    %v8327 = vunpack.c.l.b16 %v8290
    %v8328 = vunpack.c.l.b16 %v8291
    %v8329 = vunpack.c.l.b16 %v8292
    %v8330 = vunpack.c.l.b16 %v8293
    %v8331 = vunpack.c.l.b16 %v8294
    %v8332 = vunpack.c.l.b16 %v8295
    %v8333 = vunpack.c.l.b16 %v8296
    %v8334 = vunpack.c.l.b16 %v8297
    %v8335 = vpack.c.b16 %v8320, %v8319
    %v8336 = vpack.c.b16 %v8322, %v8321
    %v8337 = vpack.c.b16 %v8324, %v8323
    %v8338 = vpack.c.b16 %v8326, %v8325
    %v8339 = vpack.c.b16 %v8328, %v8327
    %v8340 = vpack.c.b16 %v8330, %v8329
    %v8341 = vpack.c.b16 %v8332, %v8331
    %v8342 = vpack.c.b16 %v8334, %v8333
    %8351 = vmatprep.subr.bf16.mxu0 0
    %8352 = vmatpush1.bf16.msra.mxu0 %v8335
    %8353 = vmatprep.subr.bf16.mxu0 0
    %8354 = vmatpush1.bf16.msra.mxu0 %v8336
    %8355 = vmatprep.subr.bf16.mxu0 0
    %8356 = vmatpush1.bf16.msra.mxu0 %v8337
    %8357 = vmatprep.subr.bf16.mxu0 0
    %8358 = vmatpush1.bf16.msra.mxu0 %v8338
    %8359 = vmatprep.subr.bf16.mxu0 0
    %8360 = vmatpush1.bf16.msra.mxu0 %v8339
    %8361 = vmatprep.subr.bf16.mxu0 0
    %8362 = vmatpush1.bf16.msra.mxu0 %v8340
    %8363 = vmatprep.subr.bf16.mxu0 0
    %8364 = vmatpush1.bf16.msra.mxu0 %v8341
    %8365 = vmatprep.subr.bf16.mxu0 0
    %8366 = vmatpush1.bf16.msra.mxu0 %v8342
    %8367 = vmatprep.subr.bf16.mxu0 0
    %8368 = vmatpush1.bf16.msra.mxu0 0
    %8369 = vmatprep.subr.bf16.mxu0 0
    %8370 = vmatpush1.bf16.msra.mxu0 0
    %8371 = vmatprep.subr.bf16.mxu0 0
    %8372 = vmatpush1.bf16.msra.mxu0 0
    %8373 = vmatprep.subr.bf16.mxu0 0
    %8374 = vmatpush1.bf16.msra.mxu0 0
    %8375 = vmatprep.subr.bf16.mxu0 0
    %8376 = vmatpush1.bf16.msra.mxu0 0
    %8377 = vmatprep.subr.bf16.mxu0 0
    %8378 = vmatpush1.bf16.msra.mxu0 0
    %8379 = vmatprep.subr.bf16.mxu0 0
    %8380 = vmatpush1.bf16.msra.mxu0 0
    %8381 = vmatprep.subr.bf16.mxu0 0
    %8382 = vmatpush1.bf16.msra.mxu0 0
    %8383 = vmatprep.mubr.bf16.mxu0 0
    %8384 = vmatmul.mubr.bf16.gmra.mrb[0].mxu0 %v8301
    %v8385 = vpop.f32.mrb[0].mxu0
    %v8386 = vadd.f32 0.0, %v8385
    %v8387 = vpop.f32.mrb[0].mxu0
    %v8388 = vpop.f32.mrb[0].mxu0
    %v8389 = vpop.f32.mrb[0].mxu0
    %8390 = vdwg.mxu0
    %v8391 = vadd.f32 %v8280, %v8386
    %s8392 = scalar_lea.vmem %s5, 1472
    %v8393 = vld [vmem:[%s8392] sm:$0xf]
    %v8394 = vld [vmem:[%s8392 + $0x4] sm:$0xf]
    %v8395 = vld [vmem:[%s8392 + $0x8] sm:$0xf]
    %v8396 = vld [vmem:[%s8392 + $0xc] sm:$0xf]
    %v8397 = vld [vmem:[%s8392 + $0x10] sm:$0xf]
    %v8398 = vld [vmem:[%s8392 + $0x14] sm:$0xf]
    %v8399 = vld [vmem:[%s8392 + $0x18] sm:$0xf]
    %v8400 = vld [vmem:[%s8392 + $0x1c] sm:$0xf]
    %v8401 = vld [vmem:[%s8392 + $0x20] sm:$0xf]
    %v8402 = vld [vmem:[%s8392 + $0x24] sm:$0xf]
    %v8403 = vld [vmem:[%s8392 + $0x28] sm:$0xf]
    %v8404 = vld [vmem:[%s8392 + $0x2c] sm:$0xf]
    %v8405 = vld [vmem:[%s8392 + $0x30] sm:$0xf]
    %v8406 = vld [vmem:[%s8392 + $0x34] sm:$0xf]
    %v8407 = vld [vmem:[%s8392 + $0x38] sm:$0xf]
    %v8408 = vld [vmem:[%s8392 + $0x3c] sm:$0xf]
    %v8409 = vrot.slane %v8076, 3
    %v8410 = vrot.slane %v8077, 2
    %v8411 = vsel %vm5869, %v8410, %v8409
    %v8412 = vpack.c.b16 %v8411, %v8411
    %v8430 = vunpack.c.l.b16 %v8393
    %v8431 = vunpack.c.l.b16 %v8394
    %v8432 = vunpack.c.l.b16 %v8395
    %v8433 = vunpack.c.l.b16 %v8396
    %v8434 = vunpack.c.l.b16 %v8397
    %v8435 = vunpack.c.l.b16 %v8398
    %v8436 = vunpack.c.l.b16 %v8399
    %v8437 = vunpack.c.l.b16 %v8400
    %v8438 = vunpack.c.l.b16 %v8401
    %v8439 = vunpack.c.l.b16 %v8402
    %v8440 = vunpack.c.l.b16 %v8403
    %v8441 = vunpack.c.l.b16 %v8404
    %v8442 = vunpack.c.l.b16 %v8405
    %v8443 = vunpack.c.l.b16 %v8406
    %v8444 = vunpack.c.l.b16 %v8407
    %v8445 = vunpack.c.l.b16 %v8408
    %v8446 = vpack.c.b16 %v8431, %v8430
    %v8447 = vpack.c.b16 %v8433, %v8432
    %v8448 = vpack.c.b16 %v8435, %v8434
    %v8449 = vpack.c.b16 %v8437, %v8436
    %v8450 = vpack.c.b16 %v8439, %v8438
    %v8451 = vpack.c.b16 %v8441, %v8440
    %v8452 = vpack.c.b16 %v8443, %v8442
    %v8453 = vpack.c.b16 %v8445, %v8444
    %8462 = vmatprep.subr.bf16.mxu0 0
    %8463 = vmatpush1.bf16.msra.mxu0 %v8446
    %8464 = vmatprep.subr.bf16.mxu0 0
    %8465 = vmatpush1.bf16.msra.mxu0 %v8447
    %8466 = vmatprep.subr.bf16.mxu0 0
    %8467 = vmatpush1.bf16.msra.mxu0 %v8448
    %8468 = vmatprep.subr.bf16.mxu0 0
    %8469 = vmatpush1.bf16.msra.mxu0 %v8449
    %8470 = vmatprep.subr.bf16.mxu0 0
    %8471 = vmatpush1.bf16.msra.mxu0 %v8450
    %8472 = vmatprep.subr.bf16.mxu0 0
    %8473 = vmatpush1.bf16.msra.mxu0 %v8451
    %8474 = vmatprep.subr.bf16.mxu0 0
    %8475 = vmatpush1.bf16.msra.mxu0 %v8452
    %8476 = vmatprep.subr.bf16.mxu0 0
    %8477 = vmatpush1.bf16.msra.mxu0 %v8453
    %8478 = vmatprep.subr.bf16.mxu0 0
    %8479 = vmatpush1.bf16.msra.mxu0 0
    %8480 = vmatprep.subr.bf16.mxu0 0
    %8481 = vmatpush1.bf16.msra.mxu0 0
    %8482 = vmatprep.subr.bf16.mxu0 0
    %8483 = vmatpush1.bf16.msra.mxu0 0
    %8484 = vmatprep.subr.bf16.mxu0 0
    %8485 = vmatpush1.bf16.msra.mxu0 0
    %8486 = vmatprep.subr.bf16.mxu0 0
    %8487 = vmatpush1.bf16.msra.mxu0 0
    %8488 = vmatprep.subr.bf16.mxu0 0
    %8489 = vmatpush1.bf16.msra.mxu0 0
    %8490 = vmatprep.subr.bf16.mxu0 0
    %8491 = vmatpush1.bf16.msra.mxu0 0
    %8492 = vmatprep.subr.bf16.mxu0 0
    %8493 = vmatpush1.bf16.msra.mxu0 0
    %8494 = vmatprep.mubr.bf16.mxu0 0
    %8495 = vmatmul.mubr.bf16.gmra.mrb[0].mxu0 %v8412
    %v8496 = vpop.f32.mrb[0].mxu0
    %v8497 = vadd.f32 0.0, %v8496
    %v8498 = vpop.f32.mrb[0].mxu0
    %v8499 = vpop.f32.mrb[0].mxu0
    %v8500 = vpop.f32.mrb[0].mxu0
    %8501 = vdwg.mxu0
    %v8502 = vadd.f32 %v8391, %v8497
    %s8503 = scalar_lea.vmem %s5, 1536
    %v8504 = vld [vmem:[%s8503] sm:$0xf]
    %v8505 = vld [vmem:[%s8503 + $0x4] sm:$0xf]
    %v8506 = vld [vmem:[%s8503 + $0x8] sm:$0xf]
    %v8507 = vld [vmem:[%s8503 + $0xc] sm:$0xf]
    %v8508 = vld [vmem:[%s8503 + $0x10] sm:$0xf]
    %v8509 = vld [vmem:[%s8503 + $0x14] sm:$0xf]
    %v8510 = vld [vmem:[%s8503 + $0x18] sm:$0xf]
    %v8511 = vld [vmem:[%s8503 + $0x1c] sm:$0xf]
    %v8512 = vld [vmem:[%s8503 + $0x20] sm:$0xf]
    %v8513 = vld [vmem:[%s8503 + $0x24] sm:$0xf]
    %v8514 = vld [vmem:[%s8503 + $0x28] sm:$0xf]
    %v8515 = vld [vmem:[%s8503 + $0x2c] sm:$0xf]
    %v8516 = vld [vmem:[%s8503 + $0x30] sm:$0xf]
    %v8517 = vld [vmem:[%s8503 + $0x34] sm:$0xf]
    %v8518 = vld [vmem:[%s8503 + $0x38] sm:$0xf]
    %v8519 = vld [vmem:[%s8503 + $0x3c] sm:$0xf]
    %v8520 = vrot.slane %v8076, 4
    %v8521 = vrot.slane %v8077, 3
    %v8522 = vsel %vm5869, %v8521, %v8520
    %v8523 = vpack.c.b16 %v8522, %v8522
    %v8541 = vunpack.c.l.b16 %v8504
    %v8542 = vunpack.c.l.b16 %v8505
    %v8543 = vunpack.c.l.b16 %v8506
    %v8544 = vunpack.c.l.b16 %v8507
    %v8545 = vunpack.c.l.b16 %v8508
    %v8546 = vunpack.c.l.b16 %v8509
    %v8547 = vunpack.c.l.b16 %v8510
    %v8548 = vunpack.c.l.b16 %v8511
    %v8549 = vunpack.c.l.b16 %v8512
    %v8550 = vunpack.c.l.b16 %v8513
    %v8551 = vunpack.c.l.b16 %v8514
    %v8552 = vunpack.c.l.b16 %v8515
    %v8553 = vunpack.c.l.b16 %v8516
    %v8554 = vunpack.c.l.b16 %v8517
    %v8555 = vunpack.c.l.b16 %v8518
    %v8556 = vunpack.c.l.b16 %v8519
    %v8557 = vpack.c.b16 %v8542, %v8541
    %v8558 = vpack.c.b16 %v8544, %v8543
    %v8559 = vpack.c.b16 %v8546, %v8545
    %v8560 = vpack.c.b16 %v8548, %v8547
    %v8561 = vpack.c.b16 %v8550, %v8549
    %v8562 = vpack.c.b16 %v8552, %v8551
    %v8563 = vpack.c.b16 %v8554, %v8553
    %v8564 = vpack.c.b16 %v8556, %v8555
    %8573 = vmatprep.subr.bf16.mxu0 0
    %8574 = vmatpush1.bf16.msra.mxu0 %v8557
    %8575 = vmatprep.subr.bf16.mxu0 0
    %8576 = vmatpush1.bf16.msra.mxu0 %v8558
    %8577 = vmatprep.subr.bf16.mxu0 0
    %8578 = vmatpush1.bf16.msra.mxu0 %v8559
    %8579 = vmatprep.subr.bf16.mxu0 0
    %8580 = vmatpush1.bf16.msra.mxu0 %v8560
    %8581 = vmatprep.subr.bf16.mxu0 0
    %8582 = vmatpush1.bf16.msra.mxu0 %v8561
    %8583 = vmatprep.subr.bf16.mxu0 0
    %8584 = vmatpush1.bf16.msra.mxu0 %v8562
    %8585 = vmatprep.subr.bf16.mxu0 0
    %8586 = vmatpush1.bf16.msra.mxu0 %v8563
    %8587 = vmatprep.subr.bf16.mxu0 0
    %8588 = vmatpush1.bf16.msra.mxu0 %v8564
    %8589 = vmatprep.subr.bf16.mxu0 0
    %8590 = vmatpush1.bf16.msra.mxu0 0
    %8591 = vmatprep.subr.bf16.mxu0 0
    %8592 = vmatpush1.bf16.msra.mxu0 0
    %8593 = vmatprep.subr.bf16.mxu0 0
    %8594 = vmatpush1.bf16.msra.mxu0 0
    %8595 = vmatprep.subr.bf16.mxu0 0
    %8596 = vmatpush1.bf16.msra.mxu0 0
    %8597 = vmatprep.subr.bf16.mxu0 0
    %8598 = vmatpush1.bf16.msra.mxu0 0
    %8599 = vmatprep.subr.bf16.mxu0 0
    %8600 = vmatpush1.bf16.msra.mxu0 0
    %8601 = vmatprep.subr.bf16.mxu0 0
    %8602 = vmatpush1.bf16.msra.mxu0 0
    %8603 = vmatprep.subr.bf16.mxu0 0
    %8604 = vmatpush1.bf16.msra.mxu0 0
    %8605 = vmatprep.mubr.bf16.mxu0 0
    %8606 = vmatmul.mubr.bf16.gmra.mrb[0].mxu0 %v8523
    %v8607 = vpop.f32.mrb[0].mxu0
    %v8608 = vadd.f32 0.0, %v8607
    %v8609 = vpop.f32.mrb[0].mxu0
    %v8610 = vpop.f32.mrb[0].mxu0
    %v8611 = vpop.f32.mrb[0].mxu0
    %8612 = vdwg.mxu0
    %v8613 = vadd.f32 %v8502, %v8608
    %v8614 = vld [vmem:[%s6] sm:$0x1]
    %v8616 = vlaneseq
    %v8617 = vshrl.u32 %v8616, 7
    %v8618 = vsub.s32 0, %v8617
    %v8619 = vrot.slane %v8614, %v8618
    %v8621 = vadd.f32 %v8613, %v8619
    %v8622 = vmax.f32 %v8621, 0.0
    %v8623 = vpack.c.bf16 %v8622, %v8622
    %v8624 = vld [vmem:[%s7] sm:$0xf]
    %v8625 = vld [vmem:[%s7 + $0x4] sm:$0xf]
    %v8626 = vld [vmem:[%s7 + $0x8] sm:$0xf]
    %v8627 = vld [vmem:[%s7 + $0xc] sm:$0xf]
    %v8628 = vld [vmem:[%s7 + $0x10] sm:$0xf]
    %v8629 = vld [vmem:[%s7 + $0x14] sm:$0xf]
    %v8630 = vld [vmem:[%s7 + $0x18] sm:$0xf]
    %v8631 = vld [vmem:[%s7 + $0x1c] sm:$0xf]
    %v8632 = vld [vmem:[%s7 + $0x20] sm:$0xf]
    %v8633 = vld [vmem:[%s7 + $0x24] sm:$0xf]
    %v8634 = vld [vmem:[%s7 + $0x28] sm:$0xf]
    %v8635 = vld [vmem:[%s7 + $0x2c] sm:$0xf]
    %v8636 = vld [vmem:[%s7 + $0x30] sm:$0xf]
    %v8637 = vld [vmem:[%s7 + $0x34] sm:$0xf]
    %v8638 = vld [vmem:[%s7 + $0x38] sm:$0xf]
    %v8639 = vld [vmem:[%s7 + $0x3c] sm:$0xf]
    %v8640 = vld [vmem:[%s8] sm:$0x1]
    %v8642 = vlaneseq
    %v8643 = vshrl.u32 %v8642, 7
    %v8644 = vsub.s32 0, %v8643
    %v8645 = vrot.slane %v8640, %v8644
    %v8663 = vunpack.c.l.b16 %v8624
    %v8664 = vunpack.c.l.b16 %v8625
    %v8665 = vunpack.c.l.b16 %v8626
    %v8666 = vunpack.c.l.b16 %v8627
    %v8667 = vunpack.c.l.b16 %v8628
    %v8668 = vunpack.c.l.b16 %v8629
    %v8669 = vunpack.c.l.b16 %v8630
    %v8670 = vunpack.c.l.b16 %v8631
    %v8671 = vunpack.c.l.b16 %v8632
    %v8672 = vunpack.c.l.b16 %v8633
    %v8673 = vunpack.c.l.b16 %v8634
    %v8674 = vunpack.c.l.b16 %v8635
    %v8675 = vunpack.c.l.b16 %v8636
    %v8676 = vunpack.c.l.b16 %v8637
    %v8677 = vunpack.c.l.b16 %v8638
    %v8678 = vunpack.c.l.b16 %v8639
    %v8679 = vpack.c.b16 %v8664, %v8663
    %v8680 = vpack.c.b16 %v8666, %v8665
    %v8681 = vpack.c.b16 %v8668, %v8667
    %v8682 = vpack.c.b16 %v8670, %v8669
    %v8683 = vpack.c.b16 %v8672, %v8671
    %v8684 = vpack.c.b16 %v8674, %v8673
    %v8685 = vpack.c.b16 %v8676, %v8675
    %v8686 = vpack.c.b16 %v8678, %v8677
    %8695 = vmatprep.subr.bf16.mxu0 0
    %8696 = vmatpush1.bf16.msra.mxu0 %v8679
    %8697 = vmatprep.subr.bf16.mxu0 0
    %8698 = vmatpush1.bf16.msra.mxu0 %v8680
    %8699 = vmatprep.subr.bf16.mxu0 0
    %8700 = vmatpush1.bf16.msra.mxu0 %v8681
    %8701 = vmatprep.subr.bf16.mxu0 0
    %8702 = vmatpush1.bf16.msra.mxu0 %v8682
    %8703 = vmatprep.subr.bf16.mxu0 0
    %8704 = vmatpush1.bf16.msra.mxu0 %v8683
    %8705 = vmatprep.subr.bf16.mxu0 0
    %8706 = vmatpush1.bf16.msra.mxu0 %v8684
    %8707 = vmatprep.subr.bf16.mxu0 0
    %8708 = vmatpush1.bf16.msra.mxu0 %v8685
    %8709 = vmatprep.subr.bf16.mxu0 0
    %8710 = vmatpush1.bf16.msra.mxu0 %v8686
    %8711 = vmatprep.subr.bf16.mxu0 0
    %8712 = vmatpush1.bf16.msra.mxu0 0
    %8713 = vmatprep.subr.bf16.mxu0 0
    %8714 = vmatpush1.bf16.msra.mxu0 0
    %8715 = vmatprep.subr.bf16.mxu0 0
    %8716 = vmatpush1.bf16.msra.mxu0 0
    %8717 = vmatprep.subr.bf16.mxu0 0
    %8718 = vmatpush1.bf16.msra.mxu0 0
    %8719 = vmatprep.subr.bf16.mxu0 0
    %8720 = vmatpush1.bf16.msra.mxu0 0
    %8721 = vmatprep.subr.bf16.mxu0 0
    %8722 = vmatpush1.bf16.msra.mxu0 0
    %8723 = vmatprep.subr.bf16.mxu0 0
    %8724 = vmatpush1.bf16.msra.mxu0 0
    %8725 = vmatprep.subr.bf16.mxu0 0
    %8726 = vmatpush1.bf16.msra.mxu0 0
    %8727 = vmatprep.mubr.bf16.mxu0 0
    %8728 = vmatmul.mubr.bf16.gmra.mrb[0].mxu0 %v8623
    %v8729 = vpop.f32.mrb[0].mxu0
    %v8730 = vadd.f32 %v8645, %v8729
    %v8731 = vpop.f32.mrb[0].mxu0
    %v8732 = vpop.f32.mrb[0].mxu0
    %v8733 = vpop.f32.mrb[0].mxu0
    %8734 = vdwg.mxu0
    %v8735 = vmax.f32 %v8730, 0.0
    %8736 = vst [vmem:[#allocation5] sm:$0x3] %v8735
    // Predicated region
    $region38: #{net_forward.1} parent=1 // pred_check
      _
    $region39: #{net_forward.1} parent=1 // pred_check_branch
      %8738 = sbr.rel (0) target = $region41
    $region40: #{net_forward.1} parent=1 // pred_region
      %s8740 = ssub.s32 32, 32
      %8741 = vsyncadd [#allocation6], %s8740
      %s8743 = sshll.u32 [#allocation5], 4
      %s8744 = int_to_ptr.vmem [resolvable:$true] %s8743
      %8746 = dma.vmem_to_hbm [thread:$0]  %s8744, 32, %s9, [#allocation6]
    $region41: #{net_forward.1} parent=1 // pred_fallthru
      _
    // Predicated region
    $region42: #{net_forward.1} parent=1 // pred_check
      _
    $region43: #{net_forward.1} parent=1 // pred_check_branch
      %8748 = sbr.rel (0) target = $region45
    $region44: #{net_forward.1} parent=1 // pred_region
      %8749 = dma.done [#allocation6], 32
    $region45: #{net_forward.1} parent=1 // pred_fallthru
      _
    %8750 = vsyncpa [#allocation6], 1

</llo_original>
